<compile_context>
chip_gen: v7x
topology: tpu7x:2x2x1
jax: 0.10.0
libtpu: 0.0.40
codegen_flags: <defaults>
</compile_context>

<pallas_src>
import jax
import jax.numpy as jnp
from jax.experimental import pallas as pl
from jax.experimental.pallas import tpu as pltpu

LATENT_DIMS = 32
LAT_PAD = 128            # latent lane-width pad (one full lane group)
IMG = 28 * 28            # 784
IMG_PAD = 896            # 7 * 128, lane-aligned image width


def _round_up(x, m):
    return ((x + m - 1) // m) * m


def _gelu(x):
    # exact (erf-based) GELU, matching torch.nn.functional.gelu default, in fp32
    return 0.5 * x * (1.0 + jax.lax.erf(x * 0.7071067811865476))


def vae_kernel(
    x_ref, noise_ref,
    # encoder params
    we1_ref, be1_ref, we2_ref, be2_ref, we3_ref, be3_ref,
    wmu_ref, bmu_ref, wsg_ref, bsg_ref,
    # decoder params
    wd1_ref, bd1_ref, wd2_ref, bd2_ref, wd3_ref, bd3_ref, wd4_ref, bd4_ref,
    # output
    out_ref,
):
    f32 = jnp.float32
    bf16 = jnp.bfloat16

    def dense(a_bf16, w_ref, b_ref):
        # bf16 operands into the MXU, fp32 accumulation, fp32 bias add.
        return jnp.dot(a_bf16, w_ref[...], preferred_element_type=f32) + b_ref[...]

    # ---------------- VariationalEncoder ----------------
    x = x_ref[...]                                             # (TM, 896) bf16
    h = _gelu(dense(x, we1_ref, be1_ref)).astype(bf16)         # (TM, 1024)
    h = _gelu(dense(h, we2_ref, be2_ref)).astype(bf16)         # (TM, 512)
    h = _gelu(dense(h, we3_ref, be3_ref)).astype(bf16)         # (TM, 256)

    # Latent heads (tiny matmuls, zero-padded to 128 output lanes).
    # Padded lanes: mu = 0, sigma = exp(0) = 1, noise = 0  ->  z = 0 (finite).
    mu = dense(h, wmu_ref, bmu_ref)                            # (TM, 128) f32
    sigma = jnp.exp(dense(h, wsg_ref, bsg_ref))                # (TM, 128) f32
    z = (mu + sigma * noise_ref[...]).astype(bf16)             # (TM, 128) bf16

    # ---------------- Decoder ----------------
    d = _gelu(dense(z, wd1_ref, bd1_ref)).astype(bf16)         # (TM, 256)
    d = _gelu(dense(d, wd2_ref, bd2_ref)).astype(bf16)         # (TM, 512)
    d = _gelu(dense(d, wd3_ref, bd3_ref)).astype(bf16)         # (TM, 1024)
    logits = dense(d, wd4_ref, bd4_ref)                        # (TM, 896) f32
    # Exact sigmoid in fp32 (kernel is MXU-bound; exact divide costs ~nothing).
    out_ref[...] = (1.0 / (1.0 + jnp.exp(-logits))).astype(out_ref.dtype)


def init_params(key, latent_dims=LATENT_DIMS):
    """Deterministic synthetic parameters. Weights stored (in, out), zero-padded
    to lane-aligned shapes, and cast to bf16; biases stay fp32."""

    def dense_init(k, fan_in, fan_out):
        kw, kb = jax.random.split(k)
        w = 0.02 * jax.random.normal(kw, (fan_in, fan_out), jnp.float32)
        b = 0.02 * jax.random.normal(kb, (1, fan_out), jnp.float32)
        return w, b

    ks = jax.random.split(key, 9)
    we1, be1 = dense_init(ks[0], IMG, 1024)
    we2, be2 = dense_init(ks[1], 1024, 512)
    we3, be3 = dense_init(ks[2], 512, 256)
    wmu, bmu = dense_init(ks[3], 256, latent_dims)
    wsg, bsg = dense_init(ks[4], 256, latent_dims)
    wd1, bd1 = dense_init(ks[5], latent_dims, 256)
    wd2, bd2 = dense_init(ks[6], 256, 512)
    wd3, bd3 = dense_init(ks[7], 512, 1024)
    wd4, bd4 = dense_init(ks[8], 1024, IMG)

    def pad_to(a, rows, cols):
        return jnp.pad(a, ((0, rows - a.shape[0]), (0, cols - a.shape[1])))

    params = {
        "we1": pad_to(we1, IMG_PAD, 1024), "be1": be1,           # zero rows 784:896
        "we2": we2, "be2": be2,
        "we3": we3, "be3": be3,
        "wmu": pad_to(wmu, 256, LAT_PAD), "bmu": pad_to(bmu, 1, LAT_PAD),
        "wsg": pad_to(wsg, 256, LAT_PAD), "bsg": pad_to(bsg, 1, LAT_PAD),
        "wd1": pad_to(wd1, LAT_PAD, 256), "bd1": bd1,            # zero rows L:128
        "wd2": wd2, "bd2": bd2,
        "wd3": wd3, "bd3": bd3,
        "wd4": pad_to(wd4, 1024, IMG_PAD),                       # zero cols 784:896
        "bd4": pad_to(bd4, 1, IMG_PAD),
    }
    for k in list(params):
        if k.startswith("w"):
            params[k] = params[k].astype(jnp.bfloat16)
    return params


def _resident_spec(shape):
    """Constant-index (weight-resident) spec; single-buffered when supported."""
    try:
        return pl.BlockSpec(shape, lambda i: (0, 0), pipeline_mode=pl.Buffered(1))
    except TypeError:
        return pl.BlockSpec(shape, lambda i: (0, 0))


def _choose_tiling(B):
    """Pick (TM, Bp) = batch tile / padded batch."""
    Bp = _round_up(max(B, 16), 16)    # bf16 (16,128) sublane packing
    if Bp <= 256:
        return Bp, Bp                 # small / latency-bound: single grid step
    # Large batch: minimize padding over tile candidates (prefer bigger tile).
    best_tm, best_bp = None, None
    for tm in (512, 256, 128):
        bp = _round_up(B, tm)
        if best_bp is None or bp < best_bp:
            best_tm, best_bp = tm, bp
    TM, Bp = best_tm, best_bp
    # v7x has 2 TensorCores: keep the parallel grid axis >= 2 steps at scale.
    if Bp // TM == 1:
        TM //= 2                      # 512->256 or 256->128, still 128-aligned
    return TM, Bp


@jax.jit
def vae_forward(x_nchw, noise, params):
    """x_nchw: (B, 1, 28, 28) float32; noise: (B, LATENT_DIMS) float32."""
    B = x_nchw.shape[0]
    x_flat = x_nchw.reshape(B, IMG)

    TM, Bp = _choose_tiling(B)
    grid = (Bp // TM,)

    # Zero-pad batch + lane dims; cast the matmul input to bf16.
    x_pad = jnp.pad(x_flat.astype(jnp.bfloat16),
                    ((0, Bp - B), (0, IMG_PAD - IMG)))
    noise_pad = jnp.pad(noise.astype(jnp.float32),
                        ((0, Bp - B), (0, LAT_PAD - LATENT_DIMS)))

    ordered = [
        params["we1"], params["be1"], params["we2"], params["be2"],
        params["we3"], params["be3"],
        params["wmu"], params["bmu"], params["wsg"], params["bsg"],
        params["wd1"], params["bd1"], params["wd2"], params["bd2"],
        params["wd3"], params["bd3"], params["wd4"], params["bd4"],
    ]

    # Batch-tiled specs for x / noise / out; constant-index, single-buffered
    # specs keep the weights resident in VMEM across all grid steps.
    x_spec = pl.BlockSpec((TM, IMG_PAD), lambda i: (i, 0))
    noise_spec = pl.BlockSpec((TM, LAT_PAD), lambda i: (i, 0))
    param_specs = [_resident_spec(p.shape) for p in ordered]
    out_spec = pl.BlockSpec((TM, IMG_PAD), lambda i: (i, 0))
    # NOTE: output kept fp32 to match the torch module; switch out_shape/dtype
    # to bf16 to halve HBM writeback if downstream tolerance allows.

    # Scheduling hint for XLA around the custom call.
    mm_units = (IMG_PAD * 1024 + 1024 * 512 + 512 * 256 + 2 * 256 * LAT_PAD
                + LAT_PAD * 256 + 256 * 512 + 512 * 1024 + 1024 * IMG_PAD)
    flops = 2 * Bp * mm_units
    transcendentals = Bp * (1024 + 512 + 256 + LAT_PAD + 256 + 512 + 1024 + IMG_PAD)
    bytes_accessed = (
        x_pad.size * 2 + noise_pad.size * 4
        + sum(p.size * p.dtype.itemsize for p in ordered)
        + Bp * IMG_PAD * 4
    )

    out_pad = pl.pallas_call(
        vae_kernel,
        out_shape=jax.ShapeDtypeStruct((Bp, IMG_PAD), jnp.float32),
        grid=grid,
        in_specs=[x_spec, noise_spec] + param_specs,
        out_specs=out_spec,
        compiler_params=pltpu.CompilerParams(
            dimension_semantics=("parallel",),
            vmem_limit_bytes=48 * 1024 * 1024,  # v7x-safe; ample for TM<=512
        ),
        cost_estimate=pl.CostEstimate(
            flops=flops,
            transcendentals=transcendentals,
            bytes_accessed=bytes_accessed,
        ),
    )(x_pad, noise_pad, *ordered)

    # Drop batch / lane padding; Decoder.forward reshapes to (-1, 1, 28, 28).
    return out_pad[:B, :IMG].reshape(B, 1, 28, 28)


if __name__ == "__main__":
    key = jax.random.PRNGKey(0)
    k_params, k_x, k_noise = jax.random.split(key, 3)

    B = 2
    params = init_params(k_params, LATENT_DIMS)
    x = jax.random.uniform(k_x, (B, 1, 28, 28), dtype=jnp.float32)
    # reparameterization noise (stand-in for torch.distributions.Normal(0,1).sample)
    noise = jax.random.normal(k_noise, (B, LATENT_DIMS), dtype=jnp.float32)

    out = vae_forward(x, noise, params)
    jax.block_until_ready(out)

    assert out.shape == (B, 1, 28, 28), out.shape
    assert out.dtype == jnp.float32
    assert bool(jnp.all(jnp.isfinite(out)))
    assert bool(jnp.all((out >= 0.0) & (out <= 1.0)))   # sigmoid range
    print("KERNEL_OK")
</pallas_src>

<mosaic_0001>
module attributes {stable_mosaic.version = 11 : i64} {
  func.func @vae_kernel(%arg0: i32, %arg1: memref<16x896xbf16, #tpu.memory_space<vmem>>, %arg2: memref<16x128xf32, #tpu.memory_space<vmem>>, %arg3: memref<896x1024xbf16, #tpu.memory_space<vmem>>, %arg4: memref<1x1024xf32, #tpu.memory_space<vmem>>, %arg5: memref<1024x512xbf16, #tpu.memory_space<vmem>>, %arg6: memref<1x512xf32, #tpu.memory_space<vmem>>, %arg7: memref<512x256xbf16, #tpu.memory_space<vmem>>, %arg8: memref<1x256xf32, #tpu.memory_space<vmem>>, %arg9: memref<256x128xbf16, #tpu.memory_space<vmem>>, %arg10: memref<1x128xf32, #tpu.memory_space<vmem>>, %arg11: memref<256x128xbf16, #tpu.memory_space<vmem>>, %arg12: memref<1x128xf32, #tpu.memory_space<vmem>>, %arg13: memref<128x256xbf16, #tpu.memory_space<vmem>>, %arg14: memref<1x256xf32, #tpu.memory_space<vmem>>, %arg15: memref<256x512xbf16, #tpu.memory_space<vmem>>, %arg16: memref<1x512xf32, #tpu.memory_space<vmem>>, %arg17: memref<512x1024xbf16, #tpu.memory_space<vmem>>, %arg18: memref<1x1024xf32, #tpu.memory_space<vmem>>, %arg19: memref<1024x896xbf16, #tpu.memory_space<vmem>>, %arg20: memref<1x896xf32, #tpu.memory_space<vmem>>, %arg21: memref<16x896xf32, #tpu.memory_space<vmem>>) attributes {dimension_semantics = [#tpu.dimension_semantics<parallel>], iteration_bounds = array<i64: 1>, scalar_prefetch = 0 : i64, scratch_operands = 0 : i64, tpu.core_type = #tpu.core_type<tc>, window_params = [{transform_indices = @transform_0, window_bounds = array<i64: 16, 896>}, {transform_indices = @transform_1, window_bounds = array<i64: 16, 128>}, {pipeline_mode = #tpu.pipeline_mode<synchronous>, transform_indices = @transform_2, window_bounds = array<i64: 896, 1024>}, {pipeline_mode = #tpu.pipeline_mode<synchronous>, transform_indices = @transform_3, window_bounds = array<i64: 1, 1024>}, {pipeline_mode = #tpu.pipeline_mode<synchronous>, transform_indices = @transform_4, window_bounds = array<i64: 1024, 512>}, {pipeline_mode = #tpu.pipeline_mode<synchronous>, transform_indices = @transform_5, window_bounds = array<i64: 1, 512>}, {pipeline_mode = #tpu.pipeline_mode<synchronous>, transform_indices = @transform_6, window_bounds = array<i64: 512, 256>}, {pipeline_mode = #tpu.pipeline_mode<synchronous>, transform_indices = @transform_7, window_bounds = array<i64: 1, 256>}, {pipeline_mode = #tpu.pipeline_mode<synchronous>, transform_indices = @transform_8, window_bounds = array<i64: 256, 128>}, {pipeline_mode = #tpu.pipeline_mode<synchronous>, transform_indices = @transform_9, window_bounds = array<i64: 1, 128>}, {pipeline_mode = #tpu.pipeline_mode<synchronous>, transform_indices = @transform_10, window_bounds = array<i64: 256, 128>}, {pipeline_mode = #tpu.pipeline_mode<synchronous>, transform_indices = @transform_11, window_bounds = array<i64: 1, 128>}, {pipeline_mode = #tpu.pipeline_mode<synchronous>, transform_indices = @transform_12, window_bounds = array<i64: 128, 256>}, {pipeline_mode = #tpu.pipeline_mode<synchronous>, transform_indices = @transform_13, window_bounds = array<i64: 1, 256>}, {pipeline_mode = #tpu.pipeline_mode<synchronous>, transform_indices = @transform_14, window_bounds = array<i64: 256, 512>}, {pipeline_mode = #tpu.pipeline_mode<synchronous>, transform_indices = @transform_15, window_bounds = array<i64: 1, 512>}, {pipeline_mode = #tpu.pipeline_mode<synchronous>, transform_indices = @transform_16, window_bounds = array<i64: 512, 1024>}, {pipeline_mode = #tpu.pipeline_mode<synchronous>, transform_indices = @transform_17, window_bounds = array<i64: 1, 1024>}, {pipeline_mode = #tpu.pipeline_mode<synchronous>, transform_indices = @transform_18, window_bounds = array<i64: 1024, 896>}, {pipeline_mode = #tpu.pipeline_mode<synchronous>, transform_indices = @transform_19, window_bounds = array<i64: 1, 896>}, {transform_indices = @transform_20, window_bounds = array<i64: 16, 896>}]} {
    %c0 = arith.constant 0 : index
    %c0_0 = arith.constant 0 : index
    %0 = vector.load %arg1[%c0, %c0_0] : memref<16x896xbf16, #tpu.memory_space<vmem>>, vector<16x896xbf16>
    %c0_1 = arith.constant 0 : index
    %c0_2 = arith.constant 0 : index
    %1 = vector.load %arg3[%c0_1, %c0_2] : memref<896x1024xbf16, #tpu.memory_space<vmem>>, vector<896x1024xbf16>
    %cst = arith.constant dense<0.000000e+00> : vector<16x1024xf32>
    %2 = tpu.matmul %0, %1, %cst {dimension_numbers = #tpu.dot_dimension_numbers<[1], [0], [0], [1], [0, 0, 1, 1], [], []>} : vector<16x896xbf16>, vector<896x1024xbf16>, vector<16x1024xf32> -> vector<16x1024xf32>
    %c0_3 = arith.constant 0 : index
    %c0_4 = arith.constant 0 : index
    %3 = vector.load %arg4[%c0_3, %c0_4] : memref<1x1024xf32, #tpu.memory_space<vmem>>, vector<1x1024xf32>
    %4 = vector.broadcast %3 : vector<1x1024xf32> to vector<16x1024xf32>
    %5 = arith.addf %2, %4 : vector<16x1024xf32>
    %cst_5 = arith.constant 5.000000e-01 : f32
    %6 = vector.broadcast %cst_5 : f32 to vector<16x1024xf32>
    %7 = arith.mulf %6, %5 : vector<16x1024xf32>
    %cst_6 = arith.constant 0.707106769 : f32
    %8 = vector.broadcast %cst_6 : f32 to vector<16x1024xf32>
    %9 = arith.mulf %5, %8 : vector<16x1024xf32>
    %10 = math.erf %9 : vector<16x1024xf32>
    %cst_7 = arith.constant 1.000000e+00 : f32
    %11 = vector.broadcast %cst_7 : f32 to vector<16x1024xf32>
    %12 = arith.addf %11, %10 : vector<16x1024xf32>
    %13 = arith.mulf %7, %12 : vector<16x1024xf32>
    %14 = arith.truncf %13 : vector<16x1024xf32> to vector<16x1024xbf16>
    %c0_8 = arith.constant 0 : index
    %c0_9 = arith.constant 0 : index
    %15 = vector.load %arg5[%c0_8, %c0_9] : memref<1024x512xbf16, #tpu.memory_space<vmem>>, vector<1024x512xbf16>
    %cst_10 = arith.constant dense<0.000000e+00> : vector<16x512xf32>
    %16 = tpu.matmul %14, %15, %cst_10 {dimension_numbers = #tpu.dot_dimension_numbers<[1], [0], [0], [1], [0, 0, 1, 1], [], []>} : vector<16x1024xbf16>, vector<1024x512xbf16>, vector<16x512xf32> -> vector<16x512xf32>
    %c0_11 = arith.constant 0 : index
    %c0_12 = arith.constant 0 : index
    %17 = vector.load %arg6[%c0_11, %c0_12] : memref<1x512xf32, #tpu.memory_space<vmem>>, vector<1x512xf32>
    %18 = vector.broadcast %17 : vector<1x512xf32> to vector<16x512xf32>
    %19 = arith.addf %16, %18 : vector<16x512xf32>
    %cst_13 = arith.constant 5.000000e-01 : f32
    %20 = vector.broadcast %cst_13 : f32 to vector<16x512xf32>
    %21 = arith.mulf %20, %19 : vector<16x512xf32>
    %cst_14 = arith.constant 0.707106769 : f32
    %22 = vector.broadcast %cst_14 : f32 to vector<16x512xf32>
    %23 = arith.mulf %19, %22 : vector<16x512xf32>
    %24 = math.erf %23 : vector<16x512xf32>
    %cst_15 = arith.constant 1.000000e+00 : f32
    %25 = vector.broadcast %cst_15 : f32 to vector<16x512xf32>
    %26 = arith.addf %25, %24 : vector<16x512xf32>
    %27 = arith.mulf %21, %26 : vector<16x512xf32>
    %28 = arith.truncf %27 : vector<16x512xf32> to vector<16x512xbf16>
    %c0_16 = arith.constant 0 : index
    %c0_17 = arith.constant 0 : index
    %29 = vector.load %arg7[%c0_16, %c0_17] : memref<512x256xbf16, #tpu.memory_space<vmem>>, vector<512x256xbf16>
    %cst_18 = arith.constant dense<0.000000e+00> : vector<16x256xf32>
    %30 = tpu.matmul %28, %29, %cst_18 {dimension_numbers = #tpu.dot_dimension_numbers<[1], [0], [0], [1], [0, 0, 1, 1], [], []>} : vector<16x512xbf16>, vector<512x256xbf16>, vector<16x256xf32> -> vector<16x256xf32>
    %c0_19 = arith.constant 0 : index
    %c0_20 = arith.constant 0 : index
    %31 = vector.load %arg8[%c0_19, %c0_20] : memref<1x256xf32, #tpu.memory_space<vmem>>, vector<1x256xf32>
    %32 = vector.broadcast %31 : vector<1x256xf32> to vector<16x256xf32>
    %33 = arith.addf %30, %32 : vector<16x256xf32>
    %cst_21 = arith.constant 5.000000e-01 : f32
    %34 = vector.broadcast %cst_21 : f32 to vector<16x256xf32>
    %35 = arith.mulf %34, %33 : vector<16x256xf32>
    %cst_22 = arith.constant 0.707106769 : f32
    %36 = vector.broadcast %cst_22 : f32 to vector<16x256xf32>
    %37 = arith.mulf %33, %36 : vector<16x256xf32>
    %38 = math.erf %37 : vector<16x256xf32>
    %cst_23 = arith.constant 1.000000e+00 : f32
    %39 = vector.broadcast %cst_23 : f32 to vector<16x256xf32>
    %40 = arith.addf %39, %38 : vector<16x256xf32>
    %41 = arith.mulf %35, %40 : vector<16x256xf32>
    %42 = arith.truncf %41 : vector<16x256xf32> to vector<16x256xbf16>
    %c0_24 = arith.constant 0 : index
    %c0_25 = arith.constant 0 : index
    %43 = vector.load %arg9[%c0_24, %c0_25] : memref<256x128xbf16, #tpu.memory_space<vmem>>, vector<256x128xbf16>
    %cst_26 = arith.constant dense<0.000000e+00> : vector<16x128xf32>
    %44 = tpu.matmul %42, %43, %cst_26 {dimension_numbers = #tpu.dot_dimension_numbers<[1], [0], [0], [1], [0, 0, 1, 1], [], []>} : vector<16x256xbf16>, vector<256x128xbf16>, vector<16x128xf32> -> vector<16x128xf32>
    %c0_27 = arith.constant 0 : index
    %c0_28 = arith.constant 0 : index
    %45 = vector.load %arg10[%c0_27, %c0_28] : memref<1x128xf32, #tpu.memory_space<vmem>>, vector<1x128xf32>
    %46 = vector.broadcast %45 : vector<1x128xf32> to vector<16x128xf32>
    %47 = arith.addf %44, %46 : vector<16x128xf32>
    %c0_29 = arith.constant 0 : index
    %c0_30 = arith.constant 0 : index
    %48 = vector.load %arg11[%c0_29, %c0_30] : memref<256x128xbf16, #tpu.memory_space<vmem>>, vector<256x128xbf16>
    %cst_31 = arith.constant dense<0.000000e+00> : vector<16x128xf32>
    %49 = tpu.matmul %42, %48, %cst_31 {dimension_numbers = #tpu.dot_dimension_numbers<[1], [0], [0], [1], [0, 0, 1, 1], [], []>} : vector<16x256xbf16>, vector<256x128xbf16>, vector<16x128xf32> -> vector<16x128xf32>
    %c0_32 = arith.constant 0 : index
    %c0_33 = arith.constant 0 : index
    %50 = vector.load %arg12[%c0_32, %c0_33] : memref<1x128xf32, #tpu.memory_space<vmem>>, vector<1x128xf32>
    %51 = vector.broadcast %50 : vector<1x128xf32> to vector<16x128xf32>
    %52 = arith.addf %49, %51 : vector<16x128xf32>
    %53 = math.exp %52 : vector<16x128xf32>
    %c0_34 = arith.constant 0 : index
    %c0_35 = arith.constant 0 : index
    %54 = vector.load %arg2[%c0_34, %c0_35] : memref<16x128xf32, #tpu.memory_space<vmem>>, vector<16x128xf32>
    %55 = arith.mulf %53, %54 : vector<16x128xf32>
    %56 = arith.addf %47, %55 : vector<16x128xf32>
    %57 = arith.truncf %56 : vector<16x128xf32> to vector<16x128xbf16>
    %c0_36 = arith.constant 0 : index
    %c0_37 = arith.constant 0 : index
    %58 = vector.load %arg13[%c0_36, %c0_37] : memref<128x256xbf16, #tpu.memory_space<vmem>>, vector<128x256xbf16>
    %cst_38 = arith.constant dense<0.000000e+00> : vector<16x256xf32>
    %59 = tpu.matmul %57, %58, %cst_38 {dimension_numbers = #tpu.dot_dimension_numbers<[1], [0], [0], [1], [0, 0, 1, 1], [], []>} : vector<16x128xbf16>, vector<128x256xbf16>, vector<16x256xf32> -> vector<16x256xf32>
    %c0_39 = arith.constant 0 : index
    %c0_40 = arith.constant 0 : index
    %60 = vector.load %arg14[%c0_39, %c0_40] : memref<1x256xf32, #tpu.memory_space<vmem>>, vector<1x256xf32>
    %61 = vector.broadcast %60 : vector<1x256xf32> to vector<16x256xf32>
    %62 = arith.addf %59, %61 : vector<16x256xf32>
    %cst_41 = arith.constant 5.000000e-01 : f32
    %63 = vector.broadcast %cst_41 : f32 to vector<16x256xf32>
    %64 = arith.mulf %63, %62 : vector<16x256xf32>
    %cst_42 = arith.constant 0.707106769 : f32
    %65 = vector.broadcast %cst_42 : f32 to vector<16x256xf32>
    %66 = arith.mulf %62, %65 : vector<16x256xf32>
    %67 = math.erf %66 : vector<16x256xf32>
    %cst_43 = arith.constant 1.000000e+00 : f32
    %68 = vector.broadcast %cst_43 : f32 to vector<16x256xf32>
    %69 = arith.addf %68, %67 : vector<16x256xf32>
    %70 = arith.mulf %64, %69 : vector<16x256xf32>
    %71 = arith.truncf %70 : vector<16x256xf32> to vector<16x256xbf16>
    %c0_44 = arith.constant 0 : index
    %c0_45 = arith.constant 0 : index
    %72 = vector.load %arg15[%c0_44, %c0_45] : memref<256x512xbf16, #tpu.memory_space<vmem>>, vector<256x512xbf16>
    %cst_46 = arith.constant dense<0.000000e+00> : vector<16x512xf32>
    %73 = tpu.matmul %71, %72, %cst_46 {dimension_numbers = #tpu.dot_dimension_numbers<[1], [0], [0], [1], [0, 0, 1, 1], [], []>} : vector<16x256xbf16>, vector<256x512xbf16>, vector<16x512xf32> -> vector<16x512xf32>
    %c0_47 = arith.constant 0 : index
    %c0_48 = arith.constant 0 : index
    %74 = vector.load %arg16[%c0_47, %c0_48] : memref<1x512xf32, #tpu.memory_space<vmem>>, vector<1x512xf32>
    %75 = vector.broadcast %74 : vector<1x512xf32> to vector<16x512xf32>
    %76 = arith.addf %73, %75 : vector<16x512xf32>
    %cst_49 = arith.constant 5.000000e-01 : f32
    %77 = vector.broadcast %cst_49 : f32 to vector<16x512xf32>
    %78 = arith.mulf %77, %76 : vector<16x512xf32>
    %cst_50 = arith.constant 0.707106769 : f32
    %79 = vector.broadcast %cst_50 : f32 to vector<16x512xf32>
    %80 = arith.mulf %76, %79 : vector<16x512xf32>
    %81 = math.erf %80 : vector<16x512xf32>
    %cst_51 = arith.constant 1.000000e+00 : f32
    %82 = vector.broadcast %cst_51 : f32 to vector<16x512xf32>
    %83 = arith.addf %82, %81 : vector<16x512xf32>
    %84 = arith.mulf %78, %83 : vector<16x512xf32>
    %85 = arith.truncf %84 : vector<16x512xf32> to vector<16x512xbf16>
    %c0_52 = arith.constant 0 : index
    %c0_53 = arith.constant 0 : index
    %86 = vector.load %arg17[%c0_52, %c0_53] : memref<512x1024xbf16, #tpu.memory_space<vmem>>, vector<512x1024xbf16>
    %cst_54 = arith.constant dense<0.000000e+00> : vector<16x1024xf32>
    %87 = tpu.matmul %85, %86, %cst_54 {dimension_numbers = #tpu.dot_dimension_numbers<[1], [0], [0], [1], [0, 0, 1, 1], [], []>} : vector<16x512xbf16>, vector<512x1024xbf16>, vector<16x1024xf32> -> vector<16x1024xf32>
    %c0_55 = arith.constant 0 : index
    %c0_56 = arith.constant 0 : index
    %88 = vector.load %arg18[%c0_55, %c0_56] : memref<1x1024xf32, #tpu.memory_space<vmem>>, vector<1x1024xf32>
    %89 = vector.broadcast %88 : vector<1x1024xf32> to vector<16x1024xf32>
    %90 = arith.addf %87, %89 : vector<16x1024xf32>
    %cst_57 = arith.constant 5.000000e-01 : f32
    %91 = vector.broadcast %cst_57 : f32 to vector<16x1024xf32>
    %92 = arith.mulf %91, %90 : vector<16x1024xf32>
    %cst_58 = arith.constant 0.707106769 : f32
    %93 = vector.broadcast %cst_58 : f32 to vector<16x1024xf32>
    %94 = arith.mulf %90, %93 : vector<16x1024xf32>
    %95 = math.erf %94 : vector<16x1024xf32>
    %cst_59 = arith.constant 1.000000e+00 : f32
    %96 = vector.broadcast %cst_59 : f32 to vector<16x1024xf32>
    %97 = arith.addf %96, %95 : vector<16x1024xf32>
    %98 = arith.mulf %92, %97 : vector<16x1024xf32>
    %99 = arith.truncf %98 : vector<16x1024xf32> to vector<16x1024xbf16>
    %c0_60 = arith.constant 0 : index
    %c0_61 = arith.constant 0 : index
    %100 = vector.load %arg19[%c0_60, %c0_61] : memref<1024x896xbf16, #tpu.memory_space<vmem>>, vector<1024x896xbf16>
    %cst_62 = arith.constant dense<0.000000e+00> : vector<16x896xf32>
    %101 = tpu.matmul %99, %100, %cst_62 {dimension_numbers = #tpu.dot_dimension_numbers<[1], [0], [0], [1], [0, 0, 1, 1], [], []>} : vector<16x1024xbf16>, vector<1024x896xbf16>, vector<16x896xf32> -> vector<16x896xf32>
    %c0_63 = arith.constant 0 : index
    %c0_64 = arith.constant 0 : index
    %102 = vector.load %arg20[%c0_63, %c0_64] : memref<1x896xf32, #tpu.memory_space<vmem>>, vector<1x896xf32>
    %103 = vector.broadcast %102 : vector<1x896xf32> to vector<16x896xf32>
    %104 = arith.addf %101, %103 : vector<16x896xf32>
    %cst_65 = arith.constant 0.000000e+00 : f32
    %105 = vector.broadcast %cst_65 : f32 to vector<16x896xf32>
    %106 = arith.subf %105, %104 : vector<16x896xf32>
    %107 = math.exp %106 : vector<16x896xf32>
    %cst_66 = arith.constant 1.000000e+00 : f32
    %108 = vector.broadcast %cst_66 : f32 to vector<16x896xf32>
    %109 = arith.addf %108, %107 : vector<16x896xf32>
    %cst_67 = arith.constant 1.000000e+00 : f32
    %110 = vector.broadcast %cst_67 : f32 to vector<16x896xf32>
    %111 = arith.divf %110, %109 : vector<16x896xf32>
    %c0_68 = arith.constant 0 : index
    %c0_69 = arith.constant 0 : index
    %112 = vector.load %arg21[%c0_68, %c0_69] : memref<16x896xf32, #tpu.memory_space<vmem>>, vector<16x896xf32>
    tpu.vector_store %arg21[%c0_68, %c0_69], %111 {strides = array<i32>} : memref<16x896xf32, #tpu.memory_space<vmem>>, vector<16x896xf32>,
    return
  }
  func.func @transform_0(%arg0: i32) -> (i32, i32) {
    %c0_i32 = arith.constant 0 : i32
    %c0_i32_0 = arith.constant 0 : i32
    return %arg0, %c0_i32 : i32, i32
  }
  func.func @transform_1(%arg0: i32) -> (i32, i32) {
    %c0_i32 = arith.constant 0 : i32
    %c0_i32_0 = arith.constant 0 : i32
    return %arg0, %c0_i32 : i32, i32
  }
  func.func @transform_2(%arg0: i32) -> (i32, i32) {
    %c0_i32 = arith.constant 0 : i32
    %c0_i32_0 = arith.constant 0 : i32
    %c0_i32_1 = arith.constant 0 : i32
    return %c0_i32, %c0_i32_0 : i32, i32
  }
  func.func @transform_3(%arg0: i32) -> (i32, i32) {
    %c0_i32 = arith.constant 0 : i32
    %c0_i32_0 = arith.constant 0 : i32
    %c0_i32_1 = arith.constant 0 : i32
    return %c0_i32, %c0_i32_0 : i32, i32
  }
  func.func @transform_4(%arg0: i32) -> (i32, i32) {
    %c0_i32 = arith.constant 0 : i32
    %c0_i32_0 = arith.constant 0 : i32
    %c0_i32_1 = arith.constant 0 : i32
    return %c0_i32, %c0_i32_0 : i32, i32
  }
  func.func @transform_5(%arg0: i32) -> (i32, i32) {
    %c0_i32 = arith.constant 0 : i32
    %c0_i32_0 = arith.constant 0 : i32
    %c0_i32_1 = arith.constant 0 : i32
    return %c0_i32, %c0_i32_0 : i32, i32
  }
  func.func @transform_6(%arg0: i32) -> (i32, i32) {
    %c0_i32 = arith.constant 0 : i32
    %c0_i32_0 = arith.constant 0 : i32
    %c0_i32_1 = arith.constant 0 : i32
    return %c0_i32, %c0_i32_0 : i32, i32
  }
  func.func @transform_7(%arg0: i32) -> (i32, i32) {
    %c0_i32 = arith.constant 0 : i32
    %c0_i32_0 = arith.constant 0 : i32
    %c0_i32_1 = arith.constant 0 : i32
    return %c0_i32, %c0_i32_0 : i32, i32
  }
  func.func @transform_8(%arg0: i32) -> (i32, i32) {
    %c0_i32 = arith.constant 0 : i32
    %c0_i32_0 = arith.constant 0 : i32
    %c0_i32_1 = arith.constant 0 : i32
    return %c0_i32, %c0_i32_0 : i32, i32
  }
  func.func @transform_9(%arg0: i32) -> (i32, i32) {
    %c0_i32 = arith.constant 0 : i32
    %c0_i32_0 = arith.constant 0 : i32
    %c0_i32_1 = arith.constant 0 : i32
    return %c0_i32, %c0_i32_0 : i32, i32
  }
  func.func @transform_10(%arg0: i32) -> (i32, i32) {
    %c0_i32 = arith.constant 0 : i32
    %c0_i32_0 = arith.constant 0 : i32
    %c0_i32_1 = arith.constant 0 : i32
    return %c0_i32, %c0_i32_0 : i32, i32
  }
  func.func @transform_11(%arg0: i32) -> (i32, i32) {
    %c0_i32 = arith.constant 0 : i32
    %c0_i32_0 = arith.constant 0 : i32
    %c0_i32_1 = arith.constant 0 : i32
    return %c0_i32, %c0_i32_0 : i32, i32
  }
  func.func @transform_12(%arg0: i32) -> (i32, i32) {
    %c0_i32 = arith.constant 0 : i32
    %c0_i32_0 = arith.constant 0 : i32
    %c0_i32_1 = arith.constant 0 : i32
    return %c0_i32, %c0_i32_0 : i32, i32
  }
  func.func @transform_13(%arg0: i32) -> (i32, i32) {
    %c0_i32 = arith.constant 0 : i32
    %c0_i32_0 = arith.constant 0 : i32
    %c0_i32_1 = arith.constant 0 : i32
    return %c0_i32, %c0_i32_0 : i32, i32
  }
  func.func @transform_14(%arg0: i32) -> (i32, i32) {
    %c0_i32 = arith.constant 0 : i32
    %c0_i32_0 = arith.constant 0 : i32
    %c0_i32_1 = arith.constant 0 : i32
    return %c0_i32, %c0_i32_0 : i32, i32
  }
  func.func @transform_15(%arg0: i32) -> (i32, i32) {
    %c0_i32 = arith.constant 0 : i32
    %c0_i32_0 = arith.constant 0 : i32
    %c0_i32_1 = arith.constant 0 : i32
    return %c0_i32, %c0_i32_0 : i32, i32
  }
  func.func @transform_16(%arg0: i32) -> (i32, i32) {
    %c0_i32 = arith.constant 0 : i32
    %c0_i32_0 = arith.constant 0 : i32
    %c0_i32_1 = arith.constant 0 : i32
    return %c0_i32, %c0_i32_0 : i32, i32
  }
  func.func @transform_17(%arg0: i32) -> (i32, i32) {
    %c0_i32 = arith.constant 0 : i32
    %c0_i32_0 = arith.constant 0 : i32
    %c0_i32_1 = arith.constant 0 : i32
    return %c0_i32, %c0_i32_0 : i32, i32
  }
  func.func @transform_18(%arg0: i32) -> (i32, i32) {
    %c0_i32 = arith.constant 0 : i32
    %c0_i32_0 = arith.constant 0 : i32
    %c0_i32_1 = arith.constant 0 : i32
    return %c0_i32, %c0_i32_0 : i32, i32
  }
  func.func @transform_19(%arg0: i32) -> (i32, i32) {
    %c0_i32 = arith.constant 0 : i32
    %c0_i32_0 = arith.constant 0 : i32
    %c0_i32_1 = arith.constant 0 : i32
    return %c0_i32, %c0_i32_0 : i32, i32
  }
  func.func @transform_20(%arg0: i32) -> (i32, i32) {
    %c0_i32 = arith.constant 0 : i32
    %c0_i32_0 = arith.constant 0 : i32
    return %arg0, %c0_i32 : i32, i32
  }
}

</mosaic_0001>

<llo_original>
// kernel: vae_forward.1
$region0: #{vae_forward.1}
  #allocation0 [shape = 'u32[]', space=smem, size = 0x4, offset = 0x4, fixed_abs, tag = 'smem constant byte address 0x4 - core index']
  #allocation1 [shape = 'u32[144,128]{1,0:T(1,128)}', space=vmem, size = 0x12000, scoped, tag = 'internal scratch']
  %s0 = inlined_call_operand.vmem [shape: bf16[16,896], index: 0, kind: input, shape index: {}]
  %s1 = inlined_call_operand.vmem [shape: f32[16,128], index: 1, kind: input, shape index: {}]
  %s2 = inlined_call_operand.hbm [shape: bf16[896,1024], index: 2, kind: input, shape index: {}]
  %s3 = inlined_call_operand.hbm [shape: f32[1,1024], index: 3, kind: input, shape index: {}]
  %s4 = inlined_call_operand.hbm [shape: bf16[1024,512], index: 4, kind: input, shape index: {}]
  %s5 = inlined_call_operand.hbm [shape: f32[1,512], index: 5, kind: input, shape index: {}]
  %s6 = inlined_call_operand.hbm [shape: bf16[512,256], index: 6, kind: input, shape index: {}]
  %s7 = inlined_call_operand.hbm [shape: f32[1,256], index: 7, kind: input, shape index: {}]
  %s8 = inlined_call_operand.hbm [shape: bf16[256,128], index: 8, kind: input, shape index: {}]
  %s9 = inlined_call_operand.hbm [shape: f32[1,128], index: 9, kind: input, shape index: {}]
  %s10 = inlined_call_operand.hbm [shape: bf16[256,128], index: 10, kind: input, shape index: {}]
  %s11 = inlined_call_operand.hbm [shape: f32[1,128], index: 11, kind: input, shape index: {}]
  %s12 = inlined_call_operand.hbm [shape: bf16[128,256], index: 12, kind: input, shape index: {}]
  %s13 = inlined_call_operand.hbm [shape: f32[1,256], index: 13, kind: input, shape index: {}]
  %s14 = inlined_call_operand.hbm [shape: bf16[256,512], index: 14, kind: input, shape index: {}]
  %s15 = inlined_call_operand.hbm [shape: f32[1,512], index: 15, kind: input, shape index: {}]
  %s16 = inlined_call_operand.hbm [shape: bf16[512,1024], index: 16, kind: input, shape index: {}]
  %s17 = inlined_call_operand.hbm [shape: f32[1,1024], index: 17, kind: input, shape index: {}]
  %s18 = inlined_call_operand.hbm [shape: bf16[1024,896], index: 18, kind: input, shape index: {}]
  %s19 = inlined_call_operand.hbm [shape: f32[1,896], index: 19, kind: input, shape index: {}]
  %s20 = inlined_call_operand.vmem [shape: f32[16,896], index: 20, kind: output, shape index: {}]
  %s21 = sld [smem:[#allocation0]]
  $region162: #{vae_forward.1} parent=0
    _
  %s23 = ssub.s32 1, %s21
  %s24 = scalar_select 0, %s23, %s21
  $region1: #{vae_forward.1} parent=0
    #allocation2 [shape = 'u8[1835008]{0}', space=vmem, size = 0x1c0000, scoped, tag = 'input window, operand 2, single buffered']
    #allocation3 [shape = 's32[1]{0}', space=sflag, size = 0x4, scoped, tag = 'scoped memory for vae_forward.1']
    #allocation4 [shape = 'u8[4096]{0}', space=vmem, size = 0x1000, scoped, tag = 'input window, operand 3, single buffered']
    #allocation5 [shape = 's32[1]{0}', space=sflag, size = 0x4, scoped, tag = 'scoped memory for vae_forward.1']
    #allocation6 [shape = 'u8[1048576]{0}', space=vmem, size = 0x100000, scoped, tag = 'input window, operand 4, single buffered']
    #allocation7 [shape = 'u8[2048]{0}', space=vmem, size = 0x800, scoped, tag = 'input window, operand 5, single buffered']
    #allocation8 [shape = 's32[1]{0}', space=sflag, size = 0x4, scoped, tag = 'scoped memory for vae_forward.1']
    #allocation9 [shape = 'u8[262144]{0}', space=vmem, size = 0x40000, scoped, tag = 'input window, operand 6, single buffered']
    #allocation10 [shape = 'u8[1024]{0}', space=vmem, size = 0x400, scoped, tag = 'input window, operand 7, single buffered']
    #allocation11 [shape = 's32[1]{0}', space=sflag, size = 0x4, scoped, tag = 'scoped memory for vae_forward.1']
    #allocation12 [shape = 'u8[65536]{0}', space=vmem, size = 0x10000, scoped, tag = 'input window, operand 8, single buffered']
    #allocation13 [shape = 'u8[512]{0}', space=vmem, size = 0x400, scoped, tag = 'input window, operand 9, single buffered']
    #allocation14 [shape = 's32[1]{0}', space=sflag, size = 0x4, scoped, tag = 'scoped memory for vae_forward.1']
    #allocation15 [shape = 'u8[65536]{0}', space=vmem, size = 0x10000, scoped, tag = 'input window, operand 10, single buffered']
    #allocation16 [shape = 'u8[512]{0}', space=vmem, size = 0x400, scoped, tag = 'input window, operand 11, single buffered']
    #allocation17 [shape = 's32[1]{0}', space=sflag, size = 0x4, scoped, tag = 'scoped memory for vae_forward.1']
    #allocation18 [shape = 'u8[65536]{0}', space=vmem, size = 0x10000, scoped, tag = 'input window, operand 12, single buffered']
    #allocation19 [shape = 'u8[1024]{0}', space=vmem, size = 0x400, scoped, tag = 'input window, operand 13, single buffered']
    #allocation20 [shape = 's32[1]{0}', space=sflag, size = 0x4, scoped, tag = 'scoped memory for vae_forward.1']
    #allocation21 [shape = 'u8[262144]{0}', space=vmem, size = 0x40000, scoped, tag = 'input window, operand 14, single buffered']
    #allocation22 [shape = 'u8[2048]{0}', space=vmem, size = 0x800, scoped, tag = 'input window, operand 15, single buffered']
    #allocation23 [shape = 's32[1]{0}', space=sflag, size = 0x4, scoped, tag = 'scoped memory for vae_forward.1']
    #allocation24 [shape = 'u8[1048576]{0}', space=vmem, size = 0x100000, scoped, tag = 'input window, operand 16, single buffered']
    #allocation25 [shape = 'u8[4096]{0}', space=vmem, size = 0x1000, scoped, tag = 'input window, operand 17, single buffered']
    #allocation26 [shape = 's32[1]{0}', space=sflag, size = 0x4, scoped, tag = 'scoped memory for vae_forward.1']
    #allocation27 [shape = 'u8[1835008]{0}', space=vmem, size = 0x1c0000, scoped, tag = 'input window, operand 18, single buffered']
    #allocation28 [shape = 'u8[3584]{0}', space=vmem, size = 0x1000, scoped, tag = 'input window, operand 19, single buffered']
    #allocation29 [shape = 's32[1]{0}', space=sflag, size = 0x4, scoped, tag = 'scoped memory for vae_forward.1']
    %25 = vsyncpa [#allocation3], 0
    %26 = vsyncpa [#allocation5], 0
    %27 = vsyncpa [#allocation8], 0
    %28 = vsyncpa [#allocation11], 0
    %29 = vsyncpa [#allocation14], 0
    %30 = vsyncpa [#allocation17], 0
    %31 = vsyncpa [#allocation20], 0
    %32 = vsyncpa [#allocation23], 0
    %33 = vsyncpa [#allocation26], 0
    %34 = vsyncpa [#allocation29], 0
    // Predicated region
    $region2: #{vae_forward.1} parent=1 // pred_check
      _
    $region3: #{vae_forward.1} parent=1 // pred_check_branch
      %36 = sbr.rel (0) target = $region5
    $region4: #{vae_forward.1} parent=1 // pred_region
      _
    $region5: #{vae_forward.1} parent=1 // pred_fallthru
      _
    // Predicated region
    $region6: #{vae_forward.1} parent=1 // pred_check
      _
    $region7: #{vae_forward.1} parent=1 // pred_check_branch
      %38 = sbr.rel (0) target = $region9
    $region8: #{vae_forward.1} parent=1 // pred_region
      _
    $region9: #{vae_forward.1} parent=1 // pred_fallthru
      _
    // Predicated region
    $region10: #{vae_forward.1} parent=1 // pred_check
      _
    $region11: #{vae_forward.1} parent=1 // pred_check_branch
      %40 = sbr.rel (0) target = $region13
    $region12: #{vae_forward.1} parent=1 // pred_region
      %s42 = ssub.s32 57344, 57344
      %43 = vsyncadd [#allocation3], %s42
      %s44 = sshll.u32 [#allocation2], 4
      %s45 = int_to_ptr.vmem [resolvable:$true] %s44
      %50 = dma.hbm_to_vmem [thread:$0]  %s2, 57344, %s45, [#allocation3], 512, 512, 32
    $region13: #{vae_forward.1} parent=1 // pred_fallthru
      _
    // Predicated region
    $region14: #{vae_forward.1} parent=1 // pred_check
      _
    $region15: #{vae_forward.1} parent=1 // pred_check_branch
      %52 = sbr.rel (0) target = $region17
    $region16: #{vae_forward.1} parent=1 // pred_region
      %s54 = ssub.s32 128, 128
      %55 = vsyncadd [#allocation5], %s54
      %s57 = sshll.u32 [#allocation4], 4
      %s58 = int_to_ptr.vmem [resolvable:$true] %s57
      %60 = dma.hbm_to_vmem [thread:$0]  %s3, 128, %s58, [#allocation5]
    $region17: #{vae_forward.1} parent=1 // pred_fallthru
      _
    // Predicated region
    $region18: #{vae_forward.1} parent=1 // pred_check
      _
    $region19: #{vae_forward.1} parent=1 // pred_check_branch
      %62 = sbr.rel (0) target = $region21
    $region20: #{vae_forward.1} parent=1 // pred_region
      %s64 = ssub.s32 32768, 32768
      %65 = vsyncadd [#allocation5], %s64
      %s66 = sshll.u32 [#allocation6], 4
      %s67 = int_to_ptr.vmem [resolvable:$true] %s66
      %72 = dma.hbm_to_vmem [thread:$0]  %s4, 32768, %s67, [#allocation5], 256, 256, 16
    $region21: #{vae_forward.1} parent=1 // pred_fallthru
      _
    // Predicated region
    $region22: #{vae_forward.1} parent=1 // pred_check
      _
    $region23: #{vae_forward.1} parent=1 // pred_check_branch
      %74 = sbr.rel (0) target = $region25
    $region24: #{vae_forward.1} parent=1 // pred_region
      %s76 = ssub.s32 64, 64
      %77 = vsyncadd [#allocation8], %s76
      %s79 = sshll.u32 [#allocation7], 4
      %s80 = int_to_ptr.vmem [resolvable:$true] %s79
      %82 = dma.hbm_to_vmem [thread:$0]  %s5, 64, %s80, [#allocation8]
    $region25: #{vae_forward.1} parent=1 // pred_fallthru
      _
    // Predicated region
    $region26: #{vae_forward.1} parent=1 // pred_check
      _
    $region27: #{vae_forward.1} parent=1 // pred_check_branch
      %84 = sbr.rel (0) target = $region29
    $region28: #{vae_forward.1} parent=1 // pred_region
      %s86 = ssub.s32 8192, 8192
      %87 = vsyncadd [#allocation8], %s86
      %s88 = sshll.u32 [#allocation9], 4
      %s89 = int_to_ptr.vmem [resolvable:$true] %s88
      %94 = dma.hbm_to_vmem [thread:$0]  %s6, 8192, %s89, [#allocation8], 128, 128, 8
    $region29: #{vae_forward.1} parent=1 // pred_fallthru
      _
    // Predicated region
    $region30: #{vae_forward.1} parent=1 // pred_check
      _
    $region31: #{vae_forward.1} parent=1 // pred_check_branch
      %96 = sbr.rel (0) target = $region33
    $region32: #{vae_forward.1} parent=1 // pred_region
      %s98 = ssub.s32 32, 32
      %99 = vsyncadd [#allocation11], %s98
      %s101 = sshll.u32 [#allocation10], 4
      %s102 = int_to_ptr.vmem [resolvable:$true] %s101
      %104 = dma.hbm_to_vmem [thread:$0]  %s7, 32, %s102, [#allocation11]
    $region33: #{vae_forward.1} parent=1 // pred_fallthru
      _
    // Predicated region
    $region34: #{vae_forward.1} parent=1 // pred_check
      _
    $region35: #{vae_forward.1} parent=1 // pred_check_branch
      %106 = sbr.rel (0) target = $region37
    $region36: #{vae_forward.1} parent=1 // pred_region
      %s108 = ssub.s32 2048, 2048
      %109 = vsyncadd [#allocation11], %s108
      %s110 = sshll.u32 [#allocation12], 4
      %s111 = int_to_ptr.vmem [resolvable:$true] %s110
      %116 = dma.hbm_to_vmem [thread:$0]  %s8, 2048, %s111, [#allocation11], 64, 64, 4
    $region37: #{vae_forward.1} parent=1 // pred_fallthru
      _
    // Predicated region
    $region38: #{vae_forward.1} parent=1 // pred_check
      _
    $region39: #{vae_forward.1} parent=1 // pred_check_branch
      %118 = sbr.rel (0) target = $region41
    $region40: #{vae_forward.1} parent=1 // pred_region
      %s120 = ssub.s32 16, 16
      %121 = vsyncadd [#allocation14], %s120
      %s123 = sshll.u32 [#allocation13], 4
      %s124 = int_to_ptr.vmem [resolvable:$true] %s123
      %126 = dma.hbm_to_vmem [thread:$0]  %s9, 16, %s124, [#allocation14]
    $region41: #{vae_forward.1} parent=1 // pred_fallthru
      _
    // Predicated region
    $region42: #{vae_forward.1} parent=1 // pred_check
      _
    $region43: #{vae_forward.1} parent=1 // pred_check_branch
      %128 = sbr.rel (0) target = $region45
    $region44: #{vae_forward.1} parent=1 // pred_region
      %s130 = ssub.s32 2048, 2048
      %131 = vsyncadd [#allocation14], %s130
      %s132 = sshll.u32 [#allocation15], 4
      %s133 = int_to_ptr.vmem [resolvable:$true] %s132
      %138 = dma.hbm_to_vmem [thread:$0]  %s10, 2048, %s133, [#allocation14], 64, 64, 4
    $region45: #{vae_forward.1} parent=1 // pred_fallthru
      _
    // Predicated region
    $region46: #{vae_forward.1} parent=1 // pred_check
      _
    $region47: #{vae_forward.1} parent=1 // pred_check_branch
      %140 = sbr.rel (0) target = $region49
    $region48: #{vae_forward.1} parent=1 // pred_region
      %s142 = ssub.s32 16, 16
      %143 = vsyncadd [#allocation17], %s142
      %s145 = sshll.u32 [#allocation16], 4
      %s146 = int_to_ptr.vmem [resolvable:$true] %s145
      %148 = dma.hbm_to_vmem [thread:$0]  %s11, 16, %s146, [#allocation17]
    $region49: #{vae_forward.1} parent=1 // pred_fallthru
      _
    // Predicated region
    $region50: #{vae_forward.1} parent=1 // pred_check
      _
    $region51: #{vae_forward.1} parent=1 // pred_check_branch
      %150 = sbr.rel (0) target = $region53
    $region52: #{vae_forward.1} parent=1 // pred_region
      %s152 = ssub.s32 2048, 2048
      %153 = vsyncadd [#allocation17], %s152
      %s154 = sshll.u32 [#allocation18], 4
      %s155 = int_to_ptr.vmem [resolvable:$true] %s154
      %160 = dma.hbm_to_vmem [thread:$0]  %s12, 2048, %s155, [#allocation17], 128, 128, 8
    $region53: #{vae_forward.1} parent=1 // pred_fallthru
      _
    // Predicated region
    $region54: #{vae_forward.1} parent=1 // pred_check
      _
    $region55: #{vae_forward.1} parent=1 // pred_check_branch
      %162 = sbr.rel (0) target = $region57
    $region56: #{vae_forward.1} parent=1 // pred_region
      %s164 = ssub.s32 32, 32
      %165 = vsyncadd [#allocation20], %s164
      %s167 = sshll.u32 [#allocation19], 4
      %s168 = int_to_ptr.vmem [resolvable:$true] %s167
      %170 = dma.hbm_to_vmem [thread:$0]  %s13, 32, %s168, [#allocation20]
    $region57: #{vae_forward.1} parent=1 // pred_fallthru
      _
    // Predicated region
    $region58: #{vae_forward.1} parent=1 // pred_check
      _
    $region59: #{vae_forward.1} parent=1 // pred_check_branch
      %172 = sbr.rel (0) target = $region61
    $region60: #{vae_forward.1} parent=1 // pred_region
      %s174 = ssub.s32 8192, 8192
      %175 = vsyncadd [#allocation20], %s174
      %s176 = sshll.u32 [#allocation21], 4
      %s177 = int_to_ptr.vmem [resolvable:$true] %s176
      %182 = dma.hbm_to_vmem [thread:$0]  %s14, 8192, %s177, [#allocation20], 256, 256, 16
    $region61: #{vae_forward.1} parent=1 // pred_fallthru
      _
    // Predicated region
    $region62: #{vae_forward.1} parent=1 // pred_check
      _
    $region63: #{vae_forward.1} parent=1 // pred_check_branch
      %184 = sbr.rel (0) target = $region65
    $region64: #{vae_forward.1} parent=1 // pred_region
      %s186 = ssub.s32 64, 64
      %187 = vsyncadd [#allocation23], %s186
      %s189 = sshll.u32 [#allocation22], 4
      %s190 = int_to_ptr.vmem [resolvable:$true] %s189
      %192 = dma.hbm_to_vmem [thread:$0]  %s15, 64, %s190, [#allocation23]
    $region65: #{vae_forward.1} parent=1 // pred_fallthru
      _
    // Predicated region
    $region66: #{vae_forward.1} parent=1 // pred_check
      _
    $region67: #{vae_forward.1} parent=1 // pred_check_branch
      %194 = sbr.rel (0) target = $region69
    $region68: #{vae_forward.1} parent=1 // pred_region
      %s196 = ssub.s32 32768, 32768
      %197 = vsyncadd [#allocation23], %s196
      %s198 = sshll.u32 [#allocation24], 4
      %s199 = int_to_ptr.vmem [resolvable:$true] %s198
      %204 = dma.hbm_to_vmem [thread:$0]  %s16, 32768, %s199, [#allocation23], 512, 512, 32
    $region69: #{vae_forward.1} parent=1 // pred_fallthru
      _
    // Predicated region
    $region70: #{vae_forward.1} parent=1 // pred_check
      _
    $region71: #{vae_forward.1} parent=1 // pred_check_branch
      %206 = sbr.rel (0) target = $region73
    $region72: #{vae_forward.1} parent=1 // pred_region
      %s208 = ssub.s32 128, 128
      %209 = vsyncadd [#allocation26], %s208
      %s211 = sshll.u32 [#allocation25], 4
      %s212 = int_to_ptr.vmem [resolvable:$true] %s211
      %214 = dma.hbm_to_vmem [thread:$0]  %s17, 128, %s212, [#allocation26]
    $region73: #{vae_forward.1} parent=1 // pred_fallthru
      _
    // Predicated region
    $region74: #{vae_forward.1} parent=1 // pred_check
      _
    $region75: #{vae_forward.1} parent=1 // pred_check_branch
      %216 = sbr.rel (0) target = $region77
    $region76: #{vae_forward.1} parent=1 // pred_region
      %s218 = ssub.s32 57344, 57344
      %219 = vsyncadd [#allocation26], %s218
      %s220 = sshll.u32 [#allocation27], 4
      %s221 = int_to_ptr.vmem [resolvable:$true] %s220
      %226 = dma.hbm_to_vmem [thread:$0]  %s18, 57344, %s221, [#allocation26], 448, 448, 28
    $region77: #{vae_forward.1} parent=1 // pred_fallthru
      _
    // Predicated region
    $region78: #{vae_forward.1} parent=1 // pred_check
      _
    $region79: #{vae_forward.1} parent=1 // pred_check_branch
      %228 = sbr.rel (0) target = $region81
    $region80: #{vae_forward.1} parent=1 // pred_region
      %s230 = ssub.s32 112, 112
      %231 = vsyncadd [#allocation29], %s230
      %s233 = sshll.u32 [#allocation28], 4
      %s234 = int_to_ptr.vmem [resolvable:$true] %s233
      %236 = dma.hbm_to_vmem [thread:$0]  %s19, 112, %s234, [#allocation29]
    $region81: #{vae_forward.1} parent=1 // pred_fallthru
      _
    // Predicated region
    $region82: #{vae_forward.1} parent=1 // pred_check
      _
    $region83: #{vae_forward.1} parent=1 // pred_check_branch
      %238 = sbr.rel (0) target = $region85
    $region84: #{vae_forward.1} parent=1 // pred_region
      %239 = dma.done [#allocation3], 57344
    $region85: #{vae_forward.1} parent=1 // pred_fallthru
      _
    // Predicated region
    $region86: #{vae_forward.1} parent=1 // pred_check
      _
    $region87: #{vae_forward.1} parent=1 // pred_check_branch
      %241 = sbr.rel (0) target = $region89
    $region88: #{vae_forward.1} parent=1 // pred_region
      %242 = dma.done [#allocation5], 128
    $region89: #{vae_forward.1} parent=1 // pred_fallthru
      _
    // Predicated region
    $region90: #{vae_forward.1} parent=1 // pred_check
      _
    $region91: #{vae_forward.1} parent=1 // pred_check_branch
      %244 = sbr.rel (0) target = $region93
    $region92: #{vae_forward.1} parent=1 // pred_region
      %245 = dma.done [#allocation5], 32768
    $region93: #{vae_forward.1} parent=1 // pred_fallthru
      _
    // Predicated region
    $region94: #{vae_forward.1} parent=1 // pred_check
      _
    $region95: #{vae_forward.1} parent=1 // pred_check_branch
      %247 = sbr.rel (0) target = $region97
    $region96: #{vae_forward.1} parent=1 // pred_region
      %248 = dma.done [#allocation8], 64
    $region97: #{vae_forward.1} parent=1 // pred_fallthru
      _
    // Predicated region
    $region98: #{vae_forward.1} parent=1 // pred_check
      _
    $region99: #{vae_forward.1} parent=1 // pred_check_branch
      %250 = sbr.rel (0) target = $region101
    $region100: #{vae_forward.1} parent=1 // pred_region
      %251 = dma.done [#allocation8], 8192
    $region101: #{vae_forward.1} parent=1 // pred_fallthru
      _
    // Predicated region
    $region102: #{vae_forward.1} parent=1 // pred_check
      _
    $region103: #{vae_forward.1} parent=1 // pred_check_branch
      %253 = sbr.rel (0) target = $region105
    $region104: #{vae_forward.1} parent=1 // pred_region
      %254 = dma.done [#allocation11], 32
    $region105: #{vae_forward.1} parent=1 // pred_fallthru
      _
    // Predicated region
    $region106: #{vae_forward.1} parent=1 // pred_check
      _
    $region107: #{vae_forward.1} parent=1 // pred_check_branch
      %256 = sbr.rel (0) target = $region109
    $region108: #{vae_forward.1} parent=1 // pred_region
      %257 = dma.done [#allocation11], 2048
    $region109: #{vae_forward.1} parent=1 // pred_fallthru
      _
    // Predicated region
    $region110: #{vae_forward.1} parent=1 // pred_check
      _
    $region111: #{vae_forward.1} parent=1 // pred_check_branch
      %259 = sbr.rel (0) target = $region113
    $region112: #{vae_forward.1} parent=1 // pred_region
      %260 = dma.done [#allocation14], 16
    $region113: #{vae_forward.1} parent=1 // pred_fallthru
      _
    // Predicated region
    $region114: #{vae_forward.1} parent=1 // pred_check
      _
    $region115: #{vae_forward.1} parent=1 // pred_check_branch
      %262 = sbr.rel (0) target = $region117
    $region116: #{vae_forward.1} parent=1 // pred_region
      %263 = dma.done [#allocation14], 2048
    $region117: #{vae_forward.1} parent=1 // pred_fallthru
      _
    // Predicated region
    $region118: #{vae_forward.1} parent=1 // pred_check
      _
    $region119: #{vae_forward.1} parent=1 // pred_check_branch
      %265 = sbr.rel (0) target = $region121
    $region120: #{vae_forward.1} parent=1 // pred_region
      %266 = dma.done [#allocation17], 16
    $region121: #{vae_forward.1} parent=1 // pred_fallthru
      _
    // Predicated region
    $region122: #{vae_forward.1} parent=1 // pred_check
      _
    $region123: #{vae_forward.1} parent=1 // pred_check_branch
      %268 = sbr.rel (0) target = $region125
    $region124: #{vae_forward.1} parent=1 // pred_region
      %269 = dma.done [#allocation17], 2048
    $region125: #{vae_forward.1} parent=1 // pred_fallthru
      _
    // Predicated region
    $region126: #{vae_forward.1} parent=1 // pred_check
      _
    $region127: #{vae_forward.1} parent=1 // pred_check_branch
      %271 = sbr.rel (0) target = $region129
    $region128: #{vae_forward.1} parent=1 // pred_region
      %272 = dma.done [#allocation20], 32
    $region129: #{vae_forward.1} parent=1 // pred_fallthru
      _
    // Predicated region
    $region130: #{vae_forward.1} parent=1 // pred_check
      _
    $region131: #{vae_forward.1} parent=1 // pred_check_branch
      %274 = sbr.rel (0) target = $region133
    $region132: #{vae_forward.1} parent=1 // pred_region
      %275 = dma.done [#allocation20], 8192
    $region133: #{vae_forward.1} parent=1 // pred_fallthru
      _
    // Predicated region
    $region134: #{vae_forward.1} parent=1 // pred_check
      _
    $region135: #{vae_forward.1} parent=1 // pred_check_branch
      %277 = sbr.rel (0) target = $region137
    $region136: #{vae_forward.1} parent=1 // pred_region
      %278 = dma.done [#allocation23], 64
    $region137: #{vae_forward.1} parent=1 // pred_fallthru
      _
    // Predicated region
    $region138: #{vae_forward.1} parent=1 // pred_check
      _
    $region139: #{vae_forward.1} parent=1 // pred_check_branch
      %280 = sbr.rel (0) target = $region141
    $region140: #{vae_forward.1} parent=1 // pred_region
      %281 = dma.done [#allocation23], 32768
    $region141: #{vae_forward.1} parent=1 // pred_fallthru
      _
    // Predicated region
    $region142: #{vae_forward.1} parent=1 // pred_check
      _
    $region143: #{vae_forward.1} parent=1 // pred_check_branch
      %283 = sbr.rel (0) target = $region145
    $region144: #{vae_forward.1} parent=1 // pred_region
      %284 = dma.done [#allocation26], 128
    $region145: #{vae_forward.1} parent=1 // pred_fallthru
      _
    // Predicated region
    $region146: #{vae_forward.1} parent=1 // pred_check
      _
    $region147: #{vae_forward.1} parent=1 // pred_check_branch
      %286 = sbr.rel (0) target = $region149
    $region148: #{vae_forward.1} parent=1 // pred_region
      %287 = dma.done [#allocation26], 57344
    $region149: #{vae_forward.1} parent=1 // pred_fallthru
      _
    // Predicated region
    $region150: #{vae_forward.1} parent=1 // pred_check
      _
    $region151: #{vae_forward.1} parent=1 // pred_check_branch
      %289 = sbr.rel (0) target = $region153
    $region152: #{vae_forward.1} parent=1 // pred_region
      %290 = dma.done [#allocation29], 112
    $region153: #{vae_forward.1} parent=1 // pred_fallthru
      _
    %v292 = vld [vmem:[%s0] sm:$0xff]
    %v293 = vld [vmem:[%s0 + $0x8] sm:$0xff]
    %v294 = vld [vmem:[%s0 + $0x10] sm:$0xff]
    %v295 = vld [vmem:[%s0 + $0x18] sm:$0xf]
    %v296 = vld [vmem:[%s0 + $0x1c] sm:$0xff]
    %v297 = vld [vmem:[%s0 + $0x24] sm:$0xff]
    %v298 = vld [vmem:[%s0 + $0x2c] sm:$0xff]
    %v299 = vld [vmem:[%s0 + $0x34] sm:$0xf]
    %v300 = vld [vmem:[#allocation2] sm:$0xff]
    %v301 = vld [vmem:[#allocation2 + $0x8] sm:$0xff]
    %v302 = vld [vmem:[#allocation2 + $0x10] sm:$0xff]
    %v303 = vld [vmem:[#allocation2 + $0x18] sm:$0xff]
    %v304 = vld [vmem:[#allocation2 + $0x20] sm:$0xff]
    %v305 = vld [vmem:[#allocation2 + $0x28] sm:$0xff]
    %v306 = vld [vmem:[#allocation2 + $0x30] sm:$0xff]
    %v307 = vld [vmem:[#allocation2 + $0x38] sm:$0xff]
    %v308 = vld [vmem:[#allocation2 + $0x40] sm:$0xff]
    %v309 = vld [vmem:[#allocation2 + $0x48] sm:$0xff]
    %v310 = vld [vmem:[#allocation2 + $0x50] sm:$0xff]
    %v311 = vld [vmem:[#allocation2 + $0x58] sm:$0xff]
    %v312 = vld [vmem:[#allocation2 + $0x60] sm:$0xff]
    %v313 = vld [vmem:[#allocation2 + $0x68] sm:$0xff]
    %v314 = vld [vmem:[#allocation2 + $0x70] sm:$0xff]
    %v315 = vld [vmem:[#allocation2 + $0x78] sm:$0xff]
    %v316 = vld [vmem:[#allocation2 + $0x80] sm:$0xff]
    %v317 = vld [vmem:[#allocation2 + $0x88] sm:$0xff]
    %v318 = vld [vmem:[#allocation2 + $0x90] sm:$0xff]
    %v319 = vld [vmem:[#allocation2 + $0x98] sm:$0xff]
    %v320 = vld [vmem:[#allocation2 + $0xa0] sm:$0xff]
    %v321 = vld [vmem:[#allocation2 + $0xa8] sm:$0xff]
    %v322 = vld [vmem:[#allocation2 + $0xb0] sm:$0xff]
    %v323 = vld [vmem:[#allocation2 + $0xb8] sm:$0xff]
    %v324 = vld [vmem:[#allocation2 + $0xc0] sm:$0xff]
    %v325 = vld [vmem:[#allocation2 + $0xc8] sm:$0xff]
    %v326 = vld [vmem:[#allocation2 + $0xd0] sm:$0xff]
    %v327 = vld [vmem:[#allocation2 + $0xd8] sm:$0xff]
    %v328 = vld [vmem:[#allocation2 + $0xe0] sm:$0xff]
    %v329 = vld [vmem:[#allocation2 + $0xe8] sm:$0xff]
    %v330 = vld [vmem:[#allocation2 + $0xf0] sm:$0xff]
    %v331 = vld [vmem:[#allocation2 + $0xf8] sm:$0xff]
    %v332 = vld [vmem:[#allocation2 + $0x100] sm:$0xff]
    %v333 = vld [vmem:[#allocation2 + $0x108] sm:$0xff]
    %v334 = vld [vmem:[#allocation2 + $0x110] sm:$0xff]
    %v335 = vld [vmem:[#allocation2 + $0x118] sm:$0xff]
    %v336 = vld [vmem:[#allocation2 + $0x120] sm:$0xff]
    %v337 = vld [vmem:[#allocation2 + $0x128] sm:$0xff]
    %v338 = vld [vmem:[#allocation2 + $0x130] sm:$0xff]
    %v339 = vld [vmem:[#allocation2 + $0x138] sm:$0xff]
    %v340 = vld [vmem:[#allocation2 + $0x140] sm:$0xff]
    %v341 = vld [vmem:[#allocation2 + $0x148] sm:$0xff]
    %v342 = vld [vmem:[#allocation2 + $0x150] sm:$0xff]
    %v343 = vld [vmem:[#allocation2 + $0x158] sm:$0xff]
    %v344 = vld [vmem:[#allocation2 + $0x160] sm:$0xff]
    %v345 = vld [vmem:[#allocation2 + $0x168] sm:$0xff]
    %v346 = vld [vmem:[#allocation2 + $0x170] sm:$0xff]
    %v347 = vld [vmem:[#allocation2 + $0x178] sm:$0xff]
    %v348 = vld [vmem:[#allocation2 + $0x180] sm:$0xff]
    %v349 = vld [vmem:[#allocation2 + $0x188] sm:$0xff]
    %v350 = vld [vmem:[#allocation2 + $0x190] sm:$0xff]
    %v351 = vld [vmem:[#allocation2 + $0x198] sm:$0xff]
    %v352 = vld [vmem:[#allocation2 + $0x1a0] sm:$0xff]
    %v353 = vld [vmem:[#allocation2 + $0x1a8] sm:$0xff]
    %v354 = vld [vmem:[#allocation2 + $0x1b0] sm:$0xff]
    %v355 = vld [vmem:[#allocation2 + $0x1b8] sm:$0xff]
    %v356 = vld [vmem:[#allocation2 + $0x1c0] sm:$0xff]
    %v357 = vld [vmem:[#allocation2 + $0x1c8] sm:$0xff]
    %v358 = vld [vmem:[#allocation2 + $0x1d0] sm:$0xff]
    %v359 = vld [vmem:[#allocation2 + $0x1d8] sm:$0xff]
    %v360 = vld [vmem:[#allocation2 + $0x1e0] sm:$0xff]
    %v361 = vld [vmem:[#allocation2 + $0x1e8] sm:$0xff]
    %v362 = vld [vmem:[#allocation2 + $0x1f0] sm:$0xff]
    %v363 = vld [vmem:[#allocation2 + $0x1f8] sm:$0xff]
    %v364 = vld [vmem:[#allocation2 + $0x200] sm:$0xff]
    %v365 = vld [vmem:[#allocation2 + $0x208] sm:$0xff]
    %v366 = vld [vmem:[#allocation2 + $0x210] sm:$0xff]
    %v367 = vld [vmem:[#allocation2 + $0x218] sm:$0xff]
    %v368 = vld [vmem:[#allocation2 + $0x220] sm:$0xff]
    %v369 = vld [vmem:[#allocation2 + $0x228] sm:$0xff]
    %v370 = vld [vmem:[#allocation2 + $0x230] sm:$0xff]
    %v371 = vld [vmem:[#allocation2 + $0x238] sm:$0xff]
    %v372 = vld [vmem:[#allocation2 + $0x240] sm:$0xff]
    %v373 = vld [vmem:[#allocation2 + $0x248] sm:$0xff]
    %v374 = vld [vmem:[#allocation2 + $0x250] sm:$0xff]
    %v375 = vld [vmem:[#allocation2 + $0x258] sm:$0xff]
    %v376 = vld [vmem:[#allocation2 + $0x260] sm:$0xff]
    %v377 = vld [vmem:[#allocation2 + $0x268] sm:$0xff]
    %v378 = vld [vmem:[#allocation2 + $0x270] sm:$0xff]
    %v379 = vld [vmem:[#allocation2 + $0x278] sm:$0xff]
    %v380 = vld [vmem:[#allocation2 + $0x280] sm:$0xff]
    %v381 = vld [vmem:[#allocation2 + $0x288] sm:$0xff]
    %v382 = vld [vmem:[#allocation2 + $0x290] sm:$0xff]
    %v383 = vld [vmem:[#allocation2 + $0x298] sm:$0xff]
    %v384 = vld [vmem:[#allocation2 + $0x2a0] sm:$0xff]
    %v385 = vld [vmem:[#allocation2 + $0x2a8] sm:$0xff]
    %v386 = vld [vmem:[#allocation2 + $0x2b0] sm:$0xff]
    %v387 = vld [vmem:[#allocation2 + $0x2b8] sm:$0xff]
    %v388 = vld [vmem:[#allocation2 + $0x2c0] sm:$0xff]
    %v389 = vld [vmem:[#allocation2 + $0x2c8] sm:$0xff]
    %v390 = vld [vmem:[#allocation2 + $0x2d0] sm:$0xff]
    %v391 = vld [vmem:[#allocation2 + $0x2d8] sm:$0xff]
    %v392 = vld [vmem:[#allocation2 + $0x2e0] sm:$0xff]
    %v393 = vld [vmem:[#allocation2 + $0x2e8] sm:$0xff]
    %v394 = vld [vmem:[#allocation2 + $0x2f0] sm:$0xff]
    %v395 = vld [vmem:[#allocation2 + $0x2f8] sm:$0xff]
    %v396 = vld [vmem:[#allocation2 + $0x300] sm:$0xff]
    %v397 = vld [vmem:[#allocation2 + $0x308] sm:$0xff]
    %v398 = vld [vmem:[#allocation2 + $0x310] sm:$0xff]
    %v399 = vld [vmem:[#allocation2 + $0x318] sm:$0xff]
    %v400 = vld [vmem:[#allocation2 + $0x320] sm:$0xff]
    %v401 = vld [vmem:[#allocation2 + $0x328] sm:$0xff]
    %v402 = vld [vmem:[#allocation2 + $0x330] sm:$0xff]
    %v403 = vld [vmem:[#allocation2 + $0x338] sm:$0xff]
    %v404 = vld [vmem:[#allocation2 + $0x340] sm:$0xff]
    %v405 = vld [vmem:[#allocation2 + $0x348] sm:$0xff]
    %v406 = vld [vmem:[#allocation2 + $0x350] sm:$0xff]
    %v407 = vld [vmem:[#allocation2 + $0x358] sm:$0xff]
    %v408 = vld [vmem:[#allocation2 + $0x360] sm:$0xff]
    %v409 = vld [vmem:[#allocation2 + $0x368] sm:$0xff]
    %v410 = vld [vmem:[#allocation2 + $0x370] sm:$0xff]
    %v411 = vld [vmem:[#allocation2 + $0x378] sm:$0xff]
    %v412 = vld [vmem:[#allocation2 + $0x380] sm:$0xff]
    %v413 = vld [vmem:[#allocation2 + $0x388] sm:$0xff]
    %v414 = vld [vmem:[#allocation2 + $0x390] sm:$0xff]
    %v415 = vld [vmem:[#allocation2 + $0x398] sm:$0xff]
    %v416 = vld [vmem:[#allocation2 + $0x3a0] sm:$0xff]
    %v417 = vld [vmem:[#allocation2 + $0x3a8] sm:$0xff]
    %v418 = vld [vmem:[#allocation2 + $0x3b0] sm:$0xff]
    %v419 = vld [vmem:[#allocation2 + $0x3b8] sm:$0xff]
    %v420 = vld [vmem:[#allocation2 + $0x3c0] sm:$0xff]
    %v421 = vld [vmem:[#allocation2 + $0x3c8] sm:$0xff]
    %v422 = vld [vmem:[#allocation2 + $0x3d0] sm:$0xff]
    %v423 = vld [vmem:[#allocation2 + $0x3d8] sm:$0xff]
    %v424 = vld [vmem:[#allocation2 + $0x3e0] sm:$0xff]
    %v425 = vld [vmem:[#allocation2 + $0x3e8] sm:$0xff]
    %v426 = vld [vmem:[#allocation2 + $0x3f0] sm:$0xff]
    %v427 = vld [vmem:[#allocation2 + $0x3f8] sm:$0xff]
    %v428 = vld [vmem:[#allocation2 + $0x400] sm:$0xff]
    %v429 = vld [vmem:[#allocation2 + $0x408] sm:$0xff]
    %v430 = vld [vmem:[#allocation2 + $0x410] sm:$0xff]
    %v431 = vld [vmem:[#allocation2 + $0x418] sm:$0xff]
    %v432 = vld [vmem:[#allocation2 + $0x420] sm:$0xff]
    %v433 = vld [vmem:[#allocation2 + $0x428] sm:$0xff]
    %v434 = vld [vmem:[#allocation2 + $0x430] sm:$0xff]
    %v435 = vld [vmem:[#allocation2 + $0x438] sm:$0xff]
    %v436 = vld [vmem:[#allocation2 + $0x440] sm:$0xff]
    %v437 = vld [vmem:[#allocation2 + $0x448] sm:$0xff]
    %v438 = vld [vmem:[#allocation2 + $0x450] sm:$0xff]
    %v439 = vld [vmem:[#allocation2 + $0x458] sm:$0xff]
    %v440 = vld [vmem:[#allocation2 + $0x460] sm:$0xff]
    %v441 = vld [vmem:[#allocation2 + $0x468] sm:$0xff]
    %v442 = vld [vmem:[#allocation2 + $0x470] sm:$0xff]
    %v443 = vld [vmem:[#allocation2 + $0x478] sm:$0xff]
    %v444 = vld [vmem:[#allocation2 + $0x480] sm:$0xff]
    %v445 = vld [vmem:[#allocation2 + $0x488] sm:$0xff]
    %v446 = vld [vmem:[#allocation2 + $0x490] sm:$0xff]
    %v447 = vld [vmem:[#allocation2 + $0x498] sm:$0xff]
    %v448 = vld [vmem:[#allocation2 + $0x4a0] sm:$0xff]
    %v449 = vld [vmem:[#allocation2 + $0x4a8] sm:$0xff]
    %v450 = vld [vmem:[#allocation2 + $0x4b0] sm:$0xff]
    %v451 = vld [vmem:[#allocation2 + $0x4b8] sm:$0xff]
    %v452 = vld [vmem:[#allocation2 + $0x4c0] sm:$0xff]
    %v453 = vld [vmem:[#allocation2 + $0x4c8] sm:$0xff]
    %v454 = vld [vmem:[#allocation2 + $0x4d0] sm:$0xff]
    %v455 = vld [vmem:[#allocation2 + $0x4d8] sm:$0xff]
    %v456 = vld [vmem:[#allocation2 + $0x4e0] sm:$0xff]
    %v457 = vld [vmem:[#allocation2 + $0x4e8] sm:$0xff]
    %v458 = vld [vmem:[#allocation2 + $0x4f0] sm:$0xff]
    %v459 = vld [vmem:[#allocation2 + $0x4f8] sm:$0xff]
    %v460 = vld [vmem:[#allocation2 + $0x500] sm:$0xff]
    %v461 = vld [vmem:[#allocation2 + $0x508] sm:$0xff]
    %v462 = vld [vmem:[#allocation2 + $0x510] sm:$0xff]
    %v463 = vld [vmem:[#allocation2 + $0x518] sm:$0xff]
    %v464 = vld [vmem:[#allocation2 + $0x520] sm:$0xff]
    %v465 = vld [vmem:[#allocation2 + $0x528] sm:$0xff]
    %v466 = vld [vmem:[#allocation2 + $0x530] sm:$0xff]
    %v467 = vld [vmem:[#allocation2 + $0x538] sm:$0xff]
    %v468 = vld [vmem:[#allocation2 + $0x540] sm:$0xff]
    %v469 = vld [vmem:[#allocation2 + $0x548] sm:$0xff]
    %v470 = vld [vmem:[#allocation2 + $0x550] sm:$0xff]
    %v471 = vld [vmem:[#allocation2 + $0x558] sm:$0xff]
    %v472 = vld [vmem:[#allocation2 + $0x560] sm:$0xff]
    %v473 = vld [vmem:[#allocation2 + $0x568] sm:$0xff]
    %v474 = vld [vmem:[#allocation2 + $0x570] sm:$0xff]
    %v475 = vld [vmem:[#allocation2 + $0x578] sm:$0xff]
    %v476 = vld [vmem:[#allocation2 + $0x580] sm:$0xff]
    %v477 = vld [vmem:[#allocation2 + $0x588] sm:$0xff]
    %v478 = vld [vmem:[#allocation2 + $0x590] sm:$0xff]
    %v479 = vld [vmem:[#allocation2 + $0x598] sm:$0xff]
    %v480 = vld [vmem:[#allocation2 + $0x5a0] sm:$0xff]
    %v481 = vld [vmem:[#allocation2 + $0x5a8] sm:$0xff]
    %v482 = vld [vmem:[#allocation2 + $0x5b0] sm:$0xff]
    %v483 = vld [vmem:[#allocation2 + $0x5b8] sm:$0xff]
    %v484 = vld [vmem:[#allocation2 + $0x5c0] sm:$0xff]
    %v485 = vld [vmem:[#allocation2 + $0x5c8] sm:$0xff]
    %v486 = vld [vmem:[#allocation2 + $0x5d0] sm:$0xff]
    %v487 = vld [vmem:[#allocation2 + $0x5d8] sm:$0xff]
    %v488 = vld [vmem:[#allocation2 + $0x5e0] sm:$0xff]
    %v489 = vld [vmem:[#allocation2 + $0x5e8] sm:$0xff]
    %v490 = vld [vmem:[#allocation2 + $0x5f0] sm:$0xff]
    %v491 = vld [vmem:[#allocation2 + $0x5f8] sm:$0xff]
    %v492 = vld [vmem:[#allocation2 + $0x600] sm:$0xff]
    %v493 = vld [vmem:[#allocation2 + $0x608] sm:$0xff]
    %v494 = vld [vmem:[#allocation2 + $0x610] sm:$0xff]
    %v495 = vld [vmem:[#allocation2 + $0x618] sm:$0xff]
    %v496 = vld [vmem:[#allocation2 + $0x620] sm:$0xff]
    %v497 = vld [vmem:[#allocation2 + $0x628] sm:$0xff]
    %v498 = vld [vmem:[#allocation2 + $0x630] sm:$0xff]
    %v499 = vld [vmem:[#allocation2 + $0x638] sm:$0xff]
    %v500 = vld [vmem:[#allocation2 + $0x640] sm:$0xff]
    %v501 = vld [vmem:[#allocation2 + $0x648] sm:$0xff]
    %v502 = vld [vmem:[#allocation2 + $0x650] sm:$0xff]
    %v503 = vld [vmem:[#allocation2 + $0x658] sm:$0xff]
    %v504 = vld [vmem:[#allocation2 + $0x660] sm:$0xff]
    %v505 = vld [vmem:[#allocation2 + $0x668] sm:$0xff]
    %v506 = vld [vmem:[#allocation2 + $0x670] sm:$0xff]
    %v507 = vld [vmem:[#allocation2 + $0x678] sm:$0xff]
    %v508 = vld [vmem:[#allocation2 + $0x680] sm:$0xff]
    %v509 = vld [vmem:[#allocation2 + $0x688] sm:$0xff]
    %v510 = vld [vmem:[#allocation2 + $0x690] sm:$0xff]
    %v511 = vld [vmem:[#allocation2 + $0x698] sm:$0xff]
    %v512 = vld [vmem:[#allocation2 + $0x6a0] sm:$0xff]
    %v513 = vld [vmem:[#allocation2 + $0x6a8] sm:$0xff]
    %v514 = vld [vmem:[#allocation2 + $0x6b0] sm:$0xff]
    %v515 = vld [vmem:[#allocation2 + $0x6b8] sm:$0xff]
    %v516 = vld [vmem:[#allocation2 + $0x6c0] sm:$0xff]
    %v517 = vld [vmem:[#allocation2 + $0x6c8] sm:$0xff]
    %v518 = vld [vmem:[#allocation2 + $0x6d0] sm:$0xff]
    %v519 = vld [vmem:[#allocation2 + $0x6d8] sm:$0xff]
    %v520 = vld [vmem:[#allocation2 + $0x6e0] sm:$0xff]
    %v521 = vld [vmem:[#allocation2 + $0x6e8] sm:$0xff]
    %v522 = vld [vmem:[#allocation2 + $0x6f0] sm:$0xff]
    %v523 = vld [vmem:[#allocation2 + $0x6f8] sm:$0xff]
    %v524 = vld [vmem:[#allocation2 + $0x700] sm:$0xff]
    %v525 = vld [vmem:[#allocation2 + $0x708] sm:$0xff]
    %v526 = vld [vmem:[#allocation2 + $0x710] sm:$0xff]
    %v527 = vld [vmem:[#allocation2 + $0x718] sm:$0xff]
    %v528 = vld [vmem:[#allocation2 + $0x720] sm:$0xff]
    %v529 = vld [vmem:[#allocation2 + $0x728] sm:$0xff]
    %v530 = vld [vmem:[#allocation2 + $0x730] sm:$0xff]
    %v531 = vld [vmem:[#allocation2 + $0x738] sm:$0xff]
    %v532 = vld [vmem:[#allocation2 + $0x740] sm:$0xff]
    %v533 = vld [vmem:[#allocation2 + $0x748] sm:$0xff]
    %v534 = vld [vmem:[#allocation2 + $0x750] sm:$0xff]
    %v535 = vld [vmem:[#allocation2 + $0x758] sm:$0xff]
    %v536 = vld [vmem:[#allocation2 + $0x760] sm:$0xff]
    %v537 = vld [vmem:[#allocation2 + $0x768] sm:$0xff]
    %v538 = vld [vmem:[#allocation2 + $0x770] sm:$0xff]
    %v539 = vld [vmem:[#allocation2 + $0x778] sm:$0xff]
    %v540 = vld [vmem:[#allocation2 + $0x780] sm:$0xff]
    %v541 = vld [vmem:[#allocation2 + $0x788] sm:$0xff]
    %v542 = vld [vmem:[#allocation2 + $0x790] sm:$0xff]
    %v543 = vld [vmem:[#allocation2 + $0x798] sm:$0xff]
    %v544 = vld [vmem:[#allocation2 + $0x7a0] sm:$0xff]
    %v545 = vld [vmem:[#allocation2 + $0x7a8] sm:$0xff]
    %v546 = vld [vmem:[#allocation2 + $0x7b0] sm:$0xff]
    %v547 = vld [vmem:[#allocation2 + $0x7b8] sm:$0xff]
    %v548 = vld [vmem:[#allocation2 + $0x7c0] sm:$0xff]
    %v549 = vld [vmem:[#allocation2 + $0x7c8] sm:$0xff]
    %v550 = vld [vmem:[#allocation2 + $0x7d0] sm:$0xff]
    %v551 = vld [vmem:[#allocation2 + $0x7d8] sm:$0xff]
    %v552 = vld [vmem:[#allocation2 + $0x7e0] sm:$0xff]
    %v553 = vld [vmem:[#allocation2 + $0x7e8] sm:$0xff]
    %v554 = vld [vmem:[#allocation2 + $0x7f0] sm:$0xff]
    %v555 = vld [vmem:[#allocation2 + $0x7f8] sm:$0xff]
    %v556 = vld [vmem:[#allocation2 + $0x800] sm:$0xff]
    %v557 = vld [vmem:[#allocation2 + $0x808] sm:$0xff]
    %v558 = vld [vmem:[#allocation2 + $0x810] sm:$0xff]
    %v559 = vld [vmem:[#allocation2 + $0x818] sm:$0xff]
    %v560 = vld [vmem:[#allocation2 + $0x820] sm:$0xff]
    %v561 = vld [vmem:[#allocation2 + $0x828] sm:$0xff]
    %v562 = vld [vmem:[#allocation2 + $0x830] sm:$0xff]
    %v563 = vld [vmem:[#allocation2 + $0x838] sm:$0xff]
    %v564 = vld [vmem:[#allocation2 + $0x840] sm:$0xff]
    %v565 = vld [vmem:[#allocation2 + $0x848] sm:$0xff]
    %v566 = vld [vmem:[#allocation2 + $0x850] sm:$0xff]
    %v567 = vld [vmem:[#allocation2 + $0x858] sm:$0xff]
    %v568 = vld [vmem:[#allocation2 + $0x860] sm:$0xff]
    %v569 = vld [vmem:[#allocation2 + $0x868] sm:$0xff]
    %v570 = vld [vmem:[#allocation2 + $0x870] sm:$0xff]
    %v571 = vld [vmem:[#allocation2 + $0x878] sm:$0xff]
    %v572 = vld [vmem:[#allocation2 + $0x880] sm:$0xff]
    %v573 = vld [vmem:[#allocation2 + $0x888] sm:$0xff]
    %v574 = vld [vmem:[#allocation2 + $0x890] sm:$0xff]
    %v575 = vld [vmem:[#allocation2 + $0x898] sm:$0xff]
    %v576 = vld [vmem:[#allocation2 + $0x8a0] sm:$0xff]
    %v577 = vld [vmem:[#allocation2 + $0x8a8] sm:$0xff]
    %v578 = vld [vmem:[#allocation2 + $0x8b0] sm:$0xff]
    %v579 = vld [vmem:[#allocation2 + $0x8b8] sm:$0xff]
    %v580 = vld [vmem:[#allocation2 + $0x8c0] sm:$0xff]
    %v581 = vld [vmem:[#allocation2 + $0x8c8] sm:$0xff]
    %v582 = vld [vmem:[#allocation2 + $0x8d0] sm:$0xff]
    %v583 = vld [vmem:[#allocation2 + $0x8d8] sm:$0xff]
    %v584 = vld [vmem:[#allocation2 + $0x8e0] sm:$0xff]
    %v585 = vld [vmem:[#allocation2 + $0x8e8] sm:$0xff]
    %v586 = vld [vmem:[#allocation2 + $0x8f0] sm:$0xff]
    %v587 = vld [vmem:[#allocation2 + $0x8f8] sm:$0xff]
    %v588 = vld [vmem:[#allocation2 + $0x900] sm:$0xff]
    %v589 = vld [vmem:[#allocation2 + $0x908] sm:$0xff]
    %v590 = vld [vmem:[#allocation2 + $0x910] sm:$0xff]
    %v591 = vld [vmem:[#allocation2 + $0x918] sm:$0xff]
    %v592 = vld [vmem:[#allocation2 + $0x920] sm:$0xff]
    %v593 = vld [vmem:[#allocation2 + $0x928] sm:$0xff]
    %v594 = vld [vmem:[#allocation2 + $0x930] sm:$0xff]
    %v595 = vld [vmem:[#allocation2 + $0x938] sm:$0xff]
    %v596 = vld [vmem:[#allocation2 + $0x940] sm:$0xff]
    %v597 = vld [vmem:[#allocation2 + $0x948] sm:$0xff]
    %v598 = vld [vmem:[#allocation2 + $0x950] sm:$0xff]
    %v599 = vld [vmem:[#allocation2 + $0x958] sm:$0xff]
    %v600 = vld [vmem:[#allocation2 + $0x960] sm:$0xff]
    %v601 = vld [vmem:[#allocation2 + $0x968] sm:$0xff]
    %v602 = vld [vmem:[#allocation2 + $0x970] sm:$0xff]
    %v603 = vld [vmem:[#allocation2 + $0x978] sm:$0xff]
    %v604 = vld [vmem:[#allocation2 + $0x980] sm:$0xff]
    %v605 = vld [vmem:[#allocation2 + $0x988] sm:$0xff]
    %v606 = vld [vmem:[#allocation2 + $0x990] sm:$0xff]
    %v607 = vld [vmem:[#allocation2 + $0x998] sm:$0xff]
    %v608 = vld [vmem:[#allocation2 + $0x9a0] sm:$0xff]
    %v609 = vld [vmem:[#allocation2 + $0x9a8] sm:$0xff]
    %v610 = vld [vmem:[#allocation2 + $0x9b0] sm:$0xff]
    %v611 = vld [vmem:[#allocation2 + $0x9b8] sm:$0xff]
    %v612 = vld [vmem:[#allocation2 + $0x9c0] sm:$0xff]
    %v613 = vld [vmem:[#allocation2 + $0x9c8] sm:$0xff]
    %v614 = vld [vmem:[#allocation2 + $0x9d0] sm:$0xff]
    %v615 = vld [vmem:[#allocation2 + $0x9d8] sm:$0xff]
    %v616 = vld [vmem:[#allocation2 + $0x9e0] sm:$0xff]
    %v617 = vld [vmem:[#allocation2 + $0x9e8] sm:$0xff]
    %v618 = vld [vmem:[#allocation2 + $0x9f0] sm:$0xff]
    %v619 = vld [vmem:[#allocation2 + $0x9f8] sm:$0xff]
    %v620 = vld [vmem:[#allocation2 + $0xa00] sm:$0xff]
    %v621 = vld [vmem:[#allocation2 + $0xa08] sm:$0xff]
    %v622 = vld [vmem:[#allocation2 + $0xa10] sm:$0xff]
    %v623 = vld [vmem:[#allocation2 + $0xa18] sm:$0xff]
    %v624 = vld [vmem:[#allocation2 + $0xa20] sm:$0xff]
    %v625 = vld [vmem:[#allocation2 + $0xa28] sm:$0xff]
    %v626 = vld [vmem:[#allocation2 + $0xa30] sm:$0xff]
    %v627 = vld [vmem:[#allocation2 + $0xa38] sm:$0xff]
    %v628 = vld [vmem:[#allocation2 + $0xa40] sm:$0xff]
    %v629 = vld [vmem:[#allocation2 + $0xa48] sm:$0xff]
    %v630 = vld [vmem:[#allocation2 + $0xa50] sm:$0xff]
    %v631 = vld [vmem:[#allocation2 + $0xa58] sm:$0xff]
    %v632 = vld [vmem:[#allocation2 + $0xa60] sm:$0xff]
    %v633 = vld [vmem:[#allocation2 + $0xa68] sm:$0xff]
    %v634 = vld [vmem:[#allocation2 + $0xa70] sm:$0xff]
    %v635 = vld [vmem:[#allocation2 + $0xa78] sm:$0xff]
    %v636 = vld [vmem:[#allocation2 + $0xa80] sm:$0xff]
    %v637 = vld [vmem:[#allocation2 + $0xa88] sm:$0xff]
    %v638 = vld [vmem:[#allocation2 + $0xa90] sm:$0xff]
    %v639 = vld [vmem:[#allocation2 + $0xa98] sm:$0xff]
    %v640 = vld [vmem:[#allocation2 + $0xaa0] sm:$0xff]
    %v641 = vld [vmem:[#allocation2 + $0xaa8] sm:$0xff]
    %v642 = vld [vmem:[#allocation2 + $0xab0] sm:$0xff]
    %v643 = vld [vmem:[#allocation2 + $0xab8] sm:$0xff]
    %v644 = vld [vmem:[#allocation2 + $0xac0] sm:$0xff]
    %v645 = vld [vmem:[#allocation2 + $0xac8] sm:$0xff]
    %v646 = vld [vmem:[#allocation2 + $0xad0] sm:$0xff]
    %v647 = vld [vmem:[#allocation2 + $0xad8] sm:$0xff]
    %v648 = vld [vmem:[#allocation2 + $0xae0] sm:$0xff]
    %v649 = vld [vmem:[#allocation2 + $0xae8] sm:$0xff]
    %v650 = vld [vmem:[#allocation2 + $0xaf0] sm:$0xff]
    %v651 = vld [vmem:[#allocation2 + $0xaf8] sm:$0xff]
    %v652 = vld [vmem:[#allocation2 + $0xb00] sm:$0xff]
    %v653 = vld [vmem:[#allocation2 + $0xb08] sm:$0xff]
    %v654 = vld [vmem:[#allocation2 + $0xb10] sm:$0xff]
    %v655 = vld [vmem:[#allocation2 + $0xb18] sm:$0xff]
    %v656 = vld [vmem:[#allocation2 + $0xb20] sm:$0xff]
    %v657 = vld [vmem:[#allocation2 + $0xb28] sm:$0xff]
    %v658 = vld [vmem:[#allocation2 + $0xb30] sm:$0xff]
    %v659 = vld [vmem:[#allocation2 + $0xb38] sm:$0xff]
    %v660 = vld [vmem:[#allocation2 + $0xb40] sm:$0xff]
    %v661 = vld [vmem:[#allocation2 + $0xb48] sm:$0xff]
    %v662 = vld [vmem:[#allocation2 + $0xb50] sm:$0xff]
    %v663 = vld [vmem:[#allocation2 + $0xb58] sm:$0xff]
    %v664 = vld [vmem:[#allocation2 + $0xb60] sm:$0xff]
    %v665 = vld [vmem:[#allocation2 + $0xb68] sm:$0xff]
    %v666 = vld [vmem:[#allocation2 + $0xb70] sm:$0xff]
    %v667 = vld [vmem:[#allocation2 + $0xb78] sm:$0xff]
    %v668 = vld [vmem:[#allocation2 + $0xb80] sm:$0xff]
    %v669 = vld [vmem:[#allocation2 + $0xb88] sm:$0xff]
    %v670 = vld [vmem:[#allocation2 + $0xb90] sm:$0xff]
    %v671 = vld [vmem:[#allocation2 + $0xb98] sm:$0xff]
    %v672 = vld [vmem:[#allocation2 + $0xba0] sm:$0xff]
    %v673 = vld [vmem:[#allocation2 + $0xba8] sm:$0xff]
    %v674 = vld [vmem:[#allocation2 + $0xbb0] sm:$0xff]
    %v675 = vld [vmem:[#allocation2 + $0xbb8] sm:$0xff]
    %v676 = vld [vmem:[#allocation2 + $0xbc0] sm:$0xff]
    %v677 = vld [vmem:[#allocation2 + $0xbc8] sm:$0xff]
    %v678 = vld [vmem:[#allocation2 + $0xbd0] sm:$0xff]
    %v679 = vld [vmem:[#allocation2 + $0xbd8] sm:$0xff]
    %v680 = vld [vmem:[#allocation2 + $0xbe0] sm:$0xff]
    %v681 = vld [vmem:[#allocation2 + $0xbe8] sm:$0xff]
    %v682 = vld [vmem:[#allocation2 + $0xbf0] sm:$0xff]
    %v683 = vld [vmem:[#allocation2 + $0xbf8] sm:$0xff]
    %v684 = vld [vmem:[#allocation2 + $0xc00] sm:$0xff]
    %v685 = vld [vmem:[#allocation2 + $0xc08] sm:$0xff]
    %v686 = vld [vmem:[#allocation2 + $0xc10] sm:$0xff]
    %v687 = vld [vmem:[#allocation2 + $0xc18] sm:$0xff]
    %v688 = vld [vmem:[#allocation2 + $0xc20] sm:$0xff]
    %v689 = vld [vmem:[#allocation2 + $0xc28] sm:$0xff]
    %v690 = vld [vmem:[#allocation2 + $0xc30] sm:$0xff]
    %v691 = vld [vmem:[#allocation2 + $0xc38] sm:$0xff]
    %v692 = vld [vmem:[#allocation2 + $0xc40] sm:$0xff]
    %v693 = vld [vmem:[#allocation2 + $0xc48] sm:$0xff]
    %v694 = vld [vmem:[#allocation2 + $0xc50] sm:$0xff]
    %v695 = vld [vmem:[#allocation2 + $0xc58] sm:$0xff]
    %v696 = vld [vmem:[#allocation2 + $0xc60] sm:$0xff]
    %v697 = vld [vmem:[#allocation2 + $0xc68] sm:$0xff]
    %v698 = vld [vmem:[#allocation2 + $0xc70] sm:$0xff]
    %v699 = vld [vmem:[#allocation2 + $0xc78] sm:$0xff]
    %v700 = vld [vmem:[#allocation2 + $0xc80] sm:$0xff]
    %v701 = vld [vmem:[#allocation2 + $0xc88] sm:$0xff]
    %v702 = vld [vmem:[#allocation2 + $0xc90] sm:$0xff]
    %v703 = vld [vmem:[#allocation2 + $0xc98] sm:$0xff]
    %v704 = vld [vmem:[#allocation2 + $0xca0] sm:$0xff]
    %v705 = vld [vmem:[#allocation2 + $0xca8] sm:$0xff]
    %v706 = vld [vmem:[#allocation2 + $0xcb0] sm:$0xff]
    %v707 = vld [vmem:[#allocation2 + $0xcb8] sm:$0xff]
    %v708 = vld [vmem:[#allocation2 + $0xcc0] sm:$0xff]
    %v709 = vld [vmem:[#allocation2 + $0xcc8] sm:$0xff]
    %v710 = vld [vmem:[#allocation2 + $0xcd0] sm:$0xff]
    %v711 = vld [vmem:[#allocation2 + $0xcd8] sm:$0xff]
    %v712 = vld [vmem:[#allocation2 + $0xce0] sm:$0xff]
    %v713 = vld [vmem:[#allocation2 + $0xce8] sm:$0xff]
    %v714 = vld [vmem:[#allocation2 + $0xcf0] sm:$0xff]
    %v715 = vld [vmem:[#allocation2 + $0xcf8] sm:$0xff]
    %v716 = vld [vmem:[#allocation2 + $0xd00] sm:$0xff]
    %v717 = vld [vmem:[#allocation2 + $0xd08] sm:$0xff]
    %v718 = vld [vmem:[#allocation2 + $0xd10] sm:$0xff]
    %v719 = vld [vmem:[#allocation2 + $0xd18] sm:$0xff]
    %v720 = vld [vmem:[#allocation2 + $0xd20] sm:$0xff]
    %v721 = vld [vmem:[#allocation2 + $0xd28] sm:$0xff]
    %v722 = vld [vmem:[#allocation2 + $0xd30] sm:$0xff]
    %v723 = vld [vmem:[#allocation2 + $0xd38] sm:$0xff]
    %v724 = vld [vmem:[#allocation2 + $0xd40] sm:$0xff]
    %v725 = vld [vmem:[#allocation2 + $0xd48] sm:$0xff]
    %v726 = vld [vmem:[#allocation2 + $0xd50] sm:$0xff]
    %v727 = vld [vmem:[#allocation2 + $0xd58] sm:$0xff]
    %v728 = vld [vmem:[#allocation2 + $0xd60] sm:$0xff]
    %v729 = vld [vmem:[#allocation2 + $0xd68] sm:$0xff]
    %v730 = vld [vmem:[#allocation2 + $0xd70] sm:$0xff]
    %v731 = vld [vmem:[#allocation2 + $0xd78] sm:$0xff]
    %v732 = vld [vmem:[#allocation2 + $0xd80] sm:$0xff]
    %v733 = vld [vmem:[#allocation2 + $0xd88] sm:$0xff]
    %v734 = vld [vmem:[#allocation2 + $0xd90] sm:$0xff]
    %v735 = vld [vmem:[#allocation2 + $0xd98] sm:$0xff]
    %v736 = vld [vmem:[#allocation2 + $0xda0] sm:$0xff]
    %v737 = vld [vmem:[#allocation2 + $0xda8] sm:$0xff]
    %v738 = vld [vmem:[#allocation2 + $0xdb0] sm:$0xff]
    %v739 = vld [vmem:[#allocation2 + $0xdb8] sm:$0xff]
    %v740 = vld [vmem:[#allocation2 + $0xdc0] sm:$0xff]
    %v741 = vld [vmem:[#allocation2 + $0xdc8] sm:$0xff]
    %v742 = vld [vmem:[#allocation2 + $0xdd0] sm:$0xff]
    %v743 = vld [vmem:[#allocation2 + $0xdd8] sm:$0xff]
    %v744 = vld [vmem:[#allocation2 + $0xde0] sm:$0xff]
    %v745 = vld [vmem:[#allocation2 + $0xde8] sm:$0xff]
    %v746 = vld [vmem:[#allocation2 + $0xdf0] sm:$0xff]
    %v747 = vld [vmem:[#allocation2 + $0xdf8] sm:$0xff]
    %v748 = vld [vmem:[#allocation4] sm:$0xff]
    %v750 = vlaneseq
    %v751 = vshrl.u32 %v750, 7
    %v752 = vsub.s32 0, %v751
    %v753 = vrot.slane %v748, %v752
    %v754 = vlaneseq
    %v755 = vshrl.u32 %v754, 7
    %v756 = vsub.s32 1, %v755
    %v757 = vrot.slane %v748, %v756
    %v758 = vlaneseq
    %v759 = vshrl.u32 %v758, 7
    %v760 = vsub.s32 2, %v759
    %v761 = vrot.slane %v748, %v760
    %v762 = vlaneseq
    %v763 = vshrl.u32 %v762, 7
    %v764 = vsub.s32 3, %v763
    %v765 = vrot.slane %v748, %v764
    %v766 = vlaneseq
    %v767 = vshrl.u32 %v766, 7
    %v768 = vsub.s32 4, %v767
    %v769 = vrot.slane %v748, %v768
    %v770 = vlaneseq
    %v771 = vshrl.u32 %v770, 7
    %v772 = vsub.s32 5, %v771
    %v773 = vrot.slane %v748, %v772
    %v774 = vlaneseq
    %v775 = vshrl.u32 %v774, 7
    %v776 = vsub.s32 6, %v775
    %v777 = vrot.slane %v748, %v776
    %v778 = vlaneseq
    %v779 = vshrl.u32 %v778, 7
    %v780 = vsub.s32 7, %v779
    %v781 = vrot.slane %v748, %v780
    %v798 = vunpack.c.l.b16 %v292
    %v799 = vunpack.c.h.b16 %v292
    %v800 = vunpack.c.l.b16 %v293
    %v801 = vunpack.c.h.b16 %v293
    %v802 = vunpack.c.l.b16 %v294
    %v803 = vunpack.c.h.b16 %v294
    %v804 = vunpack.c.l.b16 %v295
    %v805 = vunpack.c.l.b16 %v296
    %v806 = vunpack.c.h.b16 %v296
    %v807 = vunpack.c.l.b16 %v297
    %v808 = vunpack.c.h.b16 %v297
    %v809 = vunpack.c.l.b16 %v298
    %v810 = vunpack.c.h.b16 %v298
    %v811 = vunpack.c.l.b16 %v299
    %v812 = vpack.c.b16 %v805, %v798
    %v813 = vpack.c.b16 %v806, %v799
    %v814 = vpack.c.b16 %v807, %v800
    %v815 = vpack.c.b16 %v808, %v801
    %v816 = vpack.c.b16 %v809, %v802
    %v817 = vpack.c.b16 %v810, %v803
    %v818 = vpack.c.b16 %v811, %v804
    %v1274 = vunpack.c.l.b16 %v300
    %v1275 = vunpack.c.h.b16 %v300
    %v1276 = vunpack.c.l.b16 %v301
    %v1277 = vunpack.c.h.b16 %v301
    %v1278 = vunpack.c.l.b16 %v302
    %v1279 = vunpack.c.h.b16 %v302
    %v1280 = vunpack.c.l.b16 %v303
    %v1281 = vunpack.c.h.b16 %v303
    %v1282 = vunpack.c.l.b16 %v304
    %v1283 = vunpack.c.h.b16 %v304
    %v1284 = vunpack.c.l.b16 %v305
    %v1285 = vunpack.c.h.b16 %v305
    %v1286 = vunpack.c.l.b16 %v306
    %v1287 = vunpack.c.h.b16 %v306
    %v1288 = vunpack.c.l.b16 %v307
    %v1289 = vunpack.c.h.b16 %v307
    %v1290 = vunpack.c.l.b16 %v308
    %v1291 = vunpack.c.h.b16 %v308
    %v1292 = vunpack.c.l.b16 %v309
    %v1293 = vunpack.c.h.b16 %v309
    %v1294 = vunpack.c.l.b16 %v310
    %v1295 = vunpack.c.h.b16 %v310
    %v1296 = vunpack.c.l.b16 %v311
    %v1297 = vunpack.c.h.b16 %v311
    %v1298 = vunpack.c.l.b16 %v312
    %v1299 = vunpack.c.h.b16 %v312
    %v1300 = vunpack.c.l.b16 %v313
    %v1301 = vunpack.c.h.b16 %v313
    %v1302 = vunpack.c.l.b16 %v314
    %v1303 = vunpack.c.h.b16 %v314
    %v1304 = vunpack.c.l.b16 %v315
    %v1305 = vunpack.c.h.b16 %v315
    %v1306 = vunpack.c.l.b16 %v316
    %v1307 = vunpack.c.h.b16 %v316
    %v1308 = vunpack.c.l.b16 %v317
    %v1309 = vunpack.c.h.b16 %v317
    %v1310 = vunpack.c.l.b16 %v318
    %v1311 = vunpack.c.h.b16 %v318
    %v1312 = vunpack.c.l.b16 %v319
    %v1313 = vunpack.c.h.b16 %v319
    %v1314 = vunpack.c.l.b16 %v320
    %v1315 = vunpack.c.h.b16 %v320
    %v1316 = vunpack.c.l.b16 %v321
    %v1317 = vunpack.c.h.b16 %v321
    %v1318 = vunpack.c.l.b16 %v322
    %v1319 = vunpack.c.h.b16 %v322
    %v1320 = vunpack.c.l.b16 %v323
    %v1321 = vunpack.c.h.b16 %v323
    %v1322 = vunpack.c.l.b16 %v324
    %v1323 = vunpack.c.h.b16 %v324
    %v1324 = vunpack.c.l.b16 %v325
    %v1325 = vunpack.c.h.b16 %v325
    %v1326 = vunpack.c.l.b16 %v326
    %v1327 = vunpack.c.h.b16 %v326
    %v1328 = vunpack.c.l.b16 %v327
    %v1329 = vunpack.c.h.b16 %v327
    %v1330 = vunpack.c.l.b16 %v328
    %v1331 = vunpack.c.h.b16 %v328
    %v1332 = vunpack.c.l.b16 %v329
    %v1333 = vunpack.c.h.b16 %v329
    %v1334 = vunpack.c.l.b16 %v330
    %v1335 = vunpack.c.h.b16 %v330
    %v1336 = vunpack.c.l.b16 %v331
    %v1337 = vunpack.c.h.b16 %v331
    %v1338 = vunpack.c.l.b16 %v332
    %v1339 = vunpack.c.h.b16 %v332
    %v1340 = vunpack.c.l.b16 %v333
    %v1341 = vunpack.c.h.b16 %v333
    %v1342 = vunpack.c.l.b16 %v334
    %v1343 = vunpack.c.h.b16 %v334
    %v1344 = vunpack.c.l.b16 %v335
    %v1345 = vunpack.c.h.b16 %v335
    %v1346 = vunpack.c.l.b16 %v336
    %v1347 = vunpack.c.h.b16 %v336
    %v1348 = vunpack.c.l.b16 %v337
    %v1349 = vunpack.c.h.b16 %v337
    %v1350 = vunpack.c.l.b16 %v338
    %v1351 = vunpack.c.h.b16 %v338
    %v1352 = vunpack.c.l.b16 %v339
    %v1353 = vunpack.c.h.b16 %v339
    %v1354 = vunpack.c.l.b16 %v340
    %v1355 = vunpack.c.h.b16 %v340
    %v1356 = vunpack.c.l.b16 %v341
    %v1357 = vunpack.c.h.b16 %v341
    %v1358 = vunpack.c.l.b16 %v342
    %v1359 = vunpack.c.h.b16 %v342
    %v1360 = vunpack.c.l.b16 %v343
    %v1361 = vunpack.c.h.b16 %v343
    %v1362 = vunpack.c.l.b16 %v344
    %v1363 = vunpack.c.h.b16 %v344
    %v1364 = vunpack.c.l.b16 %v345
    %v1365 = vunpack.c.h.b16 %v345
    %v1366 = vunpack.c.l.b16 %v346
    %v1367 = vunpack.c.h.b16 %v346
    %v1368 = vunpack.c.l.b16 %v347
    %v1369 = vunpack.c.h.b16 %v347
    %v1370 = vunpack.c.l.b16 %v348
    %v1371 = vunpack.c.h.b16 %v348
    %v1372 = vunpack.c.l.b16 %v349
    %v1373 = vunpack.c.h.b16 %v349
    %v1374 = vunpack.c.l.b16 %v350
    %v1375 = vunpack.c.h.b16 %v350
    %v1376 = vunpack.c.l.b16 %v351
    %v1377 = vunpack.c.h.b16 %v351
    %v1378 = vunpack.c.l.b16 %v352
    %v1379 = vunpack.c.h.b16 %v352
    %v1380 = vunpack.c.l.b16 %v353
    %v1381 = vunpack.c.h.b16 %v353
    %v1382 = vunpack.c.l.b16 %v354
    %v1383 = vunpack.c.h.b16 %v354
    %v1384 = vunpack.c.l.b16 %v355
    %v1385 = vunpack.c.h.b16 %v355
    %v1386 = vunpack.c.l.b16 %v356
    %v1387 = vunpack.c.h.b16 %v356
    %v1388 = vunpack.c.l.b16 %v357
    %v1389 = vunpack.c.h.b16 %v357
    %v1390 = vunpack.c.l.b16 %v358
    %v1391 = vunpack.c.h.b16 %v358
    %v1392 = vunpack.c.l.b16 %v359
    %v1393 = vunpack.c.h.b16 %v359
    %v1394 = vunpack.c.l.b16 %v360
    %v1395 = vunpack.c.h.b16 %v360
    %v1396 = vunpack.c.l.b16 %v361
    %v1397 = vunpack.c.h.b16 %v361
    %v1398 = vunpack.c.l.b16 %v362
    %v1399 = vunpack.c.h.b16 %v362
    %v1400 = vunpack.c.l.b16 %v363
    %v1401 = vunpack.c.h.b16 %v363
    %v1402 = vunpack.c.l.b16 %v364
    %v1403 = vunpack.c.h.b16 %v364
    %v1404 = vunpack.c.l.b16 %v365
    %v1405 = vunpack.c.h.b16 %v365
    %v1406 = vunpack.c.l.b16 %v366
    %v1407 = vunpack.c.h.b16 %v366
    %v1408 = vunpack.c.l.b16 %v367
    %v1409 = vunpack.c.h.b16 %v367
    %v1410 = vunpack.c.l.b16 %v368
    %v1411 = vunpack.c.h.b16 %v368
    %v1412 = vunpack.c.l.b16 %v369
    %v1413 = vunpack.c.h.b16 %v369
    %v1414 = vunpack.c.l.b16 %v370
    %v1415 = vunpack.c.h.b16 %v370
    %v1416 = vunpack.c.l.b16 %v371
    %v1417 = vunpack.c.h.b16 %v371
    %v1418 = vunpack.c.l.b16 %v372
    %v1419 = vunpack.c.h.b16 %v372
    %v1420 = vunpack.c.l.b16 %v373
    %v1421 = vunpack.c.h.b16 %v373
    %v1422 = vunpack.c.l.b16 %v374
    %v1423 = vunpack.c.h.b16 %v374
    %v1424 = vunpack.c.l.b16 %v375
    %v1425 = vunpack.c.h.b16 %v375
    %v1426 = vunpack.c.l.b16 %v376
    %v1427 = vunpack.c.h.b16 %v376
    %v1428 = vunpack.c.l.b16 %v377
    %v1429 = vunpack.c.h.b16 %v377
    %v1430 = vunpack.c.l.b16 %v378
    %v1431 = vunpack.c.h.b16 %v378
    %v1432 = vunpack.c.l.b16 %v379
    %v1433 = vunpack.c.h.b16 %v379
    %v1434 = vunpack.c.l.b16 %v380
    %v1435 = vunpack.c.h.b16 %v380
    %v1436 = vunpack.c.l.b16 %v381
    %v1437 = vunpack.c.h.b16 %v381
    %v1438 = vunpack.c.l.b16 %v382
    %v1439 = vunpack.c.h.b16 %v382
    %v1440 = vunpack.c.l.b16 %v383
    %v1441 = vunpack.c.h.b16 %v383
    %v1442 = vunpack.c.l.b16 %v384
    %v1443 = vunpack.c.h.b16 %v384
    %v1444 = vunpack.c.l.b16 %v385
    %v1445 = vunpack.c.h.b16 %v385
    %v1446 = vunpack.c.l.b16 %v386
    %v1447 = vunpack.c.h.b16 %v386
    %v1448 = vunpack.c.l.b16 %v387
    %v1449 = vunpack.c.h.b16 %v387
    %v1450 = vunpack.c.l.b16 %v388
    %v1451 = vunpack.c.h.b16 %v388
    %v1452 = vunpack.c.l.b16 %v389
    %v1453 = vunpack.c.h.b16 %v389
    %v1454 = vunpack.c.l.b16 %v390
    %v1455 = vunpack.c.h.b16 %v390
    %v1456 = vunpack.c.l.b16 %v391
    %v1457 = vunpack.c.h.b16 %v391
    %v1458 = vunpack.c.l.b16 %v392
    %v1459 = vunpack.c.h.b16 %v392
    %v1460 = vunpack.c.l.b16 %v393
    %v1461 = vunpack.c.h.b16 %v393
    %v1462 = vunpack.c.l.b16 %v394
    %v1463 = vunpack.c.h.b16 %v394
    %v1464 = vunpack.c.l.b16 %v395
    %v1465 = vunpack.c.h.b16 %v395
    %v1466 = vunpack.c.l.b16 %v396
    %v1467 = vunpack.c.h.b16 %v396
    %v1468 = vunpack.c.l.b16 %v397
    %v1469 = vunpack.c.h.b16 %v397
    %v1470 = vunpack.c.l.b16 %v398
    %v1471 = vunpack.c.h.b16 %v398
    %v1472 = vunpack.c.l.b16 %v399
    %v1473 = vunpack.c.h.b16 %v399
    %v1474 = vunpack.c.l.b16 %v400
    %v1475 = vunpack.c.h.b16 %v400
    %v1476 = vunpack.c.l.b16 %v401
    %v1477 = vunpack.c.h.b16 %v401
    %v1478 = vunpack.c.l.b16 %v402
    %v1479 = vunpack.c.h.b16 %v402
    %v1480 = vunpack.c.l.b16 %v403
    %v1481 = vunpack.c.h.b16 %v403
    %v1482 = vunpack.c.l.b16 %v404
    %v1483 = vunpack.c.h.b16 %v404
    %v1484 = vunpack.c.l.b16 %v405
    %v1485 = vunpack.c.h.b16 %v405
    %v1486 = vunpack.c.l.b16 %v406
    %v1487 = vunpack.c.h.b16 %v406
    %v1488 = vunpack.c.l.b16 %v407
    %v1489 = vunpack.c.h.b16 %v407
    %v1490 = vunpack.c.l.b16 %v408
    %v1491 = vunpack.c.h.b16 %v408
    %v1492 = vunpack.c.l.b16 %v409
    %v1493 = vunpack.c.h.b16 %v409
    %v1494 = vunpack.c.l.b16 %v410
    %v1495 = vunpack.c.h.b16 %v410
    %v1496 = vunpack.c.l.b16 %v411
    %v1497 = vunpack.c.h.b16 %v411
    %v1498 = vunpack.c.l.b16 %v412
    %v1499 = vunpack.c.h.b16 %v412
    %v1500 = vunpack.c.l.b16 %v413
    %v1501 = vunpack.c.h.b16 %v413
    %v1502 = vunpack.c.l.b16 %v414
    %v1503 = vunpack.c.h.b16 %v414
    %v1504 = vunpack.c.l.b16 %v415
    %v1505 = vunpack.c.h.b16 %v415
    %v1506 = vunpack.c.l.b16 %v416
    %v1507 = vunpack.c.h.b16 %v416
    %v1508 = vunpack.c.l.b16 %v417
    %v1509 = vunpack.c.h.b16 %v417
    %v1510 = vunpack.c.l.b16 %v418
    %v1511 = vunpack.c.h.b16 %v418
    %v1512 = vunpack.c.l.b16 %v419
    %v1513 = vunpack.c.h.b16 %v419
    %v1514 = vunpack.c.l.b16 %v420
    %v1515 = vunpack.c.h.b16 %v420
    %v1516 = vunpack.c.l.b16 %v421
    %v1517 = vunpack.c.h.b16 %v421
    %v1518 = vunpack.c.l.b16 %v422
    %v1519 = vunpack.c.h.b16 %v422
    %v1520 = vunpack.c.l.b16 %v423
    %v1521 = vunpack.c.h.b16 %v423
    %v1522 = vunpack.c.l.b16 %v424
    %v1523 = vunpack.c.h.b16 %v424
    %v1524 = vunpack.c.l.b16 %v425
    %v1525 = vunpack.c.h.b16 %v425
    %v1526 = vunpack.c.l.b16 %v426
    %v1527 = vunpack.c.h.b16 %v426
    %v1528 = vunpack.c.l.b16 %v427
    %v1529 = vunpack.c.h.b16 %v427
    %v1530 = vunpack.c.l.b16 %v428
    %v1531 = vunpack.c.h.b16 %v428
    %v1532 = vunpack.c.l.b16 %v429
    %v1533 = vunpack.c.h.b16 %v429
    %v1534 = vunpack.c.l.b16 %v430
    %v1535 = vunpack.c.h.b16 %v430
    %v1536 = vunpack.c.l.b16 %v431
    %v1537 = vunpack.c.h.b16 %v431
    %v1538 = vunpack.c.l.b16 %v432
    %v1539 = vunpack.c.h.b16 %v432
    %v1540 = vunpack.c.l.b16 %v433
    %v1541 = vunpack.c.h.b16 %v433
    %v1542 = vunpack.c.l.b16 %v434
    %v1543 = vunpack.c.h.b16 %v434
    %v1544 = vunpack.c.l.b16 %v435
    %v1545 = vunpack.c.h.b16 %v435
    %v1546 = vunpack.c.l.b16 %v436
    %v1547 = vunpack.c.h.b16 %v436
    %v1548 = vunpack.c.l.b16 %v437
    %v1549 = vunpack.c.h.b16 %v437
    %v1550 = vunpack.c.l.b16 %v438
    %v1551 = vunpack.c.h.b16 %v438
    %v1552 = vunpack.c.l.b16 %v439
    %v1553 = vunpack.c.h.b16 %v439
    %v1554 = vunpack.c.l.b16 %v440
    %v1555 = vunpack.c.h.b16 %v440
    %v1556 = vunpack.c.l.b16 %v441
    %v1557 = vunpack.c.h.b16 %v441
    %v1558 = vunpack.c.l.b16 %v442
    %v1559 = vunpack.c.h.b16 %v442
    %v1560 = vunpack.c.l.b16 %v443
    %v1561 = vunpack.c.h.b16 %v443
    %v1562 = vunpack.c.l.b16 %v444
    %v1563 = vunpack.c.h.b16 %v444
    %v1564 = vunpack.c.l.b16 %v445
    %v1565 = vunpack.c.h.b16 %v445
    %v1566 = vunpack.c.l.b16 %v446
    %v1567 = vunpack.c.h.b16 %v446
    %v1568 = vunpack.c.l.b16 %v447
    %v1569 = vunpack.c.h.b16 %v447
    %v1570 = vunpack.c.l.b16 %v448
    %v1571 = vunpack.c.h.b16 %v448
    %v1572 = vunpack.c.l.b16 %v449
    %v1573 = vunpack.c.h.b16 %v449
    %v1574 = vunpack.c.l.b16 %v450
    %v1575 = vunpack.c.h.b16 %v450
    %v1576 = vunpack.c.l.b16 %v451
    %v1577 = vunpack.c.h.b16 %v451
    %v1578 = vunpack.c.l.b16 %v452
    %v1579 = vunpack.c.h.b16 %v452
    %v1580 = vunpack.c.l.b16 %v453
    %v1581 = vunpack.c.h.b16 %v453
    %v1582 = vunpack.c.l.b16 %v454
    %v1583 = vunpack.c.h.b16 %v454
    %v1584 = vunpack.c.l.b16 %v455
    %v1585 = vunpack.c.h.b16 %v455
    %v1586 = vunpack.c.l.b16 %v456
    %v1587 = vunpack.c.h.b16 %v456
    %v1588 = vunpack.c.l.b16 %v457
    %v1589 = vunpack.c.h.b16 %v457
    %v1590 = vunpack.c.l.b16 %v458
    %v1591 = vunpack.c.h.b16 %v458
    %v1592 = vunpack.c.l.b16 %v459
    %v1593 = vunpack.c.h.b16 %v459
    %v1594 = vunpack.c.l.b16 %v460
    %v1595 = vunpack.c.h.b16 %v460
    %v1596 = vunpack.c.l.b16 %v461
    %v1597 = vunpack.c.h.b16 %v461
    %v1598 = vunpack.c.l.b16 %v462
    %v1599 = vunpack.c.h.b16 %v462
    %v1600 = vunpack.c.l.b16 %v463
    %v1601 = vunpack.c.h.b16 %v463
    %v1602 = vunpack.c.l.b16 %v464
    %v1603 = vunpack.c.h.b16 %v464
    %v1604 = vunpack.c.l.b16 %v465
    %v1605 = vunpack.c.h.b16 %v465
    %v1606 = vunpack.c.l.b16 %v466
    %v1607 = vunpack.c.h.b16 %v466
    %v1608 = vunpack.c.l.b16 %v467
    %v1609 = vunpack.c.h.b16 %v467
    %v1610 = vunpack.c.l.b16 %v468
    %v1611 = vunpack.c.h.b16 %v468
    %v1612 = vunpack.c.l.b16 %v469
    %v1613 = vunpack.c.h.b16 %v469
    %v1614 = vunpack.c.l.b16 %v470
    %v1615 = vunpack.c.h.b16 %v470
    %v1616 = vunpack.c.l.b16 %v471
    %v1617 = vunpack.c.h.b16 %v471
    %v1618 = vunpack.c.l.b16 %v472
    %v1619 = vunpack.c.h.b16 %v472
    %v1620 = vunpack.c.l.b16 %v473
    %v1621 = vunpack.c.h.b16 %v473
    %v1622 = vunpack.c.l.b16 %v474
    %v1623 = vunpack.c.h.b16 %v474
    %v1624 = vunpack.c.l.b16 %v475
    %v1625 = vunpack.c.h.b16 %v475
    %v1626 = vunpack.c.l.b16 %v476
    %v1627 = vunpack.c.h.b16 %v476
    %v1628 = vunpack.c.l.b16 %v477
    %v1629 = vunpack.c.h.b16 %v477
    %v1630 = vunpack.c.l.b16 %v478
    %v1631 = vunpack.c.h.b16 %v478
    %v1632 = vunpack.c.l.b16 %v479
    %v1633 = vunpack.c.h.b16 %v479
    %v1634 = vunpack.c.l.b16 %v480
    %v1635 = vunpack.c.h.b16 %v480
    %v1636 = vunpack.c.l.b16 %v481
    %v1637 = vunpack.c.h.b16 %v481
    %v1638 = vunpack.c.l.b16 %v482
    %v1639 = vunpack.c.h.b16 %v482
    %v1640 = vunpack.c.l.b16 %v483
    %v1641 = vunpack.c.h.b16 %v483
    %v1642 = vunpack.c.l.b16 %v484
    %v1643 = vunpack.c.h.b16 %v484
    %v1644 = vunpack.c.l.b16 %v485
    %v1645 = vunpack.c.h.b16 %v485
    %v1646 = vunpack.c.l.b16 %v486
    %v1647 = vunpack.c.h.b16 %v486
    %v1648 = vunpack.c.l.b16 %v487
    %v1649 = vunpack.c.h.b16 %v487
    %v1650 = vunpack.c.l.b16 %v488
    %v1651 = vunpack.c.h.b16 %v488
    %v1652 = vunpack.c.l.b16 %v489
    %v1653 = vunpack.c.h.b16 %v489
    %v1654 = vunpack.c.l.b16 %v490
    %v1655 = vunpack.c.h.b16 %v490
    %v1656 = vunpack.c.l.b16 %v491
    %v1657 = vunpack.c.h.b16 %v491
    %v1658 = vunpack.c.l.b16 %v492
    %v1659 = vunpack.c.h.b16 %v492
    %v1660 = vunpack.c.l.b16 %v493
    %v1661 = vunpack.c.h.b16 %v493
    %v1662 = vunpack.c.l.b16 %v494
    %v1663 = vunpack.c.h.b16 %v494
    %v1664 = vunpack.c.l.b16 %v495
    %v1665 = vunpack.c.h.b16 %v495
    %v1666 = vunpack.c.l.b16 %v496
    %v1667 = vunpack.c.h.b16 %v496
    %v1668 = vunpack.c.l.b16 %v497
    %v1669 = vunpack.c.h.b16 %v497
    %v1670 = vunpack.c.l.b16 %v498
    %v1671 = vunpack.c.h.b16 %v498
    %v1672 = vunpack.c.l.b16 %v499
    %v1673 = vunpack.c.h.b16 %v499
    %v1674 = vunpack.c.l.b16 %v500
    %v1675 = vunpack.c.h.b16 %v500
    %v1676 = vunpack.c.l.b16 %v501
    %v1677 = vunpack.c.h.b16 %v501
    %v1678 = vunpack.c.l.b16 %v502
    %v1679 = vunpack.c.h.b16 %v502
    %v1680 = vunpack.c.l.b16 %v503
    %v1681 = vunpack.c.h.b16 %v503
    %v1682 = vunpack.c.l.b16 %v504
    %v1683 = vunpack.c.h.b16 %v504
    %v1684 = vunpack.c.l.b16 %v505
    %v1685 = vunpack.c.h.b16 %v505
    %v1686 = vunpack.c.l.b16 %v506
    %v1687 = vunpack.c.h.b16 %v506
    %v1688 = vunpack.c.l.b16 %v507
    %v1689 = vunpack.c.h.b16 %v507
    %v1690 = vunpack.c.l.b16 %v508
    %v1691 = vunpack.c.h.b16 %v508
    %v1692 = vunpack.c.l.b16 %v509
    %v1693 = vunpack.c.h.b16 %v509
    %v1694 = vunpack.c.l.b16 %v510
    %v1695 = vunpack.c.h.b16 %v510
    %v1696 = vunpack.c.l.b16 %v511
    %v1697 = vunpack.c.h.b16 %v511
    %v1698 = vunpack.c.l.b16 %v512
    %v1699 = vunpack.c.h.b16 %v512
    %v1700 = vunpack.c.l.b16 %v513
    %v1701 = vunpack.c.h.b16 %v513
    %v1702 = vunpack.c.l.b16 %v514
    %v1703 = vunpack.c.h.b16 %v514
    %v1704 = vunpack.c.l.b16 %v515
    %v1705 = vunpack.c.h.b16 %v515
    %v1706 = vunpack.c.l.b16 %v516
    %v1707 = vunpack.c.h.b16 %v516
    %v1708 = vunpack.c.l.b16 %v517
    %v1709 = vunpack.c.h.b16 %v517
    %v1710 = vunpack.c.l.b16 %v518
    %v1711 = vunpack.c.h.b16 %v518
    %v1712 = vunpack.c.l.b16 %v519
    %v1713 = vunpack.c.h.b16 %v519
    %v1714 = vunpack.c.l.b16 %v520
    %v1715 = vunpack.c.h.b16 %v520
    %v1716 = vunpack.c.l.b16 %v521
    %v1717 = vunpack.c.h.b16 %v521
    %v1718 = vunpack.c.l.b16 %v522
    %v1719 = vunpack.c.h.b16 %v522
    %v1720 = vunpack.c.l.b16 %v523
    %v1721 = vunpack.c.h.b16 %v523
    %v1722 = vunpack.c.l.b16 %v524
    %v1723 = vunpack.c.h.b16 %v524
    %v1724 = vunpack.c.l.b16 %v525
    %v1725 = vunpack.c.h.b16 %v525
    %v1726 = vunpack.c.l.b16 %v526
    %v1727 = vunpack.c.h.b16 %v526
    %v1728 = vunpack.c.l.b16 %v527
    %v1729 = vunpack.c.h.b16 %v527
    %v1730 = vunpack.c.l.b16 %v528
    %v1731 = vunpack.c.h.b16 %v528
    %v1732 = vunpack.c.l.b16 %v529
    %v1733 = vunpack.c.h.b16 %v529
    %v1734 = vunpack.c.l.b16 %v530
    %v1735 = vunpack.c.h.b16 %v530
    %v1736 = vunpack.c.l.b16 %v531
    %v1737 = vunpack.c.h.b16 %v531
    %v1738 = vunpack.c.l.b16 %v532
    %v1739 = vunpack.c.h.b16 %v532
    %v1740 = vunpack.c.l.b16 %v533
    %v1741 = vunpack.c.h.b16 %v533
    %v1742 = vunpack.c.l.b16 %v534
    %v1743 = vunpack.c.h.b16 %v534
    %v1744 = vunpack.c.l.b16 %v535
    %v1745 = vunpack.c.h.b16 %v535
    %v1746 = vunpack.c.l.b16 %v536
    %v1747 = vunpack.c.h.b16 %v536
    %v1748 = vunpack.c.l.b16 %v537
    %v1749 = vunpack.c.h.b16 %v537
    %v1750 = vunpack.c.l.b16 %v538
    %v1751 = vunpack.c.h.b16 %v538
    %v1752 = vunpack.c.l.b16 %v539
    %v1753 = vunpack.c.h.b16 %v539
    %v1754 = vunpack.c.l.b16 %v540
    %v1755 = vunpack.c.h.b16 %v540
    %v1756 = vunpack.c.l.b16 %v541
    %v1757 = vunpack.c.h.b16 %v541
    %v1758 = vunpack.c.l.b16 %v542
    %v1759 = vunpack.c.h.b16 %v542
    %v1760 = vunpack.c.l.b16 %v543
    %v1761 = vunpack.c.h.b16 %v543
    %v1762 = vunpack.c.l.b16 %v544
    %v1763 = vunpack.c.h.b16 %v544
    %v1764 = vunpack.c.l.b16 %v545
    %v1765 = vunpack.c.h.b16 %v545
    %v1766 = vunpack.c.l.b16 %v546
    %v1767 = vunpack.c.h.b16 %v546
    %v1768 = vunpack.c.l.b16 %v547
    %v1769 = vunpack.c.h.b16 %v547
    %v1770 = vunpack.c.l.b16 %v548
    %v1771 = vunpack.c.h.b16 %v548
    %v1772 = vunpack.c.l.b16 %v549
    %v1773 = vunpack.c.h.b16 %v549
    %v1774 = vunpack.c.l.b16 %v550
    %v1775 = vunpack.c.h.b16 %v550
    %v1776 = vunpack.c.l.b16 %v551
    %v1777 = vunpack.c.h.b16 %v551
    %v1778 = vunpack.c.l.b16 %v552
    %v1779 = vunpack.c.h.b16 %v552
    %v1780 = vunpack.c.l.b16 %v553
    %v1781 = vunpack.c.h.b16 %v553
    %v1782 = vunpack.c.l.b16 %v554
    %v1783 = vunpack.c.h.b16 %v554
    %v1784 = vunpack.c.l.b16 %v555
    %v1785 = vunpack.c.h.b16 %v555
    %v1786 = vunpack.c.l.b16 %v556
    %v1787 = vunpack.c.h.b16 %v556
    %v1788 = vunpack.c.l.b16 %v557
    %v1789 = vunpack.c.h.b16 %v557
    %v1790 = vunpack.c.l.b16 %v558
    %v1791 = vunpack.c.h.b16 %v558
    %v1792 = vunpack.c.l.b16 %v559
    %v1793 = vunpack.c.h.b16 %v559
    %v1794 = vunpack.c.l.b16 %v560
    %v1795 = vunpack.c.h.b16 %v560
    %v1796 = vunpack.c.l.b16 %v561
    %v1797 = vunpack.c.h.b16 %v561
    %v1798 = vunpack.c.l.b16 %v562
    %v1799 = vunpack.c.h.b16 %v562
    %v1800 = vunpack.c.l.b16 %v563
    %v1801 = vunpack.c.h.b16 %v563
    %v1802 = vunpack.c.l.b16 %v564
    %v1803 = vunpack.c.h.b16 %v564
    %v1804 = vunpack.c.l.b16 %v565
    %v1805 = vunpack.c.h.b16 %v565
    %v1806 = vunpack.c.l.b16 %v566
    %v1807 = vunpack.c.h.b16 %v566
    %v1808 = vunpack.c.l.b16 %v567
    %v1809 = vunpack.c.h.b16 %v567
    %v1810 = vunpack.c.l.b16 %v568
    %v1811 = vunpack.c.h.b16 %v568
    %v1812 = vunpack.c.l.b16 %v569
    %v1813 = vunpack.c.h.b16 %v569
    %v1814 = vunpack.c.l.b16 %v570
    %v1815 = vunpack.c.h.b16 %v570
    %v1816 = vunpack.c.l.b16 %v571
    %v1817 = vunpack.c.h.b16 %v571
    %v1818 = vunpack.c.l.b16 %v572
    %v1819 = vunpack.c.h.b16 %v572
    %v1820 = vunpack.c.l.b16 %v573
    %v1821 = vunpack.c.h.b16 %v573
    %v1822 = vunpack.c.l.b16 %v574
    %v1823 = vunpack.c.h.b16 %v574
    %v1824 = vunpack.c.l.b16 %v575
    %v1825 = vunpack.c.h.b16 %v575
    %v1826 = vunpack.c.l.b16 %v576
    %v1827 = vunpack.c.h.b16 %v576
    %v1828 = vunpack.c.l.b16 %v577
    %v1829 = vunpack.c.h.b16 %v577
    %v1830 = vunpack.c.l.b16 %v578
    %v1831 = vunpack.c.h.b16 %v578
    %v1832 = vunpack.c.l.b16 %v579
    %v1833 = vunpack.c.h.b16 %v579
    %v1834 = vunpack.c.l.b16 %v580
    %v1835 = vunpack.c.h.b16 %v580
    %v1836 = vunpack.c.l.b16 %v581
    %v1837 = vunpack.c.h.b16 %v581
    %v1838 = vunpack.c.l.b16 %v582
    %v1839 = vunpack.c.h.b16 %v582
    %v1840 = vunpack.c.l.b16 %v583
    %v1841 = vunpack.c.h.b16 %v583
    %v1842 = vunpack.c.l.b16 %v584
    %v1843 = vunpack.c.h.b16 %v584
    %v1844 = vunpack.c.l.b16 %v585
    %v1845 = vunpack.c.h.b16 %v585
    %v1846 = vunpack.c.l.b16 %v586
    %v1847 = vunpack.c.h.b16 %v586
    %v1848 = vunpack.c.l.b16 %v587
    %v1849 = vunpack.c.h.b16 %v587
    %v1850 = vunpack.c.l.b16 %v588
    %v1851 = vunpack.c.h.b16 %v588
    %v1852 = vunpack.c.l.b16 %v589
    %v1853 = vunpack.c.h.b16 %v589
    %v1854 = vunpack.c.l.b16 %v590
    %v1855 = vunpack.c.h.b16 %v590
    %v1856 = vunpack.c.l.b16 %v591
    %v1857 = vunpack.c.h.b16 %v591
    %v1858 = vunpack.c.l.b16 %v592
    %v1859 = vunpack.c.h.b16 %v592
    %v1860 = vunpack.c.l.b16 %v593
    %v1861 = vunpack.c.h.b16 %v593
    %v1862 = vunpack.c.l.b16 %v594
    %v1863 = vunpack.c.h.b16 %v594
    %v1864 = vunpack.c.l.b16 %v595
    %v1865 = vunpack.c.h.b16 %v595
    %v1866 = vunpack.c.l.b16 %v596
    %v1867 = vunpack.c.h.b16 %v596
    %v1868 = vunpack.c.l.b16 %v597
    %v1869 = vunpack.c.h.b16 %v597
    %v1870 = vunpack.c.l.b16 %v598
    %v1871 = vunpack.c.h.b16 %v598
    %v1872 = vunpack.c.l.b16 %v599
    %v1873 = vunpack.c.h.b16 %v599
    %v1874 = vunpack.c.l.b16 %v600
    %v1875 = vunpack.c.h.b16 %v600
    %v1876 = vunpack.c.l.b16 %v601
    %v1877 = vunpack.c.h.b16 %v601
    %v1878 = vunpack.c.l.b16 %v602
    %v1879 = vunpack.c.h.b16 %v602
    %v1880 = vunpack.c.l.b16 %v603
    %v1881 = vunpack.c.h.b16 %v603
    %v1882 = vunpack.c.l.b16 %v604
    %v1883 = vunpack.c.h.b16 %v604
    %v1884 = vunpack.c.l.b16 %v605
    %v1885 = vunpack.c.h.b16 %v605
    %v1886 = vunpack.c.l.b16 %v606
    %v1887 = vunpack.c.h.b16 %v606
    %v1888 = vunpack.c.l.b16 %v607
    %v1889 = vunpack.c.h.b16 %v607
    %v1890 = vunpack.c.l.b16 %v608
    %v1891 = vunpack.c.h.b16 %v608
    %v1892 = vunpack.c.l.b16 %v609
    %v1893 = vunpack.c.h.b16 %v609
    %v1894 = vunpack.c.l.b16 %v610
    %v1895 = vunpack.c.h.b16 %v610
    %v1896 = vunpack.c.l.b16 %v611
    %v1897 = vunpack.c.h.b16 %v611
    %v1898 = vunpack.c.l.b16 %v612
    %v1899 = vunpack.c.h.b16 %v612
    %v1900 = vunpack.c.l.b16 %v613
    %v1901 = vunpack.c.h.b16 %v613
    %v1902 = vunpack.c.l.b16 %v614
    %v1903 = vunpack.c.h.b16 %v614
    %v1904 = vunpack.c.l.b16 %v615
    %v1905 = vunpack.c.h.b16 %v615
    %v1906 = vunpack.c.l.b16 %v616
    %v1907 = vunpack.c.h.b16 %v616
    %v1908 = vunpack.c.l.b16 %v617
    %v1909 = vunpack.c.h.b16 %v617
    %v1910 = vunpack.c.l.b16 %v618
    %v1911 = vunpack.c.h.b16 %v618
    %v1912 = vunpack.c.l.b16 %v619
    %v1913 = vunpack.c.h.b16 %v619
    %v1914 = vunpack.c.l.b16 %v620
    %v1915 = vunpack.c.h.b16 %v620
    %v1916 = vunpack.c.l.b16 %v621
    %v1917 = vunpack.c.h.b16 %v621
    %v1918 = vunpack.c.l.b16 %v622
    %v1919 = vunpack.c.h.b16 %v622
    %v1920 = vunpack.c.l.b16 %v623
    %v1921 = vunpack.c.h.b16 %v623
    %v1922 = vunpack.c.l.b16 %v624
    %v1923 = vunpack.c.h.b16 %v624
    %v1924 = vunpack.c.l.b16 %v625
    %v1925 = vunpack.c.h.b16 %v625
    %v1926 = vunpack.c.l.b16 %v626
    %v1927 = vunpack.c.h.b16 %v626
    %v1928 = vunpack.c.l.b16 %v627
    %v1929 = vunpack.c.h.b16 %v627
    %v1930 = vunpack.c.l.b16 %v628
    %v1931 = vunpack.c.h.b16 %v628
    %v1932 = vunpack.c.l.b16 %v629
    %v1933 = vunpack.c.h.b16 %v629
    %v1934 = vunpack.c.l.b16 %v630
    %v1935 = vunpack.c.h.b16 %v630
    %v1936 = vunpack.c.l.b16 %v631
    %v1937 = vunpack.c.h.b16 %v631
    %v1938 = vunpack.c.l.b16 %v632
    %v1939 = vunpack.c.h.b16 %v632
    %v1940 = vunpack.c.l.b16 %v633
    %v1941 = vunpack.c.h.b16 %v633
    %v1942 = vunpack.c.l.b16 %v634
    %v1943 = vunpack.c.h.b16 %v634
    %v1944 = vunpack.c.l.b16 %v635
    %v1945 = vunpack.c.h.b16 %v635
    %v1946 = vunpack.c.l.b16 %v636
    %v1947 = vunpack.c.h.b16 %v636
    %v1948 = vunpack.c.l.b16 %v637
    %v1949 = vunpack.c.h.b16 %v637
    %v1950 = vunpack.c.l.b16 %v638
    %v1951 = vunpack.c.h.b16 %v638
    %v1952 = vunpack.c.l.b16 %v639
    %v1953 = vunpack.c.h.b16 %v639
    %v1954 = vunpack.c.l.b16 %v640
    %v1955 = vunpack.c.h.b16 %v640
    %v1956 = vunpack.c.l.b16 %v641
    %v1957 = vunpack.c.h.b16 %v641
    %v1958 = vunpack.c.l.b16 %v642
    %v1959 = vunpack.c.h.b16 %v642
    %v1960 = vunpack.c.l.b16 %v643
    %v1961 = vunpack.c.h.b16 %v643
    %v1962 = vunpack.c.l.b16 %v644
    %v1963 = vunpack.c.h.b16 %v644
    %v1964 = vunpack.c.l.b16 %v645
    %v1965 = vunpack.c.h.b16 %v645
    %v1966 = vunpack.c.l.b16 %v646
    %v1967 = vunpack.c.h.b16 %v646
    %v1968 = vunpack.c.l.b16 %v647
    %v1969 = vunpack.c.h.b16 %v647
    %v1970 = vunpack.c.l.b16 %v648
    %v1971 = vunpack.c.h.b16 %v648
    %v1972 = vunpack.c.l.b16 %v649
    %v1973 = vunpack.c.h.b16 %v649
    %v1974 = vunpack.c.l.b16 %v650
    %v1975 = vunpack.c.h.b16 %v650
    %v1976 = vunpack.c.l.b16 %v651
    %v1977 = vunpack.c.h.b16 %v651
    %v1978 = vunpack.c.l.b16 %v652
    %v1979 = vunpack.c.h.b16 %v652
    %v1980 = vunpack.c.l.b16 %v653
    %v1981 = vunpack.c.h.b16 %v653
    %v1982 = vunpack.c.l.b16 %v654
    %v1983 = vunpack.c.h.b16 %v654
    %v1984 = vunpack.c.l.b16 %v655
    %v1985 = vunpack.c.h.b16 %v655
    %v1986 = vunpack.c.l.b16 %v656
    %v1987 = vunpack.c.h.b16 %v656
    %v1988 = vunpack.c.l.b16 %v657
    %v1989 = vunpack.c.h.b16 %v657
    %v1990 = vunpack.c.l.b16 %v658
    %v1991 = vunpack.c.h.b16 %v658
    %v1992 = vunpack.c.l.b16 %v659
    %v1993 = vunpack.c.h.b16 %v659
    %v1994 = vunpack.c.l.b16 %v660
    %v1995 = vunpack.c.h.b16 %v660
    %v1996 = vunpack.c.l.b16 %v661
    %v1997 = vunpack.c.h.b16 %v661
    %v1998 = vunpack.c.l.b16 %v662
    %v1999 = vunpack.c.h.b16 %v662
    %v2000 = vunpack.c.l.b16 %v663
    %v2001 = vunpack.c.h.b16 %v663
    %v2002 = vunpack.c.l.b16 %v664
    %v2003 = vunpack.c.h.b16 %v664
    %v2004 = vunpack.c.l.b16 %v665
    %v2005 = vunpack.c.h.b16 %v665
    %v2006 = vunpack.c.l.b16 %v666
    %v2007 = vunpack.c.h.b16 %v666
    %v2008 = vunpack.c.l.b16 %v667
    %v2009 = vunpack.c.h.b16 %v667
    %v2010 = vunpack.c.l.b16 %v668
    %v2011 = vunpack.c.h.b16 %v668
    %v2012 = vunpack.c.l.b16 %v669
    %v2013 = vunpack.c.h.b16 %v669
    %v2014 = vunpack.c.l.b16 %v670
    %v2015 = vunpack.c.h.b16 %v670
    %v2016 = vunpack.c.l.b16 %v671
    %v2017 = vunpack.c.h.b16 %v671
    %v2018 = vunpack.c.l.b16 %v672
    %v2019 = vunpack.c.h.b16 %v672
    %v2020 = vunpack.c.l.b16 %v673
    %v2021 = vunpack.c.h.b16 %v673
    %v2022 = vunpack.c.l.b16 %v674
    %v2023 = vunpack.c.h.b16 %v674
    %v2024 = vunpack.c.l.b16 %v675
    %v2025 = vunpack.c.h.b16 %v675
    %v2026 = vunpack.c.l.b16 %v676
    %v2027 = vunpack.c.h.b16 %v676
    %v2028 = vunpack.c.l.b16 %v677
    %v2029 = vunpack.c.h.b16 %v677
    %v2030 = vunpack.c.l.b16 %v678
    %v2031 = vunpack.c.h.b16 %v678
    %v2032 = vunpack.c.l.b16 %v679
    %v2033 = vunpack.c.h.b16 %v679
    %v2034 = vunpack.c.l.b16 %v680
    %v2035 = vunpack.c.h.b16 %v680
    %v2036 = vunpack.c.l.b16 %v681
    %v2037 = vunpack.c.h.b16 %v681
    %v2038 = vunpack.c.l.b16 %v682
    %v2039 = vunpack.c.h.b16 %v682
    %v2040 = vunpack.c.l.b16 %v683
    %v2041 = vunpack.c.h.b16 %v683
    %v2042 = vunpack.c.l.b16 %v684
    %v2043 = vunpack.c.h.b16 %v684
    %v2044 = vunpack.c.l.b16 %v685
    %v2045 = vunpack.c.h.b16 %v685
    %v2046 = vunpack.c.l.b16 %v686
    %v2047 = vunpack.c.h.b16 %v686
    %v2048 = vunpack.c.l.b16 %v687
    %v2049 = vunpack.c.h.b16 %v687
    %v2050 = vunpack.c.l.b16 %v688
    %v2051 = vunpack.c.h.b16 %v688
    %v2052 = vunpack.c.l.b16 %v689
    %v2053 = vunpack.c.h.b16 %v689
    %v2054 = vunpack.c.l.b16 %v690
    %v2055 = vunpack.c.h.b16 %v690
    %v2056 = vunpack.c.l.b16 %v691
    %v2057 = vunpack.c.h.b16 %v691
    %v2058 = vunpack.c.l.b16 %v692
    %v2059 = vunpack.c.h.b16 %v692
    %v2060 = vunpack.c.l.b16 %v693
    %v2061 = vunpack.c.h.b16 %v693
    %v2062 = vunpack.c.l.b16 %v694
    %v2063 = vunpack.c.h.b16 %v694
    %v2064 = vunpack.c.l.b16 %v695
    %v2065 = vunpack.c.h.b16 %v695
    %v2066 = vunpack.c.l.b16 %v696
    %v2067 = vunpack.c.h.b16 %v696
    %v2068 = vunpack.c.l.b16 %v697
    %v2069 = vunpack.c.h.b16 %v697
    %v2070 = vunpack.c.l.b16 %v698
    %v2071 = vunpack.c.h.b16 %v698
    %v2072 = vunpack.c.l.b16 %v699
    %v2073 = vunpack.c.h.b16 %v699
    %v2074 = vunpack.c.l.b16 %v700
    %v2075 = vunpack.c.h.b16 %v700
    %v2076 = vunpack.c.l.b16 %v701
    %v2077 = vunpack.c.h.b16 %v701
    %v2078 = vunpack.c.l.b16 %v702
    %v2079 = vunpack.c.h.b16 %v702
    %v2080 = vunpack.c.l.b16 %v703
    %v2081 = vunpack.c.h.b16 %v703
    %v2082 = vunpack.c.l.b16 %v704
    %v2083 = vunpack.c.h.b16 %v704
    %v2084 = vunpack.c.l.b16 %v705
    %v2085 = vunpack.c.h.b16 %v705
    %v2086 = vunpack.c.l.b16 %v706
    %v2087 = vunpack.c.h.b16 %v706
    %v2088 = vunpack.c.l.b16 %v707
    %v2089 = vunpack.c.h.b16 %v707
    %v2090 = vunpack.c.l.b16 %v708
    %v2091 = vunpack.c.h.b16 %v708
    %v2092 = vunpack.c.l.b16 %v709
    %v2093 = vunpack.c.h.b16 %v709
    %v2094 = vunpack.c.l.b16 %v710
    %v2095 = vunpack.c.h.b16 %v710
    %v2096 = vunpack.c.l.b16 %v711
    %v2097 = vunpack.c.h.b16 %v711
    %v2098 = vunpack.c.l.b16 %v712
    %v2099 = vunpack.c.h.b16 %v712
    %v2100 = vunpack.c.l.b16 %v713
    %v2101 = vunpack.c.h.b16 %v713
    %v2102 = vunpack.c.l.b16 %v714
    %v2103 = vunpack.c.h.b16 %v714
    %v2104 = vunpack.c.l.b16 %v715
    %v2105 = vunpack.c.h.b16 %v715
    %v2106 = vunpack.c.l.b16 %v716
    %v2107 = vunpack.c.h.b16 %v716
    %v2108 = vunpack.c.l.b16 %v717
    %v2109 = vunpack.c.h.b16 %v717
    %v2110 = vunpack.c.l.b16 %v718
    %v2111 = vunpack.c.h.b16 %v718
    %v2112 = vunpack.c.l.b16 %v719
    %v2113 = vunpack.c.h.b16 %v719
    %v2114 = vunpack.c.l.b16 %v720
    %v2115 = vunpack.c.h.b16 %v720
    %v2116 = vunpack.c.l.b16 %v721
    %v2117 = vunpack.c.h.b16 %v721
    %v2118 = vunpack.c.l.b16 %v722
    %v2119 = vunpack.c.h.b16 %v722
    %v2120 = vunpack.c.l.b16 %v723
    %v2121 = vunpack.c.h.b16 %v723
    %v2122 = vunpack.c.l.b16 %v724
    %v2123 = vunpack.c.h.b16 %v724
    %v2124 = vunpack.c.l.b16 %v725
    %v2125 = vunpack.c.h.b16 %v725
    %v2126 = vunpack.c.l.b16 %v726
    %v2127 = vunpack.c.h.b16 %v726
    %v2128 = vunpack.c.l.b16 %v727
    %v2129 = vunpack.c.h.b16 %v727
    %v2130 = vunpack.c.l.b16 %v728
    %v2131 = vunpack.c.h.b16 %v728
    %v2132 = vunpack.c.l.b16 %v729
    %v2133 = vunpack.c.h.b16 %v729
    %v2134 = vunpack.c.l.b16 %v730
    %v2135 = vunpack.c.h.b16 %v730
    %v2136 = vunpack.c.l.b16 %v731
    %v2137 = vunpack.c.h.b16 %v731
    %v2138 = vunpack.c.l.b16 %v732
    %v2139 = vunpack.c.h.b16 %v732
    %v2140 = vunpack.c.l.b16 %v733
    %v2141 = vunpack.c.h.b16 %v733
    %v2142 = vunpack.c.l.b16 %v734
    %v2143 = vunpack.c.h.b16 %v734
    %v2144 = vunpack.c.l.b16 %v735
    %v2145 = vunpack.c.h.b16 %v735
    %v2146 = vunpack.c.l.b16 %v736
    %v2147 = vunpack.c.h.b16 %v736
    %v2148 = vunpack.c.l.b16 %v737
    %v2149 = vunpack.c.h.b16 %v737
    %v2150 = vunpack.c.l.b16 %v738
    %v2151 = vunpack.c.h.b16 %v738
    %v2152 = vunpack.c.l.b16 %v739
    %v2153 = vunpack.c.h.b16 %v739
    %v2154 = vunpack.c.l.b16 %v740
    %v2155 = vunpack.c.h.b16 %v740
    %v2156 = vunpack.c.l.b16 %v741
    %v2157 = vunpack.c.h.b16 %v741
    %v2158 = vunpack.c.l.b16 %v742
    %v2159 = vunpack.c.h.b16 %v742
    %v2160 = vunpack.c.l.b16 %v743
    %v2161 = vunpack.c.h.b16 %v743
    %v2162 = vunpack.c.l.b16 %v744
    %v2163 = vunpack.c.h.b16 %v744
    %v2164 = vunpack.c.l.b16 %v745
    %v2165 = vunpack.c.h.b16 %v745
    %v2166 = vunpack.c.l.b16 %v746
    %v2167 = vunpack.c.h.b16 %v746
    %v2168 = vunpack.c.l.b16 %v747
    %v2169 = vunpack.c.h.b16 %v747
    %v2170 = vpack.c.b16 %v1282, %v1274
    %v2171 = vpack.c.b16 %v1283, %v1275
    %v2172 = vpack.c.b16 %v1284, %v1276
    %v2173 = vpack.c.b16 %v1285, %v1277
    %v2174 = vpack.c.b16 %v1286, %v1278
    %v2175 = vpack.c.b16 %v1287, %v1279
    %v2176 = vpack.c.b16 %v1288, %v1280
    %v2177 = vpack.c.b16 %v1289, %v1281
    %v2178 = vpack.c.b16 %v1298, %v1290
    %v2179 = vpack.c.b16 %v1299, %v1291
    %v2180 = vpack.c.b16 %v1300, %v1292
    %v2181 = vpack.c.b16 %v1301, %v1293
    %v2182 = vpack.c.b16 %v1302, %v1294
    %v2183 = vpack.c.b16 %v1303, %v1295
    %v2184 = vpack.c.b16 %v1304, %v1296
    %v2185 = vpack.c.b16 %v1305, %v1297
    %v2186 = vpack.c.b16 %v1314, %v1306
    %v2187 = vpack.c.b16 %v1315, %v1307
    %v2188 = vpack.c.b16 %v1316, %v1308
    %v2189 = vpack.c.b16 %v1317, %v1309
    %v2190 = vpack.c.b16 %v1318, %v1310
    %v2191 = vpack.c.b16 %v1319, %v1311
    %v2192 = vpack.c.b16 %v1320, %v1312
    %v2193 = vpack.c.b16 %v1321, %v1313
    %v2194 = vpack.c.b16 %v1330, %v1322
    %v2195 = vpack.c.b16 %v1331, %v1323
    %v2196 = vpack.c.b16 %v1332, %v1324
    %v2197 = vpack.c.b16 %v1333, %v1325
    %v2198 = vpack.c.b16 %v1334, %v1326
    %v2199 = vpack.c.b16 %v1335, %v1327
    %v2200 = vpack.c.b16 %v1336, %v1328
    %v2201 = vpack.c.b16 %v1337, %v1329
    %v2202 = vpack.c.b16 %v1346, %v1338
    %v2203 = vpack.c.b16 %v1347, %v1339
    %v2204 = vpack.c.b16 %v1348, %v1340
    %v2205 = vpack.c.b16 %v1349, %v1341
    %v2206 = vpack.c.b16 %v1350, %v1342
    %v2207 = vpack.c.b16 %v1351, %v1343
    %v2208 = vpack.c.b16 %v1352, %v1344
    %v2209 = vpack.c.b16 %v1353, %v1345
    %v2210 = vpack.c.b16 %v1362, %v1354
    %v2211 = vpack.c.b16 %v1363, %v1355
    %v2212 = vpack.c.b16 %v1364, %v1356
    %v2213 = vpack.c.b16 %v1365, %v1357
    %v2214 = vpack.c.b16 %v1366, %v1358
    %v2215 = vpack.c.b16 %v1367, %v1359
    %v2216 = vpack.c.b16 %v1368, %v1360
    %v2217 = vpack.c.b16 %v1369, %v1361
    %v2218 = vpack.c.b16 %v1378, %v1370
    %v2219 = vpack.c.b16 %v1379, %v1371
    %v2220 = vpack.c.b16 %v1380, %v1372
    %v2221 = vpack.c.b16 %v1381, %v1373
    %v2222 = vpack.c.b16 %v1382, %v1374
    %v2223 = vpack.c.b16 %v1383, %v1375
    %v2224 = vpack.c.b16 %v1384, %v1376
    %v2225 = vpack.c.b16 %v1385, %v1377
    %v2226 = vpack.c.b16 %v1394, %v1386
    %v2227 = vpack.c.b16 %v1395, %v1387
    %v2228 = vpack.c.b16 %v1396, %v1388
    %v2229 = vpack.c.b16 %v1397, %v1389
    %v2230 = vpack.c.b16 %v1398, %v1390
    %v2231 = vpack.c.b16 %v1399, %v1391
    %v2232 = vpack.c.b16 %v1400, %v1392
    %v2233 = vpack.c.b16 %v1401, %v1393
    %v2234 = vpack.c.b16 %v1410, %v1402
    %v2235 = vpack.c.b16 %v1411, %v1403
    %v2236 = vpack.c.b16 %v1412, %v1404
    %v2237 = vpack.c.b16 %v1413, %v1405
    %v2238 = vpack.c.b16 %v1414, %v1406
    %v2239 = vpack.c.b16 %v1415, %v1407
    %v2240 = vpack.c.b16 %v1416, %v1408
    %v2241 = vpack.c.b16 %v1417, %v1409
    %v2242 = vpack.c.b16 %v1426, %v1418
    %v2243 = vpack.c.b16 %v1427, %v1419
    %v2244 = vpack.c.b16 %v1428, %v1420
    %v2245 = vpack.c.b16 %v1429, %v1421
    %v2246 = vpack.c.b16 %v1430, %v1422
    %v2247 = vpack.c.b16 %v1431, %v1423
    %v2248 = vpack.c.b16 %v1432, %v1424
    %v2249 = vpack.c.b16 %v1433, %v1425
    %v2250 = vpack.c.b16 %v1442, %v1434
    %v2251 = vpack.c.b16 %v1443, %v1435
    %v2252 = vpack.c.b16 %v1444, %v1436
    %v2253 = vpack.c.b16 %v1445, %v1437
    %v2254 = vpack.c.b16 %v1446, %v1438
    %v2255 = vpack.c.b16 %v1447, %v1439
    %v2256 = vpack.c.b16 %v1448, %v1440
    %v2257 = vpack.c.b16 %v1449, %v1441
    %v2258 = vpack.c.b16 %v1458, %v1450
    %v2259 = vpack.c.b16 %v1459, %v1451
    %v2260 = vpack.c.b16 %v1460, %v1452
    %v2261 = vpack.c.b16 %v1461, %v1453
    %v2262 = vpack.c.b16 %v1462, %v1454
    %v2263 = vpack.c.b16 %v1463, %v1455
    %v2264 = vpack.c.b16 %v1464, %v1456
    %v2265 = vpack.c.b16 %v1465, %v1457
    %v2266 = vpack.c.b16 %v1474, %v1466
    %v2267 = vpack.c.b16 %v1475, %v1467
    %v2268 = vpack.c.b16 %v1476, %v1468
    %v2269 = vpack.c.b16 %v1477, %v1469
    %v2270 = vpack.c.b16 %v1478, %v1470
    %v2271 = vpack.c.b16 %v1479, %v1471
    %v2272 = vpack.c.b16 %v1480, %v1472
    %v2273 = vpack.c.b16 %v1481, %v1473
    %v2274 = vpack.c.b16 %v1490, %v1482
    %v2275 = vpack.c.b16 %v1491, %v1483
    %v2276 = vpack.c.b16 %v1492, %v1484
    %v2277 = vpack.c.b16 %v1493, %v1485
    %v2278 = vpack.c.b16 %v1494, %v1486
    %v2279 = vpack.c.b16 %v1495, %v1487
    %v2280 = vpack.c.b16 %v1496, %v1488
    %v2281 = vpack.c.b16 %v1497, %v1489
    %v2282 = vpack.c.b16 %v1506, %v1498
    %v2283 = vpack.c.b16 %v1507, %v1499
    %v2284 = vpack.c.b16 %v1508, %v1500
    %v2285 = vpack.c.b16 %v1509, %v1501
    %v2286 = vpack.c.b16 %v1510, %v1502
    %v2287 = vpack.c.b16 %v1511, %v1503
    %v2288 = vpack.c.b16 %v1512, %v1504
    %v2289 = vpack.c.b16 %v1513, %v1505
    %v2290 = vpack.c.b16 %v1522, %v1514
    %v2291 = vpack.c.b16 %v1523, %v1515
    %v2292 = vpack.c.b16 %v1524, %v1516
    %v2293 = vpack.c.b16 %v1525, %v1517
    %v2294 = vpack.c.b16 %v1526, %v1518
    %v2295 = vpack.c.b16 %v1527, %v1519
    %v2296 = vpack.c.b16 %v1528, %v1520
    %v2297 = vpack.c.b16 %v1529, %v1521
    %v2298 = vpack.c.b16 %v1538, %v1530
    %v2299 = vpack.c.b16 %v1539, %v1531
    %v2300 = vpack.c.b16 %v1540, %v1532
    %v2301 = vpack.c.b16 %v1541, %v1533
    %v2302 = vpack.c.b16 %v1542, %v1534
    %v2303 = vpack.c.b16 %v1543, %v1535
    %v2304 = vpack.c.b16 %v1544, %v1536
    %v2305 = vpack.c.b16 %v1545, %v1537
    %v2306 = vpack.c.b16 %v1554, %v1546
    %v2307 = vpack.c.b16 %v1555, %v1547
    %v2308 = vpack.c.b16 %v1556, %v1548
    %v2309 = vpack.c.b16 %v1557, %v1549
    %v2310 = vpack.c.b16 %v1558, %v1550
    %v2311 = vpack.c.b16 %v1559, %v1551
    %v2312 = vpack.c.b16 %v1560, %v1552
    %v2313 = vpack.c.b16 %v1561, %v1553
    %v2314 = vpack.c.b16 %v1570, %v1562
    %v2315 = vpack.c.b16 %v1571, %v1563
    %v2316 = vpack.c.b16 %v1572, %v1564
    %v2317 = vpack.c.b16 %v1573, %v1565
    %v2318 = vpack.c.b16 %v1574, %v1566
    %v2319 = vpack.c.b16 %v1575, %v1567
    %v2320 = vpack.c.b16 %v1576, %v1568
    %v2321 = vpack.c.b16 %v1577, %v1569
    %v2322 = vpack.c.b16 %v1586, %v1578
    %v2323 = vpack.c.b16 %v1587, %v1579
    %v2324 = vpack.c.b16 %v1588, %v1580
    %v2325 = vpack.c.b16 %v1589, %v1581
    %v2326 = vpack.c.b16 %v1590, %v1582
    %v2327 = vpack.c.b16 %v1591, %v1583
    %v2328 = vpack.c.b16 %v1592, %v1584
    %v2329 = vpack.c.b16 %v1593, %v1585
    %v2330 = vpack.c.b16 %v1602, %v1594
    %v2331 = vpack.c.b16 %v1603, %v1595
    %v2332 = vpack.c.b16 %v1604, %v1596
    %v2333 = vpack.c.b16 %v1605, %v1597
    %v2334 = vpack.c.b16 %v1606, %v1598
    %v2335 = vpack.c.b16 %v1607, %v1599
    %v2336 = vpack.c.b16 %v1608, %v1600
    %v2337 = vpack.c.b16 %v1609, %v1601
    %v2338 = vpack.c.b16 %v1618, %v1610
    %v2339 = vpack.c.b16 %v1619, %v1611
    %v2340 = vpack.c.b16 %v1620, %v1612
    %v2341 = vpack.c.b16 %v1621, %v1613
    %v2342 = vpack.c.b16 %v1622, %v1614
    %v2343 = vpack.c.b16 %v1623, %v1615
    %v2344 = vpack.c.b16 %v1624, %v1616
    %v2345 = vpack.c.b16 %v1625, %v1617
    %v2346 = vpack.c.b16 %v1634, %v1626
    %v2347 = vpack.c.b16 %v1635, %v1627
    %v2348 = vpack.c.b16 %v1636, %v1628
    %v2349 = vpack.c.b16 %v1637, %v1629
    %v2350 = vpack.c.b16 %v1638, %v1630
    %v2351 = vpack.c.b16 %v1639, %v1631
    %v2352 = vpack.c.b16 %v1640, %v1632
    %v2353 = vpack.c.b16 %v1641, %v1633
    %v2354 = vpack.c.b16 %v1650, %v1642
    %v2355 = vpack.c.b16 %v1651, %v1643
    %v2356 = vpack.c.b16 %v1652, %v1644
    %v2357 = vpack.c.b16 %v1653, %v1645
    %v2358 = vpack.c.b16 %v1654, %v1646
    %v2359 = vpack.c.b16 %v1655, %v1647
    %v2360 = vpack.c.b16 %v1656, %v1648
    %v2361 = vpack.c.b16 %v1657, %v1649
    %v2362 = vpack.c.b16 %v1666, %v1658
    %v2363 = vpack.c.b16 %v1667, %v1659
    %v2364 = vpack.c.b16 %v1668, %v1660
    %v2365 = vpack.c.b16 %v1669, %v1661
    %v2366 = vpack.c.b16 %v1670, %v1662
    %v2367 = vpack.c.b16 %v1671, %v1663
    %v2368 = vpack.c.b16 %v1672, %v1664
    %v2369 = vpack.c.b16 %v1673, %v1665
    %v2370 = vpack.c.b16 %v1682, %v1674
    %v2371 = vpack.c.b16 %v1683, %v1675
    %v2372 = vpack.c.b16 %v1684, %v1676
    %v2373 = vpack.c.b16 %v1685, %v1677
    %v2374 = vpack.c.b16 %v1686, %v1678
    %v2375 = vpack.c.b16 %v1687, %v1679
    %v2376 = vpack.c.b16 %v1688, %v1680
    %v2377 = vpack.c.b16 %v1689, %v1681
    %v2378 = vpack.c.b16 %v1698, %v1690
    %v2379 = vpack.c.b16 %v1699, %v1691
    %v2380 = vpack.c.b16 %v1700, %v1692
    %v2381 = vpack.c.b16 %v1701, %v1693
    %v2382 = vpack.c.b16 %v1702, %v1694
    %v2383 = vpack.c.b16 %v1703, %v1695
    %v2384 = vpack.c.b16 %v1704, %v1696
    %v2385 = vpack.c.b16 %v1705, %v1697
    %v2386 = vpack.c.b16 %v1714, %v1706
    %v2387 = vpack.c.b16 %v1715, %v1707
    %v2388 = vpack.c.b16 %v1716, %v1708
    %v2389 = vpack.c.b16 %v1717, %v1709
    %v2390 = vpack.c.b16 %v1718, %v1710
    %v2391 = vpack.c.b16 %v1719, %v1711
    %v2392 = vpack.c.b16 %v1720, %v1712
    %v2393 = vpack.c.b16 %v1721, %v1713
    %v2394 = vpack.c.b16 %v1730, %v1722
    %v2395 = vpack.c.b16 %v1731, %v1723
    %v2396 = vpack.c.b16 %v1732, %v1724
    %v2397 = vpack.c.b16 %v1733, %v1725
    %v2398 = vpack.c.b16 %v1734, %v1726
    %v2399 = vpack.c.b16 %v1735, %v1727
    %v2400 = vpack.c.b16 %v1736, %v1728
    %v2401 = vpack.c.b16 %v1737, %v1729
    %v2402 = vpack.c.b16 %v1746, %v1738
    %v2403 = vpack.c.b16 %v1747, %v1739
    %v2404 = vpack.c.b16 %v1748, %v1740
    %v2405 = vpack.c.b16 %v1749, %v1741
    %v2406 = vpack.c.b16 %v1750, %v1742
    %v2407 = vpack.c.b16 %v1751, %v1743
    %v2408 = vpack.c.b16 %v1752, %v1744
    %v2409 = vpack.c.b16 %v1753, %v1745
    %v2410 = vpack.c.b16 %v1762, %v1754
    %v2411 = vpack.c.b16 %v1763, %v1755
    %v2412 = vpack.c.b16 %v1764, %v1756
    %v2413 = vpack.c.b16 %v1765, %v1757
    %v2414 = vpack.c.b16 %v1766, %v1758
    %v2415 = vpack.c.b16 %v1767, %v1759
    %v2416 = vpack.c.b16 %v1768, %v1760
    %v2417 = vpack.c.b16 %v1769, %v1761
    %v2418 = vpack.c.b16 %v1778, %v1770
    %v2419 = vpack.c.b16 %v1779, %v1771
    %v2420 = vpack.c.b16 %v1780, %v1772
    %v2421 = vpack.c.b16 %v1781, %v1773
    %v2422 = vpack.c.b16 %v1782, %v1774
    %v2423 = vpack.c.b16 %v1783, %v1775
    %v2424 = vpack.c.b16 %v1784, %v1776
    %v2425 = vpack.c.b16 %v1785, %v1777
    %v2426 = vpack.c.b16 %v1794, %v1786
    %v2427 = vpack.c.b16 %v1795, %v1787
    %v2428 = vpack.c.b16 %v1796, %v1788
    %v2429 = vpack.c.b16 %v1797, %v1789
    %v2430 = vpack.c.b16 %v1798, %v1790
    %v2431 = vpack.c.b16 %v1799, %v1791
    %v2432 = vpack.c.b16 %v1800, %v1792
    %v2433 = vpack.c.b16 %v1801, %v1793
    %v2434 = vpack.c.b16 %v1810, %v1802
    %v2435 = vpack.c.b16 %v1811, %v1803
    %v2436 = vpack.c.b16 %v1812, %v1804
    %v2437 = vpack.c.b16 %v1813, %v1805
    %v2438 = vpack.c.b16 %v1814, %v1806
    %v2439 = vpack.c.b16 %v1815, %v1807
    %v2440 = vpack.c.b16 %v1816, %v1808
    %v2441 = vpack.c.b16 %v1817, %v1809
    %v2442 = vpack.c.b16 %v1826, %v1818
    %v2443 = vpack.c.b16 %v1827, %v1819
    %v2444 = vpack.c.b16 %v1828, %v1820
    %v2445 = vpack.c.b16 %v1829, %v1821
    %v2446 = vpack.c.b16 %v1830, %v1822
    %v2447 = vpack.c.b16 %v1831, %v1823
    %v2448 = vpack.c.b16 %v1832, %v1824
    %v2449 = vpack.c.b16 %v1833, %v1825
    %v2450 = vpack.c.b16 %v1842, %v1834
    %v2451 = vpack.c.b16 %v1843, %v1835
    %v2452 = vpack.c.b16 %v1844, %v1836
    %v2453 = vpack.c.b16 %v1845, %v1837
    %v2454 = vpack.c.b16 %v1846, %v1838
    %v2455 = vpack.c.b16 %v1847, %v1839
    %v2456 = vpack.c.b16 %v1848, %v1840
    %v2457 = vpack.c.b16 %v1849, %v1841
    %v2458 = vpack.c.b16 %v1858, %v1850
    %v2459 = vpack.c.b16 %v1859, %v1851
    %v2460 = vpack.c.b16 %v1860, %v1852
    %v2461 = vpack.c.b16 %v1861, %v1853
    %v2462 = vpack.c.b16 %v1862, %v1854
    %v2463 = vpack.c.b16 %v1863, %v1855
    %v2464 = vpack.c.b16 %v1864, %v1856
    %v2465 = vpack.c.b16 %v1865, %v1857
    %v2466 = vpack.c.b16 %v1874, %v1866
    %v2467 = vpack.c.b16 %v1875, %v1867
    %v2468 = vpack.c.b16 %v1876, %v1868
    %v2469 = vpack.c.b16 %v1877, %v1869
    %v2470 = vpack.c.b16 %v1878, %v1870
    %v2471 = vpack.c.b16 %v1879, %v1871
    %v2472 = vpack.c.b16 %v1880, %v1872
    %v2473 = vpack.c.b16 %v1881, %v1873
    %v2474 = vpack.c.b16 %v1890, %v1882
    %v2475 = vpack.c.b16 %v1891, %v1883
    %v2476 = vpack.c.b16 %v1892, %v1884
    %v2477 = vpack.c.b16 %v1893, %v1885
    %v2478 = vpack.c.b16 %v1894, %v1886
    %v2479 = vpack.c.b16 %v1895, %v1887
    %v2480 = vpack.c.b16 %v1896, %v1888
    %v2481 = vpack.c.b16 %v1897, %v1889
    %v2482 = vpack.c.b16 %v1906, %v1898
    %v2483 = vpack.c.b16 %v1907, %v1899
    %v2484 = vpack.c.b16 %v1908, %v1900
    %v2485 = vpack.c.b16 %v1909, %v1901
    %v2486 = vpack.c.b16 %v1910, %v1902
    %v2487 = vpack.c.b16 %v1911, %v1903
    %v2488 = vpack.c.b16 %v1912, %v1904
    %v2489 = vpack.c.b16 %v1913, %v1905
    %v2490 = vpack.c.b16 %v1922, %v1914
    %v2491 = vpack.c.b16 %v1923, %v1915
    %v2492 = vpack.c.b16 %v1924, %v1916
    %v2493 = vpack.c.b16 %v1925, %v1917
    %v2494 = vpack.c.b16 %v1926, %v1918
    %v2495 = vpack.c.b16 %v1927, %v1919
    %v2496 = vpack.c.b16 %v1928, %v1920
    %v2497 = vpack.c.b16 %v1929, %v1921
    %v2498 = vpack.c.b16 %v1938, %v1930
    %v2499 = vpack.c.b16 %v1939, %v1931
    %v2500 = vpack.c.b16 %v1940, %v1932
    %v2501 = vpack.c.b16 %v1941, %v1933
    %v2502 = vpack.c.b16 %v1942, %v1934
    %v2503 = vpack.c.b16 %v1943, %v1935
    %v2504 = vpack.c.b16 %v1944, %v1936
    %v2505 = vpack.c.b16 %v1945, %v1937
    %v2506 = vpack.c.b16 %v1954, %v1946
    %v2507 = vpack.c.b16 %v1955, %v1947
    %v2508 = vpack.c.b16 %v1956, %v1948
    %v2509 = vpack.c.b16 %v1957, %v1949
    %v2510 = vpack.c.b16 %v1958, %v1950
    %v2511 = vpack.c.b16 %v1959, %v1951
    %v2512 = vpack.c.b16 %v1960, %v1952
    %v2513 = vpack.c.b16 %v1961, %v1953
    %v2514 = vpack.c.b16 %v1970, %v1962
    %v2515 = vpack.c.b16 %v1971, %v1963
    %v2516 = vpack.c.b16 %v1972, %v1964
    %v2517 = vpack.c.b16 %v1973, %v1965
    %v2518 = vpack.c.b16 %v1974, %v1966
    %v2519 = vpack.c.b16 %v1975, %v1967
    %v2520 = vpack.c.b16 %v1976, %v1968
    %v2521 = vpack.c.b16 %v1977, %v1969
    %v2522 = vpack.c.b16 %v1986, %v1978
    %v2523 = vpack.c.b16 %v1987, %v1979
    %v2524 = vpack.c.b16 %v1988, %v1980
    %v2525 = vpack.c.b16 %v1989, %v1981
    %v2526 = vpack.c.b16 %v1990, %v1982
    %v2527 = vpack.c.b16 %v1991, %v1983
    %v2528 = vpack.c.b16 %v1992, %v1984
    %v2529 = vpack.c.b16 %v1993, %v1985
    %v2530 = vpack.c.b16 %v2002, %v1994
    %v2531 = vpack.c.b16 %v2003, %v1995
    %v2532 = vpack.c.b16 %v2004, %v1996
    %v2533 = vpack.c.b16 %v2005, %v1997
    %v2534 = vpack.c.b16 %v2006, %v1998
    %v2535 = vpack.c.b16 %v2007, %v1999
    %v2536 = vpack.c.b16 %v2008, %v2000
    %v2537 = vpack.c.b16 %v2009, %v2001
    %v2538 = vpack.c.b16 %v2018, %v2010
    %v2539 = vpack.c.b16 %v2019, %v2011
    %v2540 = vpack.c.b16 %v2020, %v2012
    %v2541 = vpack.c.b16 %v2021, %v2013
    %v2542 = vpack.c.b16 %v2022, %v2014
    %v2543 = vpack.c.b16 %v2023, %v2015
    %v2544 = vpack.c.b16 %v2024, %v2016
    %v2545 = vpack.c.b16 %v2025, %v2017
    %v2546 = vpack.c.b16 %v2034, %v2026
    %v2547 = vpack.c.b16 %v2035, %v2027
    %v2548 = vpack.c.b16 %v2036, %v2028
    %v2549 = vpack.c.b16 %v2037, %v2029
    %v2550 = vpack.c.b16 %v2038, %v2030
    %v2551 = vpack.c.b16 %v2039, %v2031
    %v2552 = vpack.c.b16 %v2040, %v2032
    %v2553 = vpack.c.b16 %v2041, %v2033
    %v2554 = vpack.c.b16 %v2050, %v2042
    %v2555 = vpack.c.b16 %v2051, %v2043
    %v2556 = vpack.c.b16 %v2052, %v2044
    %v2557 = vpack.c.b16 %v2053, %v2045
    %v2558 = vpack.c.b16 %v2054, %v2046
    %v2559 = vpack.c.b16 %v2055, %v2047
    %v2560 = vpack.c.b16 %v2056, %v2048
    %v2561 = vpack.c.b16 %v2057, %v2049
    %v2562 = vpack.c.b16 %v2066, %v2058
    %v2563 = vpack.c.b16 %v2067, %v2059
    %v2564 = vpack.c.b16 %v2068, %v2060
    %v2565 = vpack.c.b16 %v2069, %v2061
    %v2566 = vpack.c.b16 %v2070, %v2062
    %v2567 = vpack.c.b16 %v2071, %v2063
    %v2568 = vpack.c.b16 %v2072, %v2064
    %v2569 = vpack.c.b16 %v2073, %v2065
    %v2570 = vpack.c.b16 %v2082, %v2074
    %v2571 = vpack.c.b16 %v2083, %v2075
    %v2572 = vpack.c.b16 %v2084, %v2076
    %v2573 = vpack.c.b16 %v2085, %v2077
    %v2574 = vpack.c.b16 %v2086, %v2078
    %v2575 = vpack.c.b16 %v2087, %v2079
    %v2576 = vpack.c.b16 %v2088, %v2080
    %v2577 = vpack.c.b16 %v2089, %v2081
    %v2578 = vpack.c.b16 %v2098, %v2090
    %v2579 = vpack.c.b16 %v2099, %v2091
    %v2580 = vpack.c.b16 %v2100, %v2092
    %v2581 = vpack.c.b16 %v2101, %v2093
    %v2582 = vpack.c.b16 %v2102, %v2094
    %v2583 = vpack.c.b16 %v2103, %v2095
    %v2584 = vpack.c.b16 %v2104, %v2096
    %v2585 = vpack.c.b16 %v2105, %v2097
    %v2586 = vpack.c.b16 %v2114, %v2106
    %v2587 = vpack.c.b16 %v2115, %v2107
    %v2588 = vpack.c.b16 %v2116, %v2108
    %v2589 = vpack.c.b16 %v2117, %v2109
    %v2590 = vpack.c.b16 %v2118, %v2110
    %v2591 = vpack.c.b16 %v2119, %v2111
    %v2592 = vpack.c.b16 %v2120, %v2112
    %v2593 = vpack.c.b16 %v2121, %v2113
    %v2594 = vpack.c.b16 %v2130, %v2122
    %v2595 = vpack.c.b16 %v2131, %v2123
    %v2596 = vpack.c.b16 %v2132, %v2124
    %v2597 = vpack.c.b16 %v2133, %v2125
    %v2598 = vpack.c.b16 %v2134, %v2126
    %v2599 = vpack.c.b16 %v2135, %v2127
    %v2600 = vpack.c.b16 %v2136, %v2128
    %v2601 = vpack.c.b16 %v2137, %v2129
    %v2602 = vpack.c.b16 %v2146, %v2138
    %v2603 = vpack.c.b16 %v2147, %v2139
    %v2604 = vpack.c.b16 %v2148, %v2140
    %v2605 = vpack.c.b16 %v2149, %v2141
    %v2606 = vpack.c.b16 %v2150, %v2142
    %v2607 = vpack.c.b16 %v2151, %v2143
    %v2608 = vpack.c.b16 %v2152, %v2144
    %v2609 = vpack.c.b16 %v2153, %v2145
    %v2610 = vpack.c.b16 %v2162, %v2154
    %v2611 = vpack.c.b16 %v2163, %v2155
    %v2612 = vpack.c.b16 %v2164, %v2156
    %v2613 = vpack.c.b16 %v2165, %v2157
    %v2614 = vpack.c.b16 %v2166, %v2158
    %v2615 = vpack.c.b16 %v2167, %v2159
    %v2616 = vpack.c.b16 %v2168, %v2160
    %v2617 = vpack.c.b16 %v2169, %v2161
    %3066 = vmatprep.subr.bf16.mxu0 %v2171
    %3067 = vmatpush1.bf16.msra.mxu0 %v2170
    %3068 = vmatprep.subr.bf16.mxu0 %v2179
    %3069 = vmatpush1.bf16.msra.mxu0 %v2178
    %3070 = vmatprep.subr.bf16.mxu0 %v2187
    %3071 = vmatpush1.bf16.msra.mxu0 %v2186
    %3072 = vmatprep.subr.bf16.mxu0 %v2195
    %3073 = vmatpush1.bf16.msra.mxu0 %v2194
    %3074 = vmatprep.subr.bf16.mxu0 %v2203
    %3075 = vmatpush1.bf16.msra.mxu0 %v2202
    %3076 = vmatprep.subr.bf16.mxu0 %v2211
    %3077 = vmatpush1.bf16.msra.mxu0 %v2210
    %3078 = vmatprep.subr.bf16.mxu0 %v2219
    %3079 = vmatpush1.bf16.msra.mxu0 %v2218
    %3080 = vmatprep.subr.bf16.mxu0 %v2227
    %3081 = vmatpush1.bf16.msra.mxu0 %v2226
    %3082 = vmatprep.subr.bf16.mxu0 %v2235
    %3083 = vmatpush1.bf16.msra.mxu0 %v2234
    %3084 = vmatprep.subr.bf16.mxu0 %v2243
    %3085 = vmatpush1.bf16.msra.mxu0 %v2242
    %3086 = vmatprep.subr.bf16.mxu0 %v2251
    %3087 = vmatpush1.bf16.msra.mxu0 %v2250
    %3088 = vmatprep.subr.bf16.mxu0 %v2259
    %3089 = vmatpush1.bf16.msra.mxu0 %v2258
    %3090 = vmatprep.subr.bf16.mxu0 %v2267
    %3091 = vmatpush1.bf16.msra.mxu0 %v2266
    %3092 = vmatprep.subr.bf16.mxu0 %v2275
    %3093 = vmatpush1.bf16.msra.mxu0 %v2274
    %3094 = vmatprep.subr.bf16.mxu0 %v2283
    %3095 = vmatpush1.bf16.msra.mxu0 %v2282
    %3096 = vmatprep.subr.bf16.mxu0 %v2291
    %3097 = vmatpush1.bf16.msra.mxu0 %v2290
    %3098 = vmatprep.mubr.bf16.mxu0 %v813
    %3099 = vmatmul.mubr.bf16.gmra.mrb[0].mxu0 %v812
    %v3100 = vpop.f32.mrb[0].mxu0
    %v3101 = vadd.f32 %v753, %v3100
    %v3102 = vpop.f32.mrb[0].mxu0
    %v3103 = vadd.f32 %v757, %v3102
    %v3104 = vpop.f32.mrb[0].mxu0
    %v3105 = vadd.f32 %v753, %v3104
    %v3106 = vpop.f32.mrb[0].mxu0
    %v3107 = vadd.f32 %v757, %v3106
    %3108 = vdwg.mxu0
    %3109 = vmatprep.subr.bf16.mxu0 %v2299
    %3110 = vmatpush1.bf16.msra.mxu0 %v2298
    %3111 = vmatprep.subr.bf16.mxu0 %v2307
    %3112 = vmatpush1.bf16.msra.mxu0 %v2306
    %3113 = vmatprep.subr.bf16.mxu0 %v2315
    %3114 = vmatpush1.bf16.msra.mxu0 %v2314
    %3115 = vmatprep.subr.bf16.mxu0 %v2323
    %3116 = vmatpush1.bf16.msra.mxu0 %v2322
    %3117 = vmatprep.subr.bf16.mxu0 %v2331
    %3118 = vmatpush1.bf16.msra.mxu0 %v2330
    %3119 = vmatprep.subr.bf16.mxu0 %v2339
    %3120 = vmatpush1.bf16.msra.mxu0 %v2338
    %3121 = vmatprep.subr.bf16.mxu0 %v2347
    %3122 = vmatpush1.bf16.msra.mxu0 %v2346
    %3123 = vmatprep.subr.bf16.mxu0 %v2355
    %3124 = vmatpush1.bf16.msra.mxu0 %v2354
    %3125 = vmatprep.subr.bf16.mxu0 %v2363
    %3126 = vmatpush1.bf16.msra.mxu0 %v2362
    %3127 = vmatprep.subr.bf16.mxu0 %v2371
    %3128 = vmatpush1.bf16.msra.mxu0 %v2370
    %3129 = vmatprep.subr.bf16.mxu0 %v2379
    %3130 = vmatpush1.bf16.msra.mxu0 %v2378
    %3131 = vmatprep.subr.bf16.mxu0 %v2387
    %3132 = vmatpush1.bf16.msra.mxu0 %v2386
    %3133 = vmatprep.subr.bf16.mxu0 %v2395
    %3134 = vmatpush1.bf16.msra.mxu0 %v2394
    %3135 = vmatprep.subr.bf16.mxu0 %v2403
    %3136 = vmatpush1.bf16.msra.mxu0 %v2402
    %3137 = vmatprep.subr.bf16.mxu0 %v2411
    %3138 = vmatpush1.bf16.msra.mxu0 %v2410
    %3139 = vmatprep.subr.bf16.mxu0 %v2419
    %3140 = vmatpush1.bf16.msra.mxu0 %v2418
    %3141 = vmatprep.mubr.bf16.mxu0 %v815
    %3142 = vmatmul.mubr.bf16.gmra.mrb[0].mxu0 %v814
    %v3143 = vpop.f32.mrb[0].mxu0
    %v3144 = vadd.f32 %v3101, %v3143
    %v3145 = vpop.f32.mrb[0].mxu0
    %v3146 = vadd.f32 %v3103, %v3145
    %v3147 = vpop.f32.mrb[0].mxu0
    %v3148 = vadd.f32 %v3105, %v3147
    %v3149 = vpop.f32.mrb[0].mxu0
    %v3150 = vadd.f32 %v3107, %v3149
    %3151 = vdwg.mxu0
    %3152 = vmatprep.subr.bf16.mxu0 %v2427
    %3153 = vmatpush1.bf16.msra.mxu0 %v2426
    %3154 = vmatprep.subr.bf16.mxu0 %v2435
    %3155 = vmatpush1.bf16.msra.mxu0 %v2434
    %3156 = vmatprep.subr.bf16.mxu0 %v2443
    %3157 = vmatpush1.bf16.msra.mxu0 %v2442
    %3158 = vmatprep.subr.bf16.mxu0 %v2451
    %3159 = vmatpush1.bf16.msra.mxu0 %v2450
    %3160 = vmatprep.subr.bf16.mxu0 %v2459
    %3161 = vmatpush1.bf16.msra.mxu0 %v2458
    %3162 = vmatprep.subr.bf16.mxu0 %v2467
    %3163 = vmatpush1.bf16.msra.mxu0 %v2466
    %3164 = vmatprep.subr.bf16.mxu0 %v2475
    %3165 = vmatpush1.bf16.msra.mxu0 %v2474
    %3166 = vmatprep.subr.bf16.mxu0 %v2483
    %3167 = vmatpush1.bf16.msra.mxu0 %v2482
    %3168 = vmatprep.subr.bf16.mxu0 %v2491
    %3169 = vmatpush1.bf16.msra.mxu0 %v2490
    %3170 = vmatprep.subr.bf16.mxu0 %v2499
    %3171 = vmatpush1.bf16.msra.mxu0 %v2498
    %3172 = vmatprep.subr.bf16.mxu0 %v2507
    %3173 = vmatpush1.bf16.msra.mxu0 %v2506
    %3174 = vmatprep.subr.bf16.mxu0 %v2515
    %3175 = vmatpush1.bf16.msra.mxu0 %v2514
    %3176 = vmatprep.subr.bf16.mxu0 %v2523
    %3177 = vmatpush1.bf16.msra.mxu0 %v2522
    %3178 = vmatprep.subr.bf16.mxu0 %v2531
    %3179 = vmatpush1.bf16.msra.mxu0 %v2530
    %3180 = vmatprep.subr.bf16.mxu0 %v2539
    %3181 = vmatpush1.bf16.msra.mxu0 %v2538
    %3182 = vmatprep.subr.bf16.mxu0 %v2547
    %3183 = vmatpush1.bf16.msra.mxu0 %v2546
    %3184 = vmatprep.mubr.bf16.mxu0 %v817
    %3185 = vmatmul.mubr.bf16.gmra.mrb[0].mxu0 %v816
    %v3186 = vpop.f32.mrb[0].mxu0
    %v3187 = vadd.f32 %v3144, %v3186
    %v3188 = vpop.f32.mrb[0].mxu0
    %v3189 = vadd.f32 %v3146, %v3188
    %v3190 = vpop.f32.mrb[0].mxu0
    %v3191 = vadd.f32 %v3148, %v3190
    %v3192 = vpop.f32.mrb[0].mxu0
    %v3193 = vadd.f32 %v3150, %v3192
    %3194 = vdwg.mxu0
    %3195 = vmatprep.subr.bf16.mxu0 %v2555
    %3196 = vmatpush1.bf16.msra.mxu0 %v2554
    %3197 = vmatprep.subr.bf16.mxu0 %v2563
    %3198 = vmatpush1.bf16.msra.mxu0 %v2562
    %3199 = vmatprep.subr.bf16.mxu0 %v2571
    %3200 = vmatpush1.bf16.msra.mxu0 %v2570
    %3201 = vmatprep.subr.bf16.mxu0 %v2579
    %3202 = vmatpush1.bf16.msra.mxu0 %v2578
    %3203 = vmatprep.subr.bf16.mxu0 %v2587
    %3204 = vmatpush1.bf16.msra.mxu0 %v2586
    %3205 = vmatprep.subr.bf16.mxu0 %v2595
    %3206 = vmatpush1.bf16.msra.mxu0 %v2594
    %3207 = vmatprep.subr.bf16.mxu0 %v2603
    %3208 = vmatpush1.bf16.msra.mxu0 %v2602
    %3209 = vmatprep.subr.bf16.mxu0 %v2611
    %3210 = vmatpush1.bf16.msra.mxu0 %v2610
    %3211 = vmatprep.subr.bf16.mxu0 0
    %3212 = vmatpush1.bf16.msra.mxu0 0
    %3213 = vmatprep.subr.bf16.mxu0 0
    %3214 = vmatpush1.bf16.msra.mxu0 0
    %3215 = vmatprep.subr.bf16.mxu0 0
    %3216 = vmatpush1.bf16.msra.mxu0 0
    %3217 = vmatprep.subr.bf16.mxu0 0
    %3218 = vmatpush1.bf16.msra.mxu0 0
    %3219 = vmatprep.subr.bf16.mxu0 0
    %3220 = vmatpush1.bf16.msra.mxu0 0
    %3221 = vmatprep.subr.bf16.mxu0 0
    %3222 = vmatpush1.bf16.msra.mxu0 0
    %3223 = vmatprep.subr.bf16.mxu0 0
    %3224 = vmatpush1.bf16.msra.mxu0 0
    %3225 = vmatprep.subr.bf16.mxu0 0
    %3226 = vmatpush1.bf16.msra.mxu0 0
    %3227 = vmatprep.mubr.bf16.mxu0 0
    %3228 = vmatmul.mubr.bf16.gmra.mrb[0].mxu0 %v818
    %v3229 = vpop.f32.mrb[0].mxu0
    %v3230 = vadd.f32 %v3187, %v3229
    %v3231 = vpop.f32.mrb[0].mxu0
    %v3232 = vadd.f32 %v3189, %v3231
    %v3233 = vpop.f32.mrb[0].mxu0
    %v3234 = vadd.f32 %v3191, %v3233
    %v3235 = vpop.f32.mrb[0].mxu0
    %v3236 = vadd.f32 %v3193, %v3235
    %3237 = vdwg.mxu0
    %3238 = vmatprep.subr.bf16.mxu0 %v2173
    %3239 = vmatpush1.bf16.msra.mxu0 %v2172
    %3240 = vmatprep.subr.bf16.mxu0 %v2181
    %3241 = vmatpush1.bf16.msra.mxu0 %v2180
    %3242 = vmatprep.subr.bf16.mxu0 %v2189
    %3243 = vmatpush1.bf16.msra.mxu0 %v2188
    %3244 = vmatprep.subr.bf16.mxu0 %v2197
    %3245 = vmatpush1.bf16.msra.mxu0 %v2196
    %3246 = vmatprep.subr.bf16.mxu0 %v2205
    %3247 = vmatpush1.bf16.msra.mxu0 %v2204
    %3248 = vmatprep.subr.bf16.mxu0 %v2213
    %3249 = vmatpush1.bf16.msra.mxu0 %v2212
    %3250 = vmatprep.subr.bf16.mxu0 %v2221
    %3251 = vmatpush1.bf16.msra.mxu0 %v2220
    %3252 = vmatprep.subr.bf16.mxu0 %v2229
    %3253 = vmatpush1.bf16.msra.mxu0 %v2228
    %3254 = vmatprep.subr.bf16.mxu0 %v2237
    %3255 = vmatpush1.bf16.msra.mxu0 %v2236
    %3256 = vmatprep.subr.bf16.mxu0 %v2245
    %3257 = vmatpush1.bf16.msra.mxu0 %v2244
    %3258 = vmatprep.subr.bf16.mxu0 %v2253
    %3259 = vmatpush1.bf16.msra.mxu0 %v2252
    %3260 = vmatprep.subr.bf16.mxu0 %v2261
    %3261 = vmatpush1.bf16.msra.mxu0 %v2260
    %3262 = vmatprep.subr.bf16.mxu0 %v2269
    %3263 = vmatpush1.bf16.msra.mxu0 %v2268
    %3264 = vmatprep.subr.bf16.mxu0 %v2277
    %3265 = vmatpush1.bf16.msra.mxu0 %v2276
    %3266 = vmatprep.subr.bf16.mxu0 %v2285
    %3267 = vmatpush1.bf16.msra.mxu0 %v2284
    %3268 = vmatprep.subr.bf16.mxu0 %v2293
    %3269 = vmatpush1.bf16.msra.mxu0 %v2292
    %3270 = vmatprep.mubr.bf16.mxu0 %v813
    %3271 = vmatmul.mubr.bf16.gmra.mrb[0].mxu0 %v812
    %v3272 = vpop.f32.mrb[0].mxu0
    %v3273 = vadd.f32 %v761, %v3272
    %v3274 = vpop.f32.mrb[0].mxu0
    %v3275 = vadd.f32 %v765, %v3274
    %v3276 = vpop.f32.mrb[0].mxu0
    %v3277 = vadd.f32 %v761, %v3276
    %v3278 = vpop.f32.mrb[0].mxu0
    %v3279 = vadd.f32 %v765, %v3278
    %3280 = vdwg.mxu0
    %3281 = vmatprep.subr.bf16.mxu0 %v2301
    %3282 = vmatpush1.bf16.msra.mxu0 %v2300
    %3283 = vmatprep.subr.bf16.mxu0 %v2309
    %3284 = vmatpush1.bf16.msra.mxu0 %v2308
    %3285 = vmatprep.subr.bf16.mxu0 %v2317
    %3286 = vmatpush1.bf16.msra.mxu0 %v2316
    %3287 = vmatprep.subr.bf16.mxu0 %v2325
    %3288 = vmatpush1.bf16.msra.mxu0 %v2324
    %3289 = vmatprep.subr.bf16.mxu0 %v2333
    %3290 = vmatpush1.bf16.msra.mxu0 %v2332
    %3291 = vmatprep.subr.bf16.mxu0 %v2341
    %3292 = vmatpush1.bf16.msra.mxu0 %v2340
    %3293 = vmatprep.subr.bf16.mxu0 %v2349
    %3294 = vmatpush1.bf16.msra.mxu0 %v2348
    %3295 = vmatprep.subr.bf16.mxu0 %v2357
    %3296 = vmatpush1.bf16.msra.mxu0 %v2356
    %3297 = vmatprep.subr.bf16.mxu0 %v2365
    %3298 = vmatpush1.bf16.msra.mxu0 %v2364
    %3299 = vmatprep.subr.bf16.mxu0 %v2373
    %3300 = vmatpush1.bf16.msra.mxu0 %v2372
    %3301 = vmatprep.subr.bf16.mxu0 %v2381
    %3302 = vmatpush1.bf16.msra.mxu0 %v2380
    %3303 = vmatprep.subr.bf16.mxu0 %v2389
    %3304 = vmatpush1.bf16.msra.mxu0 %v2388
    %3305 = vmatprep.subr.bf16.mxu0 %v2397
    %3306 = vmatpush1.bf16.msra.mxu0 %v2396
    %3307 = vmatprep.subr.bf16.mxu0 %v2405
    %3308 = vmatpush1.bf16.msra.mxu0 %v2404
    %3309 = vmatprep.subr.bf16.mxu0 %v2413
    %3310 = vmatpush1.bf16.msra.mxu0 %v2412
    %3311 = vmatprep.subr.bf16.mxu0 %v2421
    %3312 = vmatpush1.bf16.msra.mxu0 %v2420
    %3313 = vmatprep.mubr.bf16.mxu0 %v815
    %3314 = vmatmul.mubr.bf16.gmra.mrb[0].mxu0 %v814
    %v3315 = vpop.f32.mrb[0].mxu0
    %v3316 = vadd.f32 %v3273, %v3315
    %v3317 = vpop.f32.mrb[0].mxu0
    %v3318 = vadd.f32 %v3275, %v3317
    %v3319 = vpop.f32.mrb[0].mxu0
    %v3320 = vadd.f32 %v3277, %v3319
    %v3321 = vpop.f32.mrb[0].mxu0
    %v3322 = vadd.f32 %v3279, %v3321
    %3323 = vdwg.mxu0
    %3324 = vmatprep.subr.bf16.mxu0 %v2429
    %3325 = vmatpush1.bf16.msra.mxu0 %v2428
    %3326 = vmatprep.subr.bf16.mxu0 %v2437
    %3327 = vmatpush1.bf16.msra.mxu0 %v2436
    %3328 = vmatprep.subr.bf16.mxu0 %v2445
    %3329 = vmatpush1.bf16.msra.mxu0 %v2444
    %3330 = vmatprep.subr.bf16.mxu0 %v2453
    %3331 = vmatpush1.bf16.msra.mxu0 %v2452
    %3332 = vmatprep.subr.bf16.mxu0 %v2461
    %3333 = vmatpush1.bf16.msra.mxu0 %v2460
    %3334 = vmatprep.subr.bf16.mxu0 %v2469
    %3335 = vmatpush1.bf16.msra.mxu0 %v2468
    %3336 = vmatprep.subr.bf16.mxu0 %v2477
    %3337 = vmatpush1.bf16.msra.mxu0 %v2476
    %3338 = vmatprep.subr.bf16.mxu0 %v2485
    %3339 = vmatpush1.bf16.msra.mxu0 %v2484
    %3340 = vmatprep.subr.bf16.mxu0 %v2493
    %3341 = vmatpush1.bf16.msra.mxu0 %v2492
    %3342 = vmatprep.subr.bf16.mxu0 %v2501
    %3343 = vmatpush1.bf16.msra.mxu0 %v2500
    %3344 = vmatprep.subr.bf16.mxu0 %v2509
    %3345 = vmatpush1.bf16.msra.mxu0 %v2508
    %3346 = vmatprep.subr.bf16.mxu0 %v2517
    %3347 = vmatpush1.bf16.msra.mxu0 %v2516
    %3348 = vmatprep.subr.bf16.mxu0 %v2525
    %3349 = vmatpush1.bf16.msra.mxu0 %v2524
    %3350 = vmatprep.subr.bf16.mxu0 %v2533
    %3351 = vmatpush1.bf16.msra.mxu0 %v2532
    %3352 = vmatprep.subr.bf16.mxu0 %v2541
    %3353 = vmatpush1.bf16.msra.mxu0 %v2540
    %3354 = vmatprep.subr.bf16.mxu0 %v2549
    %3355 = vmatpush1.bf16.msra.mxu0 %v2548
    %3356 = vmatprep.mubr.bf16.mxu0 %v817
    %3357 = vmatmul.mubr.bf16.gmra.mrb[0].mxu0 %v816
    %v3358 = vpop.f32.mrb[0].mxu0
    %v3359 = vadd.f32 %v3316, %v3358
    %v3360 = vpop.f32.mrb[0].mxu0
    %v3361 = vadd.f32 %v3318, %v3360
    %v3362 = vpop.f32.mrb[0].mxu0
    %v3363 = vadd.f32 %v3320, %v3362
    %v3364 = vpop.f32.mrb[0].mxu0
    %v3365 = vadd.f32 %v3322, %v3364
    %3366 = vdwg.mxu0
    %3367 = vmatprep.subr.bf16.mxu0 %v2557
    %3368 = vmatpush1.bf16.msra.mxu0 %v2556
    %3369 = vmatprep.subr.bf16.mxu0 %v2565
    %3370 = vmatpush1.bf16.msra.mxu0 %v2564
    %3371 = vmatprep.subr.bf16.mxu0 %v2573
    %3372 = vmatpush1.bf16.msra.mxu0 %v2572
    %3373 = vmatprep.subr.bf16.mxu0 %v2581
    %3374 = vmatpush1.bf16.msra.mxu0 %v2580
    %3375 = vmatprep.subr.bf16.mxu0 %v2589
    %3376 = vmatpush1.bf16.msra.mxu0 %v2588
    %3377 = vmatprep.subr.bf16.mxu0 %v2597
    %3378 = vmatpush1.bf16.msra.mxu0 %v2596
    %3379 = vmatprep.subr.bf16.mxu0 %v2605
    %3380 = vmatpush1.bf16.msra.mxu0 %v2604
    %3381 = vmatprep.subr.bf16.mxu0 %v2613
    %3382 = vmatpush1.bf16.msra.mxu0 %v2612
    %3383 = vmatprep.subr.bf16.mxu0 0
    %3384 = vmatpush1.bf16.msra.mxu0 0
    %3385 = vmatprep.subr.bf16.mxu0 0
    %3386 = vmatpush1.bf16.msra.mxu0 0
    %3387 = vmatprep.subr.bf16.mxu0 0
    %3388 = vmatpush1.bf16.msra.mxu0 0
    %3389 = vmatprep.subr.bf16.mxu0 0
    %3390 = vmatpush1.bf16.msra.mxu0 0
    %3391 = vmatprep.subr.bf16.mxu0 0
    %3392 = vmatpush1.bf16.msra.mxu0 0
    %3393 = vmatprep.subr.bf16.mxu0 0
    %3394 = vmatpush1.bf16.msra.mxu0 0
    %3395 = vmatprep.subr.bf16.mxu0 0
    %3396 = vmatpush1.bf16.msra.mxu0 0
    %3397 = vmatprep.subr.bf16.mxu0 0
    %3398 = vmatpush1.bf16.msra.mxu0 0
    %3399 = vmatprep.mubr.bf16.mxu0 0
    %3400 = vmatmul.mubr.bf16.gmra.mrb[0].mxu0 %v818
    %v3401 = vpop.f32.mrb[0].mxu0
    %v3402 = vadd.f32 %v3359, %v3401
    %v3403 = vpop.f32.mrb[0].mxu0
    %v3404 = vadd.f32 %v3361, %v3403
    %v3405 = vpop.f32.mrb[0].mxu0
    %v3406 = vadd.f32 %v3363, %v3405
    %v3407 = vpop.f32.mrb[0].mxu0
    %v3408 = vadd.f32 %v3365, %v3407
    %3409 = vdwg.mxu0
    %3410 = vmatprep.subr.bf16.mxu0 %v2175
    %3411 = vmatpush1.bf16.msra.mxu0 %v2174
    %3412 = vmatprep.subr.bf16.mxu0 %v2183
    %3413 = vmatpush1.bf16.msra.mxu0 %v2182
    %3414 = vmatprep.subr.bf16.mxu0 %v2191
    %3415 = vmatpush1.bf16.msra.mxu0 %v2190
    %3416 = vmatprep.subr.bf16.mxu0 %v2199
    %3417 = vmatpush1.bf16.msra.mxu0 %v2198
    %3418 = vmatprep.subr.bf16.mxu0 %v2207
    %3419 = vmatpush1.bf16.msra.mxu0 %v2206
    %3420 = vmatprep.subr.bf16.mxu0 %v2215
    %3421 = vmatpush1.bf16.msra.mxu0 %v2214
    %3422 = vmatprep.subr.bf16.mxu0 %v2223
    %3423 = vmatpush1.bf16.msra.mxu0 %v2222
    %3424 = vmatprep.subr.bf16.mxu0 %v2231
    %3425 = vmatpush1.bf16.msra.mxu0 %v2230
    %3426 = vmatprep.subr.bf16.mxu0 %v2239
    %3427 = vmatpush1.bf16.msra.mxu0 %v2238
    %3428 = vmatprep.subr.bf16.mxu0 %v2247
    %3429 = vmatpush1.bf16.msra.mxu0 %v2246
    %3430 = vmatprep.subr.bf16.mxu0 %v2255
    %3431 = vmatpush1.bf16.msra.mxu0 %v2254
    %3432 = vmatprep.subr.bf16.mxu0 %v2263
    %3433 = vmatpush1.bf16.msra.mxu0 %v2262
    %3434 = vmatprep.subr.bf16.mxu0 %v2271
    %3435 = vmatpush1.bf16.msra.mxu0 %v2270
    %3436 = vmatprep.subr.bf16.mxu0 %v2279
    %3437 = vmatpush1.bf16.msra.mxu0 %v2278
    %3438 = vmatprep.subr.bf16.mxu0 %v2287
    %3439 = vmatpush1.bf16.msra.mxu0 %v2286
    %3440 = vmatprep.subr.bf16.mxu0 %v2295
    %3441 = vmatpush1.bf16.msra.mxu0 %v2294
    %3442 = vmatprep.mubr.bf16.mxu0 %v813
    %3443 = vmatmul.mubr.bf16.gmra.mrb[0].mxu0 %v812
    %v3444 = vpop.f32.mrb[0].mxu0
    %v3445 = vadd.f32 %v769, %v3444
    %v3446 = vpop.f32.mrb[0].mxu0
    %v3447 = vadd.f32 %v773, %v3446
    %v3448 = vpop.f32.mrb[0].mxu0
    %v3449 = vadd.f32 %v769, %v3448
    %v3450 = vpop.f32.mrb[0].mxu0
    %v3451 = vadd.f32 %v773, %v3450
    %3452 = vdwg.mxu0
    %3453 = vmatprep.subr.bf16.mxu0 %v2303
    %3454 = vmatpush1.bf16.msra.mxu0 %v2302
    %3455 = vmatprep.subr.bf16.mxu0 %v2311
    %3456 = vmatpush1.bf16.msra.mxu0 %v2310
    %3457 = vmatprep.subr.bf16.mxu0 %v2319
    %3458 = vmatpush1.bf16.msra.mxu0 %v2318
    %3459 = vmatprep.subr.bf16.mxu0 %v2327
    %3460 = vmatpush1.bf16.msra.mxu0 %v2326
    %3461 = vmatprep.subr.bf16.mxu0 %v2335
    %3462 = vmatpush1.bf16.msra.mxu0 %v2334
    %3463 = vmatprep.subr.bf16.mxu0 %v2343
    %3464 = vmatpush1.bf16.msra.mxu0 %v2342
    %3465 = vmatprep.subr.bf16.mxu0 %v2351
    %3466 = vmatpush1.bf16.msra.mxu0 %v2350
    %3467 = vmatprep.subr.bf16.mxu0 %v2359
    %3468 = vmatpush1.bf16.msra.mxu0 %v2358
    %3469 = vmatprep.subr.bf16.mxu0 %v2367
    %3470 = vmatpush1.bf16.msra.mxu0 %v2366
    %3471 = vmatprep.subr.bf16.mxu0 %v2375
    %3472 = vmatpush1.bf16.msra.mxu0 %v2374
    %3473 = vmatprep.subr.bf16.mxu0 %v2383
    %3474 = vmatpush1.bf16.msra.mxu0 %v2382
    %3475 = vmatprep.subr.bf16.mxu0 %v2391
    %3476 = vmatpush1.bf16.msra.mxu0 %v2390
    %3477 = vmatprep.subr.bf16.mxu0 %v2399
    %3478 = vmatpush1.bf16.msra.mxu0 %v2398
    %3479 = vmatprep.subr.bf16.mxu0 %v2407
    %3480 = vmatpush1.bf16.msra.mxu0 %v2406
    %3481 = vmatprep.subr.bf16.mxu0 %v2415
    %3482 = vmatpush1.bf16.msra.mxu0 %v2414
    %3483 = vmatprep.subr.bf16.mxu0 %v2423
    %3484 = vmatpush1.bf16.msra.mxu0 %v2422
    %3485 = vmatprep.mubr.bf16.mxu0 %v815
    %3486 = vmatmul.mubr.bf16.gmra.mrb[0].mxu0 %v814
    %v3487 = vpop.f32.mrb[0].mxu0
    %v3488 = vadd.f32 %v3445, %v3487
    %v3489 = vpop.f32.mrb[0].mxu0
    %v3490 = vadd.f32 %v3447, %v3489
    %v3491 = vpop.f32.mrb[0].mxu0
    %v3492 = vadd.f32 %v3449, %v3491
    %v3493 = vpop.f32.mrb[0].mxu0
    %v3494 = vadd.f32 %v3451, %v3493
    %3495 = vdwg.mxu0
    %3496 = vmatprep.subr.bf16.mxu0 %v2431
    %3497 = vmatpush1.bf16.msra.mxu0 %v2430
    %3498 = vmatprep.subr.bf16.mxu0 %v2439
    %3499 = vmatpush1.bf16.msra.mxu0 %v2438
    %3500 = vmatprep.subr.bf16.mxu0 %v2447
    %3501 = vmatpush1.bf16.msra.mxu0 %v2446
    %3502 = vmatprep.subr.bf16.mxu0 %v2455
    %3503 = vmatpush1.bf16.msra.mxu0 %v2454
    %3504 = vmatprep.subr.bf16.mxu0 %v2463
    %3505 = vmatpush1.bf16.msra.mxu0 %v2462
    %3506 = vmatprep.subr.bf16.mxu0 %v2471
    %3507 = vmatpush1.bf16.msra.mxu0 %v2470
    %3508 = vmatprep.subr.bf16.mxu0 %v2479
    %3509 = vmatpush1.bf16.msra.mxu0 %v2478
    %3510 = vmatprep.subr.bf16.mxu0 %v2487
    %3511 = vmatpush1.bf16.msra.mxu0 %v2486
    %3512 = vmatprep.subr.bf16.mxu0 %v2495
    %3513 = vmatpush1.bf16.msra.mxu0 %v2494
    %3514 = vmatprep.subr.bf16.mxu0 %v2503
    %3515 = vmatpush1.bf16.msra.mxu0 %v2502
    %3516 = vmatprep.subr.bf16.mxu0 %v2511
    %3517 = vmatpush1.bf16.msra.mxu0 %v2510
    %3518 = vmatprep.subr.bf16.mxu0 %v2519
    %3519 = vmatpush1.bf16.msra.mxu0 %v2518
    %3520 = vmatprep.subr.bf16.mxu0 %v2527
    %3521 = vmatpush1.bf16.msra.mxu0 %v2526
    %3522 = vmatprep.subr.bf16.mxu0 %v2535
    %3523 = vmatpush1.bf16.msra.mxu0 %v2534
    %3524 = vmatprep.subr.bf16.mxu0 %v2543
    %3525 = vmatpush1.bf16.msra.mxu0 %v2542
    %3526 = vmatprep.subr.bf16.mxu0 %v2551
    %3527 = vmatpush1.bf16.msra.mxu0 %v2550
    %3528 = vmatprep.mubr.bf16.mxu0 %v817
    %3529 = vmatmul.mubr.bf16.gmra.mrb[0].mxu0 %v816
    %v3530 = vpop.f32.mrb[0].mxu0
    %v3531 = vadd.f32 %v3488, %v3530
    %v3532 = vpop.f32.mrb[0].mxu0
    %v3533 = vadd.f32 %v3490, %v3532
    %v3534 = vpop.f32.mrb[0].mxu0
    %v3535 = vadd.f32 %v3492, %v3534
    %v3536 = vpop.f32.mrb[0].mxu0
    %v3537 = vadd.f32 %v3494, %v3536
    %3538 = vdwg.mxu0
    %3539 = vmatprep.subr.bf16.mxu0 %v2559
    %3540 = vmatpush1.bf16.msra.mxu0 %v2558
    %3541 = vmatprep.subr.bf16.mxu0 %v2567
    %3542 = vmatpush1.bf16.msra.mxu0 %v2566
    %3543 = vmatprep.subr.bf16.mxu0 %v2575
    %3544 = vmatpush1.bf16.msra.mxu0 %v2574
    %3545 = vmatprep.subr.bf16.mxu0 %v2583
    %3546 = vmatpush1.bf16.msra.mxu0 %v2582
    %3547 = vmatprep.subr.bf16.mxu0 %v2591
    %3548 = vmatpush1.bf16.msra.mxu0 %v2590
    %3549 = vmatprep.subr.bf16.mxu0 %v2599
    %3550 = vmatpush1.bf16.msra.mxu0 %v2598
    %3551 = vmatprep.subr.bf16.mxu0 %v2607
    %3552 = vmatpush1.bf16.msra.mxu0 %v2606
    %3553 = vmatprep.subr.bf16.mxu0 %v2615
    %3554 = vmatpush1.bf16.msra.mxu0 %v2614
    %3555 = vmatprep.subr.bf16.mxu0 0
    %3556 = vmatpush1.bf16.msra.mxu0 0
    %3557 = vmatprep.subr.bf16.mxu0 0
    %3558 = vmatpush1.bf16.msra.mxu0 0
    %3559 = vmatprep.subr.bf16.mxu0 0
    %3560 = vmatpush1.bf16.msra.mxu0 0
    %3561 = vmatprep.subr.bf16.mxu0 0
    %3562 = vmatpush1.bf16.msra.mxu0 0
    %3563 = vmatprep.subr.bf16.mxu0 0
    %3564 = vmatpush1.bf16.msra.mxu0 0
    %3565 = vmatprep.subr.bf16.mxu0 0
    %3566 = vmatpush1.bf16.msra.mxu0 0
    %3567 = vmatprep.subr.bf16.mxu0 0
    %3568 = vmatpush1.bf16.msra.mxu0 0
    %3569 = vmatprep.subr.bf16.mxu0 0
    %3570 = vmatpush1.bf16.msra.mxu0 0
    %3571 = vmatprep.mubr.bf16.mxu0 0
    %3572 = vmatmul.mubr.bf16.gmra.mrb[0].mxu0 %v818
    %v3573 = vpop.f32.mrb[0].mxu0
    %v3574 = vadd.f32 %v3531, %v3573
    %v3575 = vpop.f32.mrb[0].mxu0
    %v3576 = vadd.f32 %v3533, %v3575
    %v3577 = vpop.f32.mrb[0].mxu0
    %v3578 = vadd.f32 %v3535, %v3577
    %v3579 = vpop.f32.mrb[0].mxu0
    %v3580 = vadd.f32 %v3537, %v3579
    %3581 = vdwg.mxu0
    %3582 = vmatprep.subr.bf16.mxu0 %v2177
    %3583 = vmatpush1.bf16.msra.mxu0 %v2176
    %3584 = vmatprep.subr.bf16.mxu0 %v2185
    %3585 = vmatpush1.bf16.msra.mxu0 %v2184
    %3586 = vmatprep.subr.bf16.mxu0 %v2193
    %3587 = vmatpush1.bf16.msra.mxu0 %v2192
    %3588 = vmatprep.subr.bf16.mxu0 %v2201
    %3589 = vmatpush1.bf16.msra.mxu0 %v2200
    %3590 = vmatprep.subr.bf16.mxu0 %v2209
    %3591 = vmatpush1.bf16.msra.mxu0 %v2208
    %3592 = vmatprep.subr.bf16.mxu0 %v2217
    %3593 = vmatpush1.bf16.msra.mxu0 %v2216
    %3594 = vmatprep.subr.bf16.mxu0 %v2225
    %3595 = vmatpush1.bf16.msra.mxu0 %v2224
    %3596 = vmatprep.subr.bf16.mxu0 %v2233
    %3597 = vmatpush1.bf16.msra.mxu0 %v2232
    %3598 = vmatprep.subr.bf16.mxu0 %v2241
    %3599 = vmatpush1.bf16.msra.mxu0 %v2240
    %3600 = vmatprep.subr.bf16.mxu0 %v2249
    %3601 = vmatpush1.bf16.msra.mxu0 %v2248
    %3602 = vmatprep.subr.bf16.mxu0 %v2257
    %3603 = vmatpush1.bf16.msra.mxu0 %v2256
    %3604 = vmatprep.subr.bf16.mxu0 %v2265
    %3605 = vmatpush1.bf16.msra.mxu0 %v2264
    %3606 = vmatprep.subr.bf16.mxu0 %v2273
    %3607 = vmatpush1.bf16.msra.mxu0 %v2272
    %3608 = vmatprep.subr.bf16.mxu0 %v2281
    %3609 = vmatpush1.bf16.msra.mxu0 %v2280
    %3610 = vmatprep.subr.bf16.mxu0 %v2289
    %3611 = vmatpush1.bf16.msra.mxu0 %v2288
    %3612 = vmatprep.subr.bf16.mxu0 %v2297
    %3613 = vmatpush1.bf16.msra.mxu0 %v2296
    %3614 = vmatprep.mubr.bf16.mxu0 %v813
    %3615 = vmatmul.mubr.bf16.gmra.mrb[0].mxu0 %v812
    %v3616 = vpop.f32.mrb[0].mxu0
    %v3617 = vadd.f32 %v777, %v3616
    %v3618 = vpop.f32.mrb[0].mxu0
    %v3619 = vadd.f32 %v781, %v3618
    %v3620 = vpop.f32.mrb[0].mxu0
    %v3621 = vadd.f32 %v777, %v3620
    %v3622 = vpop.f32.mrb[0].mxu0
    %v3623 = vadd.f32 %v781, %v3622
    %3624 = vdwg.mxu0
    %3625 = vmatprep.subr.bf16.mxu0 %v2305
    %3626 = vmatpush1.bf16.msra.mxu0 %v2304
    %3627 = vmatprep.subr.bf16.mxu0 %v2313
    %3628 = vmatpush1.bf16.msra.mxu0 %v2312
    %3629 = vmatprep.subr.bf16.mxu0 %v2321
    %3630 = vmatpush1.bf16.msra.mxu0 %v2320
    %3631 = vmatprep.subr.bf16.mxu0 %v2329
    %3632 = vmatpush1.bf16.msra.mxu0 %v2328
    %3633 = vmatprep.subr.bf16.mxu0 %v2337
    %3634 = vmatpush1.bf16.msra.mxu0 %v2336
    %3635 = vmatprep.subr.bf16.mxu0 %v2345
    %3636 = vmatpush1.bf16.msra.mxu0 %v2344
    %3637 = vmatprep.subr.bf16.mxu0 %v2353
    %3638 = vmatpush1.bf16.msra.mxu0 %v2352
    %3639 = vmatprep.subr.bf16.mxu0 %v2361
    %3640 = vmatpush1.bf16.msra.mxu0 %v2360
    %3641 = vmatprep.subr.bf16.mxu0 %v2369
    %3642 = vmatpush1.bf16.msra.mxu0 %v2368
    %3643 = vmatprep.subr.bf16.mxu0 %v2377
    %3644 = vmatpush1.bf16.msra.mxu0 %v2376
    %3645 = vmatprep.subr.bf16.mxu0 %v2385
    %3646 = vmatpush1.bf16.msra.mxu0 %v2384
    %3647 = vmatprep.subr.bf16.mxu0 %v2393
    %3648 = vmatpush1.bf16.msra.mxu0 %v2392
    %3649 = vmatprep.subr.bf16.mxu0 %v2401
    %3650 = vmatpush1.bf16.msra.mxu0 %v2400
    %3651 = vmatprep.subr.bf16.mxu0 %v2409
    %3652 = vmatpush1.bf16.msra.mxu0 %v2408
    %3653 = vmatprep.subr.bf16.mxu0 %v2417
    %3654 = vmatpush1.bf16.msra.mxu0 %v2416
    %3655 = vmatprep.subr.bf16.mxu0 %v2425
    %3656 = vmatpush1.bf16.msra.mxu0 %v2424
    %3657 = vmatprep.mubr.bf16.mxu0 %v815
    %3658 = vmatmul.mubr.bf16.gmra.mrb[0].mxu0 %v814
    %v3659 = vpop.f32.mrb[0].mxu0
    %v3660 = vadd.f32 %v3617, %v3659
    %v3661 = vpop.f32.mrb[0].mxu0
    %v3662 = vadd.f32 %v3619, %v3661
    %v3663 = vpop.f32.mrb[0].mxu0
    %v3664 = vadd.f32 %v3621, %v3663
    %v3665 = vpop.f32.mrb[0].mxu0
    %v3666 = vadd.f32 %v3623, %v3665
    %3667 = vdwg.mxu0
    %3668 = vmatprep.subr.bf16.mxu0 %v2433
    %3669 = vmatpush1.bf16.msra.mxu0 %v2432
    %3670 = vmatprep.subr.bf16.mxu0 %v2441
    %3671 = vmatpush1.bf16.msra.mxu0 %v2440
    %3672 = vmatprep.subr.bf16.mxu0 %v2449
    %3673 = vmatpush1.bf16.msra.mxu0 %v2448
    %3674 = vmatprep.subr.bf16.mxu0 %v2457
    %3675 = vmatpush1.bf16.msra.mxu0 %v2456
    %3676 = vmatprep.subr.bf16.mxu0 %v2465
    %3677 = vmatpush1.bf16.msra.mxu0 %v2464
    %3678 = vmatprep.subr.bf16.mxu0 %v2473
    %3679 = vmatpush1.bf16.msra.mxu0 %v2472
    %3680 = vmatprep.subr.bf16.mxu0 %v2481
    %3681 = vmatpush1.bf16.msra.mxu0 %v2480
    %3682 = vmatprep.subr.bf16.mxu0 %v2489
    %3683 = vmatpush1.bf16.msra.mxu0 %v2488
    %3684 = vmatprep.subr.bf16.mxu0 %v2497
    %3685 = vmatpush1.bf16.msra.mxu0 %v2496
    %3686 = vmatprep.subr.bf16.mxu0 %v2505
    %3687 = vmatpush1.bf16.msra.mxu0 %v2504
    %3688 = vmatprep.subr.bf16.mxu0 %v2513
    %3689 = vmatpush1.bf16.msra.mxu0 %v2512
    %3690 = vmatprep.subr.bf16.mxu0 %v2521
    %3691 = vmatpush1.bf16.msra.mxu0 %v2520
    %3692 = vmatprep.subr.bf16.mxu0 %v2529
    %3693 = vmatpush1.bf16.msra.mxu0 %v2528
    %3694 = vmatprep.subr.bf16.mxu0 %v2537
    %3695 = vmatpush1.bf16.msra.mxu0 %v2536
    %3696 = vmatprep.subr.bf16.mxu0 %v2545
    %3697 = vmatpush1.bf16.msra.mxu0 %v2544
    %3698 = vmatprep.subr.bf16.mxu0 %v2553
    %3699 = vmatpush1.bf16.msra.mxu0 %v2552
    %3700 = vmatprep.mubr.bf16.mxu0 %v817
    %3701 = vmatmul.mubr.bf16.gmra.mrb[0].mxu0 %v816
    %v3702 = vpop.f32.mrb[0].mxu0
    %v3703 = vadd.f32 %v3660, %v3702
    %v3704 = vpop.f32.mrb[0].mxu0
    %v3705 = vadd.f32 %v3662, %v3704
    %v3706 = vpop.f32.mrb[0].mxu0
    %v3707 = vadd.f32 %v3664, %v3706
    %v3708 = vpop.f32.mrb[0].mxu0
    %v3709 = vadd.f32 %v3666, %v3708
    %3710 = vdwg.mxu0
    %3711 = vmatprep.subr.bf16.mxu0 %v2561
    %3712 = vmatpush1.bf16.msra.mxu0 %v2560
    %3713 = vmatprep.subr.bf16.mxu0 %v2569
    %3714 = vmatpush1.bf16.msra.mxu0 %v2568
    %3715 = vmatprep.subr.bf16.mxu0 %v2577
    %3716 = vmatpush1.bf16.msra.mxu0 %v2576
    %3717 = vmatprep.subr.bf16.mxu0 %v2585
    %3718 = vmatpush1.bf16.msra.mxu0 %v2584
    %3719 = vmatprep.subr.bf16.mxu0 %v2593
    %3720 = vmatpush1.bf16.msra.mxu0 %v2592
    %3721 = vmatprep.subr.bf16.mxu0 %v2601
    %3722 = vmatpush1.bf16.msra.mxu0 %v2600
    %3723 = vmatprep.subr.bf16.mxu0 %v2609
    %3724 = vmatpush1.bf16.msra.mxu0 %v2608
    %3725 = vmatprep.subr.bf16.mxu0 %v2617
    %3726 = vmatpush1.bf16.msra.mxu0 %v2616
    %3727 = vmatprep.subr.bf16.mxu0 0
    %3728 = vmatpush1.bf16.msra.mxu0 0
    %3729 = vmatprep.subr.bf16.mxu0 0
    %3730 = vmatpush1.bf16.msra.mxu0 0
    %3731 = vmatprep.subr.bf16.mxu0 0
    %3732 = vmatpush1.bf16.msra.mxu0 0
    %3733 = vmatprep.subr.bf16.mxu0 0
    %3734 = vmatpush1.bf16.msra.mxu0 0
    %3735 = vmatprep.subr.bf16.mxu0 0
    %3736 = vmatpush1.bf16.msra.mxu0 0
    %3737 = vmatprep.subr.bf16.mxu0 0
    %3738 = vmatpush1.bf16.msra.mxu0 0
    %3739 = vmatprep.subr.bf16.mxu0 0
    %3740 = vmatpush1.bf16.msra.mxu0 0
    %3741 = vmatprep.subr.bf16.mxu0 0
    %3742 = vmatpush1.bf16.msra.mxu0 0
    %3743 = vmatprep.mubr.bf16.mxu0 0
    %3744 = vmatmul.mubr.bf16.gmra.mrb[0].mxu0 %v818
    %v3745 = vpop.f32.mrb[0].mxu0
    %v3746 = vadd.f32 %v3703, %v3745
    %v3747 = vpop.f32.mrb[0].mxu0
    %v3748 = vadd.f32 %v3705, %v3747
    %v3749 = vpop.f32.mrb[0].mxu0
    %v3750 = vadd.f32 %v3707, %v3749
    %v3751 = vpop.f32.mrb[0].mxu0
    %v3752 = vadd.f32 %v3709, %v3751
    %3753 = vdwg.mxu0
    %v3754 = vmul.f32 %v3230, 0.5
    %v3755 = vmul.f32 %v3232, 0.5
    %v3756 = vmul.f32 %v3402, 0.5
    %v3757 = vmul.f32 %v3404, 0.5
    %v3758 = vmul.f32 %v3574, 0.5
    %v3759 = vmul.f32 %v3576, 0.5
    %v3760 = vmul.f32 %v3746, 0.5
    %v3761 = vmul.f32 %v3748, 0.5
    %v3762 = vmul.f32 %v3234, 0.5
    %v3763 = vmul.f32 %v3236, 0.5
    %v3764 = vmul.f32 %v3406, 0.5
    %v3765 = vmul.f32 %v3408, 0.5
    %v3766 = vmul.f32 %v3578, 0.5
    %v3767 = vmul.f32 %v3580, 0.5
    %v3768 = vmul.f32 %v3750, 0.5
    %v3769 = vmul.f32 %v3752, 0.5
    %v3770 = vmul.f32 %v3230, 0.70710677
    %v3771 = vmul.f32 %v3232, 0.70710677
    %v3772 = vmul.f32 %v3402, 0.70710677
    %v3773 = vmul.f32 %v3404, 0.70710677
    %v3774 = vmul.f32 %v3574, 0.70710677
    %v3775 = vmul.f32 %v3576, 0.70710677
    %v3776 = vmul.f32 %v3746, 0.70710677
    %v3777 = vmul.f32 %v3748, 0.70710677
    %v3778 = vmul.f32 %v3234, 0.70710677
    %v3779 = vmul.f32 %v3236, 0.70710677
    %v3780 = vmul.f32 %v3406, 0.70710677
    %v3781 = vmul.f32 %v3408, 0.70710677
    %v3782 = vmul.f32 %v3578, 0.70710677
    %v3783 = vmul.f32 %v3580, 0.70710677
    %v3784 = vmul.f32 %v3750, 0.70710677
    %v3785 = vmul.f32 %v3752, 0.70710677
    %v3786 = verf.f32.pop %v3770
    %v3787 = verf.f32.pop %v3771
    %v3788 = verf.f32.pop %v3772
    %v3789 = verf.f32.pop %v3773
    %v3790 = verf.f32.pop %v3774
    %v3791 = verf.f32.pop %v3775
    %v3792 = verf.f32.pop %v3776
    %v3793 = verf.f32.pop %v3777
    %v3794 = verf.f32.pop %v3778
    %v3795 = verf.f32.pop %v3779
    %v3796 = verf.f32.pop %v3780
    %v3797 = verf.f32.pop %v3781
    %v3798 = verf.f32.pop %v3782
    %v3799 = verf.f32.pop %v3783
    %v3800 = verf.f32.pop %v3784
    %v3801 = verf.f32.pop %v3785
    %v3802 = vadd.f32 %v3786, 1.0
    %v3803 = vadd.f32 %v3787, 1.0
    %v3804 = vadd.f32 %v3788, 1.0
    %v3805 = vadd.f32 %v3789, 1.0
    %v3806 = vadd.f32 %v3790, 1.0
    %v3807 = vadd.f32 %v3791, 1.0
    %v3808 = vadd.f32 %v3792, 1.0
    %v3809 = vadd.f32 %v3793, 1.0
    %v3810 = vadd.f32 %v3794, 1.0
    %v3811 = vadd.f32 %v3795, 1.0
    %v3812 = vadd.f32 %v3796, 1.0
    %v3813 = vadd.f32 %v3797, 1.0
    %v3814 = vadd.f32 %v3798, 1.0
    %v3815 = vadd.f32 %v3799, 1.0
    %v3816 = vadd.f32 %v3800, 1.0
    %v3817 = vadd.f32 %v3801, 1.0
    %v3818 = vmul.f32 %v3754, %v3802
    %v3819 = vmul.f32 %v3755, %v3803
    %v3820 = vmul.f32 %v3756, %v3804
    %v3821 = vmul.f32 %v3757, %v3805
    %v3822 = vmul.f32 %v3758, %v3806
    %v3823 = vmul.f32 %v3759, %v3807
    %v3824 = vmul.f32 %v3760, %v3808
    %v3825 = vmul.f32 %v3761, %v3809
    %v3826 = vmul.f32 %v3762, %v3810
    %v3827 = vmul.f32 %v3763, %v3811
    %v3828 = vmul.f32 %v3764, %v3812
    %v3829 = vmul.f32 %v3765, %v3813
    %v3830 = vmul.f32 %v3766, %v3814
    %v3831 = vmul.f32 %v3767, %v3815
    %v3832 = vmul.f32 %v3768, %v3816
    %v3833 = vmul.f32 %v3769, %v3817
    %v3834 = vpack.c.bf16 %v3826, %v3818
    %v3835 = vpack.c.bf16 %v3827, %v3819
    %v3836 = vpack.c.bf16 %v3828, %v3820
    %v3837 = vpack.c.bf16 %v3829, %v3821
    %v3838 = vpack.c.bf16 %v3830, %v3822
    %v3839 = vpack.c.bf16 %v3831, %v3823
    %v3840 = vpack.c.bf16 %v3832, %v3824
    %v3841 = vpack.c.bf16 %v3833, %v3825
    %v3842 = vld [vmem:[#allocation6] sm:$0xff]
    %v3843 = vld [vmem:[#allocation6 + $0x8] sm:$0xff]
    %v3844 = vld [vmem:[#allocation6 + $0x10] sm:$0xff]
    %v3845 = vld [vmem:[#allocation6 + $0x18] sm:$0xff]
    %v3846 = vld [vmem:[#allocation6 + $0x20] sm:$0xff]
    %v3847 = vld [vmem:[#allocation6 + $0x28] sm:$0xff]
    %v3848 = vld [vmem:[#allocation6 + $0x30] sm:$0xff]
    %v3849 = vld [vmem:[#allocation6 + $0x38] sm:$0xff]
    %v3850 = vld [vmem:[#allocation6 + $0x40] sm:$0xff]
    %v3851 = vld [vmem:[#allocation6 + $0x48] sm:$0xff]
    %v3852 = vld [vmem:[#allocation6 + $0x50] sm:$0xff]
    %v3853 = vld [vmem:[#allocation6 + $0x58] sm:$0xff]
    %v3854 = vld [vmem:[#allocation6 + $0x60] sm:$0xff]
    %v3855 = vld [vmem:[#allocation6 + $0x68] sm:$0xff]
    %v3856 = vld [vmem:[#allocation6 + $0x70] sm:$0xff]
    %v3857 = vld [vmem:[#allocation6 + $0x78] sm:$0xff]
    %v3858 = vld [vmem:[#allocation6 + $0x80] sm:$0xff]
    %v3859 = vld [vmem:[#allocation6 + $0x88] sm:$0xff]
    %v3860 = vld [vmem:[#allocation6 + $0x90] sm:$0xff]
    %v3861 = vld [vmem:[#allocation6 + $0x98] sm:$0xff]
    %v3862 = vld [vmem:[#allocation6 + $0xa0] sm:$0xff]
    %v3863 = vld [vmem:[#allocation6 + $0xa8] sm:$0xff]
    %v3864 = vld [vmem:[#allocation6 + $0xb0] sm:$0xff]
    %v3865 = vld [vmem:[#allocation6 + $0xb8] sm:$0xff]
    %v3866 = vld [vmem:[#allocation6 + $0xc0] sm:$0xff]
    %v3867 = vld [vmem:[#allocation6 + $0xc8] sm:$0xff]
    %v3868 = vld [vmem:[#allocation6 + $0xd0] sm:$0xff]
    %v3869 = vld [vmem:[#allocation6 + $0xd8] sm:$0xff]
    %v3870 = vld [vmem:[#allocation6 + $0xe0] sm:$0xff]
    %v3871 = vld [vmem:[#allocation6 + $0xe8] sm:$0xff]
    %v3872 = vld [vmem:[#allocation6 + $0xf0] sm:$0xff]
    %v3873 = vld [vmem:[#allocation6 + $0xf8] sm:$0xff]
    %v3874 = vld [vmem:[#allocation6 + $0x100] sm:$0xff]
    %v3875 = vld [vmem:[#allocation6 + $0x108] sm:$0xff]
    %v3876 = vld [vmem:[#allocation6 + $0x110] sm:$0xff]
    %v3877 = vld [vmem:[#allocation6 + $0x118] sm:$0xff]
    %v3878 = vld [vmem:[#allocation6 + $0x120] sm:$0xff]
    %v3879 = vld [vmem:[#allocation6 + $0x128] sm:$0xff]
    %v3880 = vld [vmem:[#allocation6 + $0x130] sm:$0xff]
    %v3881 = vld [vmem:[#allocation6 + $0x138] sm:$0xff]
    %v3882 = vld [vmem:[#allocation6 + $0x140] sm:$0xff]
    %v3883 = vld [vmem:[#allocation6 + $0x148] sm:$0xff]
    %v3884 = vld [vmem:[#allocation6 + $0x150] sm:$0xff]
    %v3885 = vld [vmem:[#allocation6 + $0x158] sm:$0xff]
    %v3886 = vld [vmem:[#allocation6 + $0x160] sm:$0xff]
    %v3887 = vld [vmem:[#allocation6 + $0x168] sm:$0xff]
    %v3888 = vld [vmem:[#allocation6 + $0x170] sm:$0xff]
    %v3889 = vld [vmem:[#allocation6 + $0x178] sm:$0xff]
    %v3890 = vld [vmem:[#allocation6 + $0x180] sm:$0xff]
    %v3891 = vld [vmem:[#allocation6 + $0x188] sm:$0xff]
    %v3892 = vld [vmem:[#allocation6 + $0x190] sm:$0xff]
    %v3893 = vld [vmem:[#allocation6 + $0x198] sm:$0xff]
    %v3894 = vld [vmem:[#allocation6 + $0x1a0] sm:$0xff]
    %v3895 = vld [vmem:[#allocation6 + $0x1a8] sm:$0xff]
    %v3896 = vld [vmem:[#allocation6 + $0x1b0] sm:$0xff]
    %v3897 = vld [vmem:[#allocation6 + $0x1b8] sm:$0xff]
    %v3898 = vld [vmem:[#allocation6 + $0x1c0] sm:$0xff]
    %v3899 = vld [vmem:[#allocation6 + $0x1c8] sm:$0xff]
    %v3900 = vld [vmem:[#allocation6 + $0x1d0] sm:$0xff]
    %v3901 = vld [vmem:[#allocation6 + $0x1d8] sm:$0xff]
    %v3902 = vld [vmem:[#allocation6 + $0x1e0] sm:$0xff]
    %v3903 = vld [vmem:[#allocation6 + $0x1e8] sm:$0xff]
    %v3904 = vld [vmem:[#allocation6 + $0x1f0] sm:$0xff]
    %v3905 = vld [vmem:[#allocation6 + $0x1f8] sm:$0xff]
    %v3906 = vld [vmem:[#allocation6 + $0x200] sm:$0xff]
    %v3907 = vld [vmem:[#allocation6 + $0x208] sm:$0xff]
    %v3908 = vld [vmem:[#allocation6 + $0x210] sm:$0xff]
    %v3909 = vld [vmem:[#allocation6 + $0x218] sm:$0xff]
    %v3910 = vld [vmem:[#allocation6 + $0x220] sm:$0xff]
    %v3911 = vld [vmem:[#allocation6 + $0x228] sm:$0xff]
    %v3912 = vld [vmem:[#allocation6 + $0x230] sm:$0xff]
    %v3913 = vld [vmem:[#allocation6 + $0x238] sm:$0xff]
    %v3914 = vld [vmem:[#allocation6 + $0x240] sm:$0xff]
    %v3915 = vld [vmem:[#allocation6 + $0x248] sm:$0xff]
    %v3916 = vld [vmem:[#allocation6 + $0x250] sm:$0xff]
    %v3917 = vld [vmem:[#allocation6 + $0x258] sm:$0xff]
    %v3918 = vld [vmem:[#allocation6 + $0x260] sm:$0xff]
    %v3919 = vld [vmem:[#allocation6 + $0x268] sm:$0xff]
    %v3920 = vld [vmem:[#allocation6 + $0x270] sm:$0xff]
    %v3921 = vld [vmem:[#allocation6 + $0x278] sm:$0xff]
    %v3922 = vld [vmem:[#allocation6 + $0x280] sm:$0xff]
    %v3923 = vld [vmem:[#allocation6 + $0x288] sm:$0xff]
    %v3924 = vld [vmem:[#allocation6 + $0x290] sm:$0xff]
    %v3925 = vld [vmem:[#allocation6 + $0x298] sm:$0xff]
    %v3926 = vld [vmem:[#allocation6 + $0x2a0] sm:$0xff]
    %v3927 = vld [vmem:[#allocation6 + $0x2a8] sm:$0xff]
    %v3928 = vld [vmem:[#allocation6 + $0x2b0] sm:$0xff]
    %v3929 = vld [vmem:[#allocation6 + $0x2b8] sm:$0xff]
    %v3930 = vld [vmem:[#allocation6 + $0x2c0] sm:$0xff]
    %v3931 = vld [vmem:[#allocation6 + $0x2c8] sm:$0xff]
    %v3932 = vld [vmem:[#allocation6 + $0x2d0] sm:$0xff]
    %v3933 = vld [vmem:[#allocation6 + $0x2d8] sm:$0xff]
    %v3934 = vld [vmem:[#allocation6 + $0x2e0] sm:$0xff]
    %v3935 = vld [vmem:[#allocation6 + $0x2e8] sm:$0xff]
    %v3936 = vld [vmem:[#allocation6 + $0x2f0] sm:$0xff]
    %v3937 = vld [vmem:[#allocation6 + $0x2f8] sm:$0xff]
    %v3938 = vld [vmem:[#allocation6 + $0x300] sm:$0xff]
    %v3939 = vld [vmem:[#allocation6 + $0x308] sm:$0xff]
    %v3940 = vld [vmem:[#allocation6 + $0x310] sm:$0xff]
    %v3941 = vld [vmem:[#allocation6 + $0x318] sm:$0xff]
    %v3942 = vld [vmem:[#allocation6 + $0x320] sm:$0xff]
    %v3943 = vld [vmem:[#allocation6 + $0x328] sm:$0xff]
    %v3944 = vld [vmem:[#allocation6 + $0x330] sm:$0xff]
    %v3945 = vld [vmem:[#allocation6 + $0x338] sm:$0xff]
    %v3946 = vld [vmem:[#allocation6 + $0x340] sm:$0xff]
    %v3947 = vld [vmem:[#allocation6 + $0x348] sm:$0xff]
    %v3948 = vld [vmem:[#allocation6 + $0x350] sm:$0xff]
    %v3949 = vld [vmem:[#allocation6 + $0x358] sm:$0xff]
    %v3950 = vld [vmem:[#allocation6 + $0x360] sm:$0xff]
    %v3951 = vld [vmem:[#allocation6 + $0x368] sm:$0xff]
    %v3952 = vld [vmem:[#allocation6 + $0x370] sm:$0xff]
    %v3953 = vld [vmem:[#allocation6 + $0x378] sm:$0xff]
    %v3954 = vld [vmem:[#allocation6 + $0x380] sm:$0xff]
    %v3955 = vld [vmem:[#allocation6 + $0x388] sm:$0xff]
    %v3956 = vld [vmem:[#allocation6 + $0x390] sm:$0xff]
    %v3957 = vld [vmem:[#allocation6 + $0x398] sm:$0xff]
    %v3958 = vld [vmem:[#allocation6 + $0x3a0] sm:$0xff]
    %v3959 = vld [vmem:[#allocation6 + $0x3a8] sm:$0xff]
    %v3960 = vld [vmem:[#allocation6 + $0x3b0] sm:$0xff]
    %v3961 = vld [vmem:[#allocation6 + $0x3b8] sm:$0xff]
    %v3962 = vld [vmem:[#allocation6 + $0x3c0] sm:$0xff]
    %v3963 = vld [vmem:[#allocation6 + $0x3c8] sm:$0xff]
    %v3964 = vld [vmem:[#allocation6 + $0x3d0] sm:$0xff]
    %v3965 = vld [vmem:[#allocation6 + $0x3d8] sm:$0xff]
    %v3966 = vld [vmem:[#allocation6 + $0x3e0] sm:$0xff]
    %v3967 = vld [vmem:[#allocation6 + $0x3e8] sm:$0xff]
    %v3968 = vld [vmem:[#allocation6 + $0x3f0] sm:$0xff]
    %v3969 = vld [vmem:[#allocation6 + $0x3f8] sm:$0xff]
    %v3970 = vld [vmem:[#allocation6 + $0x400] sm:$0xff]
    %v3971 = vld [vmem:[#allocation6 + $0x408] sm:$0xff]
    %v3972 = vld [vmem:[#allocation6 + $0x410] sm:$0xff]
    %v3973 = vld [vmem:[#allocation6 + $0x418] sm:$0xff]
    %v3974 = vld [vmem:[#allocation6 + $0x420] sm:$0xff]
    %v3975 = vld [vmem:[#allocation6 + $0x428] sm:$0xff]
    %v3976 = vld [vmem:[#allocation6 + $0x430] sm:$0xff]
    %v3977 = vld [vmem:[#allocation6 + $0x438] sm:$0xff]
    %v3978 = vld [vmem:[#allocation6 + $0x440] sm:$0xff]
    %v3979 = vld [vmem:[#allocation6 + $0x448] sm:$0xff]
    %v3980 = vld [vmem:[#allocation6 + $0x450] sm:$0xff]
    %v3981 = vld [vmem:[#allocation6 + $0x458] sm:$0xff]
    %v3982 = vld [vmem:[#allocation6 + $0x460] sm:$0xff]
    %v3983 = vld [vmem:[#allocation6 + $0x468] sm:$0xff]
    %v3984 = vld [vmem:[#allocation6 + $0x470] sm:$0xff]
    %v3985 = vld [vmem:[#allocation6 + $0x478] sm:$0xff]
    %v3986 = vld [vmem:[#allocation6 + $0x480] sm:$0xff]
    %v3987 = vld [vmem:[#allocation6 + $0x488] sm:$0xff]
    %v3988 = vld [vmem:[#allocation6 + $0x490] sm:$0xff]
    %v3989 = vld [vmem:[#allocation6 + $0x498] sm:$0xff]
    %v3990 = vld [vmem:[#allocation6 + $0x4a0] sm:$0xff]
    %v3991 = vld [vmem:[#allocation6 + $0x4a8] sm:$0xff]
    %v3992 = vld [vmem:[#allocation6 + $0x4b0] sm:$0xff]
    %v3993 = vld [vmem:[#allocation6 + $0x4b8] sm:$0xff]
    %v3994 = vld [vmem:[#allocation6 + $0x4c0] sm:$0xff]
    %v3995 = vld [vmem:[#allocation6 + $0x4c8] sm:$0xff]
    %v3996 = vld [vmem:[#allocation6 + $0x4d0] sm:$0xff]
    %v3997 = vld [vmem:[#allocation6 + $0x4d8] sm:$0xff]
    %v3998 = vld [vmem:[#allocation6 + $0x4e0] sm:$0xff]
    %v3999 = vld [vmem:[#allocation6 + $0x4e8] sm:$0xff]
    %v4000 = vld [vmem:[#allocation6 + $0x4f0] sm:$0xff]
    %v4001 = vld [vmem:[#allocation6 + $0x4f8] sm:$0xff]
    %v4002 = vld [vmem:[#allocation6 + $0x500] sm:$0xff]
    %v4003 = vld [vmem:[#allocation6 + $0x508] sm:$0xff]
    %v4004 = vld [vmem:[#allocation6 + $0x510] sm:$0xff]
    %v4005 = vld [vmem:[#allocation6 + $0x518] sm:$0xff]
    %v4006 = vld [vmem:[#allocation6 + $0x520] sm:$0xff]
    %v4007 = vld [vmem:[#allocation6 + $0x528] sm:$0xff]
    %v4008 = vld [vmem:[#allocation6 + $0x530] sm:$0xff]
    %v4009 = vld [vmem:[#allocation6 + $0x538] sm:$0xff]
    %v4010 = vld [vmem:[#allocation6 + $0x540] sm:$0xff]
    %v4011 = vld [vmem:[#allocation6 + $0x548] sm:$0xff]
    %v4012 = vld [vmem:[#allocation6 + $0x550] sm:$0xff]
    %v4013 = vld [vmem:[#allocation6 + $0x558] sm:$0xff]
    %v4014 = vld [vmem:[#allocation6 + $0x560] sm:$0xff]
    %v4015 = vld [vmem:[#allocation6 + $0x568] sm:$0xff]
    %v4016 = vld [vmem:[#allocation6 + $0x570] sm:$0xff]
    %v4017 = vld [vmem:[#allocation6 + $0x578] sm:$0xff]
    %v4018 = vld [vmem:[#allocation6 + $0x580] sm:$0xff]
    %v4019 = vld [vmem:[#allocation6 + $0x588] sm:$0xff]
    %v4020 = vld [vmem:[#allocation6 + $0x590] sm:$0xff]
    %v4021 = vld [vmem:[#allocation6 + $0x598] sm:$0xff]
    %v4022 = vld [vmem:[#allocation6 + $0x5a0] sm:$0xff]
    %v4023 = vld [vmem:[#allocation6 + $0x5a8] sm:$0xff]
    %v4024 = vld [vmem:[#allocation6 + $0x5b0] sm:$0xff]
    %v4025 = vld [vmem:[#allocation6 + $0x5b8] sm:$0xff]
    %v4026 = vld [vmem:[#allocation6 + $0x5c0] sm:$0xff]
    %v4027 = vld [vmem:[#allocation6 + $0x5c8] sm:$0xff]
    %v4028 = vld [vmem:[#allocation6 + $0x5d0] sm:$0xff]
    %v4029 = vld [vmem:[#allocation6 + $0x5d8] sm:$0xff]
    %v4030 = vld [vmem:[#allocation6 + $0x5e0] sm:$0xff]
    %v4031 = vld [vmem:[#allocation6 + $0x5e8] sm:$0xff]
    %v4032 = vld [vmem:[#allocation6 + $0x5f0] sm:$0xff]
    %v4033 = vld [vmem:[#allocation6 + $0x5f8] sm:$0xff]
    %v4034 = vld [vmem:[#allocation6 + $0x600] sm:$0xff]
    %v4035 = vld [vmem:[#allocation6 + $0x608] sm:$0xff]
    %v4036 = vld [vmem:[#allocation6 + $0x610] sm:$0xff]
    %v4037 = vld [vmem:[#allocation6 + $0x618] sm:$0xff]
    %v4038 = vld [vmem:[#allocation6 + $0x620] sm:$0xff]
    %v4039 = vld [vmem:[#allocation6 + $0x628] sm:$0xff]
    %v4040 = vld [vmem:[#allocation6 + $0x630] sm:$0xff]
    %v4041 = vld [vmem:[#allocation6 + $0x638] sm:$0xff]
    %v4042 = vld [vmem:[#allocation6 + $0x640] sm:$0xff]
    %v4043 = vld [vmem:[#allocation6 + $0x648] sm:$0xff]
    %v4044 = vld [vmem:[#allocation6 + $0x650] sm:$0xff]
    %v4045 = vld [vmem:[#allocation6 + $0x658] sm:$0xff]
    %v4046 = vld [vmem:[#allocation6 + $0x660] sm:$0xff]
    %v4047 = vld [vmem:[#allocation6 + $0x668] sm:$0xff]
    %v4048 = vld [vmem:[#allocation6 + $0x670] sm:$0xff]
    %v4049 = vld [vmem:[#allocation6 + $0x678] sm:$0xff]
    %v4050 = vld [vmem:[#allocation6 + $0x680] sm:$0xff]
    %v4051 = vld [vmem:[#allocation6 + $0x688] sm:$0xff]
    %v4052 = vld [vmem:[#allocation6 + $0x690] sm:$0xff]
    %v4053 = vld [vmem:[#allocation6 + $0x698] sm:$0xff]
    %v4054 = vld [vmem:[#allocation6 + $0x6a0] sm:$0xff]
    %v4055 = vld [vmem:[#allocation6 + $0x6a8] sm:$0xff]
    %v4056 = vld [vmem:[#allocation6 + $0x6b0] sm:$0xff]
    %v4057 = vld [vmem:[#allocation6 + $0x6b8] sm:$0xff]
    %v4058 = vld [vmem:[#allocation6 + $0x6c0] sm:$0xff]
    %v4059 = vld [vmem:[#allocation6 + $0x6c8] sm:$0xff]
    %v4060 = vld [vmem:[#allocation6 + $0x6d0] sm:$0xff]
    %v4061 = vld [vmem:[#allocation6 + $0x6d8] sm:$0xff]
    %v4062 = vld [vmem:[#allocation6 + $0x6e0] sm:$0xff]
    %v4063 = vld [vmem:[#allocation6 + $0x6e8] sm:$0xff]
    %v4064 = vld [vmem:[#allocation6 + $0x6f0] sm:$0xff]
    %v4065 = vld [vmem:[#allocation6 + $0x6f8] sm:$0xff]
    %v4066 = vld [vmem:[#allocation6 + $0x700] sm:$0xff]
    %v4067 = vld [vmem:[#allocation6 + $0x708] sm:$0xff]
    %v4068 = vld [vmem:[#allocation6 + $0x710] sm:$0xff]
    %v4069 = vld [vmem:[#allocation6 + $0x718] sm:$0xff]
    %v4070 = vld [vmem:[#allocation6 + $0x720] sm:$0xff]
    %v4071 = vld [vmem:[#allocation6 + $0x728] sm:$0xff]
    %v4072 = vld [vmem:[#allocation6 + $0x730] sm:$0xff]
    %v4073 = vld [vmem:[#allocation6 + $0x738] sm:$0xff]
    %v4074 = vld [vmem:[#allocation6 + $0x740] sm:$0xff]
    %v4075 = vld [vmem:[#allocation6 + $0x748] sm:$0xff]
    %v4076 = vld [vmem:[#allocation6 + $0x750] sm:$0xff]
    %v4077 = vld [vmem:[#allocation6 + $0x758] sm:$0xff]
    %v4078 = vld [vmem:[#allocation6 + $0x760] sm:$0xff]
    %v4079 = vld [vmem:[#allocation6 + $0x768] sm:$0xff]
    %v4080 = vld [vmem:[#allocation6 + $0x770] sm:$0xff]
    %v4081 = vld [vmem:[#allocation6 + $0x778] sm:$0xff]
    %v4082 = vld [vmem:[#allocation6 + $0x780] sm:$0xff]
    %v4083 = vld [vmem:[#allocation6 + $0x788] sm:$0xff]
    %v4084 = vld [vmem:[#allocation6 + $0x790] sm:$0xff]
    %v4085 = vld [vmem:[#allocation6 + $0x798] sm:$0xff]
    %v4086 = vld [vmem:[#allocation6 + $0x7a0] sm:$0xff]
    %v4087 = vld [vmem:[#allocation6 + $0x7a8] sm:$0xff]
    %v4088 = vld [vmem:[#allocation6 + $0x7b0] sm:$0xff]
    %v4089 = vld [vmem:[#allocation6 + $0x7b8] sm:$0xff]
    %v4090 = vld [vmem:[#allocation6 + $0x7c0] sm:$0xff]
    %v4091 = vld [vmem:[#allocation6 + $0x7c8] sm:$0xff]
    %v4092 = vld [vmem:[#allocation6 + $0x7d0] sm:$0xff]
    %v4093 = vld [vmem:[#allocation6 + $0x7d8] sm:$0xff]
    %v4094 = vld [vmem:[#allocation6 + $0x7e0] sm:$0xff]
    %v4095 = vld [vmem:[#allocation6 + $0x7e8] sm:$0xff]
    %v4096 = vld [vmem:[#allocation6 + $0x7f0] sm:$0xff]
    %v4097 = vld [vmem:[#allocation6 + $0x7f8] sm:$0xff]
    %v4098 = vld [vmem:[#allocation7] sm:$0xf]
    %v4100 = vlaneseq
    %v4101 = vshrl.u32 %v4100, 7
    %v4102 = vsub.s32 0, %v4101
    %v4103 = vrot.slane %v4098, %v4102
    %v4104 = vlaneseq
    %v4105 = vshrl.u32 %v4104, 7
    %v4106 = vsub.s32 1, %v4105
    %v4107 = vrot.slane %v4098, %v4106
    %v4108 = vlaneseq
    %v4109 = vshrl.u32 %v4108, 7
    %v4110 = vsub.s32 2, %v4109
    %v4111 = vrot.slane %v4098, %v4110
    %v4112 = vlaneseq
    %v4113 = vshrl.u32 %v4112, 7
    %v4114 = vsub.s32 3, %v4113
    %v4115 = vrot.slane %v4098, %v4114
    %v4376 = vunpack.c.l.b16 %v3842
    %v4377 = vunpack.c.h.b16 %v3842
    %v4378 = vunpack.c.l.b16 %v3843
    %v4379 = vunpack.c.h.b16 %v3843
    %v4380 = vunpack.c.l.b16 %v3844
    %v4381 = vunpack.c.h.b16 %v3844
    %v4382 = vunpack.c.l.b16 %v3845
    %v4383 = vunpack.c.h.b16 %v3845
    %v4384 = vunpack.c.l.b16 %v3846
    %v4385 = vunpack.c.h.b16 %v3846
    %v4386 = vunpack.c.l.b16 %v3847
    %v4387 = vunpack.c.h.b16 %v3847
    %v4388 = vunpack.c.l.b16 %v3848
    %v4389 = vunpack.c.h.b16 %v3848
    %v4390 = vunpack.c.l.b16 %v3849
    %v4391 = vunpack.c.h.b16 %v3849
    %v4392 = vunpack.c.l.b16 %v3850
    %v4393 = vunpack.c.h.b16 %v3850
    %v4394 = vunpack.c.l.b16 %v3851
    %v4395 = vunpack.c.h.b16 %v3851
    %v4396 = vunpack.c.l.b16 %v3852
    %v4397 = vunpack.c.h.b16 %v3852
    %v4398 = vunpack.c.l.b16 %v3853
    %v4399 = vunpack.c.h.b16 %v3853
    %v4400 = vunpack.c.l.b16 %v3854
    %v4401 = vunpack.c.h.b16 %v3854
    %v4402 = vunpack.c.l.b16 %v3855
    %v4403 = vunpack.c.h.b16 %v3855
    %v4404 = vunpack.c.l.b16 %v3856
    %v4405 = vunpack.c.h.b16 %v3856
    %v4406 = vunpack.c.l.b16 %v3857
    %v4407 = vunpack.c.h.b16 %v3857
    %v4408 = vunpack.c.l.b16 %v3858
    %v4409 = vunpack.c.h.b16 %v3858
    %v4410 = vunpack.c.l.b16 %v3859
    %v4411 = vunpack.c.h.b16 %v3859
    %v4412 = vunpack.c.l.b16 %v3860
    %v4413 = vunpack.c.h.b16 %v3860
    %v4414 = vunpack.c.l.b16 %v3861
    %v4415 = vunpack.c.h.b16 %v3861
    %v4416 = vunpack.c.l.b16 %v3862
    %v4417 = vunpack.c.h.b16 %v3862
    %v4418 = vunpack.c.l.b16 %v3863
    %v4419 = vunpack.c.h.b16 %v3863
    %v4420 = vunpack.c.l.b16 %v3864
    %v4421 = vunpack.c.h.b16 %v3864
    %v4422 = vunpack.c.l.b16 %v3865
    %v4423 = vunpack.c.h.b16 %v3865
    %v4424 = vunpack.c.l.b16 %v3866
    %v4425 = vunpack.c.h.b16 %v3866
    %v4426 = vunpack.c.l.b16 %v3867
    %v4427 = vunpack.c.h.b16 %v3867
    %v4428 = vunpack.c.l.b16 %v3868
    %v4429 = vunpack.c.h.b16 %v3868
    %v4430 = vunpack.c.l.b16 %v3869
    %v4431 = vunpack.c.h.b16 %v3869
    %v4432 = vunpack.c.l.b16 %v3870
    %v4433 = vunpack.c.h.b16 %v3870
    %v4434 = vunpack.c.l.b16 %v3871
    %v4435 = vunpack.c.h.b16 %v3871
    %v4436 = vunpack.c.l.b16 %v3872
    %v4437 = vunpack.c.h.b16 %v3872
    %v4438 = vunpack.c.l.b16 %v3873
    %v4439 = vunpack.c.h.b16 %v3873
    %v4440 = vunpack.c.l.b16 %v3874
    %v4441 = vunpack.c.h.b16 %v3874
    %v4442 = vunpack.c.l.b16 %v3875
    %v4443 = vunpack.c.h.b16 %v3875
    %v4444 = vunpack.c.l.b16 %v3876
    %v4445 = vunpack.c.h.b16 %v3876
    %v4446 = vunpack.c.l.b16 %v3877
    %v4447 = vunpack.c.h.b16 %v3877
    %v4448 = vunpack.c.l.b16 %v3878
    %v4449 = vunpack.c.h.b16 %v3878
    %v4450 = vunpack.c.l.b16 %v3879
    %v4451 = vunpack.c.h.b16 %v3879
    %v4452 = vunpack.c.l.b16 %v3880
    %v4453 = vunpack.c.h.b16 %v3880
    %v4454 = vunpack.c.l.b16 %v3881
    %v4455 = vunpack.c.h.b16 %v3881
    %v4456 = vunpack.c.l.b16 %v3882
    %v4457 = vunpack.c.h.b16 %v3882
    %v4458 = vunpack.c.l.b16 %v3883
    %v4459 = vunpack.c.h.b16 %v3883
    %v4460 = vunpack.c.l.b16 %v3884
    %v4461 = vunpack.c.h.b16 %v3884
    %v4462 = vunpack.c.l.b16 %v3885
    %v4463 = vunpack.c.h.b16 %v3885
    %v4464 = vunpack.c.l.b16 %v3886
    %v4465 = vunpack.c.h.b16 %v3886
    %v4466 = vunpack.c.l.b16 %v3887
    %v4467 = vunpack.c.h.b16 %v3887
    %v4468 = vunpack.c.l.b16 %v3888
    %v4469 = vunpack.c.h.b16 %v3888
    %v4470 = vunpack.c.l.b16 %v3889
    %v4471 = vunpack.c.h.b16 %v3889
    %v4472 = vunpack.c.l.b16 %v3890
    %v4473 = vunpack.c.h.b16 %v3890
    %v4474 = vunpack.c.l.b16 %v3891
    %v4475 = vunpack.c.h.b16 %v3891
    %v4476 = vunpack.c.l.b16 %v3892
    %v4477 = vunpack.c.h.b16 %v3892
    %v4478 = vunpack.c.l.b16 %v3893
    %v4479 = vunpack.c.h.b16 %v3893
    %v4480 = vunpack.c.l.b16 %v3894
    %v4481 = vunpack.c.h.b16 %v3894
    %v4482 = vunpack.c.l.b16 %v3895
    %v4483 = vunpack.c.h.b16 %v3895
    %v4484 = vunpack.c.l.b16 %v3896
    %v4485 = vunpack.c.h.b16 %v3896
    %v4486 = vunpack.c.l.b16 %v3897
    %v4487 = vunpack.c.h.b16 %v3897
    %v4488 = vunpack.c.l.b16 %v3898
    %v4489 = vunpack.c.h.b16 %v3898
    %v4490 = vunpack.c.l.b16 %v3899
    %v4491 = vunpack.c.h.b16 %v3899
    %v4492 = vunpack.c.l.b16 %v3900
    %v4493 = vunpack.c.h.b16 %v3900
    %v4494 = vunpack.c.l.b16 %v3901
    %v4495 = vunpack.c.h.b16 %v3901
    %v4496 = vunpack.c.l.b16 %v3902
    %v4497 = vunpack.c.h.b16 %v3902
    %v4498 = vunpack.c.l.b16 %v3903
    %v4499 = vunpack.c.h.b16 %v3903
    %v4500 = vunpack.c.l.b16 %v3904
    %v4501 = vunpack.c.h.b16 %v3904
    %v4502 = vunpack.c.l.b16 %v3905
    %v4503 = vunpack.c.h.b16 %v3905
    %v4504 = vunpack.c.l.b16 %v3906
    %v4505 = vunpack.c.h.b16 %v3906
    %v4506 = vunpack.c.l.b16 %v3907
    %v4507 = vunpack.c.h.b16 %v3907
    %v4508 = vunpack.c.l.b16 %v3908
    %v4509 = vunpack.c.h.b16 %v3908
    %v4510 = vunpack.c.l.b16 %v3909
    %v4511 = vunpack.c.h.b16 %v3909
    %v4512 = vunpack.c.l.b16 %v3910
    %v4513 = vunpack.c.h.b16 %v3910
    %v4514 = vunpack.c.l.b16 %v3911
    %v4515 = vunpack.c.h.b16 %v3911
    %v4516 = vunpack.c.l.b16 %v3912
    %v4517 = vunpack.c.h.b16 %v3912
    %v4518 = vunpack.c.l.b16 %v3913
    %v4519 = vunpack.c.h.b16 %v3913
    %v4520 = vunpack.c.l.b16 %v3914
    %v4521 = vunpack.c.h.b16 %v3914
    %v4522 = vunpack.c.l.b16 %v3915
    %v4523 = vunpack.c.h.b16 %v3915
    %v4524 = vunpack.c.l.b16 %v3916
    %v4525 = vunpack.c.h.b16 %v3916
    %v4526 = vunpack.c.l.b16 %v3917
    %v4527 = vunpack.c.h.b16 %v3917
    %v4528 = vunpack.c.l.b16 %v3918
    %v4529 = vunpack.c.h.b16 %v3918
    %v4530 = vunpack.c.l.b16 %v3919
    %v4531 = vunpack.c.h.b16 %v3919
    %v4532 = vunpack.c.l.b16 %v3920
    %v4533 = vunpack.c.h.b16 %v3920
    %v4534 = vunpack.c.l.b16 %v3921
    %v4535 = vunpack.c.h.b16 %v3921
    %v4536 = vunpack.c.l.b16 %v3922
    %v4537 = vunpack.c.h.b16 %v3922
    %v4538 = vunpack.c.l.b16 %v3923
    %v4539 = vunpack.c.h.b16 %v3923
    %v4540 = vunpack.c.l.b16 %v3924
    %v4541 = vunpack.c.h.b16 %v3924
    %v4542 = vunpack.c.l.b16 %v3925
    %v4543 = vunpack.c.h.b16 %v3925
    %v4544 = vunpack.c.l.b16 %v3926
    %v4545 = vunpack.c.h.b16 %v3926
    %v4546 = vunpack.c.l.b16 %v3927
    %v4547 = vunpack.c.h.b16 %v3927
    %v4548 = vunpack.c.l.b16 %v3928
    %v4549 = vunpack.c.h.b16 %v3928
    %v4550 = vunpack.c.l.b16 %v3929
    %v4551 = vunpack.c.h.b16 %v3929
    %v4552 = vunpack.c.l.b16 %v3930
    %v4553 = vunpack.c.h.b16 %v3930
    %v4554 = vunpack.c.l.b16 %v3931
    %v4555 = vunpack.c.h.b16 %v3931
    %v4556 = vunpack.c.l.b16 %v3932
    %v4557 = vunpack.c.h.b16 %v3932
    %v4558 = vunpack.c.l.b16 %v3933
    %v4559 = vunpack.c.h.b16 %v3933
    %v4560 = vunpack.c.l.b16 %v3934
    %v4561 = vunpack.c.h.b16 %v3934
    %v4562 = vunpack.c.l.b16 %v3935
    %v4563 = vunpack.c.h.b16 %v3935
    %v4564 = vunpack.c.l.b16 %v3936
    %v4565 = vunpack.c.h.b16 %v3936
    %v4566 = vunpack.c.l.b16 %v3937
    %v4567 = vunpack.c.h.b16 %v3937
    %v4568 = vunpack.c.l.b16 %v3938
    %v4569 = vunpack.c.h.b16 %v3938
    %v4570 = vunpack.c.l.b16 %v3939
    %v4571 = vunpack.c.h.b16 %v3939
    %v4572 = vunpack.c.l.b16 %v3940
    %v4573 = vunpack.c.h.b16 %v3940
    %v4574 = vunpack.c.l.b16 %v3941
    %v4575 = vunpack.c.h.b16 %v3941
    %v4576 = vunpack.c.l.b16 %v3942
    %v4577 = vunpack.c.h.b16 %v3942
    %v4578 = vunpack.c.l.b16 %v3943
    %v4579 = vunpack.c.h.b16 %v3943
    %v4580 = vunpack.c.l.b16 %v3944
    %v4581 = vunpack.c.h.b16 %v3944
    %v4582 = vunpack.c.l.b16 %v3945
    %v4583 = vunpack.c.h.b16 %v3945
    %v4584 = vunpack.c.l.b16 %v3946
    %v4585 = vunpack.c.h.b16 %v3946
    %v4586 = vunpack.c.l.b16 %v3947
    %v4587 = vunpack.c.h.b16 %v3947
    %v4588 = vunpack.c.l.b16 %v3948
    %v4589 = vunpack.c.h.b16 %v3948
    %v4590 = vunpack.c.l.b16 %v3949
    %v4591 = vunpack.c.h.b16 %v3949
    %v4592 = vunpack.c.l.b16 %v3950
    %v4593 = vunpack.c.h.b16 %v3950
    %v4594 = vunpack.c.l.b16 %v3951
    %v4595 = vunpack.c.h.b16 %v3951
    %v4596 = vunpack.c.l.b16 %v3952
    %v4597 = vunpack.c.h.b16 %v3952
    %v4598 = vunpack.c.l.b16 %v3953
    %v4599 = vunpack.c.h.b16 %v3953
    %v4600 = vunpack.c.l.b16 %v3954
    %v4601 = vunpack.c.h.b16 %v3954
    %v4602 = vunpack.c.l.b16 %v3955
    %v4603 = vunpack.c.h.b16 %v3955
    %v4604 = vunpack.c.l.b16 %v3956
    %v4605 = vunpack.c.h.b16 %v3956
    %v4606 = vunpack.c.l.b16 %v3957
    %v4607 = vunpack.c.h.b16 %v3957
    %v4608 = vunpack.c.l.b16 %v3958
    %v4609 = vunpack.c.h.b16 %v3958
    %v4610 = vunpack.c.l.b16 %v3959
    %v4611 = vunpack.c.h.b16 %v3959
    %v4612 = vunpack.c.l.b16 %v3960
    %v4613 = vunpack.c.h.b16 %v3960
    %v4614 = vunpack.c.l.b16 %v3961
    %v4615 = vunpack.c.h.b16 %v3961
    %v4616 = vunpack.c.l.b16 %v3962
    %v4617 = vunpack.c.h.b16 %v3962
    %v4618 = vunpack.c.l.b16 %v3963
    %v4619 = vunpack.c.h.b16 %v3963
    %v4620 = vunpack.c.l.b16 %v3964
    %v4621 = vunpack.c.h.b16 %v3964
    %v4622 = vunpack.c.l.b16 %v3965
    %v4623 = vunpack.c.h.b16 %v3965
    %v4624 = vunpack.c.l.b16 %v3966
    %v4625 = vunpack.c.h.b16 %v3966
    %v4626 = vunpack.c.l.b16 %v3967
    %v4627 = vunpack.c.h.b16 %v3967
    %v4628 = vunpack.c.l.b16 %v3968
    %v4629 = vunpack.c.h.b16 %v3968
    %v4630 = vunpack.c.l.b16 %v3969
    %v4631 = vunpack.c.h.b16 %v3969
    %v4632 = vunpack.c.l.b16 %v3970
    %v4633 = vunpack.c.h.b16 %v3970
    %v4634 = vunpack.c.l.b16 %v3971
    %v4635 = vunpack.c.h.b16 %v3971
    %v4636 = vunpack.c.l.b16 %v3972
    %v4637 = vunpack.c.h.b16 %v3972
    %v4638 = vunpack.c.l.b16 %v3973
    %v4639 = vunpack.c.h.b16 %v3973
    %v4640 = vunpack.c.l.b16 %v3974
    %v4641 = vunpack.c.h.b16 %v3974
    %v4642 = vunpack.c.l.b16 %v3975
    %v4643 = vunpack.c.h.b16 %v3975
    %v4644 = vunpack.c.l.b16 %v3976
    %v4645 = vunpack.c.h.b16 %v3976
    %v4646 = vunpack.c.l.b16 %v3977
    %v4647 = vunpack.c.h.b16 %v3977
    %v4648 = vunpack.c.l.b16 %v3978
    %v4649 = vunpack.c.h.b16 %v3978
    %v4650 = vunpack.c.l.b16 %v3979
    %v4651 = vunpack.c.h.b16 %v3979
    %v4652 = vunpack.c.l.b16 %v3980
    %v4653 = vunpack.c.h.b16 %v3980
    %v4654 = vunpack.c.l.b16 %v3981
    %v4655 = vunpack.c.h.b16 %v3981
    %v4656 = vunpack.c.l.b16 %v3982
    %v4657 = vunpack.c.h.b16 %v3982
    %v4658 = vunpack.c.l.b16 %v3983
    %v4659 = vunpack.c.h.b16 %v3983
    %v4660 = vunpack.c.l.b16 %v3984
    %v4661 = vunpack.c.h.b16 %v3984
    %v4662 = vunpack.c.l.b16 %v3985
    %v4663 = vunpack.c.h.b16 %v3985
    %v4664 = vunpack.c.l.b16 %v3986
    %v4665 = vunpack.c.h.b16 %v3986
    %v4666 = vunpack.c.l.b16 %v3987
    %v4667 = vunpack.c.h.b16 %v3987
    %v4668 = vunpack.c.l.b16 %v3988
    %v4669 = vunpack.c.h.b16 %v3988
    %v4670 = vunpack.c.l.b16 %v3989
    %v4671 = vunpack.c.h.b16 %v3989
    %v4672 = vunpack.c.l.b16 %v3990
    %v4673 = vunpack.c.h.b16 %v3990
    %v4674 = vunpack.c.l.b16 %v3991
    %v4675 = vunpack.c.h.b16 %v3991
    %v4676 = vunpack.c.l.b16 %v3992
    %v4677 = vunpack.c.h.b16 %v3992
    %v4678 = vunpack.c.l.b16 %v3993
    %v4679 = vunpack.c.h.b16 %v3993
    %v4680 = vunpack.c.l.b16 %v3994
    %v4681 = vunpack.c.h.b16 %v3994
    %v4682 = vunpack.c.l.b16 %v3995
    %v4683 = vunpack.c.h.b16 %v3995
    %v4684 = vunpack.c.l.b16 %v3996
    %v4685 = vunpack.c.h.b16 %v3996
    %v4686 = vunpack.c.l.b16 %v3997
    %v4687 = vunpack.c.h.b16 %v3997
    %v4688 = vunpack.c.l.b16 %v3998
    %v4689 = vunpack.c.h.b16 %v3998
    %v4690 = vunpack.c.l.b16 %v3999
    %v4691 = vunpack.c.h.b16 %v3999
    %v4692 = vunpack.c.l.b16 %v4000
    %v4693 = vunpack.c.h.b16 %v4000
    %v4694 = vunpack.c.l.b16 %v4001
    %v4695 = vunpack.c.h.b16 %v4001
    %v4696 = vunpack.c.l.b16 %v4002
    %v4697 = vunpack.c.h.b16 %v4002
    %v4698 = vunpack.c.l.b16 %v4003
    %v4699 = vunpack.c.h.b16 %v4003
    %v4700 = vunpack.c.l.b16 %v4004
    %v4701 = vunpack.c.h.b16 %v4004
    %v4702 = vunpack.c.l.b16 %v4005
    %v4703 = vunpack.c.h.b16 %v4005
    %v4704 = vunpack.c.l.b16 %v4006
    %v4705 = vunpack.c.h.b16 %v4006
    %v4706 = vunpack.c.l.b16 %v4007
    %v4707 = vunpack.c.h.b16 %v4007
    %v4708 = vunpack.c.l.b16 %v4008
    %v4709 = vunpack.c.h.b16 %v4008
    %v4710 = vunpack.c.l.b16 %v4009
    %v4711 = vunpack.c.h.b16 %v4009
    %v4712 = vunpack.c.l.b16 %v4010
    %v4713 = vunpack.c.h.b16 %v4010
    %v4714 = vunpack.c.l.b16 %v4011
    %v4715 = vunpack.c.h.b16 %v4011
    %v4716 = vunpack.c.l.b16 %v4012
    %v4717 = vunpack.c.h.b16 %v4012
    %v4718 = vunpack.c.l.b16 %v4013
    %v4719 = vunpack.c.h.b16 %v4013
    %v4720 = vunpack.c.l.b16 %v4014
    %v4721 = vunpack.c.h.b16 %v4014
    %v4722 = vunpack.c.l.b16 %v4015
    %v4723 = vunpack.c.h.b16 %v4015
    %v4724 = vunpack.c.l.b16 %v4016
    %v4725 = vunpack.c.h.b16 %v4016
    %v4726 = vunpack.c.l.b16 %v4017
    %v4727 = vunpack.c.h.b16 %v4017
    %v4728 = vunpack.c.l.b16 %v4018
    %v4729 = vunpack.c.h.b16 %v4018
    %v4730 = vunpack.c.l.b16 %v4019
    %v4731 = vunpack.c.h.b16 %v4019
    %v4732 = vunpack.c.l.b16 %v4020
    %v4733 = vunpack.c.h.b16 %v4020
    %v4734 = vunpack.c.l.b16 %v4021
    %v4735 = vunpack.c.h.b16 %v4021
    %v4736 = vunpack.c.l.b16 %v4022
    %v4737 = vunpack.c.h.b16 %v4022
    %v4738 = vunpack.c.l.b16 %v4023
    %v4739 = vunpack.c.h.b16 %v4023
    %v4740 = vunpack.c.l.b16 %v4024
    %v4741 = vunpack.c.h.b16 %v4024
    %v4742 = vunpack.c.l.b16 %v4025
    %v4743 = vunpack.c.h.b16 %v4025
    %v4744 = vunpack.c.l.b16 %v4026
    %v4745 = vunpack.c.h.b16 %v4026
    %v4746 = vunpack.c.l.b16 %v4027
    %v4747 = vunpack.c.h.b16 %v4027
    %v4748 = vunpack.c.l.b16 %v4028
    %v4749 = vunpack.c.h.b16 %v4028
    %v4750 = vunpack.c.l.b16 %v4029
    %v4751 = vunpack.c.h.b16 %v4029
    %v4752 = vunpack.c.l.b16 %v4030
    %v4753 = vunpack.c.h.b16 %v4030
    %v4754 = vunpack.c.l.b16 %v4031
    %v4755 = vunpack.c.h.b16 %v4031
    %v4756 = vunpack.c.l.b16 %v4032
    %v4757 = vunpack.c.h.b16 %v4032
    %v4758 = vunpack.c.l.b16 %v4033
    %v4759 = vunpack.c.h.b16 %v4033
    %v4760 = vunpack.c.l.b16 %v4034
    %v4761 = vunpack.c.h.b16 %v4034
    %v4762 = vunpack.c.l.b16 %v4035
    %v4763 = vunpack.c.h.b16 %v4035
    %v4764 = vunpack.c.l.b16 %v4036
    %v4765 = vunpack.c.h.b16 %v4036
    %v4766 = vunpack.c.l.b16 %v4037
    %v4767 = vunpack.c.h.b16 %v4037
    %v4768 = vunpack.c.l.b16 %v4038
    %v4769 = vunpack.c.h.b16 %v4038
    %v4770 = vunpack.c.l.b16 %v4039
    %v4771 = vunpack.c.h.b16 %v4039
    %v4772 = vunpack.c.l.b16 %v4040
    %v4773 = vunpack.c.h.b16 %v4040
    %v4774 = vunpack.c.l.b16 %v4041
    %v4775 = vunpack.c.h.b16 %v4041
    %v4776 = vunpack.c.l.b16 %v4042
    %v4777 = vunpack.c.h.b16 %v4042
    %v4778 = vunpack.c.l.b16 %v4043
    %v4779 = vunpack.c.h.b16 %v4043
    %v4780 = vunpack.c.l.b16 %v4044
    %v4781 = vunpack.c.h.b16 %v4044
    %v4782 = vunpack.c.l.b16 %v4045
    %v4783 = vunpack.c.h.b16 %v4045
    %v4784 = vunpack.c.l.b16 %v4046
    %v4785 = vunpack.c.h.b16 %v4046
    %v4786 = vunpack.c.l.b16 %v4047
    %v4787 = vunpack.c.h.b16 %v4047
    %v4788 = vunpack.c.l.b16 %v4048
    %v4789 = vunpack.c.h.b16 %v4048
    %v4790 = vunpack.c.l.b16 %v4049
    %v4791 = vunpack.c.h.b16 %v4049
    %v4792 = vunpack.c.l.b16 %v4050
    %v4793 = vunpack.c.h.b16 %v4050
    %v4794 = vunpack.c.l.b16 %v4051
    %v4795 = vunpack.c.h.b16 %v4051
    %v4796 = vunpack.c.l.b16 %v4052
    %v4797 = vunpack.c.h.b16 %v4052
    %v4798 = vunpack.c.l.b16 %v4053
    %v4799 = vunpack.c.h.b16 %v4053
    %v4800 = vunpack.c.l.b16 %v4054
    %v4801 = vunpack.c.h.b16 %v4054
    %v4802 = vunpack.c.l.b16 %v4055
    %v4803 = vunpack.c.h.b16 %v4055
    %v4804 = vunpack.c.l.b16 %v4056
    %v4805 = vunpack.c.h.b16 %v4056
    %v4806 = vunpack.c.l.b16 %v4057
    %v4807 = vunpack.c.h.b16 %v4057
    %v4808 = vunpack.c.l.b16 %v4058
    %v4809 = vunpack.c.h.b16 %v4058
    %v4810 = vunpack.c.l.b16 %v4059
    %v4811 = vunpack.c.h.b16 %v4059
    %v4812 = vunpack.c.l.b16 %v4060
    %v4813 = vunpack.c.h.b16 %v4060
    %v4814 = vunpack.c.l.b16 %v4061
    %v4815 = vunpack.c.h.b16 %v4061
    %v4816 = vunpack.c.l.b16 %v4062
    %v4817 = vunpack.c.h.b16 %v4062
    %v4818 = vunpack.c.l.b16 %v4063
    %v4819 = vunpack.c.h.b16 %v4063
    %v4820 = vunpack.c.l.b16 %v4064
    %v4821 = vunpack.c.h.b16 %v4064
    %v4822 = vunpack.c.l.b16 %v4065
    %v4823 = vunpack.c.h.b16 %v4065
    %v4824 = vunpack.c.l.b16 %v4066
    %v4825 = vunpack.c.h.b16 %v4066
    %v4826 = vunpack.c.l.b16 %v4067
    %v4827 = vunpack.c.h.b16 %v4067
    %v4828 = vunpack.c.l.b16 %v4068
    %v4829 = vunpack.c.h.b16 %v4068
    %v4830 = vunpack.c.l.b16 %v4069
    %v4831 = vunpack.c.h.b16 %v4069
    %v4832 = vunpack.c.l.b16 %v4070
    %v4833 = vunpack.c.h.b16 %v4070
    %v4834 = vunpack.c.l.b16 %v4071
    %v4835 = vunpack.c.h.b16 %v4071
    %v4836 = vunpack.c.l.b16 %v4072
    %v4837 = vunpack.c.h.b16 %v4072
    %v4838 = vunpack.c.l.b16 %v4073
    %v4839 = vunpack.c.h.b16 %v4073
    %v4840 = vunpack.c.l.b16 %v4074
    %v4841 = vunpack.c.h.b16 %v4074
    %v4842 = vunpack.c.l.b16 %v4075
    %v4843 = vunpack.c.h.b16 %v4075
    %v4844 = vunpack.c.l.b16 %v4076
    %v4845 = vunpack.c.h.b16 %v4076
    %v4846 = vunpack.c.l.b16 %v4077
    %v4847 = vunpack.c.h.b16 %v4077
    %v4848 = vunpack.c.l.b16 %v4078
    %v4849 = vunpack.c.h.b16 %v4078
    %v4850 = vunpack.c.l.b16 %v4079
    %v4851 = vunpack.c.h.b16 %v4079
    %v4852 = vunpack.c.l.b16 %v4080
    %v4853 = vunpack.c.h.b16 %v4080
    %v4854 = vunpack.c.l.b16 %v4081
    %v4855 = vunpack.c.h.b16 %v4081
    %v4856 = vunpack.c.l.b16 %v4082
    %v4857 = vunpack.c.h.b16 %v4082
    %v4858 = vunpack.c.l.b16 %v4083
    %v4859 = vunpack.c.h.b16 %v4083
    %v4860 = vunpack.c.l.b16 %v4084
    %v4861 = vunpack.c.h.b16 %v4084
    %v4862 = vunpack.c.l.b16 %v4085
    %v4863 = vunpack.c.h.b16 %v4085
    %v4864 = vunpack.c.l.b16 %v4086
    %v4865 = vunpack.c.h.b16 %v4086
    %v4866 = vunpack.c.l.b16 %v4087
    %v4867 = vunpack.c.h.b16 %v4087
    %v4868 = vunpack.c.l.b16 %v4088
    %v4869 = vunpack.c.h.b16 %v4088
    %v4870 = vunpack.c.l.b16 %v4089
    %v4871 = vunpack.c.h.b16 %v4089
    %v4872 = vunpack.c.l.b16 %v4090
    %v4873 = vunpack.c.h.b16 %v4090
    %v4874 = vunpack.c.l.b16 %v4091
    %v4875 = vunpack.c.h.b16 %v4091
    %v4876 = vunpack.c.l.b16 %v4092
    %v4877 = vunpack.c.h.b16 %v4092
    %v4878 = vunpack.c.l.b16 %v4093
    %v4879 = vunpack.c.h.b16 %v4093
    %v4880 = vunpack.c.l.b16 %v4094
    %v4881 = vunpack.c.h.b16 %v4094
    %v4882 = vunpack.c.l.b16 %v4095
    %v4883 = vunpack.c.h.b16 %v4095
    %v4884 = vunpack.c.l.b16 %v4096
    %v4885 = vunpack.c.h.b16 %v4096
    %v4886 = vunpack.c.l.b16 %v4097
    %v4887 = vunpack.c.h.b16 %v4097
    %v4888 = vpack.c.b16 %v4380, %v4376
    %v4889 = vpack.c.b16 %v4381, %v4377
    %v4890 = vpack.c.b16 %v4382, %v4378
    %v4891 = vpack.c.b16 %v4383, %v4379
    %v4892 = vpack.c.b16 %v4388, %v4384
    %v4893 = vpack.c.b16 %v4389, %v4385
    %v4894 = vpack.c.b16 %v4390, %v4386
    %v4895 = vpack.c.b16 %v4391, %v4387
    %v4896 = vpack.c.b16 %v4396, %v4392
    %v4897 = vpack.c.b16 %v4397, %v4393
    %v4898 = vpack.c.b16 %v4398, %v4394
    %v4899 = vpack.c.b16 %v4399, %v4395
    %v4900 = vpack.c.b16 %v4404, %v4400
    %v4901 = vpack.c.b16 %v4405, %v4401
    %v4902 = vpack.c.b16 %v4406, %v4402
    %v4903 = vpack.c.b16 %v4407, %v4403
    %v4904 = vpack.c.b16 %v4412, %v4408
    %v4905 = vpack.c.b16 %v4413, %v4409
    %v4906 = vpack.c.b16 %v4414, %v4410
    %v4907 = vpack.c.b16 %v4415, %v4411
    %v4908 = vpack.c.b16 %v4420, %v4416
    %v4909 = vpack.c.b16 %v4421, %v4417
    %v4910 = vpack.c.b16 %v4422, %v4418
    %v4911 = vpack.c.b16 %v4423, %v4419
    %v4912 = vpack.c.b16 %v4428, %v4424
    %v4913 = vpack.c.b16 %v4429, %v4425
    %v4914 = vpack.c.b16 %v4430, %v4426
    %v4915 = vpack.c.b16 %v4431, %v4427
    %v4916 = vpack.c.b16 %v4436, %v4432
    %v4917 = vpack.c.b16 %v4437, %v4433
    %v4918 = vpack.c.b16 %v4438, %v4434
    %v4919 = vpack.c.b16 %v4439, %v4435
    %v4920 = vpack.c.b16 %v4444, %v4440
    %v4921 = vpack.c.b16 %v4445, %v4441
    %v4922 = vpack.c.b16 %v4446, %v4442
    %v4923 = vpack.c.b16 %v4447, %v4443
    %v4924 = vpack.c.b16 %v4452, %v4448
    %v4925 = vpack.c.b16 %v4453, %v4449
    %v4926 = vpack.c.b16 %v4454, %v4450
    %v4927 = vpack.c.b16 %v4455, %v4451
    %v4928 = vpack.c.b16 %v4460, %v4456
    %v4929 = vpack.c.b16 %v4461, %v4457
    %v4930 = vpack.c.b16 %v4462, %v4458
    %v4931 = vpack.c.b16 %v4463, %v4459
    %v4932 = vpack.c.b16 %v4468, %v4464
    %v4933 = vpack.c.b16 %v4469, %v4465
    %v4934 = vpack.c.b16 %v4470, %v4466
    %v4935 = vpack.c.b16 %v4471, %v4467
    %v4936 = vpack.c.b16 %v4476, %v4472
    %v4937 = vpack.c.b16 %v4477, %v4473
    %v4938 = vpack.c.b16 %v4478, %v4474
    %v4939 = vpack.c.b16 %v4479, %v4475
    %v4940 = vpack.c.b16 %v4484, %v4480
    %v4941 = vpack.c.b16 %v4485, %v4481
    %v4942 = vpack.c.b16 %v4486, %v4482
    %v4943 = vpack.c.b16 %v4487, %v4483
    %v4944 = vpack.c.b16 %v4492, %v4488
    %v4945 = vpack.c.b16 %v4493, %v4489
    %v4946 = vpack.c.b16 %v4494, %v4490
    %v4947 = vpack.c.b16 %v4495, %v4491
    %v4948 = vpack.c.b16 %v4500, %v4496
    %v4949 = vpack.c.b16 %v4501, %v4497
    %v4950 = vpack.c.b16 %v4502, %v4498
    %v4951 = vpack.c.b16 %v4503, %v4499
    %v4952 = vpack.c.b16 %v4508, %v4504
    %v4953 = vpack.c.b16 %v4509, %v4505
    %v4954 = vpack.c.b16 %v4510, %v4506
    %v4955 = vpack.c.b16 %v4511, %v4507
    %v4956 = vpack.c.b16 %v4516, %v4512
    %v4957 = vpack.c.b16 %v4517, %v4513
    %v4958 = vpack.c.b16 %v4518, %v4514
    %v4959 = vpack.c.b16 %v4519, %v4515
    %v4960 = vpack.c.b16 %v4524, %v4520
    %v4961 = vpack.c.b16 %v4525, %v4521
    %v4962 = vpack.c.b16 %v4526, %v4522
    %v4963 = vpack.c.b16 %v4527, %v4523
    %v4964 = vpack.c.b16 %v4532, %v4528
    %v4965 = vpack.c.b16 %v4533, %v4529
    %v4966 = vpack.c.b16 %v4534, %v4530
    %v4967 = vpack.c.b16 %v4535, %v4531
    %v4968 = vpack.c.b16 %v4540, %v4536
    %v4969 = vpack.c.b16 %v4541, %v4537
    %v4970 = vpack.c.b16 %v4542, %v4538
    %v4971 = vpack.c.b16 %v4543, %v4539
    %v4972 = vpack.c.b16 %v4548, %v4544
    %v4973 = vpack.c.b16 %v4549, %v4545
    %v4974 = vpack.c.b16 %v4550, %v4546
    %v4975 = vpack.c.b16 %v4551, %v4547
    %v4976 = vpack.c.b16 %v4556, %v4552
    %v4977 = vpack.c.b16 %v4557, %v4553
    %v4978 = vpack.c.b16 %v4558, %v4554
    %v4979 = vpack.c.b16 %v4559, %v4555
    %v4980 = vpack.c.b16 %v4564, %v4560
    %v4981 = vpack.c.b16 %v4565, %v4561
    %v4982 = vpack.c.b16 %v4566, %v4562
    %v4983 = vpack.c.b16 %v4567, %v4563
    %v4984 = vpack.c.b16 %v4572, %v4568
    %v4985 = vpack.c.b16 %v4573, %v4569
    %v4986 = vpack.c.b16 %v4574, %v4570
    %v4987 = vpack.c.b16 %v4575, %v4571
    %v4988 = vpack.c.b16 %v4580, %v4576
    %v4989 = vpack.c.b16 %v4581, %v4577
    %v4990 = vpack.c.b16 %v4582, %v4578
    %v4991 = vpack.c.b16 %v4583, %v4579
    %v4992 = vpack.c.b16 %v4588, %v4584
    %v4993 = vpack.c.b16 %v4589, %v4585
    %v4994 = vpack.c.b16 %v4590, %v4586
    %v4995 = vpack.c.b16 %v4591, %v4587
    %v4996 = vpack.c.b16 %v4596, %v4592
    %v4997 = vpack.c.b16 %v4597, %v4593
    %v4998 = vpack.c.b16 %v4598, %v4594
    %v4999 = vpack.c.b16 %v4599, %v4595
    %v5000 = vpack.c.b16 %v4604, %v4600
    %v5001 = vpack.c.b16 %v4605, %v4601
    %v5002 = vpack.c.b16 %v4606, %v4602
    %v5003 = vpack.c.b16 %v4607, %v4603
    %v5004 = vpack.c.b16 %v4612, %v4608
    %v5005 = vpack.c.b16 %v4613, %v4609
    %v5006 = vpack.c.b16 %v4614, %v4610
    %v5007 = vpack.c.b16 %v4615, %v4611
    %v5008 = vpack.c.b16 %v4620, %v4616
    %v5009 = vpack.c.b16 %v4621, %v4617
    %v5010 = vpack.c.b16 %v4622, %v4618
    %v5011 = vpack.c.b16 %v4623, %v4619
    %v5012 = vpack.c.b16 %v4628, %v4624
    %v5013 = vpack.c.b16 %v4629, %v4625
    %v5014 = vpack.c.b16 %v4630, %v4626
    %v5015 = vpack.c.b16 %v4631, %v4627
    %v5016 = vpack.c.b16 %v4636, %v4632
    %v5017 = vpack.c.b16 %v4637, %v4633
    %v5018 = vpack.c.b16 %v4638, %v4634
    %v5019 = vpack.c.b16 %v4639, %v4635
    %v5020 = vpack.c.b16 %v4644, %v4640
    %v5021 = vpack.c.b16 %v4645, %v4641
    %v5022 = vpack.c.b16 %v4646, %v4642
    %v5023 = vpack.c.b16 %v4647, %v4643
    %v5024 = vpack.c.b16 %v4652, %v4648
    %v5025 = vpack.c.b16 %v4653, %v4649
    %v5026 = vpack.c.b16 %v4654, %v4650
    %v5027 = vpack.c.b16 %v4655, %v4651
    %v5028 = vpack.c.b16 %v4660, %v4656
    %v5029 = vpack.c.b16 %v4661, %v4657
    %v5030 = vpack.c.b16 %v4662, %v4658
    %v5031 = vpack.c.b16 %v4663, %v4659
    %v5032 = vpack.c.b16 %v4668, %v4664
    %v5033 = vpack.c.b16 %v4669, %v4665
    %v5034 = vpack.c.b16 %v4670, %v4666
    %v5035 = vpack.c.b16 %v4671, %v4667
    %v5036 = vpack.c.b16 %v4676, %v4672
    %v5037 = vpack.c.b16 %v4677, %v4673
    %v5038 = vpack.c.b16 %v4678, %v4674
    %v5039 = vpack.c.b16 %v4679, %v4675
    %v5040 = vpack.c.b16 %v4684, %v4680
    %v5041 = vpack.c.b16 %v4685, %v4681
    %v5042 = vpack.c.b16 %v4686, %v4682
    %v5043 = vpack.c.b16 %v4687, %v4683
    %v5044 = vpack.c.b16 %v4692, %v4688
    %v5045 = vpack.c.b16 %v4693, %v4689
    %v5046 = vpack.c.b16 %v4694, %v4690
    %v5047 = vpack.c.b16 %v4695, %v4691
    %v5048 = vpack.c.b16 %v4700, %v4696
    %v5049 = vpack.c.b16 %v4701, %v4697
    %v5050 = vpack.c.b16 %v4702, %v4698
    %v5051 = vpack.c.b16 %v4703, %v4699
    %v5052 = vpack.c.b16 %v4708, %v4704
    %v5053 = vpack.c.b16 %v4709, %v4705
    %v5054 = vpack.c.b16 %v4710, %v4706
    %v5055 = vpack.c.b16 %v4711, %v4707
    %v5056 = vpack.c.b16 %v4716, %v4712
    %v5057 = vpack.c.b16 %v4717, %v4713
    %v5058 = vpack.c.b16 %v4718, %v4714
    %v5059 = vpack.c.b16 %v4719, %v4715
    %v5060 = vpack.c.b16 %v4724, %v4720
    %v5061 = vpack.c.b16 %v4725, %v4721
    %v5062 = vpack.c.b16 %v4726, %v4722
    %v5063 = vpack.c.b16 %v4727, %v4723
    %v5064 = vpack.c.b16 %v4732, %v4728
    %v5065 = vpack.c.b16 %v4733, %v4729
    %v5066 = vpack.c.b16 %v4734, %v4730
    %v5067 = vpack.c.b16 %v4735, %v4731
    %v5068 = vpack.c.b16 %v4740, %v4736
    %v5069 = vpack.c.b16 %v4741, %v4737
    %v5070 = vpack.c.b16 %v4742, %v4738
    %v5071 = vpack.c.b16 %v4743, %v4739
    %v5072 = vpack.c.b16 %v4748, %v4744
    %v5073 = vpack.c.b16 %v4749, %v4745
    %v5074 = vpack.c.b16 %v4750, %v4746
    %v5075 = vpack.c.b16 %v4751, %v4747
    %v5076 = vpack.c.b16 %v4756, %v4752
    %v5077 = vpack.c.b16 %v4757, %v4753
    %v5078 = vpack.c.b16 %v4758, %v4754
    %v5079 = vpack.c.b16 %v4759, %v4755
    %v5080 = vpack.c.b16 %v4764, %v4760
    %v5081 = vpack.c.b16 %v4765, %v4761
    %v5082 = vpack.c.b16 %v4766, %v4762
    %v5083 = vpack.c.b16 %v4767, %v4763
    %v5084 = vpack.c.b16 %v4772, %v4768
    %v5085 = vpack.c.b16 %v4773, %v4769
    %v5086 = vpack.c.b16 %v4774, %v4770
    %v5087 = vpack.c.b16 %v4775, %v4771
    %v5088 = vpack.c.b16 %v4780, %v4776
    %v5089 = vpack.c.b16 %v4781, %v4777
    %v5090 = vpack.c.b16 %v4782, %v4778
    %v5091 = vpack.c.b16 %v4783, %v4779
    %v5092 = vpack.c.b16 %v4788, %v4784
    %v5093 = vpack.c.b16 %v4789, %v4785
    %v5094 = vpack.c.b16 %v4790, %v4786
    %v5095 = vpack.c.b16 %v4791, %v4787
    %v5096 = vpack.c.b16 %v4796, %v4792
    %v5097 = vpack.c.b16 %v4797, %v4793
    %v5098 = vpack.c.b16 %v4798, %v4794
    %v5099 = vpack.c.b16 %v4799, %v4795
    %v5100 = vpack.c.b16 %v4804, %v4800
    %v5101 = vpack.c.b16 %v4805, %v4801
    %v5102 = vpack.c.b16 %v4806, %v4802
    %v5103 = vpack.c.b16 %v4807, %v4803
    %v5104 = vpack.c.b16 %v4812, %v4808
    %v5105 = vpack.c.b16 %v4813, %v4809
    %v5106 = vpack.c.b16 %v4814, %v4810
    %v5107 = vpack.c.b16 %v4815, %v4811
    %v5108 = vpack.c.b16 %v4820, %v4816
    %v5109 = vpack.c.b16 %v4821, %v4817
    %v5110 = vpack.c.b16 %v4822, %v4818
    %v5111 = vpack.c.b16 %v4823, %v4819
    %v5112 = vpack.c.b16 %v4828, %v4824
    %v5113 = vpack.c.b16 %v4829, %v4825
    %v5114 = vpack.c.b16 %v4830, %v4826
    %v5115 = vpack.c.b16 %v4831, %v4827
    %v5116 = vpack.c.b16 %v4836, %v4832
    %v5117 = vpack.c.b16 %v4837, %v4833
    %v5118 = vpack.c.b16 %v4838, %v4834
    %v5119 = vpack.c.b16 %v4839, %v4835
    %v5120 = vpack.c.b16 %v4844, %v4840
    %v5121 = vpack.c.b16 %v4845, %v4841
    %v5122 = vpack.c.b16 %v4846, %v4842
    %v5123 = vpack.c.b16 %v4847, %v4843
    %v5124 = vpack.c.b16 %v4852, %v4848
    %v5125 = vpack.c.b16 %v4853, %v4849
    %v5126 = vpack.c.b16 %v4854, %v4850
    %v5127 = vpack.c.b16 %v4855, %v4851
    %v5128 = vpack.c.b16 %v4860, %v4856
    %v5129 = vpack.c.b16 %v4861, %v4857
    %v5130 = vpack.c.b16 %v4862, %v4858
    %v5131 = vpack.c.b16 %v4863, %v4859
    %v5132 = vpack.c.b16 %v4868, %v4864
    %v5133 = vpack.c.b16 %v4869, %v4865
    %v5134 = vpack.c.b16 %v4870, %v4866
    %v5135 = vpack.c.b16 %v4871, %v4867
    %v5136 = vpack.c.b16 %v4876, %v4872
    %v5137 = vpack.c.b16 %v4877, %v4873
    %v5138 = vpack.c.b16 %v4878, %v4874
    %v5139 = vpack.c.b16 %v4879, %v4875
    %v5140 = vpack.c.b16 %v4884, %v4880
    %v5141 = vpack.c.b16 %v4885, %v4881
    %v5142 = vpack.c.b16 %v4886, %v4882
    %v5143 = vpack.c.b16 %v4887, %v4883
    %5400 = vmatprep.subr.bf16.mxu0 %v4889
    %5401 = vmatpush1.bf16.msra.mxu0 %v4888
    %5402 = vmatprep.subr.bf16.mxu0 %v4893
    %5403 = vmatpush1.bf16.msra.mxu0 %v4892
    %5404 = vmatprep.subr.bf16.mxu0 %v4897
    %5405 = vmatpush1.bf16.msra.mxu0 %v4896
    %5406 = vmatprep.subr.bf16.mxu0 %v4901
    %5407 = vmatpush1.bf16.msra.mxu0 %v4900
    %5408 = vmatprep.subr.bf16.mxu0 %v4905
    %5409 = vmatpush1.bf16.msra.mxu0 %v4904
    %5410 = vmatprep.subr.bf16.mxu0 %v4909
    %5411 = vmatpush1.bf16.msra.mxu0 %v4908
    %5412 = vmatprep.subr.bf16.mxu0 %v4913
    %5413 = vmatpush1.bf16.msra.mxu0 %v4912
    %5414 = vmatprep.subr.bf16.mxu0 %v4917
    %5415 = vmatpush1.bf16.msra.mxu0 %v4916
    %5416 = vmatprep.subr.bf16.mxu0 %v4921
    %5417 = vmatpush1.bf16.msra.mxu0 %v4920
    %5418 = vmatprep.subr.bf16.mxu0 %v4925
    %5419 = vmatpush1.bf16.msra.mxu0 %v4924
    %5420 = vmatprep.subr.bf16.mxu0 %v4929
    %5421 = vmatpush1.bf16.msra.mxu0 %v4928
    %5422 = vmatprep.subr.bf16.mxu0 %v4933
    %5423 = vmatpush1.bf16.msra.mxu0 %v4932
    %5424 = vmatprep.subr.bf16.mxu0 %v4937
    %5425 = vmatpush1.bf16.msra.mxu0 %v4936
    %5426 = vmatprep.subr.bf16.mxu0 %v4941
    %5427 = vmatpush1.bf16.msra.mxu0 %v4940
    %5428 = vmatprep.subr.bf16.mxu0 %v4945
    %5429 = vmatpush1.bf16.msra.mxu0 %v4944
    %5430 = vmatprep.subr.bf16.mxu0 %v4949
    %5431 = vmatpush1.bf16.msra.mxu0 %v4948
    %5432 = vmatprep.mubr.bf16.mxu0 %v3835
    %5433 = vmatmul.mubr.bf16.gmra.mrb[0].mxu0 %v3834
    %v5434 = vpop.f32.mrb[0].mxu0
    %v5435 = vadd.f32 %v4103, %v5434
    %v5436 = vpop.f32.mrb[0].mxu0
    %v5437 = vadd.f32 %v4107, %v5436
    %v5438 = vpop.f32.mrb[0].mxu0
    %v5439 = vadd.f32 %v4103, %v5438
    %v5440 = vpop.f32.mrb[0].mxu0
    %v5441 = vadd.f32 %v4107, %v5440
    %5442 = vdwg.mxu0
    %5443 = vmatprep.subr.bf16.mxu0 %v4953
    %5444 = vmatpush1.bf16.msra.mxu0 %v4952
    %5445 = vmatprep.subr.bf16.mxu0 %v4957
    %5446 = vmatpush1.bf16.msra.mxu0 %v4956
    %5447 = vmatprep.subr.bf16.mxu0 %v4961
    %5448 = vmatpush1.bf16.msra.mxu0 %v4960
    %5449 = vmatprep.subr.bf16.mxu0 %v4965
    %5450 = vmatpush1.bf16.msra.mxu0 %v4964
    %5451 = vmatprep.subr.bf16.mxu0 %v4969
    %5452 = vmatpush1.bf16.msra.mxu0 %v4968
    %5453 = vmatprep.subr.bf16.mxu0 %v4973
    %5454 = vmatpush1.bf16.msra.mxu0 %v4972
    %5455 = vmatprep.subr.bf16.mxu0 %v4977
    %5456 = vmatpush1.bf16.msra.mxu0 %v4976
    %5457 = vmatprep.subr.bf16.mxu0 %v4981
    %5458 = vmatpush1.bf16.msra.mxu0 %v4980
    %5459 = vmatprep.subr.bf16.mxu0 %v4985
    %5460 = vmatpush1.bf16.msra.mxu0 %v4984
    %5461 = vmatprep.subr.bf16.mxu0 %v4989
    %5462 = vmatpush1.bf16.msra.mxu0 %v4988
    %5463 = vmatprep.subr.bf16.mxu0 %v4993
    %5464 = vmatpush1.bf16.msra.mxu0 %v4992
    %5465 = vmatprep.subr.bf16.mxu0 %v4997
    %5466 = vmatpush1.bf16.msra.mxu0 %v4996
    %5467 = vmatprep.subr.bf16.mxu0 %v5001
    %5468 = vmatpush1.bf16.msra.mxu0 %v5000
    %5469 = vmatprep.subr.bf16.mxu0 %v5005
    %5470 = vmatpush1.bf16.msra.mxu0 %v5004
    %5471 = vmatprep.subr.bf16.mxu0 %v5009
    %5472 = vmatpush1.bf16.msra.mxu0 %v5008
    %5473 = vmatprep.subr.bf16.mxu0 %v5013
    %5474 = vmatpush1.bf16.msra.mxu0 %v5012
    %5475 = vmatprep.mubr.bf16.mxu0 %v3837
    %5476 = vmatmul.mubr.bf16.gmra.mrb[0].mxu0 %v3836
    %v5477 = vpop.f32.mrb[0].mxu0
    %v5478 = vadd.f32 %v5435, %v5477
    %v5479 = vpop.f32.mrb[0].mxu0
    %v5480 = vadd.f32 %v5437, %v5479
    %v5481 = vpop.f32.mrb[0].mxu0
    %v5482 = vadd.f32 %v5439, %v5481
    %v5483 = vpop.f32.mrb[0].mxu0
    %v5484 = vadd.f32 %v5441, %v5483
    %5485 = vdwg.mxu0
    %5486 = vmatprep.subr.bf16.mxu0 %v5017
    %5487 = vmatpush1.bf16.msra.mxu0 %v5016
    %5488 = vmatprep.subr.bf16.mxu0 %v5021
    %5489 = vmatpush1.bf16.msra.mxu0 %v5020
    %5490 = vmatprep.subr.bf16.mxu0 %v5025
    %5491 = vmatpush1.bf16.msra.mxu0 %v5024
    %5492 = vmatprep.subr.bf16.mxu0 %v5029
    %5493 = vmatpush1.bf16.msra.mxu0 %v5028
    %5494 = vmatprep.subr.bf16.mxu0 %v5033
    %5495 = vmatpush1.bf16.msra.mxu0 %v5032
    %5496 = vmatprep.subr.bf16.mxu0 %v5037
    %5497 = vmatpush1.bf16.msra.mxu0 %v5036
    %5498 = vmatprep.subr.bf16.mxu0 %v5041
    %5499 = vmatpush1.bf16.msra.mxu0 %v5040
    %5500 = vmatprep.subr.bf16.mxu0 %v5045
    %5501 = vmatpush1.bf16.msra.mxu0 %v5044
    %5502 = vmatprep.subr.bf16.mxu0 %v5049
    %5503 = vmatpush1.bf16.msra.mxu0 %v5048
    %5504 = vmatprep.subr.bf16.mxu0 %v5053
    %5505 = vmatpush1.bf16.msra.mxu0 %v5052
    %5506 = vmatprep.subr.bf16.mxu0 %v5057
    %5507 = vmatpush1.bf16.msra.mxu0 %v5056
    %5508 = vmatprep.subr.bf16.mxu0 %v5061
    %5509 = vmatpush1.bf16.msra.mxu0 %v5060
    %5510 = vmatprep.subr.bf16.mxu0 %v5065
    %5511 = vmatpush1.bf16.msra.mxu0 %v5064
    %5512 = vmatprep.subr.bf16.mxu0 %v5069
    %5513 = vmatpush1.bf16.msra.mxu0 %v5068
    %5514 = vmatprep.subr.bf16.mxu0 %v5073
    %5515 = vmatpush1.bf16.msra.mxu0 %v5072
    %5516 = vmatprep.subr.bf16.mxu0 %v5077
    %5517 = vmatpush1.bf16.msra.mxu0 %v5076
    %5518 = vmatprep.mubr.bf16.mxu0 %v3839
    %5519 = vmatmul.mubr.bf16.gmra.mrb[0].mxu0 %v3838
    %v5520 = vpop.f32.mrb[0].mxu0
    %v5521 = vadd.f32 %v5478, %v5520
    %v5522 = vpop.f32.mrb[0].mxu0
    %v5523 = vadd.f32 %v5480, %v5522
    %v5524 = vpop.f32.mrb[0].mxu0
    %v5525 = vadd.f32 %v5482, %v5524
    %v5526 = vpop.f32.mrb[0].mxu0
    %v5527 = vadd.f32 %v5484, %v5526
    %5528 = vdwg.mxu0
    %5529 = vmatprep.subr.bf16.mxu0 %v5081
    %5530 = vmatpush1.bf16.msra.mxu0 %v5080
    %5531 = vmatprep.subr.bf16.mxu0 %v5085
    %5532 = vmatpush1.bf16.msra.mxu0 %v5084
    %5533 = vmatprep.subr.bf16.mxu0 %v5089
    %5534 = vmatpush1.bf16.msra.mxu0 %v5088
    %5535 = vmatprep.subr.bf16.mxu0 %v5093
    %5536 = vmatpush1.bf16.msra.mxu0 %v5092
    %5537 = vmatprep.subr.bf16.mxu0 %v5097
    %5538 = vmatpush1.bf16.msra.mxu0 %v5096
    %5539 = vmatprep.subr.bf16.mxu0 %v5101
    %5540 = vmatpush1.bf16.msra.mxu0 %v5100
    %5541 = vmatprep.subr.bf16.mxu0 %v5105
    %5542 = vmatpush1.bf16.msra.mxu0 %v5104
    %5543 = vmatprep.subr.bf16.mxu0 %v5109
    %5544 = vmatpush1.bf16.msra.mxu0 %v5108
    %5545 = vmatprep.subr.bf16.mxu0 %v5113
    %5546 = vmatpush1.bf16.msra.mxu0 %v5112
    %5547 = vmatprep.subr.bf16.mxu0 %v5117
    %5548 = vmatpush1.bf16.msra.mxu0 %v5116
    %5549 = vmatprep.subr.bf16.mxu0 %v5121
    %5550 = vmatpush1.bf16.msra.mxu0 %v5120
    %5551 = vmatprep.subr.bf16.mxu0 %v5125
    %5552 = vmatpush1.bf16.msra.mxu0 %v5124
    %5553 = vmatprep.subr.bf16.mxu0 %v5129
    %5554 = vmatpush1.bf16.msra.mxu0 %v5128
    %5555 = vmatprep.subr.bf16.mxu0 %v5133
    %5556 = vmatpush1.bf16.msra.mxu0 %v5132
    %5557 = vmatprep.subr.bf16.mxu0 %v5137
    %5558 = vmatpush1.bf16.msra.mxu0 %v5136
    %5559 = vmatprep.subr.bf16.mxu0 %v5141
    %5560 = vmatpush1.bf16.msra.mxu0 %v5140
    %5561 = vmatprep.mubr.bf16.mxu0 %v3841
    %5562 = vmatmul.mubr.bf16.gmra.mrb[0].mxu0 %v3840
    %v5563 = vpop.f32.mrb[0].mxu0
    %v5564 = vadd.f32 %v5521, %v5563
    %v5565 = vpop.f32.mrb[0].mxu0
    %v5566 = vadd.f32 %v5523, %v5565
    %v5567 = vpop.f32.mrb[0].mxu0
    %v5568 = vadd.f32 %v5525, %v5567
    %v5569 = vpop.f32.mrb[0].mxu0
    %v5570 = vadd.f32 %v5527, %v5569
    %5571 = vdwg.mxu0
    %5572 = vmatprep.subr.bf16.mxu0 %v4891
    %5573 = vmatpush1.bf16.msra.mxu0 %v4890
    %5574 = vmatprep.subr.bf16.mxu0 %v4895
    %5575 = vmatpush1.bf16.msra.mxu0 %v4894
    %5576 = vmatprep.subr.bf16.mxu0 %v4899
    %5577 = vmatpush1.bf16.msra.mxu0 %v4898
    %5578 = vmatprep.subr.bf16.mxu0 %v4903
    %5579 = vmatpush1.bf16.msra.mxu0 %v4902
    %5580 = vmatprep.subr.bf16.mxu0 %v4907
    %5581 = vmatpush1.bf16.msra.mxu0 %v4906
    %5582 = vmatprep.subr.bf16.mxu0 %v4911
    %5583 = vmatpush1.bf16.msra.mxu0 %v4910
    %5584 = vmatprep.subr.bf16.mxu0 %v4915
    %5585 = vmatpush1.bf16.msra.mxu0 %v4914
    %5586 = vmatprep.subr.bf16.mxu0 %v4919
    %5587 = vmatpush1.bf16.msra.mxu0 %v4918
    %5588 = vmatprep.subr.bf16.mxu0 %v4923
    %5589 = vmatpush1.bf16.msra.mxu0 %v4922
    %5590 = vmatprep.subr.bf16.mxu0 %v4927
    %5591 = vmatpush1.bf16.msra.mxu0 %v4926
    %5592 = vmatprep.subr.bf16.mxu0 %v4931
    %5593 = vmatpush1.bf16.msra.mxu0 %v4930
    %5594 = vmatprep.subr.bf16.mxu0 %v4935
    %5595 = vmatpush1.bf16.msra.mxu0 %v4934
    %5596 = vmatprep.subr.bf16.mxu0 %v4939
    %5597 = vmatpush1.bf16.msra.mxu0 %v4938
    %5598 = vmatprep.subr.bf16.mxu0 %v4943
    %5599 = vmatpush1.bf16.msra.mxu0 %v4942
    %5600 = vmatprep.subr.bf16.mxu0 %v4947
    %5601 = vmatpush1.bf16.msra.mxu0 %v4946
    %5602 = vmatprep.subr.bf16.mxu0 %v4951
    %5603 = vmatpush1.bf16.msra.mxu0 %v4950
    %5604 = vmatprep.mubr.bf16.mxu0 %v3835
    %5605 = vmatmul.mubr.bf16.gmra.mrb[0].mxu0 %v3834
    %v5606 = vpop.f32.mrb[0].mxu0
    %v5607 = vadd.f32 %v4111, %v5606
    %v5608 = vpop.f32.mrb[0].mxu0
    %v5609 = vadd.f32 %v4115, %v5608
    %v5610 = vpop.f32.mrb[0].mxu0
    %v5611 = vadd.f32 %v4111, %v5610
    %v5612 = vpop.f32.mrb[0].mxu0
    %v5613 = vadd.f32 %v4115, %v5612
    %5614 = vdwg.mxu0
    %5615 = vmatprep.subr.bf16.mxu0 %v4955
    %5616 = vmatpush1.bf16.msra.mxu0 %v4954
    %5617 = vmatprep.subr.bf16.mxu0 %v4959
    %5618 = vmatpush1.bf16.msra.mxu0 %v4958
    %5619 = vmatprep.subr.bf16.mxu0 %v4963
    %5620 = vmatpush1.bf16.msra.mxu0 %v4962
    %5621 = vmatprep.subr.bf16.mxu0 %v4967
    %5622 = vmatpush1.bf16.msra.mxu0 %v4966
    %5623 = vmatprep.subr.bf16.mxu0 %v4971
    %5624 = vmatpush1.bf16.msra.mxu0 %v4970
    %5625 = vmatprep.subr.bf16.mxu0 %v4975
    %5626 = vmatpush1.bf16.msra.mxu0 %v4974
    %5627 = vmatprep.subr.bf16.mxu0 %v4979
    %5628 = vmatpush1.bf16.msra.mxu0 %v4978
    %5629 = vmatprep.subr.bf16.mxu0 %v4983
    %5630 = vmatpush1.bf16.msra.mxu0 %v4982
    %5631 = vmatprep.subr.bf16.mxu0 %v4987
    %5632 = vmatpush1.bf16.msra.mxu0 %v4986
    %5633 = vmatprep.subr.bf16.mxu0 %v4991
    %5634 = vmatpush1.bf16.msra.mxu0 %v4990
    %5635 = vmatprep.subr.bf16.mxu0 %v4995
    %5636 = vmatpush1.bf16.msra.mxu0 %v4994
    %5637 = vmatprep.subr.bf16.mxu0 %v4999
    %5638 = vmatpush1.bf16.msra.mxu0 %v4998
    %5639 = vmatprep.subr.bf16.mxu0 %v5003
    %5640 = vmatpush1.bf16.msra.mxu0 %v5002
    %5641 = vmatprep.subr.bf16.mxu0 %v5007
    %5642 = vmatpush1.bf16.msra.mxu0 %v5006
    %5643 = vmatprep.subr.bf16.mxu0 %v5011
    %5644 = vmatpush1.bf16.msra.mxu0 %v5010
    %5645 = vmatprep.subr.bf16.mxu0 %v5015
    %5646 = vmatpush1.bf16.msra.mxu0 %v5014
    %5647 = vmatprep.mubr.bf16.mxu0 %v3837
    %5648 = vmatmul.mubr.bf16.gmra.mrb[0].mxu0 %v3836
    %v5649 = vpop.f32.mrb[0].mxu0
    %v5650 = vadd.f32 %v5607, %v5649
    %v5651 = vpop.f32.mrb[0].mxu0
    %v5652 = vadd.f32 %v5609, %v5651
    %v5653 = vpop.f32.mrb[0].mxu0
    %v5654 = vadd.f32 %v5611, %v5653
    %v5655 = vpop.f32.mrb[0].mxu0
    %v5656 = vadd.f32 %v5613, %v5655
    %5657 = vdwg.mxu0
    %5658 = vmatprep.subr.bf16.mxu0 %v5019
    %5659 = vmatpush1.bf16.msra.mxu0 %v5018
    %5660 = vmatprep.subr.bf16.mxu0 %v5023
    %5661 = vmatpush1.bf16.msra.mxu0 %v5022
    %5662 = vmatprep.subr.bf16.mxu0 %v5027
    %5663 = vmatpush1.bf16.msra.mxu0 %v5026
    %5664 = vmatprep.subr.bf16.mxu0 %v5031
    %5665 = vmatpush1.bf16.msra.mxu0 %v5030
    %5666 = vmatprep.subr.bf16.mxu0 %v5035
    %5667 = vmatpush1.bf16.msra.mxu0 %v5034
    %5668 = vmatprep.subr.bf16.mxu0 %v5039
    %5669 = vmatpush1.bf16.msra.mxu0 %v5038
    %5670 = vmatprep.subr.bf16.mxu0 %v5043
    %5671 = vmatpush1.bf16.msra.mxu0 %v5042
    %5672 = vmatprep.subr.bf16.mxu0 %v5047
    %5673 = vmatpush1.bf16.msra.mxu0 %v5046
    %5674 = vmatprep.subr.bf16.mxu0 %v5051
    %5675 = vmatpush1.bf16.msra.mxu0 %v5050
    %5676 = vmatprep.subr.bf16.mxu0 %v5055
    %5677 = vmatpush1.bf16.msra.mxu0 %v5054
    %5678 = vmatprep.subr.bf16.mxu0 %v5059
    %5679 = vmatpush1.bf16.msra.mxu0 %v5058
    %5680 = vmatprep.subr.bf16.mxu0 %v5063
    %5681 = vmatpush1.bf16.msra.mxu0 %v5062
    %5682 = vmatprep.subr.bf16.mxu0 %v5067
    %5683 = vmatpush1.bf16.msra.mxu0 %v5066
    %5684 = vmatprep.subr.bf16.mxu0 %v5071
    %5685 = vmatpush1.bf16.msra.mxu0 %v5070
    %5686 = vmatprep.subr.bf16.mxu0 %v5075
    %5687 = vmatpush1.bf16.msra.mxu0 %v5074
    %5688 = vmatprep.subr.bf16.mxu0 %v5079
    %5689 = vmatpush1.bf16.msra.mxu0 %v5078
    %5690 = vmatprep.mubr.bf16.mxu0 %v3839
    %5691 = vmatmul.mubr.bf16.gmra.mrb[0].mxu0 %v3838
    %v5692 = vpop.f32.mrb[0].mxu0
    %v5693 = vadd.f32 %v5650, %v5692
    %v5694 = vpop.f32.mrb[0].mxu0
    %v5695 = vadd.f32 %v5652, %v5694
    %v5696 = vpop.f32.mrb[0].mxu0
    %v5697 = vadd.f32 %v5654, %v5696
    %v5698 = vpop.f32.mrb[0].mxu0
    %v5699 = vadd.f32 %v5656, %v5698
    %5700 = vdwg.mxu0
    %5701 = vmatprep.subr.bf16.mxu0 %v5083
    %5702 = vmatpush1.bf16.msra.mxu0 %v5082
    %5703 = vmatprep.subr.bf16.mxu0 %v5087
    %5704 = vmatpush1.bf16.msra.mxu0 %v5086
    %5705 = vmatprep.subr.bf16.mxu0 %v5091
    %5706 = vmatpush1.bf16.msra.mxu0 %v5090
    %5707 = vmatprep.subr.bf16.mxu0 %v5095
    %5708 = vmatpush1.bf16.msra.mxu0 %v5094
    %5709 = vmatprep.subr.bf16.mxu0 %v5099
    %5710 = vmatpush1.bf16.msra.mxu0 %v5098
    %5711 = vmatprep.subr.bf16.mxu0 %v5103
    %5712 = vmatpush1.bf16.msra.mxu0 %v5102
    %5713 = vmatprep.subr.bf16.mxu0 %v5107
    %5714 = vmatpush1.bf16.msra.mxu0 %v5106
    %5715 = vmatprep.subr.bf16.mxu0 %v5111
    %5716 = vmatpush1.bf16.msra.mxu0 %v5110
    %5717 = vmatprep.subr.bf16.mxu0 %v5115
    %5718 = vmatpush1.bf16.msra.mxu0 %v5114
    %5719 = vmatprep.subr.bf16.mxu0 %v5119
    %5720 = vmatpush1.bf16.msra.mxu0 %v5118
    %5721 = vmatprep.subr.bf16.mxu0 %v5123
    %5722 = vmatpush1.bf16.msra.mxu0 %v5122
    %5723 = vmatprep.subr.bf16.mxu0 %v5127
    %5724 = vmatpush1.bf16.msra.mxu0 %v5126
    %5725 = vmatprep.subr.bf16.mxu0 %v5131
    %5726 = vmatpush1.bf16.msra.mxu0 %v5130
    %5727 = vmatprep.subr.bf16.mxu0 %v5135
    %5728 = vmatpush1.bf16.msra.mxu0 %v5134
    %5729 = vmatprep.subr.bf16.mxu0 %v5139
    %5730 = vmatpush1.bf16.msra.mxu0 %v5138
    %5731 = vmatprep.subr.bf16.mxu0 %v5143
    %5732 = vmatpush1.bf16.msra.mxu0 %v5142
    %5733 = vmatprep.mubr.bf16.mxu0 %v3841
    %5734 = vmatmul.mubr.bf16.gmra.mrb[0].mxu0 %v3840
    %v5735 = vpop.f32.mrb[0].mxu0
    %v5736 = vadd.f32 %v5693, %v5735
    %v5737 = vpop.f32.mrb[0].mxu0
    %v5738 = vadd.f32 %v5695, %v5737
    %v5739 = vpop.f32.mrb[0].mxu0
    %v5740 = vadd.f32 %v5697, %v5739
    %v5741 = vpop.f32.mrb[0].mxu0
    %v5742 = vadd.f32 %v5699, %v5741
    %5743 = vdwg.mxu0
    %v5744 = vmul.f32 %v5564, 0.5
    %v5745 = vmul.f32 %v5566, 0.5
    %v5746 = vmul.f32 %v5736, 0.5
    %v5747 = vmul.f32 %v5738, 0.5
    %v5748 = vmul.f32 %v5568, 0.5
    %v5749 = vmul.f32 %v5570, 0.5
    %v5750 = vmul.f32 %v5740, 0.5
    %v5751 = vmul.f32 %v5742, 0.5
    %v5752 = vmul.f32 %v5564, 0.70710677
    %v5753 = vmul.f32 %v5566, 0.70710677
    %v5754 = vmul.f32 %v5736, 0.70710677
    %v5755 = vmul.f32 %v5738, 0.70710677
    %v5756 = vmul.f32 %v5568, 0.70710677
    %v5757 = vmul.f32 %v5570, 0.70710677
    %v5758 = vmul.f32 %v5740, 0.70710677
    %v5759 = vmul.f32 %v5742, 0.70710677
    %v5760 = verf.f32.pop %v5752
    %v5761 = verf.f32.pop %v5753
    %v5762 = verf.f32.pop %v5754
    %v5763 = verf.f32.pop %v5755
    %v5764 = verf.f32.pop %v5756
    %v5765 = verf.f32.pop %v5757
    %v5766 = verf.f32.pop %v5758
    %v5767 = verf.f32.pop %v5759
    %v5768 = vadd.f32 %v5760, 1.0
    %v5769 = vadd.f32 %v5761, 1.0
    %v5770 = vadd.f32 %v5762, 1.0
    %v5771 = vadd.f32 %v5763, 1.0
    %v5772 = vadd.f32 %v5764, 1.0
    %v5773 = vadd.f32 %v5765, 1.0
    %v5774 = vadd.f32 %v5766, 1.0
    %v5775 = vadd.f32 %v5767, 1.0
    %v5776 = vmul.f32 %v5744, %v5768
    %v5777 = vmul.f32 %v5745, %v5769
    %v5778 = vmul.f32 %v5746, %v5770
    %v5779 = vmul.f32 %v5747, %v5771
    %v5780 = vmul.f32 %v5748, %v5772
    %v5781 = vmul.f32 %v5749, %v5773
    %v5782 = vmul.f32 %v5750, %v5774
    %v5783 = vmul.f32 %v5751, %v5775
    %v5784 = vpack.c.bf16 %v5780, %v5776
    %v5785 = vpack.c.bf16 %v5781, %v5777
    %v5786 = vpack.c.bf16 %v5782, %v5778
    %v5787 = vpack.c.bf16 %v5783, %v5779
    %v5788 = vld [vmem:[#allocation9] sm:$0xff]
    %v5789 = vld [vmem:[#allocation9 + $0x8] sm:$0xff]
    %v5790 = vld [vmem:[#allocation9 + $0x10] sm:$0xff]
    %v5791 = vld [vmem:[#allocation9 + $0x18] sm:$0xff]
    %v5792 = vld [vmem:[#allocation9 + $0x20] sm:$0xff]
    %v5793 = vld [vmem:[#allocation9 + $0x28] sm:$0xff]
    %v5794 = vld [vmem:[#allocation9 + $0x30] sm:$0xff]
    %v5795 = vld [vmem:[#allocation9 + $0x38] sm:$0xff]
    %v5796 = vld [vmem:[#allocation9 + $0x40] sm:$0xff]
    %v5797 = vld [vmem:[#allocation9 + $0x48] sm:$0xff]
    %v5798 = vld [vmem:[#allocation9 + $0x50] sm:$0xff]
    %v5799 = vld [vmem:[#allocation9 + $0x58] sm:$0xff]
    %v5800 = vld [vmem:[#allocation9 + $0x60] sm:$0xff]
    %v5801 = vld [vmem:[#allocation9 + $0x68] sm:$0xff]
    %v5802 = vld [vmem:[#allocation9 + $0x70] sm:$0xff]
    %v5803 = vld [vmem:[#allocation9 + $0x78] sm:$0xff]
    %v5804 = vld [vmem:[#allocation9 + $0x80] sm:$0xff]
    %v5805 = vld [vmem:[#allocation9 + $0x88] sm:$0xff]
    %v5806 = vld [vmem:[#allocation9 + $0x90] sm:$0xff]
    %v5807 = vld [vmem:[#allocation9 + $0x98] sm:$0xff]
    %v5808 = vld [vmem:[#allocation9 + $0xa0] sm:$0xff]
    %v5809 = vld [vmem:[#allocation9 + $0xa8] sm:$0xff]
    %v5810 = vld [vmem:[#allocation9 + $0xb0] sm:$0xff]
    %v5811 = vld [vmem:[#allocation9 + $0xb8] sm:$0xff]
    %v5812 = vld [vmem:[#allocation9 + $0xc0] sm:$0xff]
    %v5813 = vld [vmem:[#allocation9 + $0xc8] sm:$0xff]
    %v5814 = vld [vmem:[#allocation9 + $0xd0] sm:$0xff]
    %v5815 = vld [vmem:[#allocation9 + $0xd8] sm:$0xff]
    %v5816 = vld [vmem:[#allocation9 + $0xe0] sm:$0xff]
    %v5817 = vld [vmem:[#allocation9 + $0xe8] sm:$0xff]
    %v5818 = vld [vmem:[#allocation9 + $0xf0] sm:$0xff]
    %v5819 = vld [vmem:[#allocation9 + $0xf8] sm:$0xff]
    %v5820 = vld [vmem:[#allocation9 + $0x100] sm:$0xff]
    %v5821 = vld [vmem:[#allocation9 + $0x108] sm:$0xff]
    %v5822 = vld [vmem:[#allocation9 + $0x110] sm:$0xff]
    %v5823 = vld [vmem:[#allocation9 + $0x118] sm:$0xff]
    %v5824 = vld [vmem:[#allocation9 + $0x120] sm:$0xff]
    %v5825 = vld [vmem:[#allocation9 + $0x128] sm:$0xff]
    %v5826 = vld [vmem:[#allocation9 + $0x130] sm:$0xff]
    %v5827 = vld [vmem:[#allocation9 + $0x138] sm:$0xff]
    %v5828 = vld [vmem:[#allocation9 + $0x140] sm:$0xff]
    %v5829 = vld [vmem:[#allocation9 + $0x148] sm:$0xff]
    %v5830 = vld [vmem:[#allocation9 + $0x150] sm:$0xff]
    %v5831 = vld [vmem:[#allocation9 + $0x158] sm:$0xff]
    %v5832 = vld [vmem:[#allocation9 + $0x160] sm:$0xff]
    %v5833 = vld [vmem:[#allocation9 + $0x168] sm:$0xff]
    %v5834 = vld [vmem:[#allocation9 + $0x170] sm:$0xff]
    %v5835 = vld [vmem:[#allocation9 + $0x178] sm:$0xff]
    %v5836 = vld [vmem:[#allocation9 + $0x180] sm:$0xff]
    %v5837 = vld [vmem:[#allocation9 + $0x188] sm:$0xff]
    %v5838 = vld [vmem:[#allocation9 + $0x190] sm:$0xff]
    %v5839 = vld [vmem:[#allocation9 + $0x198] sm:$0xff]
    %v5840 = vld [vmem:[#allocation9 + $0x1a0] sm:$0xff]
    %v5841 = vld [vmem:[#allocation9 + $0x1a8] sm:$0xff]
    %v5842 = vld [vmem:[#allocation9 + $0x1b0] sm:$0xff]
    %v5843 = vld [vmem:[#allocation9 + $0x1b8] sm:$0xff]
    %v5844 = vld [vmem:[#allocation9 + $0x1c0] sm:$0xff]
    %v5845 = vld [vmem:[#allocation9 + $0x1c8] sm:$0xff]
    %v5846 = vld [vmem:[#allocation9 + $0x1d0] sm:$0xff]
    %v5847 = vld [vmem:[#allocation9 + $0x1d8] sm:$0xff]
    %v5848 = vld [vmem:[#allocation9 + $0x1e0] sm:$0xff]
    %v5849 = vld [vmem:[#allocation9 + $0x1e8] sm:$0xff]
    %v5850 = vld [vmem:[#allocation9 + $0x1f0] sm:$0xff]
    %v5851 = vld [vmem:[#allocation9 + $0x1f8] sm:$0xff]
    %v5852 = vld [vmem:[#allocation10] sm:$0x3]
    %v5854 = vlaneseq
    %v5855 = vshrl.u32 %v5854, 7
    %v5856 = vsub.s32 0, %v5855
    %v5857 = vrot.slane %v5852, %v5856
    %v5858 = vlaneseq
    %v5859 = vshrl.u32 %v5858, 7
    %v5860 = vsub.s32 1, %v5859
    %v5861 = vrot.slane %v5852, %v5860
    %v5928 = vunpack.c.l.b16 %v5788
    %v5929 = vunpack.c.h.b16 %v5788
    %v5930 = vunpack.c.l.b16 %v5789
    %v5931 = vunpack.c.h.b16 %v5789
    %v5932 = vunpack.c.l.b16 %v5790
    %v5933 = vunpack.c.h.b16 %v5790
    %v5934 = vunpack.c.l.b16 %v5791
    %v5935 = vunpack.c.h.b16 %v5791
    %v5936 = vunpack.c.l.b16 %v5792
    %v5937 = vunpack.c.h.b16 %v5792
    %v5938 = vunpack.c.l.b16 %v5793
    %v5939 = vunpack.c.h.b16 %v5793
    %v5940 = vunpack.c.l.b16 %v5794
    %v5941 = vunpack.c.h.b16 %v5794
    %v5942 = vunpack.c.l.b16 %v5795
    %v5943 = vunpack.c.h.b16 %v5795
    %v5944 = vunpack.c.l.b16 %v5796
    %v5945 = vunpack.c.h.b16 %v5796
    %v5946 = vunpack.c.l.b16 %v5797
    %v5947 = vunpack.c.h.b16 %v5797
    %v5948 = vunpack.c.l.b16 %v5798
    %v5949 = vunpack.c.h.b16 %v5798
    %v5950 = vunpack.c.l.b16 %v5799
    %v5951 = vunpack.c.h.b16 %v5799
    %v5952 = vunpack.c.l.b16 %v5800
    %v5953 = vunpack.c.h.b16 %v5800
    %v5954 = vunpack.c.l.b16 %v5801
    %v5955 = vunpack.c.h.b16 %v5801
    %v5956 = vunpack.c.l.b16 %v5802
    %v5957 = vunpack.c.h.b16 %v5802
    %v5958 = vunpack.c.l.b16 %v5803
    %v5959 = vunpack.c.h.b16 %v5803
    %v5960 = vunpack.c.l.b16 %v5804
    %v5961 = vunpack.c.h.b16 %v5804
    %v5962 = vunpack.c.l.b16 %v5805
    %v5963 = vunpack.c.h.b16 %v5805
    %v5964 = vunpack.c.l.b16 %v5806
    %v5965 = vunpack.c.h.b16 %v5806
    %v5966 = vunpack.c.l.b16 %v5807
    %v5967 = vunpack.c.h.b16 %v5807
    %v5968 = vunpack.c.l.b16 %v5808
    %v5969 = vunpack.c.h.b16 %v5808
    %v5970 = vunpack.c.l.b16 %v5809
    %v5971 = vunpack.c.h.b16 %v5809
    %v5972 = vunpack.c.l.b16 %v5810
    %v5973 = vunpack.c.h.b16 %v5810
    %v5974 = vunpack.c.l.b16 %v5811
    %v5975 = vunpack.c.h.b16 %v5811
    %v5976 = vunpack.c.l.b16 %v5812
    %v5977 = vunpack.c.h.b16 %v5812
    %v5978 = vunpack.c.l.b16 %v5813
    %v5979 = vunpack.c.h.b16 %v5813
    %v5980 = vunpack.c.l.b16 %v5814
    %v5981 = vunpack.c.h.b16 %v5814
    %v5982 = vunpack.c.l.b16 %v5815
    %v5983 = vunpack.c.h.b16 %v5815
    %v5984 = vunpack.c.l.b16 %v5816
    %v5985 = vunpack.c.h.b16 %v5816
    %v5986 = vunpack.c.l.b16 %v5817
    %v5987 = vunpack.c.h.b16 %v5817
    %v5988 = vunpack.c.l.b16 %v5818
    %v5989 = vunpack.c.h.b16 %v5818
    %v5990 = vunpack.c.l.b16 %v5819
    %v5991 = vunpack.c.h.b16 %v5819
    %v5992 = vunpack.c.l.b16 %v5820
    %v5993 = vunpack.c.h.b16 %v5820
    %v5994 = vunpack.c.l.b16 %v5821
    %v5995 = vunpack.c.h.b16 %v5821
    %v5996 = vunpack.c.l.b16 %v5822
    %v5997 = vunpack.c.h.b16 %v5822
    %v5998 = vunpack.c.l.b16 %v5823
    %v5999 = vunpack.c.h.b16 %v5823
    %v6000 = vunpack.c.l.b16 %v5824
    %v6001 = vunpack.c.h.b16 %v5824
    %v6002 = vunpack.c.l.b16 %v5825
    %v6003 = vunpack.c.h.b16 %v5825
    %v6004 = vunpack.c.l.b16 %v5826
    %v6005 = vunpack.c.h.b16 %v5826
    %v6006 = vunpack.c.l.b16 %v5827
    %v6007 = vunpack.c.h.b16 %v5827
    %v6008 = vunpack.c.l.b16 %v5828
    %v6009 = vunpack.c.h.b16 %v5828
    %v6010 = vunpack.c.l.b16 %v5829
    %v6011 = vunpack.c.h.b16 %v5829
    %v6012 = vunpack.c.l.b16 %v5830
    %v6013 = vunpack.c.h.b16 %v5830
    %v6014 = vunpack.c.l.b16 %v5831
    %v6015 = vunpack.c.h.b16 %v5831
    %v6016 = vunpack.c.l.b16 %v5832
    %v6017 = vunpack.c.h.b16 %v5832
    %v6018 = vunpack.c.l.b16 %v5833
    %v6019 = vunpack.c.h.b16 %v5833
    %v6020 = vunpack.c.l.b16 %v5834
    %v6021 = vunpack.c.h.b16 %v5834
    %v6022 = vunpack.c.l.b16 %v5835
    %v6023 = vunpack.c.h.b16 %v5835
    %v6024 = vunpack.c.l.b16 %v5836
    %v6025 = vunpack.c.h.b16 %v5836
    %v6026 = vunpack.c.l.b16 %v5837
    %v6027 = vunpack.c.h.b16 %v5837
    %v6028 = vunpack.c.l.b16 %v5838
    %v6029 = vunpack.c.h.b16 %v5838
    %v6030 = vunpack.c.l.b16 %v5839
    %v6031 = vunpack.c.h.b16 %v5839
    %v6032 = vunpack.c.l.b16 %v5840
    %v6033 = vunpack.c.h.b16 %v5840
    %v6034 = vunpack.c.l.b16 %v5841
    %v6035 = vunpack.c.h.b16 %v5841
    %v6036 = vunpack.c.l.b16 %v5842
    %v6037 = vunpack.c.h.b16 %v5842
    %v6038 = vunpack.c.l.b16 %v5843
    %v6039 = vunpack.c.h.b16 %v5843
    %v6040 = vunpack.c.l.b16 %v5844
    %v6041 = vunpack.c.h.b16 %v5844
    %v6042 = vunpack.c.l.b16 %v5845
    %v6043 = vunpack.c.h.b16 %v5845
    %v6044 = vunpack.c.l.b16 %v5846
    %v6045 = vunpack.c.h.b16 %v5846
    %v6046 = vunpack.c.l.b16 %v5847
    %v6047 = vunpack.c.h.b16 %v5847
    %v6048 = vunpack.c.l.b16 %v5848
    %v6049 = vunpack.c.h.b16 %v5848
    %v6050 = vunpack.c.l.b16 %v5849
    %v6051 = vunpack.c.h.b16 %v5849
    %v6052 = vunpack.c.l.b16 %v5850
    %v6053 = vunpack.c.h.b16 %v5850
    %v6054 = vunpack.c.l.b16 %v5851
    %v6055 = vunpack.c.h.b16 %v5851
    %v6056 = vpack.c.b16 %v5930, %v5928
    %v6057 = vpack.c.b16 %v5931, %v5929
    %v6058 = vpack.c.b16 %v5934, %v5932
    %v6059 = vpack.c.b16 %v5935, %v5933
    %v6060 = vpack.c.b16 %v5938, %v5936
    %v6061 = vpack.c.b16 %v5939, %v5937
    %v6062 = vpack.c.b16 %v5942, %v5940
    %v6063 = vpack.c.b16 %v5943, %v5941
    %v6064 = vpack.c.b16 %v5946, %v5944
    %v6065 = vpack.c.b16 %v5947, %v5945
    %v6066 = vpack.c.b16 %v5950, %v5948
    %v6067 = vpack.c.b16 %v5951, %v5949
    %v6068 = vpack.c.b16 %v5954, %v5952
    %v6069 = vpack.c.b16 %v5955, %v5953
    %v6070 = vpack.c.b16 %v5958, %v5956
    %v6071 = vpack.c.b16 %v5959, %v5957
    %v6072 = vpack.c.b16 %v5962, %v5960
    %v6073 = vpack.c.b16 %v5963, %v5961
    %v6074 = vpack.c.b16 %v5966, %v5964
    %v6075 = vpack.c.b16 %v5967, %v5965
    %v6076 = vpack.c.b16 %v5970, %v5968
    %v6077 = vpack.c.b16 %v5971, %v5969
    %v6078 = vpack.c.b16 %v5974, %v5972
    %v6079 = vpack.c.b16 %v5975, %v5973
    %v6080 = vpack.c.b16 %v5978, %v5976
    %v6081 = vpack.c.b16 %v5979, %v5977
    %v6082 = vpack.c.b16 %v5982, %v5980
    %v6083 = vpack.c.b16 %v5983, %v5981
    %v6084 = vpack.c.b16 %v5986, %v5984
    %v6085 = vpack.c.b16 %v5987, %v5985
    %v6086 = vpack.c.b16 %v5990, %v5988
    %v6087 = vpack.c.b16 %v5991, %v5989
    %v6088 = vpack.c.b16 %v5994, %v5992
    %v6089 = vpack.c.b16 %v5995, %v5993
    %v6090 = vpack.c.b16 %v5998, %v5996
    %v6091 = vpack.c.b16 %v5999, %v5997
    %v6092 = vpack.c.b16 %v6002, %v6000
    %v6093 = vpack.c.b16 %v6003, %v6001
    %v6094 = vpack.c.b16 %v6006, %v6004
    %v6095 = vpack.c.b16 %v6007, %v6005
    %v6096 = vpack.c.b16 %v6010, %v6008
    %v6097 = vpack.c.b16 %v6011, %v6009
    %v6098 = vpack.c.b16 %v6014, %v6012
    %v6099 = vpack.c.b16 %v6015, %v6013
    %v6100 = vpack.c.b16 %v6018, %v6016
    %v6101 = vpack.c.b16 %v6019, %v6017
    %v6102 = vpack.c.b16 %v6022, %v6020
    %v6103 = vpack.c.b16 %v6023, %v6021
    %v6104 = vpack.c.b16 %v6026, %v6024
    %v6105 = vpack.c.b16 %v6027, %v6025
    %v6106 = vpack.c.b16 %v6030, %v6028
    %v6107 = vpack.c.b16 %v6031, %v6029
    %v6108 = vpack.c.b16 %v6034, %v6032
    %v6109 = vpack.c.b16 %v6035, %v6033
    %v6110 = vpack.c.b16 %v6038, %v6036
    %v6111 = vpack.c.b16 %v6039, %v6037
    %v6112 = vpack.c.b16 %v6042, %v6040
    %v6113 = vpack.c.b16 %v6043, %v6041
    %v6114 = vpack.c.b16 %v6046, %v6044
    %v6115 = vpack.c.b16 %v6047, %v6045
    %v6116 = vpack.c.b16 %v6050, %v6048
    %v6117 = vpack.c.b16 %v6051, %v6049
    %v6118 = vpack.c.b16 %v6054, %v6052
    %v6119 = vpack.c.b16 %v6055, %v6053
    %6184 = vmatprep.subr.bf16.mxu0 %v6057
    %6185 = vmatpush1.bf16.msra.mxu0 %v6056
    %6186 = vmatprep.subr.bf16.mxu0 %v6059
    %6187 = vmatpush1.bf16.msra.mxu0 %v6058
    %6188 = vmatprep.subr.bf16.mxu0 %v6061
    %6189 = vmatpush1.bf16.msra.mxu0 %v6060
    %6190 = vmatprep.subr.bf16.mxu0 %v6063
    %6191 = vmatpush1.bf16.msra.mxu0 %v6062
    %6192 = vmatprep.subr.bf16.mxu0 %v6065
    %6193 = vmatpush1.bf16.msra.mxu0 %v6064
    %6194 = vmatprep.subr.bf16.mxu0 %v6067
    %6195 = vmatpush1.bf16.msra.mxu0 %v6066
    %6196 = vmatprep.subr.bf16.mxu0 %v6069
    %6197 = vmatpush1.bf16.msra.mxu0 %v6068
    %6198 = vmatprep.subr.bf16.mxu0 %v6071
    %6199 = vmatpush1.bf16.msra.mxu0 %v6070
    %6200 = vmatprep.subr.bf16.mxu0 %v6073
    %6201 = vmatpush1.bf16.msra.mxu0 %v6072
    %6202 = vmatprep.subr.bf16.mxu0 %v6075
    %6203 = vmatpush1.bf16.msra.mxu0 %v6074
    %6204 = vmatprep.subr.bf16.mxu0 %v6077
    %6205 = vmatpush1.bf16.msra.mxu0 %v6076
    %6206 = vmatprep.subr.bf16.mxu0 %v6079
    %6207 = vmatpush1.bf16.msra.mxu0 %v6078
    %6208 = vmatprep.subr.bf16.mxu0 %v6081
    %6209 = vmatpush1.bf16.msra.mxu0 %v6080
    %6210 = vmatprep.subr.bf16.mxu0 %v6083
    %6211 = vmatpush1.bf16.msra.mxu0 %v6082
    %6212 = vmatprep.subr.bf16.mxu0 %v6085
    %6213 = vmatpush1.bf16.msra.mxu0 %v6084
    %6214 = vmatprep.subr.bf16.mxu0 %v6087
    %6215 = vmatpush1.bf16.msra.mxu0 %v6086
    %6216 = vmatprep.mubr.bf16.mxu0 %v5785
    %6217 = vmatmul.mubr.bf16.gmra.mrb[0].mxu0 %v5784
    %v6218 = vpop.f32.mrb[0].mxu0
    %v6219 = vadd.f32 %v5857, %v6218
    %v6220 = vpop.f32.mrb[0].mxu0
    %v6221 = vadd.f32 %v5861, %v6220
    %v6222 = vpop.f32.mrb[0].mxu0
    %v6223 = vadd.f32 %v5857, %v6222
    %v6224 = vpop.f32.mrb[0].mxu0
    %v6225 = vadd.f32 %v5861, %v6224
    %6226 = vdwg.mxu0
    %6227 = vmatprep.subr.bf16.mxu0 %v6089
    %6228 = vmatpush1.bf16.msra.mxu0 %v6088
    %6229 = vmatprep.subr.bf16.mxu0 %v6091
    %6230 = vmatpush1.bf16.msra.mxu0 %v6090
    %6231 = vmatprep.subr.bf16.mxu0 %v6093
    %6232 = vmatpush1.bf16.msra.mxu0 %v6092
    %6233 = vmatprep.subr.bf16.mxu0 %v6095
    %6234 = vmatpush1.bf16.msra.mxu0 %v6094
    %6235 = vmatprep.subr.bf16.mxu0 %v6097
    %6236 = vmatpush1.bf16.msra.mxu0 %v6096
    %6237 = vmatprep.subr.bf16.mxu0 %v6099
    %6238 = vmatpush1.bf16.msra.mxu0 %v6098
    %6239 = vmatprep.subr.bf16.mxu0 %v6101
    %6240 = vmatpush1.bf16.msra.mxu0 %v6100
    %6241 = vmatprep.subr.bf16.mxu0 %v6103
    %6242 = vmatpush1.bf16.msra.mxu0 %v6102
    %6243 = vmatprep.subr.bf16.mxu0 %v6105
    %6244 = vmatpush1.bf16.msra.mxu0 %v6104
    %6245 = vmatprep.subr.bf16.mxu0 %v6107
    %6246 = vmatpush1.bf16.msra.mxu0 %v6106
    %6247 = vmatprep.subr.bf16.mxu0 %v6109
    %6248 = vmatpush1.bf16.msra.mxu0 %v6108
    %6249 = vmatprep.subr.bf16.mxu0 %v6111
    %6250 = vmatpush1.bf16.msra.mxu0 %v6110
    %6251 = vmatprep.subr.bf16.mxu0 %v6113
    %6252 = vmatpush1.bf16.msra.mxu0 %v6112
    %6253 = vmatprep.subr.bf16.mxu0 %v6115
    %6254 = vmatpush1.bf16.msra.mxu0 %v6114
    %6255 = vmatprep.subr.bf16.mxu0 %v6117
    %6256 = vmatpush1.bf16.msra.mxu0 %v6116
    %6257 = vmatprep.subr.bf16.mxu0 %v6119
    %6258 = vmatpush1.bf16.msra.mxu0 %v6118
    %6259 = vmatprep.mubr.bf16.mxu0 %v5787
    %6260 = vmatmul.mubr.bf16.gmra.mrb[0].mxu0 %v5786
    %v6261 = vpop.f32.mrb[0].mxu0
    %v6262 = vadd.f32 %v6219, %v6261
    %v6263 = vpop.f32.mrb[0].mxu0
    %v6264 = vadd.f32 %v6221, %v6263
    %v6265 = vpop.f32.mrb[0].mxu0
    %v6266 = vadd.f32 %v6223, %v6265
    %v6267 = vpop.f32.mrb[0].mxu0
    %v6268 = vadd.f32 %v6225, %v6267
    %6269 = vdwg.mxu0
    %v6270 = vmul.f32 %v6262, 0.5
    %v6271 = vmul.f32 %v6264, 0.5
    %v6272 = vmul.f32 %v6266, 0.5
    %v6273 = vmul.f32 %v6268, 0.5
    %v6274 = vmul.f32 %v6262, 0.70710677
    %v6275 = vmul.f32 %v6264, 0.70710677
    %v6276 = vmul.f32 %v6266, 0.70710677
    %v6277 = vmul.f32 %v6268, 0.70710677
    %v6278 = verf.f32.pop %v6274
    %v6279 = verf.f32.pop %v6275
    %v6280 = verf.f32.pop %v6276
    %v6281 = verf.f32.pop %v6277
    %v6282 = vadd.f32 %v6278, 1.0
    %v6283 = vadd.f32 %v6279, 1.0
    %v6284 = vadd.f32 %v6280, 1.0
    %v6285 = vadd.f32 %v6281, 1.0
    %v6286 = vmul.f32 %v6270, %v6282
    %v6287 = vmul.f32 %v6271, %v6283
    %v6288 = vmul.f32 %v6272, %v6284
    %v6289 = vmul.f32 %v6273, %v6285
    %v6290 = vpack.c.bf16 %v6288, %v6286
    %v6291 = vpack.c.bf16 %v6289, %v6287
    %v6292 = vld [vmem:[#allocation12] sm:$0xf]
    %v6293 = vld [vmem:[#allocation12 + $0x4] sm:$0xf]
    %v6294 = vld [vmem:[#allocation12 + $0x8] sm:$0xf]
    %v6295 = vld [vmem:[#allocation12 + $0xc] sm:$0xf]
    %v6296 = vld [vmem:[#allocation12 + $0x10] sm:$0xf]
    %v6297 = vld [vmem:[#allocation12 + $0x14] sm:$0xf]
    %v6298 = vld [vmem:[#allocation12 + $0x18] sm:$0xf]
    %v6299 = vld [vmem:[#allocation12 + $0x1c] sm:$0xf]
    %v6300 = vld [vmem:[#allocation12 + $0x20] sm:$0xf]
    %v6301 = vld [vmem:[#allocation12 + $0x24] sm:$0xf]
    %v6302 = vld [vmem:[#allocation12 + $0x28] sm:$0xf]
    %v6303 = vld [vmem:[#allocation12 + $0x2c] sm:$0xf]
    %v6304 = vld [vmem:[#allocation12 + $0x30] sm:$0xf]
    %v6305 = vld [vmem:[#allocation12 + $0x34] sm:$0xf]
    %v6306 = vld [vmem:[#allocation12 + $0x38] sm:$0xf]
    %v6307 = vld [vmem:[#allocation12 + $0x3c] sm:$0xf]
    %v6308 = vld [vmem:[#allocation12 + $0x40] sm:$0xf]
    %v6309 = vld [vmem:[#allocation12 + $0x44] sm:$0xf]
    %v6310 = vld [vmem:[#allocation12 + $0x48] sm:$0xf]
    %v6311 = vld [vmem:[#allocation12 + $0x4c] sm:$0xf]
    %v6312 = vld [vmem:[#allocation12 + $0x50] sm:$0xf]
    %v6313 = vld [vmem:[#allocation12 + $0x54] sm:$0xf]
    %v6314 = vld [vmem:[#allocation12 + $0x58] sm:$0xf]
    %v6315 = vld [vmem:[#allocation12 + $0x5c] sm:$0xf]
    %v6316 = vld [vmem:[#allocation12 + $0x60] sm:$0xf]
    %v6317 = vld [vmem:[#allocation12 + $0x64] sm:$0xf]
    %v6318 = vld [vmem:[#allocation12 + $0x68] sm:$0xf]
    %v6319 = vld [vmem:[#allocation12 + $0x6c] sm:$0xf]
    %v6320 = vld [vmem:[#allocation12 + $0x70] sm:$0xf]
    %v6321 = vld [vmem:[#allocation12 + $0x74] sm:$0xf]
    %v6322 = vld [vmem:[#allocation12 + $0x78] sm:$0xf]
    %v6323 = vld [vmem:[#allocation12 + $0x7c] sm:$0xf]
    %v6324 = vld [vmem:[#allocation13] sm:$0x1]
    %v6326 = vlaneseq
    %v6327 = vshrl.u32 %v6326, 7
    %v6328 = vsub.s32 0, %v6327
    %v6329 = vrot.slane %v6324, %v6328
    %v6363 = vunpack.c.l.b16 %v6292
    %v6364 = vunpack.c.l.b16 %v6293
    %v6365 = vunpack.c.l.b16 %v6294
    %v6366 = vunpack.c.l.b16 %v6295
    %v6367 = vunpack.c.l.b16 %v6296
    %v6368 = vunpack.c.l.b16 %v6297
    %v6369 = vunpack.c.l.b16 %v6298
    %v6370 = vunpack.c.l.b16 %v6299
    %v6371 = vunpack.c.l.b16 %v6300
    %v6372 = vunpack.c.l.b16 %v6301
    %v6373 = vunpack.c.l.b16 %v6302
    %v6374 = vunpack.c.l.b16 %v6303
    %v6375 = vunpack.c.l.b16 %v6304
    %v6376 = vunpack.c.l.b16 %v6305
    %v6377 = vunpack.c.l.b16 %v6306
    %v6378 = vunpack.c.l.b16 %v6307
    %v6379 = vunpack.c.l.b16 %v6308
    %v6380 = vunpack.c.l.b16 %v6309
    %v6381 = vunpack.c.l.b16 %v6310
    %v6382 = vunpack.c.l.b16 %v6311
    %v6383 = vunpack.c.l.b16 %v6312
    %v6384 = vunpack.c.l.b16 %v6313
    %v6385 = vunpack.c.l.b16 %v6314
    %v6386 = vunpack.c.l.b16 %v6315
    %v6387 = vunpack.c.l.b16 %v6316
    %v6388 = vunpack.c.l.b16 %v6317
    %v6389 = vunpack.c.l.b16 %v6318
    %v6390 = vunpack.c.l.b16 %v6319
    %v6391 = vunpack.c.l.b16 %v6320
    %v6392 = vunpack.c.l.b16 %v6321
    %v6393 = vunpack.c.l.b16 %v6322
    %v6394 = vunpack.c.l.b16 %v6323
    %v6395 = vpack.c.b16 %v6364, %v6363
    %v6396 = vpack.c.b16 %v6366, %v6365
    %v6397 = vpack.c.b16 %v6368, %v6367
    %v6398 = vpack.c.b16 %v6370, %v6369
    %v6399 = vpack.c.b16 %v6372, %v6371
    %v6400 = vpack.c.b16 %v6374, %v6373
    %v6401 = vpack.c.b16 %v6376, %v6375
    %v6402 = vpack.c.b16 %v6378, %v6377
    %v6403 = vpack.c.b16 %v6380, %v6379
    %v6404 = vpack.c.b16 %v6382, %v6381
    %v6405 = vpack.c.b16 %v6384, %v6383
    %v6406 = vpack.c.b16 %v6386, %v6385
    %v6407 = vpack.c.b16 %v6388, %v6387
    %v6408 = vpack.c.b16 %v6390, %v6389
    %v6409 = vpack.c.b16 %v6392, %v6391
    %v6410 = vpack.c.b16 %v6394, %v6393
    %6427 = vmatprep.subr.bf16.mxu0 0
    %6428 = vmatpush1.bf16.msra.mxu0 %v6395
    %6429 = vmatprep.subr.bf16.mxu0 0
    %6430 = vmatpush1.bf16.msra.mxu0 %v6396
    %6431 = vmatprep.subr.bf16.mxu0 0
    %6432 = vmatpush1.bf16.msra.mxu0 %v6397
    %6433 = vmatprep.subr.bf16.mxu0 0
    %6434 = vmatpush1.bf16.msra.mxu0 %v6398
    %6435 = vmatprep.subr.bf16.mxu0 0
    %6436 = vmatpush1.bf16.msra.mxu0 %v6399
    %6437 = vmatprep.subr.bf16.mxu0 0
    %6438 = vmatpush1.bf16.msra.mxu0 %v6400
    %6439 = vmatprep.subr.bf16.mxu0 0
    %6440 = vmatpush1.bf16.msra.mxu0 %v6401
    %6441 = vmatprep.subr.bf16.mxu0 0
    %6442 = vmatpush1.bf16.msra.mxu0 %v6402
    %6443 = vmatprep.subr.bf16.mxu0 0
    %6444 = vmatpush1.bf16.msra.mxu0 %v6403
    %6445 = vmatprep.subr.bf16.mxu0 0
    %6446 = vmatpush1.bf16.msra.mxu0 %v6404
    %6447 = vmatprep.subr.bf16.mxu0 0
    %6448 = vmatpush1.bf16.msra.mxu0 %v6405
    %6449 = vmatprep.subr.bf16.mxu0 0
    %6450 = vmatpush1.bf16.msra.mxu0 %v6406
    %6451 = vmatprep.subr.bf16.mxu0 0
    %6452 = vmatpush1.bf16.msra.mxu0 %v6407
    %6453 = vmatprep.subr.bf16.mxu0 0
    %6454 = vmatpush1.bf16.msra.mxu0 %v6408
    %6455 = vmatprep.subr.bf16.mxu0 0
    %6456 = vmatpush1.bf16.msra.mxu0 %v6409
    %6457 = vmatprep.subr.bf16.mxu0 0
    %6458 = vmatpush1.bf16.msra.mxu0 %v6410
    %6459 = vmatprep.mubr.bf16.mxu0 %v6291
    %6460 = vmatmul.mubr.bf16.gmra.mrb[0].mxu0 %v6290
    %v6461 = vpop.f32.mrb[0].mxu0
    %v6462 = vadd.f32 %v6329, %v6461
    %v6463 = vpop.f32.mrb[0].mxu0
    %v6464 = vpop.f32.mrb[0].mxu0
    %v6465 = vadd.f32 %v6329, %v6464
    %v6466 = vpop.f32.mrb[0].mxu0
    %6467 = vdwg.mxu0
    %v6468 = vld [vmem:[#allocation15] sm:$0xf]
    %v6469 = vld [vmem:[#allocation15 + $0x4] sm:$0xf]
    %v6470 = vld [vmem:[#allocation15 + $0x8] sm:$0xf]
    %v6471 = vld [vmem:[#allocation15 + $0xc] sm:$0xf]
    %v6472 = vld [vmem:[#allocation15 + $0x10] sm:$0xf]
    %v6473 = vld [vmem:[#allocation15 + $0x14] sm:$0xf]
    %v6474 = vld [vmem:[#allocation15 + $0x18] sm:$0xf]
    %v6475 = vld [vmem:[#allocation15 + $0x1c] sm:$0xf]
    %v6476 = vld [vmem:[#allocation15 + $0x20] sm:$0xf]
    %v6477 = vld [vmem:[#allocation15 + $0x24] sm:$0xf]
    %v6478 = vld [vmem:[#allocation15 + $0x28] sm:$0xf]
    %v6479 = vld [vmem:[#allocation15 + $0x2c] sm:$0xf]
    %v6480 = vld [vmem:[#allocation15 + $0x30] sm:$0xf]
    %v6481 = vld [vmem:[#allocation15 + $0x34] sm:$0xf]
    %v6482 = vld [vmem:[#allocation15 + $0x38] sm:$0xf]
    %v6483 = vld [vmem:[#allocation15 + $0x3c] sm:$0xf]
    %v6484 = vld [vmem:[#allocation15 + $0x40] sm:$0xf]
    %v6485 = vld [vmem:[#allocation15 + $0x44] sm:$0xf]
    %v6486 = vld [vmem:[#allocation15 + $0x48] sm:$0xf]
    %v6487 = vld [vmem:[#allocation15 + $0x4c] sm:$0xf]
    %v6488 = vld [vmem:[#allocation15 + $0x50] sm:$0xf]
    %v6489 = vld [vmem:[#allocation15 + $0x54] sm:$0xf]
    %v6490 = vld [vmem:[#allocation15 + $0x58] sm:$0xf]
    %v6491 = vld [vmem:[#allocation15 + $0x5c] sm:$0xf]
    %v6492 = vld [vmem:[#allocation15 + $0x60] sm:$0xf]
    %v6493 = vld [vmem:[#allocation15 + $0x64] sm:$0xf]
    %v6494 = vld [vmem:[#allocation15 + $0x68] sm:$0xf]
    %v6495 = vld [vmem:[#allocation15 + $0x6c] sm:$0xf]
    %v6496 = vld [vmem:[#allocation15 + $0x70] sm:$0xf]
    %v6497 = vld [vmem:[#allocation15 + $0x74] sm:$0xf]
    %v6498 = vld [vmem:[#allocation15 + $0x78] sm:$0xf]
    %v6499 = vld [vmem:[#allocation15 + $0x7c] sm:$0xf]
    %v6500 = vld [vmem:[#allocation16] sm:$0x1]
    %v6502 = vlaneseq
    %v6503 = vshrl.u32 %v6502, 7
    %v6504 = vsub.s32 0, %v6503
    %v6505 = vrot.slane %v6500, %v6504
    %v6539 = vunpack.c.l.b16 %v6468
    %v6540 = vunpack.c.l.b16 %v6469
    %v6541 = vunpack.c.l.b16 %v6470
    %v6542 = vunpack.c.l.b16 %v6471
    %v6543 = vunpack.c.l.b16 %v6472
    %v6544 = vunpack.c.l.b16 %v6473
    %v6545 = vunpack.c.l.b16 %v6474
    %v6546 = vunpack.c.l.b16 %v6475
    %v6547 = vunpack.c.l.b16 %v6476
    %v6548 = vunpack.c.l.b16 %v6477
    %v6549 = vunpack.c.l.b16 %v6478
    %v6550 = vunpack.c.l.b16 %v6479
    %v6551 = vunpack.c.l.b16 %v6480
    %v6552 = vunpack.c.l.b16 %v6481
    %v6553 = vunpack.c.l.b16 %v6482
    %v6554 = vunpack.c.l.b16 %v6483
    %v6555 = vunpack.c.l.b16 %v6484
    %v6556 = vunpack.c.l.b16 %v6485
    %v6557 = vunpack.c.l.b16 %v6486
    %v6558 = vunpack.c.l.b16 %v6487
    %v6559 = vunpack.c.l.b16 %v6488
    %v6560 = vunpack.c.l.b16 %v6489
    %v6561 = vunpack.c.l.b16 %v6490
    %v6562 = vunpack.c.l.b16 %v6491
    %v6563 = vunpack.c.l.b16 %v6492
    %v6564 = vunpack.c.l.b16 %v6493
    %v6565 = vunpack.c.l.b16 %v6494
    %v6566 = vunpack.c.l.b16 %v6495
    %v6567 = vunpack.c.l.b16 %v6496
    %v6568 = vunpack.c.l.b16 %v6497
    %v6569 = vunpack.c.l.b16 %v6498
    %v6570 = vunpack.c.l.b16 %v6499
    %v6571 = vpack.c.b16 %v6540, %v6539
    %v6572 = vpack.c.b16 %v6542, %v6541
    %v6573 = vpack.c.b16 %v6544, %v6543
    %v6574 = vpack.c.b16 %v6546, %v6545
    %v6575 = vpack.c.b16 %v6548, %v6547
    %v6576 = vpack.c.b16 %v6550, %v6549
    %v6577 = vpack.c.b16 %v6552, %v6551
    %v6578 = vpack.c.b16 %v6554, %v6553
    %v6579 = vpack.c.b16 %v6556, %v6555
    %v6580 = vpack.c.b16 %v6558, %v6557
    %v6581 = vpack.c.b16 %v6560, %v6559
    %v6582 = vpack.c.b16 %v6562, %v6561
    %v6583 = vpack.c.b16 %v6564, %v6563
    %v6584 = vpack.c.b16 %v6566, %v6565
    %v6585 = vpack.c.b16 %v6568, %v6567
    %v6586 = vpack.c.b16 %v6570, %v6569
    %6603 = vmatprep.subr.bf16.mxu0 0
    %6604 = vmatpush1.bf16.msra.mxu0 %v6571
    %6605 = vmatprep.subr.bf16.mxu0 0
    %6606 = vmatpush1.bf16.msra.mxu0 %v6572
    %6607 = vmatprep.subr.bf16.mxu0 0
    %6608 = vmatpush1.bf16.msra.mxu0 %v6573
    %6609 = vmatprep.subr.bf16.mxu0 0
    %6610 = vmatpush1.bf16.msra.mxu0 %v6574
    %6611 = vmatprep.subr.bf16.mxu0 0
    %6612 = vmatpush1.bf16.msra.mxu0 %v6575
    %6613 = vmatprep.subr.bf16.mxu0 0
    %6614 = vmatpush1.bf16.msra.mxu0 %v6576
    %6615 = vmatprep.subr.bf16.mxu0 0
    %6616 = vmatpush1.bf16.msra.mxu0 %v6577
    %6617 = vmatprep.subr.bf16.mxu0 0
    %6618 = vmatpush1.bf16.msra.mxu0 %v6578
    %6619 = vmatprep.subr.bf16.mxu0 0
    %6620 = vmatpush1.bf16.msra.mxu0 %v6579
    %6621 = vmatprep.subr.bf16.mxu0 0
    %6622 = vmatpush1.bf16.msra.mxu0 %v6580
    %6623 = vmatprep.subr.bf16.mxu0 0
    %6624 = vmatpush1.bf16.msra.mxu0 %v6581
    %6625 = vmatprep.subr.bf16.mxu0 0
    %6626 = vmatpush1.bf16.msra.mxu0 %v6582
    %6627 = vmatprep.subr.bf16.mxu0 0
    %6628 = vmatpush1.bf16.msra.mxu0 %v6583
    %6629 = vmatprep.subr.bf16.mxu0 0
    %6630 = vmatpush1.bf16.msra.mxu0 %v6584
    %6631 = vmatprep.subr.bf16.mxu0 0
    %6632 = vmatpush1.bf16.msra.mxu0 %v6585
    %6633 = vmatprep.subr.bf16.mxu0 0
    %6634 = vmatpush1.bf16.msra.mxu0 %v6586
    %6635 = vmatprep.mubr.bf16.mxu0 %v6291
    %6636 = vmatmul.mubr.bf16.gmra.mrb[0].mxu0 %v6290
    %v6637 = vpop.f32.mrb[0].mxu0
    %v6638 = vadd.f32 %v6505, %v6637
    %v6639 = vpop.f32.mrb[0].mxu0
    %v6640 = vpop.f32.mrb[0].mxu0
    %v6641 = vadd.f32 %v6505, %v6640
    %v6642 = vpop.f32.mrb[0].mxu0
    %6643 = vdwg.mxu0
    %v6644 = vmul.f32 %v6638, 1.442695
    %v6645 = vpow.pop %v6644
    %v6646 = vmul.f32 %v6641, 1.442695
    %v6647 = vpow.pop %v6646
    %v6648 = vld [vmem:[%s1] sm:$0xff]
    %v6649 = vld [vmem:[%s1 + $0x8] sm:$0xff]
    %v6650 = vmul.f32 %v6645, %v6648
    %v6651 = vmul.f32 %v6647, %v6649
    %v6652 = vadd.f32 %v6462, %v6650
    %v6653 = vadd.f32 %v6465, %v6651
    %v6654 = vpack.c.bf16 %v6653, %v6652
    %v6655 = vld [vmem:[#allocation18] sm:$0xff]
    %v6656 = vld [vmem:[#allocation18 + $0x8] sm:$0xff]
    %v6657 = vld [vmem:[#allocation18 + $0x10] sm:$0xff]
    %v6658 = vld [vmem:[#allocation18 + $0x18] sm:$0xff]
    %v6659 = vld [vmem:[#allocation18 + $0x20] sm:$0xff]
    %v6660 = vld [vmem:[#allocation18 + $0x28] sm:$0xff]
    %v6661 = vld [vmem:[#allocation18 + $0x30] sm:$0xff]
    %v6662 = vld [vmem:[#allocation18 + $0x38] sm:$0xff]
    %v6663 = vld [vmem:[#allocation18 + $0x40] sm:$0xff]
    %v6664 = vld [vmem:[#allocation18 + $0x48] sm:$0xff]
    %v6665 = vld [vmem:[#allocation18 + $0x50] sm:$0xff]
    %v6666 = vld [vmem:[#allocation18 + $0x58] sm:$0xff]
    %v6667 = vld [vmem:[#allocation18 + $0x60] sm:$0xff]
    %v6668 = vld [vmem:[#allocation18 + $0x68] sm:$0xff]
    %v6669 = vld [vmem:[#allocation18 + $0x70] sm:$0xff]
    %v6670 = vld [vmem:[#allocation18 + $0x78] sm:$0xff]
    %v6671 = vld [vmem:[#allocation19] sm:$0x3]
    %v6673 = vlaneseq
    %v6674 = vshrl.u32 %v6673, 7
    %v6675 = vsub.s32 0, %v6674
    %v6676 = vrot.slane %v6671, %v6675
    %v6677 = vlaneseq
    %v6678 = vshrl.u32 %v6677, 7
    %v6679 = vsub.s32 1, %v6678
    %v6680 = vrot.slane %v6671, %v6679
    %v6699 = vunpack.c.l.b16 %v6655
    %v6700 = vunpack.c.h.b16 %v6655
    %v6701 = vunpack.c.l.b16 %v6656
    %v6702 = vunpack.c.h.b16 %v6656
    %v6703 = vunpack.c.l.b16 %v6657
    %v6704 = vunpack.c.h.b16 %v6657
    %v6705 = vunpack.c.l.b16 %v6658
    %v6706 = vunpack.c.h.b16 %v6658
    %v6707 = vunpack.c.l.b16 %v6659
    %v6708 = vunpack.c.h.b16 %v6659
    %v6709 = vunpack.c.l.b16 %v6660
    %v6710 = vunpack.c.h.b16 %v6660
    %v6711 = vunpack.c.l.b16 %v6661
    %v6712 = vunpack.c.h.b16 %v6661
    %v6713 = vunpack.c.l.b16 %v6662
    %v6714 = vunpack.c.h.b16 %v6662
    %v6715 = vunpack.c.l.b16 %v6663
    %v6716 = vunpack.c.h.b16 %v6663
    %v6717 = vunpack.c.l.b16 %v6664
    %v6718 = vunpack.c.h.b16 %v6664
    %v6719 = vunpack.c.l.b16 %v6665
    %v6720 = vunpack.c.h.b16 %v6665
    %v6721 = vunpack.c.l.b16 %v6666
    %v6722 = vunpack.c.h.b16 %v6666
    %v6723 = vunpack.c.l.b16 %v6667
    %v6724 = vunpack.c.h.b16 %v6667
    %v6725 = vunpack.c.l.b16 %v6668
    %v6726 = vunpack.c.h.b16 %v6668
    %v6727 = vunpack.c.l.b16 %v6669
    %v6728 = vunpack.c.h.b16 %v6669
    %v6729 = vunpack.c.l.b16 %v6670
    %v6730 = vunpack.c.h.b16 %v6670
    %v6731 = vpack.c.b16 %v6701, %v6699
    %v6732 = vpack.c.b16 %v6702, %v6700
    %v6733 = vpack.c.b16 %v6705, %v6703
    %v6734 = vpack.c.b16 %v6706, %v6704
    %v6735 = vpack.c.b16 %v6709, %v6707
    %v6736 = vpack.c.b16 %v6710, %v6708
    %v6737 = vpack.c.b16 %v6713, %v6711
    %v6738 = vpack.c.b16 %v6714, %v6712
    %v6739 = vpack.c.b16 %v6717, %v6715
    %v6740 = vpack.c.b16 %v6718, %v6716
    %v6741 = vpack.c.b16 %v6721, %v6719
    %v6742 = vpack.c.b16 %v6722, %v6720
    %v6743 = vpack.c.b16 %v6725, %v6723
    %v6744 = vpack.c.b16 %v6726, %v6724
    %v6745 = vpack.c.b16 %v6729, %v6727
    %v6746 = vpack.c.b16 %v6730, %v6728
    %6763 = vmatprep.subr.bf16.mxu0 %v6732
    %6764 = vmatpush1.bf16.msra.mxu0 %v6731
    %6765 = vmatprep.subr.bf16.mxu0 %v6734
    %6766 = vmatpush1.bf16.msra.mxu0 %v6733
    %6767 = vmatprep.subr.bf16.mxu0 %v6736
    %6768 = vmatpush1.bf16.msra.mxu0 %v6735
    %6769 = vmatprep.subr.bf16.mxu0 %v6738
    %6770 = vmatpush1.bf16.msra.mxu0 %v6737
    %6771 = vmatprep.subr.bf16.mxu0 %v6740
    %6772 = vmatpush1.bf16.msra.mxu0 %v6739
    %6773 = vmatprep.subr.bf16.mxu0 %v6742
    %6774 = vmatpush1.bf16.msra.mxu0 %v6741
    %6775 = vmatprep.subr.bf16.mxu0 %v6744
    %6776 = vmatpush1.bf16.msra.mxu0 %v6743
    %6777 = vmatprep.subr.bf16.mxu0 %v6746
    %6778 = vmatpush1.bf16.msra.mxu0 %v6745
    %6779 = vmatprep.subr.bf16.mxu0 0
    %6780 = vmatpush1.bf16.msra.mxu0 0
    %6781 = vmatprep.subr.bf16.mxu0 0
    %6782 = vmatpush1.bf16.msra.mxu0 0
    %6783 = vmatprep.subr.bf16.mxu0 0
    %6784 = vmatpush1.bf16.msra.mxu0 0
    %6785 = vmatprep.subr.bf16.mxu0 0
    %6786 = vmatpush1.bf16.msra.mxu0 0
    %6787 = vmatprep.subr.bf16.mxu0 0
    %6788 = vmatpush1.bf16.msra.mxu0 0
    %6789 = vmatprep.subr.bf16.mxu0 0
    %6790 = vmatpush1.bf16.msra.mxu0 0
    %6791 = vmatprep.subr.bf16.mxu0 0
    %6792 = vmatpush1.bf16.msra.mxu0 0
    %6793 = vmatprep.subr.bf16.mxu0 0
    %6794 = vmatpush1.bf16.msra.mxu0 0
    %6795 = vmatprep.mubr.bf16.mxu0 0
    %6796 = vmatmul.mubr.bf16.gmra.mrb[0].mxu0 %v6654
    %v6797 = vpop.f32.mrb[0].mxu0
    %v6798 = vadd.f32 %v6676, %v6797
    %v6799 = vpop.f32.mrb[0].mxu0
    %v6800 = vadd.f32 %v6680, %v6799
    %v6801 = vpop.f32.mrb[0].mxu0
    %v6802 = vadd.f32 %v6676, %v6801
    %v6803 = vpop.f32.mrb[0].mxu0
    %v6804 = vadd.f32 %v6680, %v6803
    %6805 = vdwg.mxu0
    %v6806 = vmul.f32 %v6798, 0.5
    %v6807 = vmul.f32 %v6800, 0.5
    %v6808 = vmul.f32 %v6802, 0.5
    %v6809 = vmul.f32 %v6804, 0.5
    %v6810 = vmul.f32 %v6798, 0.70710677
    %v6811 = vmul.f32 %v6800, 0.70710677
    %v6812 = vmul.f32 %v6802, 0.70710677
    %v6813 = vmul.f32 %v6804, 0.70710677
    %v6814 = verf.f32.pop %v6810
    %v6815 = verf.f32.pop %v6811
    %v6816 = verf.f32.pop %v6812
    %v6817 = verf.f32.pop %v6813
    %v6818 = vadd.f32 %v6814, 1.0
    %v6819 = vadd.f32 %v6815, 1.0
    %v6820 = vadd.f32 %v6816, 1.0
    %v6821 = vadd.f32 %v6817, 1.0
    %v6822 = vmul.f32 %v6806, %v6818
    %v6823 = vmul.f32 %v6807, %v6819
    %v6824 = vmul.f32 %v6808, %v6820
    %v6825 = vmul.f32 %v6809, %v6821
    %v6826 = vpack.c.bf16 %v6824, %v6822
    %v6827 = vpack.c.bf16 %v6825, %v6823
    %v6828 = vld [vmem:[#allocation21] sm:$0xff]
    %v6829 = vld [vmem:[#allocation21 + $0x8] sm:$0xff]
    %v6830 = vld [vmem:[#allocation21 + $0x10] sm:$0xff]
    %v6831 = vld [vmem:[#allocation21 + $0x18] sm:$0xff]
    %v6832 = vld [vmem:[#allocation21 + $0x20] sm:$0xff]
    %v6833 = vld [vmem:[#allocation21 + $0x28] sm:$0xff]
    %v6834 = vld [vmem:[#allocation21 + $0x30] sm:$0xff]
    %v6835 = vld [vmem:[#allocation21 + $0x38] sm:$0xff]
    %v6836 = vld [vmem:[#allocation21 + $0x40] sm:$0xff]
    %v6837 = vld [vmem:[#allocation21 + $0x48] sm:$0xff]
    %v6838 = vld [vmem:[#allocation21 + $0x50] sm:$0xff]
    %v6839 = vld [vmem:[#allocation21 + $0x58] sm:$0xff]
    %v6840 = vld [vmem:[#allocation21 + $0x60] sm:$0xff]
    %v6841 = vld [vmem:[#allocation21 + $0x68] sm:$0xff]
    %v6842 = vld [vmem:[#allocation21 + $0x70] sm:$0xff]
    %v6843 = vld [vmem:[#allocation21 + $0x78] sm:$0xff]
    %v6844 = vld [vmem:[#allocation21 + $0x80] sm:$0xff]
    %v6845 = vld [vmem:[#allocation21 + $0x88] sm:$0xff]
    %v6846 = vld [vmem:[#allocation21 + $0x90] sm:$0xff]
    %v6847 = vld [vmem:[#allocation21 + $0x98] sm:$0xff]
    %v6848 = vld [vmem:[#allocation21 + $0xa0] sm:$0xff]
    %v6849 = vld [vmem:[#allocation21 + $0xa8] sm:$0xff]
    %v6850 = vld [vmem:[#allocation21 + $0xb0] sm:$0xff]
    %v6851 = vld [vmem:[#allocation21 + $0xb8] sm:$0xff]
    %v6852 = vld [vmem:[#allocation21 + $0xc0] sm:$0xff]
    %v6853 = vld [vmem:[#allocation21 + $0xc8] sm:$0xff]
    %v6854 = vld [vmem:[#allocation21 + $0xd0] sm:$0xff]
    %v6855 = vld [vmem:[#allocation21 + $0xd8] sm:$0xff]
    %v6856 = vld [vmem:[#allocation21 + $0xe0] sm:$0xff]
    %v6857 = vld [vmem:[#allocation21 + $0xe8] sm:$0xff]
    %v6858 = vld [vmem:[#allocation21 + $0xf0] sm:$0xff]
    %v6859 = vld [vmem:[#allocation21 + $0xf8] sm:$0xff]
    %v6860 = vld [vmem:[#allocation21 + $0x100] sm:$0xff]
    %v6861 = vld [vmem:[#allocation21 + $0x108] sm:$0xff]
    %v6862 = vld [vmem:[#allocation21 + $0x110] sm:$0xff]
    %v6863 = vld [vmem:[#allocation21 + $0x118] sm:$0xff]
    %v6864 = vld [vmem:[#allocation21 + $0x120] sm:$0xff]
    %v6865 = vld [vmem:[#allocation21 + $0x128] sm:$0xff]
    %v6866 = vld [vmem:[#allocation21 + $0x130] sm:$0xff]
    %v6867 = vld [vmem:[#allocation21 + $0x138] sm:$0xff]
    %v6868 = vld [vmem:[#allocation21 + $0x140] sm:$0xff]
    %v6869 = vld [vmem:[#allocation21 + $0x148] sm:$0xff]
    %v6870 = vld [vmem:[#allocation21 + $0x150] sm:$0xff]
    %v6871 = vld [vmem:[#allocation21 + $0x158] sm:$0xff]
    %v6872 = vld [vmem:[#allocation21 + $0x160] sm:$0xff]
    %v6873 = vld [vmem:[#allocation21 + $0x168] sm:$0xff]
    %v6874 = vld [vmem:[#allocation21 + $0x170] sm:$0xff]
    %v6875 = vld [vmem:[#allocation21 + $0x178] sm:$0xff]
    %v6876 = vld [vmem:[#allocation21 + $0x180] sm:$0xff]
    %v6877 = vld [vmem:[#allocation21 + $0x188] sm:$0xff]
    %v6878 = vld [vmem:[#allocation21 + $0x190] sm:$0xff]
    %v6879 = vld [vmem:[#allocation21 + $0x198] sm:$0xff]
    %v6880 = vld [vmem:[#allocation21 + $0x1a0] sm:$0xff]
    %v6881 = vld [vmem:[#allocation21 + $0x1a8] sm:$0xff]
    %v6882 = vld [vmem:[#allocation21 + $0x1b0] sm:$0xff]
    %v6883 = vld [vmem:[#allocation21 + $0x1b8] sm:$0xff]
    %v6884 = vld [vmem:[#allocation21 + $0x1c0] sm:$0xff]
    %v6885 = vld [vmem:[#allocation21 + $0x1c8] sm:$0xff]
    %v6886 = vld [vmem:[#allocation21 + $0x1d0] sm:$0xff]
    %v6887 = vld [vmem:[#allocation21 + $0x1d8] sm:$0xff]
    %v6888 = vld [vmem:[#allocation21 + $0x1e0] sm:$0xff]
    %v6889 = vld [vmem:[#allocation21 + $0x1e8] sm:$0xff]
    %v6890 = vld [vmem:[#allocation21 + $0x1f0] sm:$0xff]
    %v6891 = vld [vmem:[#allocation21 + $0x1f8] sm:$0xff]
    %v6892 = vld [vmem:[#allocation22] sm:$0xf]
    %v6894 = vlaneseq
    %v6895 = vshrl.u32 %v6894, 7
    %v6896 = vsub.s32 0, %v6895
    %v6897 = vrot.slane %v6892, %v6896
    %v6898 = vlaneseq
    %v6899 = vshrl.u32 %v6898, 7
    %v6900 = vsub.s32 1, %v6899
    %v6901 = vrot.slane %v6892, %v6900
    %v6902 = vlaneseq
    %v6903 = vshrl.u32 %v6902, 7
    %v6904 = vsub.s32 2, %v6903
    %v6905 = vrot.slane %v6892, %v6904
    %v6906 = vlaneseq
    %v6907 = vshrl.u32 %v6906, 7
    %v6908 = vsub.s32 3, %v6907
    %v6909 = vrot.slane %v6892, %v6908
    %v6978 = vunpack.c.l.b16 %v6828
    %v6979 = vunpack.c.h.b16 %v6828
    %v6980 = vunpack.c.l.b16 %v6829
    %v6981 = vunpack.c.h.b16 %v6829
    %v6982 = vunpack.c.l.b16 %v6830
    %v6983 = vunpack.c.h.b16 %v6830
    %v6984 = vunpack.c.l.b16 %v6831
    %v6985 = vunpack.c.h.b16 %v6831
    %v6986 = vunpack.c.l.b16 %v6832
    %v6987 = vunpack.c.h.b16 %v6832
    %v6988 = vunpack.c.l.b16 %v6833
    %v6989 = vunpack.c.h.b16 %v6833
    %v6990 = vunpack.c.l.b16 %v6834
    %v6991 = vunpack.c.h.b16 %v6834
    %v6992 = vunpack.c.l.b16 %v6835
    %v6993 = vunpack.c.h.b16 %v6835
    %v6994 = vunpack.c.l.b16 %v6836
    %v6995 = vunpack.c.h.b16 %v6836
    %v6996 = vunpack.c.l.b16 %v6837
    %v6997 = vunpack.c.h.b16 %v6837
    %v6998 = vunpack.c.l.b16 %v6838
    %v6999 = vunpack.c.h.b16 %v6838
    %v7000 = vunpack.c.l.b16 %v6839
    %v7001 = vunpack.c.h.b16 %v6839
    %v7002 = vunpack.c.l.b16 %v6840
    %v7003 = vunpack.c.h.b16 %v6840
    %v7004 = vunpack.c.l.b16 %v6841
    %v7005 = vunpack.c.h.b16 %v6841
    %v7006 = vunpack.c.l.b16 %v6842
    %v7007 = vunpack.c.h.b16 %v6842
    %v7008 = vunpack.c.l.b16 %v6843
    %v7009 = vunpack.c.h.b16 %v6843
    %v7010 = vunpack.c.l.b16 %v6844
    %v7011 = vunpack.c.h.b16 %v6844
    %v7012 = vunpack.c.l.b16 %v6845
    %v7013 = vunpack.c.h.b16 %v6845
    %v7014 = vunpack.c.l.b16 %v6846
    %v7015 = vunpack.c.h.b16 %v6846
    %v7016 = vunpack.c.l.b16 %v6847
    %v7017 = vunpack.c.h.b16 %v6847
    %v7018 = vunpack.c.l.b16 %v6848
    %v7019 = vunpack.c.h.b16 %v6848
    %v7020 = vunpack.c.l.b16 %v6849
    %v7021 = vunpack.c.h.b16 %v6849
    %v7022 = vunpack.c.l.b16 %v6850
    %v7023 = vunpack.c.h.b16 %v6850
    %v7024 = vunpack.c.l.b16 %v6851
    %v7025 = vunpack.c.h.b16 %v6851
    %v7026 = vunpack.c.l.b16 %v6852
    %v7027 = vunpack.c.h.b16 %v6852
    %v7028 = vunpack.c.l.b16 %v6853
    %v7029 = vunpack.c.h.b16 %v6853
    %v7030 = vunpack.c.l.b16 %v6854
    %v7031 = vunpack.c.h.b16 %v6854
    %v7032 = vunpack.c.l.b16 %v6855
    %v7033 = vunpack.c.h.b16 %v6855
    %v7034 = vunpack.c.l.b16 %v6856
    %v7035 = vunpack.c.h.b16 %v6856
    %v7036 = vunpack.c.l.b16 %v6857
    %v7037 = vunpack.c.h.b16 %v6857
    %v7038 = vunpack.c.l.b16 %v6858
    %v7039 = vunpack.c.h.b16 %v6858
    %v7040 = vunpack.c.l.b16 %v6859
    %v7041 = vunpack.c.h.b16 %v6859
    %v7042 = vunpack.c.l.b16 %v6860
    %v7043 = vunpack.c.h.b16 %v6860
    %v7044 = vunpack.c.l.b16 %v6861
    %v7045 = vunpack.c.h.b16 %v6861
    %v7046 = vunpack.c.l.b16 %v6862
    %v7047 = vunpack.c.h.b16 %v6862
    %v7048 = vunpack.c.l.b16 %v6863
    %v7049 = vunpack.c.h.b16 %v6863
    %v7050 = vunpack.c.l.b16 %v6864
    %v7051 = vunpack.c.h.b16 %v6864
    %v7052 = vunpack.c.l.b16 %v6865
    %v7053 = vunpack.c.h.b16 %v6865
    %v7054 = vunpack.c.l.b16 %v6866
    %v7055 = vunpack.c.h.b16 %v6866
    %v7056 = vunpack.c.l.b16 %v6867
    %v7057 = vunpack.c.h.b16 %v6867
    %v7058 = vunpack.c.l.b16 %v6868
    %v7059 = vunpack.c.h.b16 %v6868
    %v7060 = vunpack.c.l.b16 %v6869
    %v7061 = vunpack.c.h.b16 %v6869
    %v7062 = vunpack.c.l.b16 %v6870
    %v7063 = vunpack.c.h.b16 %v6870
    %v7064 = vunpack.c.l.b16 %v6871
    %v7065 = vunpack.c.h.b16 %v6871
    %v7066 = vunpack.c.l.b16 %v6872
    %v7067 = vunpack.c.h.b16 %v6872
    %v7068 = vunpack.c.l.b16 %v6873
    %v7069 = vunpack.c.h.b16 %v6873
    %v7070 = vunpack.c.l.b16 %v6874
    %v7071 = vunpack.c.h.b16 %v6874
    %v7072 = vunpack.c.l.b16 %v6875
    %v7073 = vunpack.c.h.b16 %v6875
    %v7074 = vunpack.c.l.b16 %v6876
    %v7075 = vunpack.c.h.b16 %v6876
    %v7076 = vunpack.c.l.b16 %v6877
    %v7077 = vunpack.c.h.b16 %v6877
    %v7078 = vunpack.c.l.b16 %v6878
    %v7079 = vunpack.c.h.b16 %v6878
    %v7080 = vunpack.c.l.b16 %v6879
    %v7081 = vunpack.c.h.b16 %v6879
    %v7082 = vunpack.c.l.b16 %v6880
    %v7083 = vunpack.c.h.b16 %v6880
    %v7084 = vunpack.c.l.b16 %v6881
    %v7085 = vunpack.c.h.b16 %v6881
    %v7086 = vunpack.c.l.b16 %v6882
    %v7087 = vunpack.c.h.b16 %v6882
    %v7088 = vunpack.c.l.b16 %v6883
    %v7089 = vunpack.c.h.b16 %v6883
    %v7090 = vunpack.c.l.b16 %v6884
    %v7091 = vunpack.c.h.b16 %v6884
    %v7092 = vunpack.c.l.b16 %v6885
    %v7093 = vunpack.c.h.b16 %v6885
    %v7094 = vunpack.c.l.b16 %v6886
    %v7095 = vunpack.c.h.b16 %v6886
    %v7096 = vunpack.c.l.b16 %v6887
    %v7097 = vunpack.c.h.b16 %v6887
    %v7098 = vunpack.c.l.b16 %v6888
    %v7099 = vunpack.c.h.b16 %v6888
    %v7100 = vunpack.c.l.b16 %v6889
    %v7101 = vunpack.c.h.b16 %v6889
    %v7102 = vunpack.c.l.b16 %v6890
    %v7103 = vunpack.c.h.b16 %v6890
    %v7104 = vunpack.c.l.b16 %v6891
    %v7105 = vunpack.c.h.b16 %v6891
    %v7106 = vpack.c.b16 %v6982, %v6978
    %v7107 = vpack.c.b16 %v6983, %v6979
    %v7108 = vpack.c.b16 %v6984, %v6980
    %v7109 = vpack.c.b16 %v6985, %v6981
    %v7110 = vpack.c.b16 %v6990, %v6986
    %v7111 = vpack.c.b16 %v6991, %v6987
    %v7112 = vpack.c.b16 %v6992, %v6988
    %v7113 = vpack.c.b16 %v6993, %v6989
    %v7114 = vpack.c.b16 %v6998, %v6994
    %v7115 = vpack.c.b16 %v6999, %v6995
    %v7116 = vpack.c.b16 %v7000, %v6996
    %v7117 = vpack.c.b16 %v7001, %v6997
    %v7118 = vpack.c.b16 %v7006, %v7002
    %v7119 = vpack.c.b16 %v7007, %v7003
    %v7120 = vpack.c.b16 %v7008, %v7004
    %v7121 = vpack.c.b16 %v7009, %v7005
    %v7122 = vpack.c.b16 %v7014, %v7010
    %v7123 = vpack.c.b16 %v7015, %v7011
    %v7124 = vpack.c.b16 %v7016, %v7012
    %v7125 = vpack.c.b16 %v7017, %v7013
    %v7126 = vpack.c.b16 %v7022, %v7018
    %v7127 = vpack.c.b16 %v7023, %v7019
    %v7128 = vpack.c.b16 %v7024, %v7020
    %v7129 = vpack.c.b16 %v7025, %v7021
    %v7130 = vpack.c.b16 %v7030, %v7026
    %v7131 = vpack.c.b16 %v7031, %v7027
    %v7132 = vpack.c.b16 %v7032, %v7028
    %v7133 = vpack.c.b16 %v7033, %v7029
    %v7134 = vpack.c.b16 %v7038, %v7034
    %v7135 = vpack.c.b16 %v7039, %v7035
    %v7136 = vpack.c.b16 %v7040, %v7036
    %v7137 = vpack.c.b16 %v7041, %v7037
    %v7138 = vpack.c.b16 %v7046, %v7042
    %v7139 = vpack.c.b16 %v7047, %v7043
    %v7140 = vpack.c.b16 %v7048, %v7044
    %v7141 = vpack.c.b16 %v7049, %v7045
    %v7142 = vpack.c.b16 %v7054, %v7050
    %v7143 = vpack.c.b16 %v7055, %v7051
    %v7144 = vpack.c.b16 %v7056, %v7052
    %v7145 = vpack.c.b16 %v7057, %v7053
    %v7146 = vpack.c.b16 %v7062, %v7058
    %v7147 = vpack.c.b16 %v7063, %v7059
    %v7148 = vpack.c.b16 %v7064, %v7060
    %v7149 = vpack.c.b16 %v7065, %v7061
    %v7150 = vpack.c.b16 %v7070, %v7066
    %v7151 = vpack.c.b16 %v7071, %v7067
    %v7152 = vpack.c.b16 %v7072, %v7068
    %v7153 = vpack.c.b16 %v7073, %v7069
    %v7154 = vpack.c.b16 %v7078, %v7074
    %v7155 = vpack.c.b16 %v7079, %v7075
    %v7156 = vpack.c.b16 %v7080, %v7076
    %v7157 = vpack.c.b16 %v7081, %v7077
    %v7158 = vpack.c.b16 %v7086, %v7082
    %v7159 = vpack.c.b16 %v7087, %v7083
    %v7160 = vpack.c.b16 %v7088, %v7084
    %v7161 = vpack.c.b16 %v7089, %v7085
    %v7162 = vpack.c.b16 %v7094, %v7090
    %v7163 = vpack.c.b16 %v7095, %v7091
    %v7164 = vpack.c.b16 %v7096, %v7092
    %v7165 = vpack.c.b16 %v7097, %v7093
    %v7166 = vpack.c.b16 %v7102, %v7098
    %v7167 = vpack.c.b16 %v7103, %v7099
    %v7168 = vpack.c.b16 %v7104, %v7100
    %v7169 = vpack.c.b16 %v7105, %v7101
    %7234 = vmatprep.subr.bf16.mxu0 %v7107
    %7235 = vmatpush1.bf16.msra.mxu0 %v7106
    %7236 = vmatprep.subr.bf16.mxu0 %v7111
    %7237 = vmatpush1.bf16.msra.mxu0 %v7110
    %7238 = vmatprep.subr.bf16.mxu0 %v7115
    %7239 = vmatpush1.bf16.msra.mxu0 %v7114
    %7240 = vmatprep.subr.bf16.mxu0 %v7119
    %7241 = vmatpush1.bf16.msra.mxu0 %v7118
    %7242 = vmatprep.subr.bf16.mxu0 %v7123
    %7243 = vmatpush1.bf16.msra.mxu0 %v7122
    %7244 = vmatprep.subr.bf16.mxu0 %v7127
    %7245 = vmatpush1.bf16.msra.mxu0 %v7126
    %7246 = vmatprep.subr.bf16.mxu0 %v7131
    %7247 = vmatpush1.bf16.msra.mxu0 %v7130
    %7248 = vmatprep.subr.bf16.mxu0 %v7135
    %7249 = vmatpush1.bf16.msra.mxu0 %v7134
    %7250 = vmatprep.subr.bf16.mxu0 %v7139
    %7251 = vmatpush1.bf16.msra.mxu0 %v7138
    %7252 = vmatprep.subr.bf16.mxu0 %v7143
    %7253 = vmatpush1.bf16.msra.mxu0 %v7142
    %7254 = vmatprep.subr.bf16.mxu0 %v7147
    %7255 = vmatpush1.bf16.msra.mxu0 %v7146
    %7256 = vmatprep.subr.bf16.mxu0 %v7151
    %7257 = vmatpush1.bf16.msra.mxu0 %v7150
    %7258 = vmatprep.subr.bf16.mxu0 %v7155
    %7259 = vmatpush1.bf16.msra.mxu0 %v7154
    %7260 = vmatprep.subr.bf16.mxu0 %v7159
    %7261 = vmatpush1.bf16.msra.mxu0 %v7158
    %7262 = vmatprep.subr.bf16.mxu0 %v7163
    %7263 = vmatpush1.bf16.msra.mxu0 %v7162
    %7264 = vmatprep.subr.bf16.mxu0 %v7167
    %7265 = vmatpush1.bf16.msra.mxu0 %v7166
    %7266 = vmatprep.mubr.bf16.mxu0 %v6827
    %7267 = vmatmul.mubr.bf16.gmra.mrb[0].mxu0 %v6826
    %v7268 = vpop.f32.mrb[0].mxu0
    %v7269 = vadd.f32 %v6897, %v7268
    %v7270 = vpop.f32.mrb[0].mxu0
    %v7271 = vadd.f32 %v6901, %v7270
    %v7272 = vpop.f32.mrb[0].mxu0
    %v7273 = vadd.f32 %v6897, %v7272
    %v7274 = vpop.f32.mrb[0].mxu0
    %v7275 = vadd.f32 %v6901, %v7274
    %7276 = vdwg.mxu0
    %7277 = vmatprep.subr.bf16.mxu0 %v7109
    %7278 = vmatpush1.bf16.msra.mxu0 %v7108
    %7279 = vmatprep.subr.bf16.mxu0 %v7113
    %7280 = vmatpush1.bf16.msra.mxu0 %v7112
    %7281 = vmatprep.subr.bf16.mxu0 %v7117
    %7282 = vmatpush1.bf16.msra.mxu0 %v7116
    %7283 = vmatprep.subr.bf16.mxu0 %v7121
    %7284 = vmatpush1.bf16.msra.mxu0 %v7120
    %7285 = vmatprep.subr.bf16.mxu0 %v7125
    %7286 = vmatpush1.bf16.msra.mxu0 %v7124
    %7287 = vmatprep.subr.bf16.mxu0 %v7129
    %7288 = vmatpush1.bf16.msra.mxu0 %v7128
    %7289 = vmatprep.subr.bf16.mxu0 %v7133
    %7290 = vmatpush1.bf16.msra.mxu0 %v7132
    %7291 = vmatprep.subr.bf16.mxu0 %v7137
    %7292 = vmatpush1.bf16.msra.mxu0 %v7136
    %7293 = vmatprep.subr.bf16.mxu0 %v7141
    %7294 = vmatpush1.bf16.msra.mxu0 %v7140
    %7295 = vmatprep.subr.bf16.mxu0 %v7145
    %7296 = vmatpush1.bf16.msra.mxu0 %v7144
    %7297 = vmatprep.subr.bf16.mxu0 %v7149
    %7298 = vmatpush1.bf16.msra.mxu0 %v7148
    %7299 = vmatprep.subr.bf16.mxu0 %v7153
    %7300 = vmatpush1.bf16.msra.mxu0 %v7152
    %7301 = vmatprep.subr.bf16.mxu0 %v7157
    %7302 = vmatpush1.bf16.msra.mxu0 %v7156
    %7303 = vmatprep.subr.bf16.mxu0 %v7161
    %7304 = vmatpush1.bf16.msra.mxu0 %v7160
    %7305 = vmatprep.subr.bf16.mxu0 %v7165
    %7306 = vmatpush1.bf16.msra.mxu0 %v7164
    %7307 = vmatprep.subr.bf16.mxu0 %v7169
    %7308 = vmatpush1.bf16.msra.mxu0 %v7168
    %7309 = vmatprep.mubr.bf16.mxu0 %v6827
    %7310 = vmatmul.mubr.bf16.gmra.mrb[0].mxu0 %v6826
    %v7311 = vpop.f32.mrb[0].mxu0
    %v7312 = vadd.f32 %v6905, %v7311
    %v7313 = vpop.f32.mrb[0].mxu0
    %v7314 = vadd.f32 %v6909, %v7313
    %v7315 = vpop.f32.mrb[0].mxu0
    %v7316 = vadd.f32 %v6905, %v7315
    %v7317 = vpop.f32.mrb[0].mxu0
    %v7318 = vadd.f32 %v6909, %v7317
    %7319 = vdwg.mxu0
    %v7320 = vmul.f32 %v7269, 0.5
    %v7321 = vmul.f32 %v7271, 0.5
    %v7322 = vmul.f32 %v7312, 0.5
    %v7323 = vmul.f32 %v7314, 0.5
    %v7324 = vmul.f32 %v7273, 0.5
    %v7325 = vmul.f32 %v7275, 0.5
    %v7326 = vmul.f32 %v7316, 0.5
    %v7327 = vmul.f32 %v7318, 0.5
    %v7328 = vmul.f32 %v7269, 0.70710677
    %v7329 = vmul.f32 %v7271, 0.70710677
    %v7330 = vmul.f32 %v7312, 0.70710677
    %v7331 = vmul.f32 %v7314, 0.70710677
    %v7332 = vmul.f32 %v7273, 0.70710677
    %v7333 = vmul.f32 %v7275, 0.70710677
    %v7334 = vmul.f32 %v7316, 0.70710677
    %v7335 = vmul.f32 %v7318, 0.70710677
    %v7336 = verf.f32.pop %v7328
    %v7337 = verf.f32.pop %v7329
    %v7338 = verf.f32.pop %v7330
    %v7339 = verf.f32.pop %v7331
    %v7340 = verf.f32.pop %v7332
    %v7341 = verf.f32.pop %v7333
    %v7342 = verf.f32.pop %v7334
    %v7343 = verf.f32.pop %v7335
    %v7344 = vadd.f32 %v7336, 1.0
    %v7345 = vadd.f32 %v7337, 1.0
    %v7346 = vadd.f32 %v7338, 1.0
    %v7347 = vadd.f32 %v7339, 1.0
    %v7348 = vadd.f32 %v7340, 1.0
    %v7349 = vadd.f32 %v7341, 1.0
    %v7350 = vadd.f32 %v7342, 1.0
    %v7351 = vadd.f32 %v7343, 1.0
    %v7352 = vmul.f32 %v7320, %v7344
    %v7353 = vmul.f32 %v7321, %v7345
    %v7354 = vmul.f32 %v7322, %v7346
    %v7355 = vmul.f32 %v7323, %v7347
    %v7356 = vmul.f32 %v7324, %v7348
    %v7357 = vmul.f32 %v7325, %v7349
    %v7358 = vmul.f32 %v7326, %v7350
    %v7359 = vmul.f32 %v7327, %v7351
    %v7360 = vpack.c.bf16 %v7356, %v7352
    %v7361 = vpack.c.bf16 %v7357, %v7353
    %v7362 = vpack.c.bf16 %v7358, %v7354
    %v7363 = vpack.c.bf16 %v7359, %v7355
    %v7364 = vld [vmem:[#allocation24] sm:$0xff]
    %v7365 = vld [vmem:[#allocation24 + $0x8] sm:$0xff]
    %v7366 = vld [vmem:[#allocation24 + $0x10] sm:$0xff]
    %v7367 = vld [vmem:[#allocation24 + $0x18] sm:$0xff]
    %v7368 = vld [vmem:[#allocation24 + $0x20] sm:$0xff]
    %v7369 = vld [vmem:[#allocation24 + $0x28] sm:$0xff]
    %v7370 = vld [vmem:[#allocation24 + $0x30] sm:$0xff]
    %v7371 = vld [vmem:[#allocation24 + $0x38] sm:$0xff]
    %v7372 = vld [vmem:[#allocation24 + $0x40] sm:$0xff]
    %v7373 = vld [vmem:[#allocation24 + $0x48] sm:$0xff]
    %v7374 = vld [vmem:[#allocation24 + $0x50] sm:$0xff]
    %v7375 = vld [vmem:[#allocation24 + $0x58] sm:$0xff]
    %v7376 = vld [vmem:[#allocation24 + $0x60] sm:$0xff]
    %v7377 = vld [vmem:[#allocation24 + $0x68] sm:$0xff]
    %v7378 = vld [vmem:[#allocation24 + $0x70] sm:$0xff]
    %v7379 = vld [vmem:[#allocation24 + $0x78] sm:$0xff]
    %v7380 = vld [vmem:[#allocation24 + $0x80] sm:$0xff]
    %v7381 = vld [vmem:[#allocation24 + $0x88] sm:$0xff]
    %v7382 = vld [vmem:[#allocation24 + $0x90] sm:$0xff]
    %v7383 = vld [vmem:[#allocation24 + $0x98] sm:$0xff]
    %v7384 = vld [vmem:[#allocation24 + $0xa0] sm:$0xff]
    %v7385 = vld [vmem:[#allocation24 + $0xa8] sm:$0xff]
    %v7386 = vld [vmem:[#allocation24 + $0xb0] sm:$0xff]
    %v7387 = vld [vmem:[#allocation24 + $0xb8] sm:$0xff]
    %v7388 = vld [vmem:[#allocation24 + $0xc0] sm:$0xff]
    %v7389 = vld [vmem:[#allocation24 + $0xc8] sm:$0xff]
    %v7390 = vld [vmem:[#allocation24 + $0xd0] sm:$0xff]
    %v7391 = vld [vmem:[#allocation24 + $0xd8] sm:$0xff]
    %v7392 = vld [vmem:[#allocation24 + $0xe0] sm:$0xff]
    %v7393 = vld [vmem:[#allocation24 + $0xe8] sm:$0xff]
    %v7394 = vld [vmem:[#allocation24 + $0xf0] sm:$0xff]
    %v7395 = vld [vmem:[#allocation24 + $0xf8] sm:$0xff]
    %v7396 = vld [vmem:[#allocation24 + $0x100] sm:$0xff]
    %v7397 = vld [vmem:[#allocation24 + $0x108] sm:$0xff]
    %v7398 = vld [vmem:[#allocation24 + $0x110] sm:$0xff]
    %v7399 = vld [vmem:[#allocation24 + $0x118] sm:$0xff]
    %v7400 = vld [vmem:[#allocation24 + $0x120] sm:$0xff]
    %v7401 = vld [vmem:[#allocation24 + $0x128] sm:$0xff]
    %v7402 = vld [vmem:[#allocation24 + $0x130] sm:$0xff]
    %v7403 = vld [vmem:[#allocation24 + $0x138] sm:$0xff]
    %v7404 = vld [vmem:[#allocation24 + $0x140] sm:$0xff]
    %v7405 = vld [vmem:[#allocation24 + $0x148] sm:$0xff]
    %v7406 = vld [vmem:[#allocation24 + $0x150] sm:$0xff]
    %v7407 = vld [vmem:[#allocation24 + $0x158] sm:$0xff]
    %v7408 = vld [vmem:[#allocation24 + $0x160] sm:$0xff]
    %v7409 = vld [vmem:[#allocation24 + $0x168] sm:$0xff]
    %v7410 = vld [vmem:[#allocation24 + $0x170] sm:$0xff]
    %v7411 = vld [vmem:[#allocation24 + $0x178] sm:$0xff]
    %v7412 = vld [vmem:[#allocation24 + $0x180] sm:$0xff]
    %v7413 = vld [vmem:[#allocation24 + $0x188] sm:$0xff]
    %v7414 = vld [vmem:[#allocation24 + $0x190] sm:$0xff]
    %v7415 = vld [vmem:[#allocation24 + $0x198] sm:$0xff]
    %v7416 = vld [vmem:[#allocation24 + $0x1a0] sm:$0xff]
    %v7417 = vld [vmem:[#allocation24 + $0x1a8] sm:$0xff]
    %v7418 = vld [vmem:[#allocation24 + $0x1b0] sm:$0xff]
    %v7419 = vld [vmem:[#allocation24 + $0x1b8] sm:$0xff]
    %v7420 = vld [vmem:[#allocation24 + $0x1c0] sm:$0xff]
    %v7421 = vld [vmem:[#allocation24 + $0x1c8] sm:$0xff]
    %v7422 = vld [vmem:[#allocation24 + $0x1d0] sm:$0xff]
    %v7423 = vld [vmem:[#allocation24 + $0x1d8] sm:$0xff]
    %v7424 = vld [vmem:[#allocation24 + $0x1e0] sm:$0xff]
    %v7425 = vld [vmem:[#allocation24 + $0x1e8] sm:$0xff]
    %v7426 = vld [vmem:[#allocation24 + $0x1f0] sm:$0xff]
    %v7427 = vld [vmem:[#allocation24 + $0x1f8] sm:$0xff]
    %v7428 = vld [vmem:[#allocation24 + $0x200] sm:$0xff]
    %v7429 = vld [vmem:[#allocation24 + $0x208] sm:$0xff]
    %v7430 = vld [vmem:[#allocation24 + $0x210] sm:$0xff]
    %v7431 = vld [vmem:[#allocation24 + $0x218] sm:$0xff]
    %v7432 = vld [vmem:[#allocation24 + $0x220] sm:$0xff]
    %v7433 = vld [vmem:[#allocation24 + $0x228] sm:$0xff]
    %v7434 = vld [vmem:[#allocation24 + $0x230] sm:$0xff]
    %v7435 = vld [vmem:[#allocation24 + $0x238] sm:$0xff]
    %v7436 = vld [vmem:[#allocation24 + $0x240] sm:$0xff]
    %v7437 = vld [vmem:[#allocation24 + $0x248] sm:$0xff]
    %v7438 = vld [vmem:[#allocation24 + $0x250] sm:$0xff]
    %v7439 = vld [vmem:[#allocation24 + $0x258] sm:$0xff]
    %v7440 = vld [vmem:[#allocation24 + $0x260] sm:$0xff]
    %v7441 = vld [vmem:[#allocation24 + $0x268] sm:$0xff]
    %v7442 = vld [vmem:[#allocation24 + $0x270] sm:$0xff]
    %v7443 = vld [vmem:[#allocation24 + $0x278] sm:$0xff]
    %v7444 = vld [vmem:[#allocation24 + $0x280] sm:$0xff]
    %v7445 = vld [vmem:[#allocation24 + $0x288] sm:$0xff]
    %v7446 = vld [vmem:[#allocation24 + $0x290] sm:$0xff]
    %v7447 = vld [vmem:[#allocation24 + $0x298] sm:$0xff]
    %v7448 = vld [vmem:[#allocation24 + $0x2a0] sm:$0xff]
    %v7449 = vld [vmem:[#allocation24 + $0x2a8] sm:$0xff]
    %v7450 = vld [vmem:[#allocation24 + $0x2b0] sm:$0xff]
    %v7451 = vld [vmem:[#allocation24 + $0x2b8] sm:$0xff]
    %v7452 = vld [vmem:[#allocation24 + $0x2c0] sm:$0xff]
    %v7453 = vld [vmem:[#allocation24 + $0x2c8] sm:$0xff]
    %v7454 = vld [vmem:[#allocation24 + $0x2d0] sm:$0xff]
    %v7455 = vld [vmem:[#allocation24 + $0x2d8] sm:$0xff]
    %v7456 = vld [vmem:[#allocation24 + $0x2e0] sm:$0xff]
    %v7457 = vld [vmem:[#allocation24 + $0x2e8] sm:$0xff]
    %v7458 = vld [vmem:[#allocation24 + $0x2f0] sm:$0xff]
    %v7459 = vld [vmem:[#allocation24 + $0x2f8] sm:$0xff]
    %v7460 = vld [vmem:[#allocation24 + $0x300] sm:$0xff]
    %v7461 = vld [vmem:[#allocation24 + $0x308] sm:$0xff]
    %v7462 = vld [vmem:[#allocation24 + $0x310] sm:$0xff]
    %v7463 = vld [vmem:[#allocation24 + $0x318] sm:$0xff]
    %v7464 = vld [vmem:[#allocation24 + $0x320] sm:$0xff]
    %v7465 = vld [vmem:[#allocation24 + $0x328] sm:$0xff]
    %v7466 = vld [vmem:[#allocation24 + $0x330] sm:$0xff]
    %v7467 = vld [vmem:[#allocation24 + $0x338] sm:$0xff]
    %v7468 = vld [vmem:[#allocation24 + $0x340] sm:$0xff]
    %v7469 = vld [vmem:[#allocation24 + $0x348] sm:$0xff]
    %v7470 = vld [vmem:[#allocation24 + $0x350] sm:$0xff]
    %v7471 = vld [vmem:[#allocation24 + $0x358] sm:$0xff]
    %v7472 = vld [vmem:[#allocation24 + $0x360] sm:$0xff]
    %v7473 = vld [vmem:[#allocation24 + $0x368] sm:$0xff]
    %v7474 = vld [vmem:[#allocation24 + $0x370] sm:$0xff]
    %v7475 = vld [vmem:[#allocation24 + $0x378] sm:$0xff]
    %v7476 = vld [vmem:[#allocation24 + $0x380] sm:$0xff]
    %v7477 = vld [vmem:[#allocation24 + $0x388] sm:$0xff]
    %v7478 = vld [vmem:[#allocation24 + $0x390] sm:$0xff]
    %v7479 = vld [vmem:[#allocation24 + $0x398] sm:$0xff]
    %v7480 = vld [vmem:[#allocation24 + $0x3a0] sm:$0xff]
    %v7481 = vld [vmem:[#allocation24 + $0x3a8] sm:$0xff]
    %v7482 = vld [vmem:[#allocation24 + $0x3b0] sm:$0xff]
    %v7483 = vld [vmem:[#allocation24 + $0x3b8] sm:$0xff]
    %v7484 = vld [vmem:[#allocation24 + $0x3c0] sm:$0xff]
    %v7485 = vld [vmem:[#allocation24 + $0x3c8] sm:$0xff]
    %v7486 = vld [vmem:[#allocation24 + $0x3d0] sm:$0xff]
    %v7487 = vld [vmem:[#allocation24 + $0x3d8] sm:$0xff]
    %v7488 = vld [vmem:[#allocation24 + $0x3e0] sm:$0xff]
    %v7489 = vld [vmem:[#allocation24 + $0x3e8] sm:$0xff]
    %v7490 = vld [vmem:[#allocation24 + $0x3f0] sm:$0xff]
    %v7491 = vld [vmem:[#allocation24 + $0x3f8] sm:$0xff]
    %v7492 = vld [vmem:[#allocation24 + $0x400] sm:$0xff]
    %v7493 = vld [vmem:[#allocation24 + $0x408] sm:$0xff]
    %v7494 = vld [vmem:[#allocation24 + $0x410] sm:$0xff]
    %v7495 = vld [vmem:[#allocation24 + $0x418] sm:$0xff]
    %v7496 = vld [vmem:[#allocation24 + $0x420] sm:$0xff]
    %v7497 = vld [vmem:[#allocation24 + $0x428] sm:$0xff]
    %v7498 = vld [vmem:[#allocation24 + $0x430] sm:$0xff]
    %v7499 = vld [vmem:[#allocation24 + $0x438] sm:$0xff]
    %v7500 = vld [vmem:[#allocation24 + $0x440] sm:$0xff]
    %v7501 = vld [vmem:[#allocation24 + $0x448] sm:$0xff]
    %v7502 = vld [vmem:[#allocation24 + $0x450] sm:$0xff]
    %v7503 = vld [vmem:[#allocation24 + $0x458] sm:$0xff]
    %v7504 = vld [vmem:[#allocation24 + $0x460] sm:$0xff]
    %v7505 = vld [vmem:[#allocation24 + $0x468] sm:$0xff]
    %v7506 = vld [vmem:[#allocation24 + $0x470] sm:$0xff]
    %v7507 = vld [vmem:[#allocation24 + $0x478] sm:$0xff]
    %v7508 = vld [vmem:[#allocation24 + $0x480] sm:$0xff]
    %v7509 = vld [vmem:[#allocation24 + $0x488] sm:$0xff]
    %v7510 = vld [vmem:[#allocation24 + $0x490] sm:$0xff]
    %v7511 = vld [vmem:[#allocation24 + $0x498] sm:$0xff]
    %v7512 = vld [vmem:[#allocation24 + $0x4a0] sm:$0xff]
    %v7513 = vld [vmem:[#allocation24 + $0x4a8] sm:$0xff]
    %v7514 = vld [vmem:[#allocation24 + $0x4b0] sm:$0xff]
    %v7515 = vld [vmem:[#allocation24 + $0x4b8] sm:$0xff]
    %v7516 = vld [vmem:[#allocation24 + $0x4c0] sm:$0xff]
    %v7517 = vld [vmem:[#allocation24 + $0x4c8] sm:$0xff]
    %v7518 = vld [vmem:[#allocation24 + $0x4d0] sm:$0xff]
    %v7519 = vld [vmem:[#allocation24 + $0x4d8] sm:$0xff]
    %v7520 = vld [vmem:[#allocation24 + $0x4e0] sm:$0xff]
    %v7521 = vld [vmem:[#allocation24 + $0x4e8] sm:$0xff]
    %v7522 = vld [vmem:[#allocation24 + $0x4f0] sm:$0xff]
    %v7523 = vld [vmem:[#allocation24 + $0x4f8] sm:$0xff]
    %v7524 = vld [vmem:[#allocation24 + $0x500] sm:$0xff]
    %v7525 = vld [vmem:[#allocation24 + $0x508] sm:$0xff]
    %v7526 = vld [vmem:[#allocation24 + $0x510] sm:$0xff]
    %v7527 = vld [vmem:[#allocation24 + $0x518] sm:$0xff]
    %v7528 = vld [vmem:[#allocation24 + $0x520] sm:$0xff]
    %v7529 = vld [vmem:[#allocation24 + $0x528] sm:$0xff]
    %v7530 = vld [vmem:[#allocation24 + $0x530] sm:$0xff]
    %v7531 = vld [vmem:[#allocation24 + $0x538] sm:$0xff]
    %v7532 = vld [vmem:[#allocation24 + $0x540] sm:$0xff]
    %v7533 = vld [vmem:[#allocation24 + $0x548] sm:$0xff]
    %v7534 = vld [vmem:[#allocation24 + $0x550] sm:$0xff]
    %v7535 = vld [vmem:[#allocation24 + $0x558] sm:$0xff]
    %v7536 = vld [vmem:[#allocation24 + $0x560] sm:$0xff]
    %v7537 = vld [vmem:[#allocation24 + $0x568] sm:$0xff]
    %v7538 = vld [vmem:[#allocation24 + $0x570] sm:$0xff]
    %v7539 = vld [vmem:[#allocation24 + $0x578] sm:$0xff]
    %v7540 = vld [vmem:[#allocation24 + $0x580] sm:$0xff]
    %v7541 = vld [vmem:[#allocation24 + $0x588] sm:$0xff]
    %v7542 = vld [vmem:[#allocation24 + $0x590] sm:$0xff]
    %v7543 = vld [vmem:[#allocation24 + $0x598] sm:$0xff]
    %v7544 = vld [vmem:[#allocation24 + $0x5a0] sm:$0xff]
    %v7545 = vld [vmem:[#allocation24 + $0x5a8] sm:$0xff]
    %v7546 = vld [vmem:[#allocation24 + $0x5b0] sm:$0xff]
    %v7547 = vld [vmem:[#allocation24 + $0x5b8] sm:$0xff]
    %v7548 = vld [vmem:[#allocation24 + $0x5c0] sm:$0xff]
    %v7549 = vld [vmem:[#allocation24 + $0x5c8] sm:$0xff]
    %v7550 = vld [vmem:[#allocation24 + $0x5d0] sm:$0xff]
    %v7551 = vld [vmem:[#allocation24 + $0x5d8] sm:$0xff]
    %v7552 = vld [vmem:[#allocation24 + $0x5e0] sm:$0xff]
    %v7553 = vld [vmem:[#allocation24 + $0x5e8] sm:$0xff]
    %v7554 = vld [vmem:[#allocation24 + $0x5f0] sm:$0xff]
    %v7555 = vld [vmem:[#allocation24 + $0x5f8] sm:$0xff]
    %v7556 = vld [vmem:[#allocation24 + $0x600] sm:$0xff]
    %v7557 = vld [vmem:[#allocation24 + $0x608] sm:$0xff]
    %v7558 = vld [vmem:[#allocation24 + $0x610] sm:$0xff]
    %v7559 = vld [vmem:[#allocation24 + $0x618] sm:$0xff]
    %v7560 = vld [vmem:[#allocation24 + $0x620] sm:$0xff]
    %v7561 = vld [vmem:[#allocation24 + $0x628] sm:$0xff]
    %v7562 = vld [vmem:[#allocation24 + $0x630] sm:$0xff]
    %v7563 = vld [vmem:[#allocation24 + $0x638] sm:$0xff]
    %v7564 = vld [vmem:[#allocation24 + $0x640] sm:$0xff]
    %v7565 = vld [vmem:[#allocation24 + $0x648] sm:$0xff]
    %v7566 = vld [vmem:[#allocation24 + $0x650] sm:$0xff]
    %v7567 = vld [vmem:[#allocation24 + $0x658] sm:$0xff]
    %v7568 = vld [vmem:[#allocation24 + $0x660] sm:$0xff]
    %v7569 = vld [vmem:[#allocation24 + $0x668] sm:$0xff]
    %v7570 = vld [vmem:[#allocation24 + $0x670] sm:$0xff]
    %v7571 = vld [vmem:[#allocation24 + $0x678] sm:$0xff]
    %v7572 = vld [vmem:[#allocation24 + $0x680] sm:$0xff]
    %v7573 = vld [vmem:[#allocation24 + $0x688] sm:$0xff]
    %v7574 = vld [vmem:[#allocation24 + $0x690] sm:$0xff]
    %v7575 = vld [vmem:[#allocation24 + $0x698] sm:$0xff]
    %v7576 = vld [vmem:[#allocation24 + $0x6a0] sm:$0xff]
    %v7577 = vld [vmem:[#allocation24 + $0x6a8] sm:$0xff]
    %v7578 = vld [vmem:[#allocation24 + $0x6b0] sm:$0xff]
    %v7579 = vld [vmem:[#allocation24 + $0x6b8] sm:$0xff]
    %v7580 = vld [vmem:[#allocation24 + $0x6c0] sm:$0xff]
    %v7581 = vld [vmem:[#allocation24 + $0x6c8] sm:$0xff]
    %v7582 = vld [vmem:[#allocation24 + $0x6d0] sm:$0xff]
    %v7583 = vld [vmem:[#allocation24 + $0x6d8] sm:$0xff]
    %v7584 = vld [vmem:[#allocation24 + $0x6e0] sm:$0xff]
    %v7585 = vld [vmem:[#allocation24 + $0x6e8] sm:$0xff]
    %v7586 = vld [vmem:[#allocation24 + $0x6f0] sm:$0xff]
    %v7587 = vld [vmem:[#allocation24 + $0x6f8] sm:$0xff]
    %v7588 = vld [vmem:[#allocation24 + $0x700] sm:$0xff]
    %v7589 = vld [vmem:[#allocation24 + $0x708] sm:$0xff]
    %v7590 = vld [vmem:[#allocation24 + $0x710] sm:$0xff]
    %v7591 = vld [vmem:[#allocation24 + $0x718] sm:$0xff]
    %v7592 = vld [vmem:[#allocation24 + $0x720] sm:$0xff]
    %v7593 = vld [vmem:[#allocation24 + $0x728] sm:$0xff]
    %v7594 = vld [vmem:[#allocation24 + $0x730] sm:$0xff]
    %v7595 = vld [vmem:[#allocation24 + $0x738] sm:$0xff]
    %v7596 = vld [vmem:[#allocation24 + $0x740] sm:$0xff]
    %v7597 = vld [vmem:[#allocation24 + $0x748] sm:$0xff]
    %v7598 = vld [vmem:[#allocation24 + $0x750] sm:$0xff]
    %v7599 = vld [vmem:[#allocation24 + $0x758] sm:$0xff]
    %v7600 = vld [vmem:[#allocation24 + $0x760] sm:$0xff]
    %v7601 = vld [vmem:[#allocation24 + $0x768] sm:$0xff]
    %v7602 = vld [vmem:[#allocation24 + $0x770] sm:$0xff]
    %v7603 = vld [vmem:[#allocation24 + $0x778] sm:$0xff]
    %v7604 = vld [vmem:[#allocation24 + $0x780] sm:$0xff]
    %v7605 = vld [vmem:[#allocation24 + $0x788] sm:$0xff]
    %v7606 = vld [vmem:[#allocation24 + $0x790] sm:$0xff]
    %v7607 = vld [vmem:[#allocation24 + $0x798] sm:$0xff]
    %v7608 = vld [vmem:[#allocation24 + $0x7a0] sm:$0xff]
    %v7609 = vld [vmem:[#allocation24 + $0x7a8] sm:$0xff]
    %v7610 = vld [vmem:[#allocation24 + $0x7b0] sm:$0xff]
    %v7611 = vld [vmem:[#allocation24 + $0x7b8] sm:$0xff]
    %v7612 = vld [vmem:[#allocation24 + $0x7c0] sm:$0xff]
    %v7613 = vld [vmem:[#allocation24 + $0x7c8] sm:$0xff]
    %v7614 = vld [vmem:[#allocation24 + $0x7d0] sm:$0xff]
    %v7615 = vld [vmem:[#allocation24 + $0x7d8] sm:$0xff]
    %v7616 = vld [vmem:[#allocation24 + $0x7e0] sm:$0xff]
    %v7617 = vld [vmem:[#allocation24 + $0x7e8] sm:$0xff]
    %v7618 = vld [vmem:[#allocation24 + $0x7f0] sm:$0xff]
    %v7619 = vld [vmem:[#allocation24 + $0x7f8] sm:$0xff]
    %v7620 = vld [vmem:[#allocation25] sm:$0xff]
    %v7622 = vlaneseq
    %v7623 = vshrl.u32 %v7622, 7
    %v7624 = vsub.s32 0, %v7623
    %v7625 = vrot.slane %v7620, %v7624
    %v7626 = vlaneseq
    %v7627 = vshrl.u32 %v7626, 7
    %v7628 = vsub.s32 1, %v7627
    %v7629 = vrot.slane %v7620, %v7628
    %v7630 = vlaneseq
    %v7631 = vshrl.u32 %v7630, 7
    %v7632 = vsub.s32 2, %v7631
    %v7633 = vrot.slane %v7620, %v7632
    %v7634 = vlaneseq
    %v7635 = vshrl.u32 %v7634, 7
    %v7636 = vsub.s32 3, %v7635
    %v7637 = vrot.slane %v7620, %v7636
    %v7638 = vlaneseq
    %v7639 = vshrl.u32 %v7638, 7
    %v7640 = vsub.s32 4, %v7639
    %v7641 = vrot.slane %v7620, %v7640
    %v7642 = vlaneseq
    %v7643 = vshrl.u32 %v7642, 7
    %v7644 = vsub.s32 5, %v7643
    %v7645 = vrot.slane %v7620, %v7644
    %v7646 = vlaneseq
    %v7647 = vshrl.u32 %v7646, 7
    %v7648 = vsub.s32 6, %v7647
    %v7649 = vrot.slane %v7620, %v7648
    %v7650 = vlaneseq
    %v7651 = vshrl.u32 %v7650, 7
    %v7652 = vsub.s32 7, %v7651
    %v7653 = vrot.slane %v7620, %v7652
    %v7918 = vunpack.c.l.b16 %v7364
    %v7919 = vunpack.c.h.b16 %v7364
    %v7920 = vunpack.c.l.b16 %v7365
    %v7921 = vunpack.c.h.b16 %v7365
    %v7922 = vunpack.c.l.b16 %v7366
    %v7923 = vunpack.c.h.b16 %v7366
    %v7924 = vunpack.c.l.b16 %v7367
    %v7925 = vunpack.c.h.b16 %v7367
    %v7926 = vunpack.c.l.b16 %v7368
    %v7927 = vunpack.c.h.b16 %v7368
    %v7928 = vunpack.c.l.b16 %v7369
    %v7929 = vunpack.c.h.b16 %v7369
    %v7930 = vunpack.c.l.b16 %v7370
    %v7931 = vunpack.c.h.b16 %v7370
    %v7932 = vunpack.c.l.b16 %v7371
    %v7933 = vunpack.c.h.b16 %v7371
    %v7934 = vunpack.c.l.b16 %v7372
    %v7935 = vunpack.c.h.b16 %v7372
    %v7936 = vunpack.c.l.b16 %v7373
    %v7937 = vunpack.c.h.b16 %v7373
    %v7938 = vunpack.c.l.b16 %v7374
    %v7939 = vunpack.c.h.b16 %v7374
    %v7940 = vunpack.c.l.b16 %v7375
    %v7941 = vunpack.c.h.b16 %v7375
    %v7942 = vunpack.c.l.b16 %v7376
    %v7943 = vunpack.c.h.b16 %v7376
    %v7944 = vunpack.c.l.b16 %v7377
    %v7945 = vunpack.c.h.b16 %v7377
    %v7946 = vunpack.c.l.b16 %v7378
    %v7947 = vunpack.c.h.b16 %v7378
    %v7948 = vunpack.c.l.b16 %v7379
    %v7949 = vunpack.c.h.b16 %v7379
    %v7950 = vunpack.c.l.b16 %v7380
    %v7951 = vunpack.c.h.b16 %v7380
    %v7952 = vunpack.c.l.b16 %v7381
    %v7953 = vunpack.c.h.b16 %v7381
    %v7954 = vunpack.c.l.b16 %v7382
    %v7955 = vunpack.c.h.b16 %v7382
    %v7956 = vunpack.c.l.b16 %v7383
    %v7957 = vunpack.c.h.b16 %v7383
    %v7958 = vunpack.c.l.b16 %v7384
    %v7959 = vunpack.c.h.b16 %v7384
    %v7960 = vunpack.c.l.b16 %v7385
    %v7961 = vunpack.c.h.b16 %v7385
    %v7962 = vunpack.c.l.b16 %v7386
    %v7963 = vunpack.c.h.b16 %v7386
    %v7964 = vunpack.c.l.b16 %v7387
    %v7965 = vunpack.c.h.b16 %v7387
    %v7966 = vunpack.c.l.b16 %v7388
    %v7967 = vunpack.c.h.b16 %v7388
    %v7968 = vunpack.c.l.b16 %v7389
    %v7969 = vunpack.c.h.b16 %v7389
    %v7970 = vunpack.c.l.b16 %v7390
    %v7971 = vunpack.c.h.b16 %v7390
    %v7972 = vunpack.c.l.b16 %v7391
    %v7973 = vunpack.c.h.b16 %v7391
    %v7974 = vunpack.c.l.b16 %v7392
    %v7975 = vunpack.c.h.b16 %v7392
    %v7976 = vunpack.c.l.b16 %v7393
    %v7977 = vunpack.c.h.b16 %v7393
    %v7978 = vunpack.c.l.b16 %v7394
    %v7979 = vunpack.c.h.b16 %v7394
    %v7980 = vunpack.c.l.b16 %v7395
    %v7981 = vunpack.c.h.b16 %v7395
    %v7982 = vunpack.c.l.b16 %v7396
    %v7983 = vunpack.c.h.b16 %v7396
    %v7984 = vunpack.c.l.b16 %v7397
    %v7985 = vunpack.c.h.b16 %v7397
    %v7986 = vunpack.c.l.b16 %v7398
    %v7987 = vunpack.c.h.b16 %v7398
    %v7988 = vunpack.c.l.b16 %v7399
    %v7989 = vunpack.c.h.b16 %v7399
    %v7990 = vunpack.c.l.b16 %v7400
    %v7991 = vunpack.c.h.b16 %v7400
    %v7992 = vunpack.c.l.b16 %v7401
    %v7993 = vunpack.c.h.b16 %v7401
    %v7994 = vunpack.c.l.b16 %v7402
    %v7995 = vunpack.c.h.b16 %v7402
    %v7996 = vunpack.c.l.b16 %v7403
    %v7997 = vunpack.c.h.b16 %v7403
    %v7998 = vunpack.c.l.b16 %v7404
    %v7999 = vunpack.c.h.b16 %v7404
    %v8000 = vunpack.c.l.b16 %v7405
    %v8001 = vunpack.c.h.b16 %v7405
    %v8002 = vunpack.c.l.b16 %v7406
    %v8003 = vunpack.c.h.b16 %v7406
    %v8004 = vunpack.c.l.b16 %v7407
    %v8005 = vunpack.c.h.b16 %v7407
    %v8006 = vunpack.c.l.b16 %v7408
    %v8007 = vunpack.c.h.b16 %v7408
    %v8008 = vunpack.c.l.b16 %v7409
    %v8009 = vunpack.c.h.b16 %v7409
    %v8010 = vunpack.c.l.b16 %v7410
    %v8011 = vunpack.c.h.b16 %v7410
    %v8012 = vunpack.c.l.b16 %v7411
    %v8013 = vunpack.c.h.b16 %v7411
    %v8014 = vunpack.c.l.b16 %v7412
    %v8015 = vunpack.c.h.b16 %v7412
    %v8016 = vunpack.c.l.b16 %v7413
    %v8017 = vunpack.c.h.b16 %v7413
    %v8018 = vunpack.c.l.b16 %v7414
    %v8019 = vunpack.c.h.b16 %v7414
    %v8020 = vunpack.c.l.b16 %v7415
    %v8021 = vunpack.c.h.b16 %v7415
    %v8022 = vunpack.c.l.b16 %v7416
    %v8023 = vunpack.c.h.b16 %v7416
    %v8024 = vunpack.c.l.b16 %v7417
    %v8025 = vunpack.c.h.b16 %v7417
    %v8026 = vunpack.c.l.b16 %v7418
    %v8027 = vunpack.c.h.b16 %v7418
    %v8028 = vunpack.c.l.b16 %v7419
    %v8029 = vunpack.c.h.b16 %v7419
    %v8030 = vunpack.c.l.b16 %v7420
    %v8031 = vunpack.c.h.b16 %v7420
    %v8032 = vunpack.c.l.b16 %v7421
    %v8033 = vunpack.c.h.b16 %v7421
    %v8034 = vunpack.c.l.b16 %v7422
    %v8035 = vunpack.c.h.b16 %v7422
    %v8036 = vunpack.c.l.b16 %v7423
    %v8037 = vunpack.c.h.b16 %v7423
    %v8038 = vunpack.c.l.b16 %v7424
    %v8039 = vunpack.c.h.b16 %v7424
    %v8040 = vunpack.c.l.b16 %v7425
    %v8041 = vunpack.c.h.b16 %v7425
    %v8042 = vunpack.c.l.b16 %v7426
    %v8043 = vunpack.c.h.b16 %v7426
    %v8044 = vunpack.c.l.b16 %v7427
    %v8045 = vunpack.c.h.b16 %v7427
    %v8046 = vunpack.c.l.b16 %v7428
    %v8047 = vunpack.c.h.b16 %v7428
    %v8048 = vunpack.c.l.b16 %v7429
    %v8049 = vunpack.c.h.b16 %v7429
    %v8050 = vunpack.c.l.b16 %v7430
    %v8051 = vunpack.c.h.b16 %v7430
    %v8052 = vunpack.c.l.b16 %v7431
    %v8053 = vunpack.c.h.b16 %v7431
    %v8054 = vunpack.c.l.b16 %v7432
    %v8055 = vunpack.c.h.b16 %v7432
    %v8056 = vunpack.c.l.b16 %v7433
    %v8057 = vunpack.c.h.b16 %v7433
    %v8058 = vunpack.c.l.b16 %v7434
    %v8059 = vunpack.c.h.b16 %v7434
    %v8060 = vunpack.c.l.b16 %v7435
    %v8061 = vunpack.c.h.b16 %v7435
    %v8062 = vunpack.c.l.b16 %v7436
    %v8063 = vunpack.c.h.b16 %v7436
    %v8064 = vunpack.c.l.b16 %v7437
    %v8065 = vunpack.c.h.b16 %v7437
    %v8066 = vunpack.c.l.b16 %v7438
    %v8067 = vunpack.c.h.b16 %v7438
    %v8068 = vunpack.c.l.b16 %v7439
    %v8069 = vunpack.c.h.b16 %v7439
    %v8070 = vunpack.c.l.b16 %v7440
    %v8071 = vunpack.c.h.b16 %v7440
    %v8072 = vunpack.c.l.b16 %v7441
    %v8073 = vunpack.c.h.b16 %v7441
    %v8074 = vunpack.c.l.b16 %v7442
    %v8075 = vunpack.c.h.b16 %v7442
    %v8076 = vunpack.c.l.b16 %v7443
    %v8077 = vunpack.c.h.b16 %v7443
    %v8078 = vunpack.c.l.b16 %v7444
    %v8079 = vunpack.c.h.b16 %v7444
    %v8080 = vunpack.c.l.b16 %v7445
    %v8081 = vunpack.c.h.b16 %v7445
    %v8082 = vunpack.c.l.b16 %v7446
    %v8083 = vunpack.c.h.b16 %v7446
    %v8084 = vunpack.c.l.b16 %v7447
    %v8085 = vunpack.c.h.b16 %v7447
    %v8086 = vunpack.c.l.b16 %v7448
    %v8087 = vunpack.c.h.b16 %v7448
    %v8088 = vunpack.c.l.b16 %v7449
    %v8089 = vunpack.c.h.b16 %v7449
    %v8090 = vunpack.c.l.b16 %v7450
    %v8091 = vunpack.c.h.b16 %v7450
    %v8092 = vunpack.c.l.b16 %v7451
    %v8093 = vunpack.c.h.b16 %v7451
    %v8094 = vunpack.c.l.b16 %v7452
    %v8095 = vunpack.c.h.b16 %v7452
    %v8096 = vunpack.c.l.b16 %v7453
    %v8097 = vunpack.c.h.b16 %v7453
    %v8098 = vunpack.c.l.b16 %v7454
    %v8099 = vunpack.c.h.b16 %v7454
    %v8100 = vunpack.c.l.b16 %v7455
    %v8101 = vunpack.c.h.b16 %v7455
    %v8102 = vunpack.c.l.b16 %v7456
    %v8103 = vunpack.c.h.b16 %v7456
    %v8104 = vunpack.c.l.b16 %v7457
    %v8105 = vunpack.c.h.b16 %v7457
    %v8106 = vunpack.c.l.b16 %v7458
    %v8107 = vunpack.c.h.b16 %v7458
    %v8108 = vunpack.c.l.b16 %v7459
    %v8109 = vunpack.c.h.b16 %v7459
    %v8110 = vunpack.c.l.b16 %v7460
    %v8111 = vunpack.c.h.b16 %v7460
    %v8112 = vunpack.c.l.b16 %v7461
    %v8113 = vunpack.c.h.b16 %v7461
    %v8114 = vunpack.c.l.b16 %v7462
    %v8115 = vunpack.c.h.b16 %v7462
    %v8116 = vunpack.c.l.b16 %v7463
    %v8117 = vunpack.c.h.b16 %v7463
    %v8118 = vunpack.c.l.b16 %v7464
    %v8119 = vunpack.c.h.b16 %v7464
    %v8120 = vunpack.c.l.b16 %v7465
    %v8121 = vunpack.c.h.b16 %v7465
    %v8122 = vunpack.c.l.b16 %v7466
    %v8123 = vunpack.c.h.b16 %v7466
    %v8124 = vunpack.c.l.b16 %v7467
    %v8125 = vunpack.c.h.b16 %v7467
    %v8126 = vunpack.c.l.b16 %v7468
    %v8127 = vunpack.c.h.b16 %v7468
    %v8128 = vunpack.c.l.b16 %v7469
    %v8129 = vunpack.c.h.b16 %v7469
    %v8130 = vunpack.c.l.b16 %v7470
    %v8131 = vunpack.c.h.b16 %v7470
    %v8132 = vunpack.c.l.b16 %v7471
    %v8133 = vunpack.c.h.b16 %v7471
    %v8134 = vunpack.c.l.b16 %v7472
    %v8135 = vunpack.c.h.b16 %v7472
    %v8136 = vunpack.c.l.b16 %v7473
    %v8137 = vunpack.c.h.b16 %v7473
    %v8138 = vunpack.c.l.b16 %v7474
    %v8139 = vunpack.c.h.b16 %v7474
    %v8140 = vunpack.c.l.b16 %v7475
    %v8141 = vunpack.c.h.b16 %v7475
    %v8142 = vunpack.c.l.b16 %v7476
    %v8143 = vunpack.c.h.b16 %v7476
    %v8144 = vunpack.c.l.b16 %v7477
    %v8145 = vunpack.c.h.b16 %v7477
    %v8146 = vunpack.c.l.b16 %v7478
    %v8147 = vunpack.c.h.b16 %v7478
    %v8148 = vunpack.c.l.b16 %v7479
    %v8149 = vunpack.c.h.b16 %v7479
    %v8150 = vunpack.c.l.b16 %v7480
    %v8151 = vunpack.c.h.b16 %v7480
    %v8152 = vunpack.c.l.b16 %v7481
    %v8153 = vunpack.c.h.b16 %v7481
    %v8154 = vunpack.c.l.b16 %v7482
    %v8155 = vunpack.c.h.b16 %v7482
    %v8156 = vunpack.c.l.b16 %v7483
    %v8157 = vunpack.c.h.b16 %v7483
    %v8158 = vunpack.c.l.b16 %v7484
    %v8159 = vunpack.c.h.b16 %v7484
    %v8160 = vunpack.c.l.b16 %v7485
    %v8161 = vunpack.c.h.b16 %v7485
    %v8162 = vunpack.c.l.b16 %v7486
    %v8163 = vunpack.c.h.b16 %v7486
    %v8164 = vunpack.c.l.b16 %v7487
    %v8165 = vunpack.c.h.b16 %v7487
    %v8166 = vunpack.c.l.b16 %v7488
    %v8167 = vunpack.c.h.b16 %v7488
    %v8168 = vunpack.c.l.b16 %v7489
    %v8169 = vunpack.c.h.b16 %v7489
    %v8170 = vunpack.c.l.b16 %v7490
    %v8171 = vunpack.c.h.b16 %v7490
    %v8172 = vunpack.c.l.b16 %v7491
    %v8173 = vunpack.c.h.b16 %v7491
    %v8174 = vunpack.c.l.b16 %v7492
    %v8175 = vunpack.c.h.b16 %v7492
    %v8176 = vunpack.c.l.b16 %v7493
    %v8177 = vunpack.c.h.b16 %v7493
    %v8178 = vunpack.c.l.b16 %v7494
    %v8179 = vunpack.c.h.b16 %v7494
    %v8180 = vunpack.c.l.b16 %v7495
    %v8181 = vunpack.c.h.b16 %v7495
    %v8182 = vunpack.c.l.b16 %v7496
    %v8183 = vunpack.c.h.b16 %v7496
    %v8184 = vunpack.c.l.b16 %v7497
    %v8185 = vunpack.c.h.b16 %v7497
    %v8186 = vunpack.c.l.b16 %v7498
    %v8187 = vunpack.c.h.b16 %v7498
    %v8188 = vunpack.c.l.b16 %v7499
    %v8189 = vunpack.c.h.b16 %v7499
    %v8190 = vunpack.c.l.b16 %v7500
    %v8191 = vunpack.c.h.b16 %v7500
    %v8192 = vunpack.c.l.b16 %v7501
    %v8193 = vunpack.c.h.b16 %v7501
    %v8194 = vunpack.c.l.b16 %v7502
    %v8195 = vunpack.c.h.b16 %v7502
    %v8196 = vunpack.c.l.b16 %v7503
    %v8197 = vunpack.c.h.b16 %v7503
    %v8198 = vunpack.c.l.b16 %v7504
    %v8199 = vunpack.c.h.b16 %v7504
    %v8200 = vunpack.c.l.b16 %v7505
    %v8201 = vunpack.c.h.b16 %v7505
    %v8202 = vunpack.c.l.b16 %v7506
    %v8203 = vunpack.c.h.b16 %v7506
    %v8204 = vunpack.c.l.b16 %v7507
    %v8205 = vunpack.c.h.b16 %v7507
    %v8206 = vunpack.c.l.b16 %v7508
    %v8207 = vunpack.c.h.b16 %v7508
    %v8208 = vunpack.c.l.b16 %v7509
    %v8209 = vunpack.c.h.b16 %v7509
    %v8210 = vunpack.c.l.b16 %v7510
    %v8211 = vunpack.c.h.b16 %v7510
    %v8212 = vunpack.c.l.b16 %v7511
    %v8213 = vunpack.c.h.b16 %v7511
    %v8214 = vunpack.c.l.b16 %v7512
    %v8215 = vunpack.c.h.b16 %v7512
    %v8216 = vunpack.c.l.b16 %v7513
    %v8217 = vunpack.c.h.b16 %v7513
    %v8218 = vunpack.c.l.b16 %v7514
    %v8219 = vunpack.c.h.b16 %v7514
    %v8220 = vunpack.c.l.b16 %v7515
    %v8221 = vunpack.c.h.b16 %v7515
    %v8222 = vunpack.c.l.b16 %v7516
    %v8223 = vunpack.c.h.b16 %v7516
    %v8224 = vunpack.c.l.b16 %v7517
    %v8225 = vunpack.c.h.b16 %v7517
    %v8226 = vunpack.c.l.b16 %v7518
    %v8227 = vunpack.c.h.b16 %v7518
    %v8228 = vunpack.c.l.b16 %v7519
    %v8229 = vunpack.c.h.b16 %v7519
    %v8230 = vunpack.c.l.b16 %v7520
    %v8231 = vunpack.c.h.b16 %v7520
    %v8232 = vunpack.c.l.b16 %v7521
    %v8233 = vunpack.c.h.b16 %v7521
    %v8234 = vunpack.c.l.b16 %v7522
    %v8235 = vunpack.c.h.b16 %v7522
    %v8236 = vunpack.c.l.b16 %v7523
    %v8237 = vunpack.c.h.b16 %v7523
    %v8238 = vunpack.c.l.b16 %v7524
    %v8239 = vunpack.c.h.b16 %v7524
    %v8240 = vunpack.c.l.b16 %v7525
    %v8241 = vunpack.c.h.b16 %v7525
    %v8242 = vunpack.c.l.b16 %v7526
    %v8243 = vunpack.c.h.b16 %v7526
    %v8244 = vunpack.c.l.b16 %v7527
    %v8245 = vunpack.c.h.b16 %v7527
    %v8246 = vunpack.c.l.b16 %v7528
    %v8247 = vunpack.c.h.b16 %v7528
    %v8248 = vunpack.c.l.b16 %v7529
    %v8249 = vunpack.c.h.b16 %v7529
    %v8250 = vunpack.c.l.b16 %v7530
    %v8251 = vunpack.c.h.b16 %v7530
    %v8252 = vunpack.c.l.b16 %v7531
    %v8253 = vunpack.c.h.b16 %v7531
    %v8254 = vunpack.c.l.b16 %v7532
    %v8255 = vunpack.c.h.b16 %v7532
    %v8256 = vunpack.c.l.b16 %v7533
    %v8257 = vunpack.c.h.b16 %v7533
    %v8258 = vunpack.c.l.b16 %v7534
    %v8259 = vunpack.c.h.b16 %v7534
    %v8260 = vunpack.c.l.b16 %v7535
    %v8261 = vunpack.c.h.b16 %v7535
    %v8262 = vunpack.c.l.b16 %v7536
    %v8263 = vunpack.c.h.b16 %v7536
    %v8264 = vunpack.c.l.b16 %v7537
    %v8265 = vunpack.c.h.b16 %v7537
    %v8266 = vunpack.c.l.b16 %v7538
    %v8267 = vunpack.c.h.b16 %v7538
    %v8268 = vunpack.c.l.b16 %v7539
    %v8269 = vunpack.c.h.b16 %v7539
    %v8270 = vunpack.c.l.b16 %v7540
    %v8271 = vunpack.c.h.b16 %v7540
    %v8272 = vunpack.c.l.b16 %v7541
    %v8273 = vunpack.c.h.b16 %v7541
    %v8274 = vunpack.c.l.b16 %v7542
    %v8275 = vunpack.c.h.b16 %v7542
    %v8276 = vunpack.c.l.b16 %v7543
    %v8277 = vunpack.c.h.b16 %v7543
    %v8278 = vunpack.c.l.b16 %v7544
    %v8279 = vunpack.c.h.b16 %v7544
    %v8280 = vunpack.c.l.b16 %v7545
    %v8281 = vunpack.c.h.b16 %v7545
    %v8282 = vunpack.c.l.b16 %v7546
    %v8283 = vunpack.c.h.b16 %v7546
    %v8284 = vunpack.c.l.b16 %v7547
    %v8285 = vunpack.c.h.b16 %v7547
    %v8286 = vunpack.c.l.b16 %v7548
    %v8287 = vunpack.c.h.b16 %v7548
    %v8288 = vunpack.c.l.b16 %v7549
    %v8289 = vunpack.c.h.b16 %v7549
    %v8290 = vunpack.c.l.b16 %v7550
    %v8291 = vunpack.c.h.b16 %v7550
    %v8292 = vunpack.c.l.b16 %v7551
    %v8293 = vunpack.c.h.b16 %v7551
    %v8294 = vunpack.c.l.b16 %v7552
    %v8295 = vunpack.c.h.b16 %v7552
    %v8296 = vunpack.c.l.b16 %v7553
    %v8297 = vunpack.c.h.b16 %v7553
    %v8298 = vunpack.c.l.b16 %v7554
    %v8299 = vunpack.c.h.b16 %v7554
    %v8300 = vunpack.c.l.b16 %v7555
    %v8301 = vunpack.c.h.b16 %v7555
    %v8302 = vunpack.c.l.b16 %v7556
    %v8303 = vunpack.c.h.b16 %v7556
    %v8304 = vunpack.c.l.b16 %v7557
    %v8305 = vunpack.c.h.b16 %v7557
    %v8306 = vunpack.c.l.b16 %v7558
    %v8307 = vunpack.c.h.b16 %v7558
    %v8308 = vunpack.c.l.b16 %v7559
    %v8309 = vunpack.c.h.b16 %v7559
    %v8310 = vunpack.c.l.b16 %v7560
    %v8311 = vunpack.c.h.b16 %v7560
    %v8312 = vunpack.c.l.b16 %v7561
    %v8313 = vunpack.c.h.b16 %v7561
    %v8314 = vunpack.c.l.b16 %v7562
    %v8315 = vunpack.c.h.b16 %v7562
    %v8316 = vunpack.c.l.b16 %v7563
    %v8317 = vunpack.c.h.b16 %v7563
    %v8318 = vunpack.c.l.b16 %v7564
    %v8319 = vunpack.c.h.b16 %v7564
    %v8320 = vunpack.c.l.b16 %v7565
    %v8321 = vunpack.c.h.b16 %v7565
    %v8322 = vunpack.c.l.b16 %v7566
    %v8323 = vunpack.c.h.b16 %v7566
    %v8324 = vunpack.c.l.b16 %v7567
    %v8325 = vunpack.c.h.b16 %v7567
    %v8326 = vunpack.c.l.b16 %v7568
    %v8327 = vunpack.c.h.b16 %v7568
    %v8328 = vunpack.c.l.b16 %v7569
    %v8329 = vunpack.c.h.b16 %v7569
    %v8330 = vunpack.c.l.b16 %v7570
    %v8331 = vunpack.c.h.b16 %v7570
    %v8332 = vunpack.c.l.b16 %v7571
    %v8333 = vunpack.c.h.b16 %v7571
    %v8334 = vunpack.c.l.b16 %v7572
    %v8335 = vunpack.c.h.b16 %v7572
    %v8336 = vunpack.c.l.b16 %v7573
    %v8337 = vunpack.c.h.b16 %v7573
    %v8338 = vunpack.c.l.b16 %v7574
    %v8339 = vunpack.c.h.b16 %v7574
    %v8340 = vunpack.c.l.b16 %v7575
    %v8341 = vunpack.c.h.b16 %v7575
    %v8342 = vunpack.c.l.b16 %v7576
    %v8343 = vunpack.c.h.b16 %v7576
    %v8344 = vunpack.c.l.b16 %v7577
    %v8345 = vunpack.c.h.b16 %v7577
    %v8346 = vunpack.c.l.b16 %v7578
    %v8347 = vunpack.c.h.b16 %v7578
    %v8348 = vunpack.c.l.b16 %v7579
    %v8349 = vunpack.c.h.b16 %v7579
    %v8350 = vunpack.c.l.b16 %v7580
    %v8351 = vunpack.c.h.b16 %v7580
    %v8352 = vunpack.c.l.b16 %v7581
    %v8353 = vunpack.c.h.b16 %v7581
    %v8354 = vunpack.c.l.b16 %v7582
    %v8355 = vunpack.c.h.b16 %v7582
    %v8356 = vunpack.c.l.b16 %v7583
    %v8357 = vunpack.c.h.b16 %v7583
    %v8358 = vunpack.c.l.b16 %v7584
    %v8359 = vunpack.c.h.b16 %v7584
    %v8360 = vunpack.c.l.b16 %v7585
    %v8361 = vunpack.c.h.b16 %v7585
    %v8362 = vunpack.c.l.b16 %v7586
    %v8363 = vunpack.c.h.b16 %v7586
    %v8364 = vunpack.c.l.b16 %v7587
    %v8365 = vunpack.c.h.b16 %v7587
    %v8366 = vunpack.c.l.b16 %v7588
    %v8367 = vunpack.c.h.b16 %v7588
    %v8368 = vunpack.c.l.b16 %v7589
    %v8369 = vunpack.c.h.b16 %v7589
    %v8370 = vunpack.c.l.b16 %v7590
    %v8371 = vunpack.c.h.b16 %v7590
    %v8372 = vunpack.c.l.b16 %v7591
    %v8373 = vunpack.c.h.b16 %v7591
    %v8374 = vunpack.c.l.b16 %v7592
    %v8375 = vunpack.c.h.b16 %v7592
    %v8376 = vunpack.c.l.b16 %v7593
    %v8377 = vunpack.c.h.b16 %v7593
    %v8378 = vunpack.c.l.b16 %v7594
    %v8379 = vunpack.c.h.b16 %v7594
    %v8380 = vunpack.c.l.b16 %v7595
    %v8381 = vunpack.c.h.b16 %v7595
    %v8382 = vunpack.c.l.b16 %v7596
    %v8383 = vunpack.c.h.b16 %v7596
    %v8384 = vunpack.c.l.b16 %v7597
    %v8385 = vunpack.c.h.b16 %v7597
    %v8386 = vunpack.c.l.b16 %v7598
    %v8387 = vunpack.c.h.b16 %v7598
    %v8388 = vunpack.c.l.b16 %v7599
    %v8389 = vunpack.c.h.b16 %v7599
    %v8390 = vunpack.c.l.b16 %v7600
    %v8391 = vunpack.c.h.b16 %v7600
    %v8392 = vunpack.c.l.b16 %v7601
    %v8393 = vunpack.c.h.b16 %v7601
    %v8394 = vunpack.c.l.b16 %v7602
    %v8395 = vunpack.c.h.b16 %v7602
    %v8396 = vunpack.c.l.b16 %v7603
    %v8397 = vunpack.c.h.b16 %v7603
    %v8398 = vunpack.c.l.b16 %v7604
    %v8399 = vunpack.c.h.b16 %v7604
    %v8400 = vunpack.c.l.b16 %v7605
    %v8401 = vunpack.c.h.b16 %v7605
    %v8402 = vunpack.c.l.b16 %v7606
    %v8403 = vunpack.c.h.b16 %v7606
    %v8404 = vunpack.c.l.b16 %v7607
    %v8405 = vunpack.c.h.b16 %v7607
    %v8406 = vunpack.c.l.b16 %v7608
    %v8407 = vunpack.c.h.b16 %v7608
    %v8408 = vunpack.c.l.b16 %v7609
    %v8409 = vunpack.c.h.b16 %v7609
    %v8410 = vunpack.c.l.b16 %v7610
    %v8411 = vunpack.c.h.b16 %v7610
    %v8412 = vunpack.c.l.b16 %v7611
    %v8413 = vunpack.c.h.b16 %v7611
    %v8414 = vunpack.c.l.b16 %v7612
    %v8415 = vunpack.c.h.b16 %v7612
    %v8416 = vunpack.c.l.b16 %v7613
    %v8417 = vunpack.c.h.b16 %v7613
    %v8418 = vunpack.c.l.b16 %v7614
    %v8419 = vunpack.c.h.b16 %v7614
    %v8420 = vunpack.c.l.b16 %v7615
    %v8421 = vunpack.c.h.b16 %v7615
    %v8422 = vunpack.c.l.b16 %v7616
    %v8423 = vunpack.c.h.b16 %v7616
    %v8424 = vunpack.c.l.b16 %v7617
    %v8425 = vunpack.c.h.b16 %v7617
    %v8426 = vunpack.c.l.b16 %v7618
    %v8427 = vunpack.c.h.b16 %v7618
    %v8428 = vunpack.c.l.b16 %v7619
    %v8429 = vunpack.c.h.b16 %v7619
    %v8430 = vpack.c.b16 %v7926, %v7918
    %v8431 = vpack.c.b16 %v7927, %v7919
    %v8432 = vpack.c.b16 %v7928, %v7920
    %v8433 = vpack.c.b16 %v7929, %v7921
    %v8434 = vpack.c.b16 %v7930, %v7922
    %v8435 = vpack.c.b16 %v7931, %v7923
    %v8436 = vpack.c.b16 %v7932, %v7924
    %v8437 = vpack.c.b16 %v7933, %v7925
    %v8438 = vpack.c.b16 %v7942, %v7934
    %v8439 = vpack.c.b16 %v7943, %v7935
    %v8440 = vpack.c.b16 %v7944, %v7936
    %v8441 = vpack.c.b16 %v7945, %v7937
    %v8442 = vpack.c.b16 %v7946, %v7938
    %v8443 = vpack.c.b16 %v7947, %v7939
    %v8444 = vpack.c.b16 %v7948, %v7940
    %v8445 = vpack.c.b16 %v7949, %v7941
    %v8446 = vpack.c.b16 %v7958, %v7950
    %v8447 = vpack.c.b16 %v7959, %v7951
    %v8448 = vpack.c.b16 %v7960, %v7952
    %v8449 = vpack.c.b16 %v7961, %v7953
    %v8450 = vpack.c.b16 %v7962, %v7954
    %v8451 = vpack.c.b16 %v7963, %v7955
    %v8452 = vpack.c.b16 %v7964, %v7956
    %v8453 = vpack.c.b16 %v7965, %v7957
    %v8454 = vpack.c.b16 %v7974, %v7966
    %v8455 = vpack.c.b16 %v7975, %v7967
    %v8456 = vpack.c.b16 %v7976, %v7968
    %v8457 = vpack.c.b16 %v7977, %v7969
    %v8458 = vpack.c.b16 %v7978, %v7970
    %v8459 = vpack.c.b16 %v7979, %v7971
    %v8460 = vpack.c.b16 %v7980, %v7972
    %v8461 = vpack.c.b16 %v7981, %v7973
    %v8462 = vpack.c.b16 %v7990, %v7982
    %v8463 = vpack.c.b16 %v7991, %v7983
    %v8464 = vpack.c.b16 %v7992, %v7984
    %v8465 = vpack.c.b16 %v7993, %v7985
    %v8466 = vpack.c.b16 %v7994, %v7986
    %v8467 = vpack.c.b16 %v7995, %v7987
    %v8468 = vpack.c.b16 %v7996, %v7988
    %v8469 = vpack.c.b16 %v7997, %v7989
    %v8470 = vpack.c.b16 %v8006, %v7998
    %v8471 = vpack.c.b16 %v8007, %v7999
    %v8472 = vpack.c.b16 %v8008, %v8000
    %v8473 = vpack.c.b16 %v8009, %v8001
    %v8474 = vpack.c.b16 %v8010, %v8002
    %v8475 = vpack.c.b16 %v8011, %v8003
    %v8476 = vpack.c.b16 %v8012, %v8004
    %v8477 = vpack.c.b16 %v8013, %v8005
    %v8478 = vpack.c.b16 %v8022, %v8014
    %v8479 = vpack.c.b16 %v8023, %v8015
    %v8480 = vpack.c.b16 %v8024, %v8016
    %v8481 = vpack.c.b16 %v8025, %v8017
    %v8482 = vpack.c.b16 %v8026, %v8018
    %v8483 = vpack.c.b16 %v8027, %v8019
    %v8484 = vpack.c.b16 %v8028, %v8020
    %v8485 = vpack.c.b16 %v8029, %v8021
    %v8486 = vpack.c.b16 %v8038, %v8030
    %v8487 = vpack.c.b16 %v8039, %v8031
    %v8488 = vpack.c.b16 %v8040, %v8032
    %v8489 = vpack.c.b16 %v8041, %v8033
    %v8490 = vpack.c.b16 %v8042, %v8034
    %v8491 = vpack.c.b16 %v8043, %v8035
    %v8492 = vpack.c.b16 %v8044, %v8036
    %v8493 = vpack.c.b16 %v8045, %v8037
    %v8494 = vpack.c.b16 %v8054, %v8046
    %v8495 = vpack.c.b16 %v8055, %v8047
    %v8496 = vpack.c.b16 %v8056, %v8048
    %v8497 = vpack.c.b16 %v8057, %v8049
    %v8498 = vpack.c.b16 %v8058, %v8050
    %v8499 = vpack.c.b16 %v8059, %v8051
    %v8500 = vpack.c.b16 %v8060, %v8052
    %v8501 = vpack.c.b16 %v8061, %v8053
    %v8502 = vpack.c.b16 %v8070, %v8062
    %v8503 = vpack.c.b16 %v8071, %v8063
    %v8504 = vpack.c.b16 %v8072, %v8064
    %v8505 = vpack.c.b16 %v8073, %v8065
    %v8506 = vpack.c.b16 %v8074, %v8066
    %v8507 = vpack.c.b16 %v8075, %v8067
    %v8508 = vpack.c.b16 %v8076, %v8068
    %v8509 = vpack.c.b16 %v8077, %v8069
    %v8510 = vpack.c.b16 %v8086, %v8078
    %v8511 = vpack.c.b16 %v8087, %v8079
    %v8512 = vpack.c.b16 %v8088, %v8080
    %v8513 = vpack.c.b16 %v8089, %v8081
    %v8514 = vpack.c.b16 %v8090, %v8082
    %v8515 = vpack.c.b16 %v8091, %v8083
    %v8516 = vpack.c.b16 %v8092, %v8084
    %v8517 = vpack.c.b16 %v8093, %v8085
    %v8518 = vpack.c.b16 %v8102, %v8094
    %v8519 = vpack.c.b16 %v8103, %v8095
    %v8520 = vpack.c.b16 %v8104, %v8096
    %v8521 = vpack.c.b16 %v8105, %v8097
    %v8522 = vpack.c.b16 %v8106, %v8098
    %v8523 = vpack.c.b16 %v8107, %v8099
    %v8524 = vpack.c.b16 %v8108, %v8100
    %v8525 = vpack.c.b16 %v8109, %v8101
    %v8526 = vpack.c.b16 %v8118, %v8110
    %v8527 = vpack.c.b16 %v8119, %v8111
    %v8528 = vpack.c.b16 %v8120, %v8112
    %v8529 = vpack.c.b16 %v8121, %v8113
    %v8530 = vpack.c.b16 %v8122, %v8114
    %v8531 = vpack.c.b16 %v8123, %v8115
    %v8532 = vpack.c.b16 %v8124, %v8116
    %v8533 = vpack.c.b16 %v8125, %v8117
    %v8534 = vpack.c.b16 %v8134, %v8126
    %v8535 = vpack.c.b16 %v8135, %v8127
    %v8536 = vpack.c.b16 %v8136, %v8128
    %v8537 = vpack.c.b16 %v8137, %v8129
    %v8538 = vpack.c.b16 %v8138, %v8130
    %v8539 = vpack.c.b16 %v8139, %v8131
    %v8540 = vpack.c.b16 %v8140, %v8132
    %v8541 = vpack.c.b16 %v8141, %v8133
    %v8542 = vpack.c.b16 %v8150, %v8142
    %v8543 = vpack.c.b16 %v8151, %v8143
    %v8544 = vpack.c.b16 %v8152, %v8144
    %v8545 = vpack.c.b16 %v8153, %v8145
    %v8546 = vpack.c.b16 %v8154, %v8146
    %v8547 = vpack.c.b16 %v8155, %v8147
    %v8548 = vpack.c.b16 %v8156, %v8148
    %v8549 = vpack.c.b16 %v8157, %v8149
    %v8550 = vpack.c.b16 %v8166, %v8158
    %v8551 = vpack.c.b16 %v8167, %v8159
    %v8552 = vpack.c.b16 %v8168, %v8160
    %v8553 = vpack.c.b16 %v8169, %v8161
    %v8554 = vpack.c.b16 %v8170, %v8162
    %v8555 = vpack.c.b16 %v8171, %v8163
    %v8556 = vpack.c.b16 %v8172, %v8164
    %v8557 = vpack.c.b16 %v8173, %v8165
    %v8558 = vpack.c.b16 %v8182, %v8174
    %v8559 = vpack.c.b16 %v8183, %v8175
    %v8560 = vpack.c.b16 %v8184, %v8176
    %v8561 = vpack.c.b16 %v8185, %v8177
    %v8562 = vpack.c.b16 %v8186, %v8178
    %v8563 = vpack.c.b16 %v8187, %v8179
    %v8564 = vpack.c.b16 %v8188, %v8180
    %v8565 = vpack.c.b16 %v8189, %v8181
    %v8566 = vpack.c.b16 %v8198, %v8190
    %v8567 = vpack.c.b16 %v8199, %v8191
    %v8568 = vpack.c.b16 %v8200, %v8192
    %v8569 = vpack.c.b16 %v8201, %v8193
    %v8570 = vpack.c.b16 %v8202, %v8194
    %v8571 = vpack.c.b16 %v8203, %v8195
    %v8572 = vpack.c.b16 %v8204, %v8196
    %v8573 = vpack.c.b16 %v8205, %v8197
    %v8574 = vpack.c.b16 %v8214, %v8206
    %v8575 = vpack.c.b16 %v8215, %v8207
    %v8576 = vpack.c.b16 %v8216, %v8208
    %v8577 = vpack.c.b16 %v8217, %v8209
    %v8578 = vpack.c.b16 %v8218, %v8210
    %v8579 = vpack.c.b16 %v8219, %v8211
    %v8580 = vpack.c.b16 %v8220, %v8212
    %v8581 = vpack.c.b16 %v8221, %v8213
    %v8582 = vpack.c.b16 %v8230, %v8222
    %v8583 = vpack.c.b16 %v8231, %v8223
    %v8584 = vpack.c.b16 %v8232, %v8224
    %v8585 = vpack.c.b16 %v8233, %v8225
    %v8586 = vpack.c.b16 %v8234, %v8226
    %v8587 = vpack.c.b16 %v8235, %v8227
    %v8588 = vpack.c.b16 %v8236, %v8228
    %v8589 = vpack.c.b16 %v8237, %v8229
    %v8590 = vpack.c.b16 %v8246, %v8238
    %v8591 = vpack.c.b16 %v8247, %v8239
    %v8592 = vpack.c.b16 %v8248, %v8240
    %v8593 = vpack.c.b16 %v8249, %v8241
    %v8594 = vpack.c.b16 %v8250, %v8242
    %v8595 = vpack.c.b16 %v8251, %v8243
    %v8596 = vpack.c.b16 %v8252, %v8244
    %v8597 = vpack.c.b16 %v8253, %v8245
    %v8598 = vpack.c.b16 %v8262, %v8254
    %v8599 = vpack.c.b16 %v8263, %v8255
    %v8600 = vpack.c.b16 %v8264, %v8256
    %v8601 = vpack.c.b16 %v8265, %v8257
    %v8602 = vpack.c.b16 %v8266, %v8258
    %v8603 = vpack.c.b16 %v8267, %v8259
    %v8604 = vpack.c.b16 %v8268, %v8260
    %v8605 = vpack.c.b16 %v8269, %v8261
    %v8606 = vpack.c.b16 %v8278, %v8270
    %v8607 = vpack.c.b16 %v8279, %v8271
    %v8608 = vpack.c.b16 %v8280, %v8272
    %v8609 = vpack.c.b16 %v8281, %v8273
    %v8610 = vpack.c.b16 %v8282, %v8274
    %v8611 = vpack.c.b16 %v8283, %v8275
    %v8612 = vpack.c.b16 %v8284, %v8276
    %v8613 = vpack.c.b16 %v8285, %v8277
    %v8614 = vpack.c.b16 %v8294, %v8286
    %v8615 = vpack.c.b16 %v8295, %v8287
    %v8616 = vpack.c.b16 %v8296, %v8288
    %v8617 = vpack.c.b16 %v8297, %v8289
    %v8618 = vpack.c.b16 %v8298, %v8290
    %v8619 = vpack.c.b16 %v8299, %v8291
    %v8620 = vpack.c.b16 %v8300, %v8292
    %v8621 = vpack.c.b16 %v8301, %v8293
    %v8622 = vpack.c.b16 %v8310, %v8302
    %v8623 = vpack.c.b16 %v8311, %v8303
    %v8624 = vpack.c.b16 %v8312, %v8304
    %v8625 = vpack.c.b16 %v8313, %v8305
    %v8626 = vpack.c.b16 %v8314, %v8306
    %v8627 = vpack.c.b16 %v8315, %v8307
    %v8628 = vpack.c.b16 %v8316, %v8308
    %v8629 = vpack.c.b16 %v8317, %v8309
    %v8630 = vpack.c.b16 %v8326, %v8318
    %v8631 = vpack.c.b16 %v8327, %v8319
    %v8632 = vpack.c.b16 %v8328, %v8320
    %v8633 = vpack.c.b16 %v8329, %v8321
    %v8634 = vpack.c.b16 %v8330, %v8322
    %v8635 = vpack.c.b16 %v8331, %v8323
    %v8636 = vpack.c.b16 %v8332, %v8324
    %v8637 = vpack.c.b16 %v8333, %v8325
    %v8638 = vpack.c.b16 %v8342, %v8334
    %v8639 = vpack.c.b16 %v8343, %v8335
    %v8640 = vpack.c.b16 %v8344, %v8336
    %v8641 = vpack.c.b16 %v8345, %v8337
    %v8642 = vpack.c.b16 %v8346, %v8338
    %v8643 = vpack.c.b16 %v8347, %v8339
    %v8644 = vpack.c.b16 %v8348, %v8340
    %v8645 = vpack.c.b16 %v8349, %v8341
    %v8646 = vpack.c.b16 %v8358, %v8350
    %v8647 = vpack.c.b16 %v8359, %v8351
    %v8648 = vpack.c.b16 %v8360, %v8352
    %v8649 = vpack.c.b16 %v8361, %v8353
    %v8650 = vpack.c.b16 %v8362, %v8354
    %v8651 = vpack.c.b16 %v8363, %v8355
    %v8652 = vpack.c.b16 %v8364, %v8356
    %v8653 = vpack.c.b16 %v8365, %v8357
    %v8654 = vpack.c.b16 %v8374, %v8366
    %v8655 = vpack.c.b16 %v8375, %v8367
    %v8656 = vpack.c.b16 %v8376, %v8368
    %v8657 = vpack.c.b16 %v8377, %v8369
    %v8658 = vpack.c.b16 %v8378, %v8370
    %v8659 = vpack.c.b16 %v8379, %v8371
    %v8660 = vpack.c.b16 %v8380, %v8372
    %v8661 = vpack.c.b16 %v8381, %v8373
    %v8662 = vpack.c.b16 %v8390, %v8382
    %v8663 = vpack.c.b16 %v8391, %v8383
    %v8664 = vpack.c.b16 %v8392, %v8384
    %v8665 = vpack.c.b16 %v8393, %v8385
    %v8666 = vpack.c.b16 %v8394, %v8386
    %v8667 = vpack.c.b16 %v8395, %v8387
    %v8668 = vpack.c.b16 %v8396, %v8388
    %v8669 = vpack.c.b16 %v8397, %v8389
    %v8670 = vpack.c.b16 %v8406, %v8398
    %v8671 = vpack.c.b16 %v8407, %v8399
    %v8672 = vpack.c.b16 %v8408, %v8400
    %v8673 = vpack.c.b16 %v8409, %v8401
    %v8674 = vpack.c.b16 %v8410, %v8402
    %v8675 = vpack.c.b16 %v8411, %v8403
    %v8676 = vpack.c.b16 %v8412, %v8404
    %v8677 = vpack.c.b16 %v8413, %v8405
    %v8678 = vpack.c.b16 %v8422, %v8414
    %v8679 = vpack.c.b16 %v8423, %v8415
    %v8680 = vpack.c.b16 %v8424, %v8416
    %v8681 = vpack.c.b16 %v8425, %v8417
    %v8682 = vpack.c.b16 %v8426, %v8418
    %v8683 = vpack.c.b16 %v8427, %v8419
    %v8684 = vpack.c.b16 %v8428, %v8420
    %v8685 = vpack.c.b16 %v8429, %v8421
    %8942 = vmatprep.subr.bf16.mxu0 %v8431
    %8943 = vmatpush1.bf16.msra.mxu0 %v8430
    %8944 = vmatprep.subr.bf16.mxu0 %v8439
    %8945 = vmatpush1.bf16.msra.mxu0 %v8438
    %8946 = vmatprep.subr.bf16.mxu0 %v8447
    %8947 = vmatpush1.bf16.msra.mxu0 %v8446
    %8948 = vmatprep.subr.bf16.mxu0 %v8455
    %8949 = vmatpush1.bf16.msra.mxu0 %v8454
    %8950 = vmatprep.subr.bf16.mxu0 %v8463
    %8951 = vmatpush1.bf16.msra.mxu0 %v8462
    %8952 = vmatprep.subr.bf16.mxu0 %v8471
    %8953 = vmatpush1.bf16.msra.mxu0 %v8470
    %8954 = vmatprep.subr.bf16.mxu0 %v8479
    %8955 = vmatpush1.bf16.msra.mxu0 %v8478
    %8956 = vmatprep.subr.bf16.mxu0 %v8487
    %8957 = vmatpush1.bf16.msra.mxu0 %v8486
    %8958 = vmatprep.subr.bf16.mxu0 %v8495
    %8959 = vmatpush1.bf16.msra.mxu0 %v8494
    %8960 = vmatprep.subr.bf16.mxu0 %v8503
    %8961 = vmatpush1.bf16.msra.mxu0 %v8502
    %8962 = vmatprep.subr.bf16.mxu0 %v8511
    %8963 = vmatpush1.bf16.msra.mxu0 %v8510
    %8964 = vmatprep.subr.bf16.mxu0 %v8519
    %8965 = vmatpush1.bf16.msra.mxu0 %v8518
    %8966 = vmatprep.subr.bf16.mxu0 %v8527
    %8967 = vmatpush1.bf16.msra.mxu0 %v8526
    %8968 = vmatprep.subr.bf16.mxu0 %v8535
    %8969 = vmatpush1.bf16.msra.mxu0 %v8534
    %8970 = vmatprep.subr.bf16.mxu0 %v8543
    %8971 = vmatpush1.bf16.msra.mxu0 %v8542
    %8972 = vmatprep.subr.bf16.mxu0 %v8551
    %8973 = vmatpush1.bf16.msra.mxu0 %v8550
    %8974 = vmatprep.mubr.bf16.mxu0 %v7361
    %8975 = vmatmul.mubr.bf16.gmra.mrb[0].mxu0 %v7360
    %v8976 = vpop.f32.mrb[0].mxu0
    %v8977 = vadd.f32 %v7625, %v8976
    %v8978 = vpop.f32.mrb[0].mxu0
    %v8979 = vadd.f32 %v7629, %v8978
    %v8980 = vpop.f32.mrb[0].mxu0
    %v8981 = vadd.f32 %v7625, %v8980
    %v8982 = vpop.f32.mrb[0].mxu0
    %v8983 = vadd.f32 %v7629, %v8982
    %8984 = vdwg.mxu0
    %8985 = vmatprep.subr.bf16.mxu0 %v8559
    %8986 = vmatpush1.bf16.msra.mxu0 %v8558
    %8987 = vmatprep.subr.bf16.mxu0 %v8567
    %8988 = vmatpush1.bf16.msra.mxu0 %v8566
    %8989 = vmatprep.subr.bf16.mxu0 %v8575
    %8990 = vmatpush1.bf16.msra.mxu0 %v8574
    %8991 = vmatprep.subr.bf16.mxu0 %v8583
    %8992 = vmatpush1.bf16.msra.mxu0 %v8582
    %8993 = vmatprep.subr.bf16.mxu0 %v8591
    %8994 = vmatpush1.bf16.msra.mxu0 %v8590
    %8995 = vmatprep.subr.bf16.mxu0 %v8599
    %8996 = vmatpush1.bf16.msra.mxu0 %v8598
    %8997 = vmatprep.subr.bf16.mxu0 %v8607
    %8998 = vmatpush1.bf16.msra.mxu0 %v8606
    %8999 = vmatprep.subr.bf16.mxu0 %v8615
    %9000 = vmatpush1.bf16.msra.mxu0 %v8614
    %9001 = vmatprep.subr.bf16.mxu0 %v8623
    %9002 = vmatpush1.bf16.msra.mxu0 %v8622
    %9003 = vmatprep.subr.bf16.mxu0 %v8631
    %9004 = vmatpush1.bf16.msra.mxu0 %v8630
    %9005 = vmatprep.subr.bf16.mxu0 %v8639
    %9006 = vmatpush1.bf16.msra.mxu0 %v8638
    %9007 = vmatprep.subr.bf16.mxu0 %v8647
    %9008 = vmatpush1.bf16.msra.mxu0 %v8646
    %9009 = vmatprep.subr.bf16.mxu0 %v8655
    %9010 = vmatpush1.bf16.msra.mxu0 %v8654
    %9011 = vmatprep.subr.bf16.mxu0 %v8663
    %9012 = vmatpush1.bf16.msra.mxu0 %v8662
    %9013 = vmatprep.subr.bf16.mxu0 %v8671
    %9014 = vmatpush1.bf16.msra.mxu0 %v8670
    %9015 = vmatprep.subr.bf16.mxu0 %v8679
    %9016 = vmatpush1.bf16.msra.mxu0 %v8678
    %9017 = vmatprep.mubr.bf16.mxu0 %v7363
    %9018 = vmatmul.mubr.bf16.gmra.mrb[0].mxu0 %v7362
    %v9019 = vpop.f32.mrb[0].mxu0
    %v9020 = vadd.f32 %v8977, %v9019
    %v9021 = vpop.f32.mrb[0].mxu0
    %v9022 = vadd.f32 %v8979, %v9021
    %v9023 = vpop.f32.mrb[0].mxu0
    %v9024 = vadd.f32 %v8981, %v9023
    %v9025 = vpop.f32.mrb[0].mxu0
    %v9026 = vadd.f32 %v8983, %v9025
    %9027 = vdwg.mxu0
    %9028 = vmatprep.subr.bf16.mxu0 %v8433
    %9029 = vmatpush1.bf16.msra.mxu0 %v8432
    %9030 = vmatprep.subr.bf16.mxu0 %v8441
    %9031 = vmatpush1.bf16.msra.mxu0 %v8440
    %9032 = vmatprep.subr.bf16.mxu0 %v8449
    %9033 = vmatpush1.bf16.msra.mxu0 %v8448
    %9034 = vmatprep.subr.bf16.mxu0 %v8457
    %9035 = vmatpush1.bf16.msra.mxu0 %v8456
    %9036 = vmatprep.subr.bf16.mxu0 %v8465
    %9037 = vmatpush1.bf16.msra.mxu0 %v8464
    %9038 = vmatprep.subr.bf16.mxu0 %v8473
    %9039 = vmatpush1.bf16.msra.mxu0 %v8472
    %9040 = vmatprep.subr.bf16.mxu0 %v8481
    %9041 = vmatpush1.bf16.msra.mxu0 %v8480
    %9042 = vmatprep.subr.bf16.mxu0 %v8489
    %9043 = vmatpush1.bf16.msra.mxu0 %v8488
    %9044 = vmatprep.subr.bf16.mxu0 %v8497
    %9045 = vmatpush1.bf16.msra.mxu0 %v8496
    %9046 = vmatprep.subr.bf16.mxu0 %v8505
    %9047 = vmatpush1.bf16.msra.mxu0 %v8504
    %9048 = vmatprep.subr.bf16.mxu0 %v8513
    %9049 = vmatpush1.bf16.msra.mxu0 %v8512
    %9050 = vmatprep.subr.bf16.mxu0 %v8521
    %9051 = vmatpush1.bf16.msra.mxu0 %v8520
    %9052 = vmatprep.subr.bf16.mxu0 %v8529
    %9053 = vmatpush1.bf16.msra.mxu0 %v8528
    %9054 = vmatprep.subr.bf16.mxu0 %v8537
    %9055 = vmatpush1.bf16.msra.mxu0 %v8536
    %9056 = vmatprep.subr.bf16.mxu0 %v8545
    %9057 = vmatpush1.bf16.msra.mxu0 %v8544
    %9058 = vmatprep.subr.bf16.mxu0 %v8553
    %9059 = vmatpush1.bf16.msra.mxu0 %v8552
    %9060 = vmatprep.mubr.bf16.mxu0 %v7361
    %9061 = vmatmul.mubr.bf16.gmra.mrb[0].mxu0 %v7360
    %v9062 = vpop.f32.mrb[0].mxu0
    %v9063 = vadd.f32 %v7633, %v9062
    %v9064 = vpop.f32.mrb[0].mxu0
    %v9065 = vadd.f32 %v7637, %v9064
    %v9066 = vpop.f32.mrb[0].mxu0
    %v9067 = vadd.f32 %v7633, %v9066
    %v9068 = vpop.f32.mrb[0].mxu0
    %v9069 = vadd.f32 %v7637, %v9068
    %9070 = vdwg.mxu0
    %9071 = vmatprep.subr.bf16.mxu0 %v8561
    %9072 = vmatpush1.bf16.msra.mxu0 %v8560
    %9073 = vmatprep.subr.bf16.mxu0 %v8569
    %9074 = vmatpush1.bf16.msra.mxu0 %v8568
    %9075 = vmatprep.subr.bf16.mxu0 %v8577
    %9076 = vmatpush1.bf16.msra.mxu0 %v8576
    %9077 = vmatprep.subr.bf16.mxu0 %v8585
    %9078 = vmatpush1.bf16.msra.mxu0 %v8584
    %9079 = vmatprep.subr.bf16.mxu0 %v8593
    %9080 = vmatpush1.bf16.msra.mxu0 %v8592
    %9081 = vmatprep.subr.bf16.mxu0 %v8601
    %9082 = vmatpush1.bf16.msra.mxu0 %v8600
    %9083 = vmatprep.subr.bf16.mxu0 %v8609
    %9084 = vmatpush1.bf16.msra.mxu0 %v8608
    %9085 = vmatprep.subr.bf16.mxu0 %v8617
    %9086 = vmatpush1.bf16.msra.mxu0 %v8616
    %9087 = vmatprep.subr.bf16.mxu0 %v8625
    %9088 = vmatpush1.bf16.msra.mxu0 %v8624
    %9089 = vmatprep.subr.bf16.mxu0 %v8633
    %9090 = vmatpush1.bf16.msra.mxu0 %v8632
    %9091 = vmatprep.subr.bf16.mxu0 %v8641
    %9092 = vmatpush1.bf16.msra.mxu0 %v8640
    %9093 = vmatprep.subr.bf16.mxu0 %v8649
    %9094 = vmatpush1.bf16.msra.mxu0 %v8648
    %9095 = vmatprep.subr.bf16.mxu0 %v8657
    %9096 = vmatpush1.bf16.msra.mxu0 %v8656
    %9097 = vmatprep.subr.bf16.mxu0 %v8665
    %9098 = vmatpush1.bf16.msra.mxu0 %v8664
    %9099 = vmatprep.subr.bf16.mxu0 %v8673
    %9100 = vmatpush1.bf16.msra.mxu0 %v8672
    %9101 = vmatprep.subr.bf16.mxu0 %v8681
    %9102 = vmatpush1.bf16.msra.mxu0 %v8680
    %9103 = vmatprep.mubr.bf16.mxu0 %v7363
    %9104 = vmatmul.mubr.bf16.gmra.mrb[0].mxu0 %v7362
    %v9105 = vpop.f32.mrb[0].mxu0
    %v9106 = vadd.f32 %v9063, %v9105
    %v9107 = vpop.f32.mrb[0].mxu0
    %v9108 = vadd.f32 %v9065, %v9107
    %v9109 = vpop.f32.mrb[0].mxu0
    %v9110 = vadd.f32 %v9067, %v9109
    %v9111 = vpop.f32.mrb[0].mxu0
    %v9112 = vadd.f32 %v9069, %v9111
    %9113 = vdwg.mxu0
    %9114 = vmatprep.subr.bf16.mxu0 %v8435
    %9115 = vmatpush1.bf16.msra.mxu0 %v8434
    %9116 = vmatprep.subr.bf16.mxu0 %v8443
    %9117 = vmatpush1.bf16.msra.mxu0 %v8442
    %9118 = vmatprep.subr.bf16.mxu0 %v8451
    %9119 = vmatpush1.bf16.msra.mxu0 %v8450
    %9120 = vmatprep.subr.bf16.mxu0 %v8459
    %9121 = vmatpush1.bf16.msra.mxu0 %v8458
    %9122 = vmatprep.subr.bf16.mxu0 %v8467
    %9123 = vmatpush1.bf16.msra.mxu0 %v8466
    %9124 = vmatprep.subr.bf16.mxu0 %v8475
    %9125 = vmatpush1.bf16.msra.mxu0 %v8474
    %9126 = vmatprep.subr.bf16.mxu0 %v8483
    %9127 = vmatpush1.bf16.msra.mxu0 %v8482
    %9128 = vmatprep.subr.bf16.mxu0 %v8491
    %9129 = vmatpush1.bf16.msra.mxu0 %v8490
    %9130 = vmatprep.subr.bf16.mxu0 %v8499
    %9131 = vmatpush1.bf16.msra.mxu0 %v8498
    %9132 = vmatprep.subr.bf16.mxu0 %v8507
    %9133 = vmatpush1.bf16.msra.mxu0 %v8506
    %9134 = vmatprep.subr.bf16.mxu0 %v8515
    %9135 = vmatpush1.bf16.msra.mxu0 %v8514
    %9136 = vmatprep.subr.bf16.mxu0 %v8523
    %9137 = vmatpush1.bf16.msra.mxu0 %v8522
    %9138 = vmatprep.subr.bf16.mxu0 %v8531
    %9139 = vmatpush1.bf16.msra.mxu0 %v8530
    %9140 = vmatprep.subr.bf16.mxu0 %v8539
    %9141 = vmatpush1.bf16.msra.mxu0 %v8538
    %9142 = vmatprep.subr.bf16.mxu0 %v8547
    %9143 = vmatpush1.bf16.msra.mxu0 %v8546
    %9144 = vmatprep.subr.bf16.mxu0 %v8555
    %9145 = vmatpush1.bf16.msra.mxu0 %v8554
    %9146 = vmatprep.mubr.bf16.mxu0 %v7361
    %9147 = vmatmul.mubr.bf16.gmra.mrb[0].mxu0 %v7360
    %v9148 = vpop.f32.mrb[0].mxu0
    %v9149 = vadd.f32 %v7641, %v9148
    %v9150 = vpop.f32.mrb[0].mxu0
    %v9151 = vadd.f32 %v7645, %v9150
    %v9152 = vpop.f32.mrb[0].mxu0
    %v9153 = vadd.f32 %v7641, %v9152
    %v9154 = vpop.f32.mrb[0].mxu0
    %v9155 = vadd.f32 %v7645, %v9154
    %9156 = vdwg.mxu0
    %9157 = vmatprep.subr.bf16.mxu0 %v8563
    %9158 = vmatpush1.bf16.msra.mxu0 %v8562
    %9159 = vmatprep.subr.bf16.mxu0 %v8571
    %9160 = vmatpush1.bf16.msra.mxu0 %v8570
    %9161 = vmatprep.subr.bf16.mxu0 %v8579
    %9162 = vmatpush1.bf16.msra.mxu0 %v8578
    %9163 = vmatprep.subr.bf16.mxu0 %v8587
    %9164 = vmatpush1.bf16.msra.mxu0 %v8586
    %9165 = vmatprep.subr.bf16.mxu0 %v8595
    %9166 = vmatpush1.bf16.msra.mxu0 %v8594
    %9167 = vmatprep.subr.bf16.mxu0 %v8603
    %9168 = vmatpush1.bf16.msra.mxu0 %v8602
    %9169 = vmatprep.subr.bf16.mxu0 %v8611
    %9170 = vmatpush1.bf16.msra.mxu0 %v8610
    %9171 = vmatprep.subr.bf16.mxu0 %v8619
    %9172 = vmatpush1.bf16.msra.mxu0 %v8618
    %9173 = vmatprep.subr.bf16.mxu0 %v8627
    %9174 = vmatpush1.bf16.msra.mxu0 %v8626
    %9175 = vmatprep.subr.bf16.mxu0 %v8635
    %9176 = vmatpush1.bf16.msra.mxu0 %v8634
    %9177 = vmatprep.subr.bf16.mxu0 %v8643
    %9178 = vmatpush1.bf16.msra.mxu0 %v8642
    %9179 = vmatprep.subr.bf16.mxu0 %v8651
    %9180 = vmatpush1.bf16.msra.mxu0 %v8650
    %9181 = vmatprep.subr.bf16.mxu0 %v8659
    %9182 = vmatpush1.bf16.msra.mxu0 %v8658
    %9183 = vmatprep.subr.bf16.mxu0 %v8667
    %9184 = vmatpush1.bf16.msra.mxu0 %v8666
    %9185 = vmatprep.subr.bf16.mxu0 %v8675
    %9186 = vmatpush1.bf16.msra.mxu0 %v8674
    %9187 = vmatprep.subr.bf16.mxu0 %v8683
    %9188 = vmatpush1.bf16.msra.mxu0 %v8682
    %9189 = vmatprep.mubr.bf16.mxu0 %v7363
    %9190 = vmatmul.mubr.bf16.gmra.mrb[0].mxu0 %v7362
    %v9191 = vpop.f32.mrb[0].mxu0
    %v9192 = vadd.f32 %v9149, %v9191
    %v9193 = vpop.f32.mrb[0].mxu0
    %v9194 = vadd.f32 %v9151, %v9193
    %v9195 = vpop.f32.mrb[0].mxu0
    %v9196 = vadd.f32 %v9153, %v9195
    %v9197 = vpop.f32.mrb[0].mxu0
    %v9198 = vadd.f32 %v9155, %v9197
    %9199 = vdwg.mxu0
    %9200 = vmatprep.subr.bf16.mxu0 %v8437
    %9201 = vmatpush1.bf16.msra.mxu0 %v8436
    %9202 = vmatprep.subr.bf16.mxu0 %v8445
    %9203 = vmatpush1.bf16.msra.mxu0 %v8444
    %9204 = vmatprep.subr.bf16.mxu0 %v8453
    %9205 = vmatpush1.bf16.msra.mxu0 %v8452
    %9206 = vmatprep.subr.bf16.mxu0 %v8461
    %9207 = vmatpush1.bf16.msra.mxu0 %v8460
    %9208 = vmatprep.subr.bf16.mxu0 %v8469
    %9209 = vmatpush1.bf16.msra.mxu0 %v8468
    %9210 = vmatprep.subr.bf16.mxu0 %v8477
    %9211 = vmatpush1.bf16.msra.mxu0 %v8476
    %9212 = vmatprep.subr.bf16.mxu0 %v8485
    %9213 = vmatpush1.bf16.msra.mxu0 %v8484
    %9214 = vmatprep.subr.bf16.mxu0 %v8493
    %9215 = vmatpush1.bf16.msra.mxu0 %v8492
    %9216 = vmatprep.subr.bf16.mxu0 %v8501
    %9217 = vmatpush1.bf16.msra.mxu0 %v8500
    %9218 = vmatprep.subr.bf16.mxu0 %v8509
    %9219 = vmatpush1.bf16.msra.mxu0 %v8508
    %9220 = vmatprep.subr.bf16.mxu0 %v8517
    %9221 = vmatpush1.bf16.msra.mxu0 %v8516
    %9222 = vmatprep.subr.bf16.mxu0 %v8525
    %9223 = vmatpush1.bf16.msra.mxu0 %v8524
    %9224 = vmatprep.subr.bf16.mxu0 %v8533
    %9225 = vmatpush1.bf16.msra.mxu0 %v8532
    %9226 = vmatprep.subr.bf16.mxu0 %v8541
    %9227 = vmatpush1.bf16.msra.mxu0 %v8540
    %9228 = vmatprep.subr.bf16.mxu0 %v8549
    %9229 = vmatpush1.bf16.msra.mxu0 %v8548
    %9230 = vmatprep.subr.bf16.mxu0 %v8557
    %9231 = vmatpush1.bf16.msra.mxu0 %v8556
    %9232 = vmatprep.mubr.bf16.mxu0 %v7361
    %9233 = vmatmul.mubr.bf16.gmra.mrb[0].mxu0 %v7360
    %v9234 = vpop.f32.mrb[0].mxu0
    %v9235 = vadd.f32 %v7649, %v9234
    %v9236 = vpop.f32.mrb[0].mxu0
    %v9237 = vadd.f32 %v7653, %v9236
    %v9238 = vpop.f32.mrb[0].mxu0
    %v9239 = vadd.f32 %v7649, %v9238
    %v9240 = vpop.f32.mrb[0].mxu0
    %v9241 = vadd.f32 %v7653, %v9240
    %9242 = vdwg.mxu0
    %9243 = vmatprep.subr.bf16.mxu0 %v8565
    %9244 = vmatpush1.bf16.msra.mxu0 %v8564
    %9245 = vmatprep.subr.bf16.mxu0 %v8573
    %9246 = vmatpush1.bf16.msra.mxu0 %v8572
    %9247 = vmatprep.subr.bf16.mxu0 %v8581
    %9248 = vmatpush1.bf16.msra.mxu0 %v8580
    %9249 = vmatprep.subr.bf16.mxu0 %v8589
    %9250 = vmatpush1.bf16.msra.mxu0 %v8588
    %9251 = vmatprep.subr.bf16.mxu0 %v8597
    %9252 = vmatpush1.bf16.msra.mxu0 %v8596
    %9253 = vmatprep.subr.bf16.mxu0 %v8605
    %9254 = vmatpush1.bf16.msra.mxu0 %v8604
    %9255 = vmatprep.subr.bf16.mxu0 %v8613
    %9256 = vmatpush1.bf16.msra.mxu0 %v8612
    %9257 = vmatprep.subr.bf16.mxu0 %v8621
    %9258 = vmatpush1.bf16.msra.mxu0 %v8620
    %9259 = vmatprep.subr.bf16.mxu0 %v8629
    %9260 = vmatpush1.bf16.msra.mxu0 %v8628
    %9261 = vmatprep.subr.bf16.mxu0 %v8637
    %9262 = vmatpush1.bf16.msra.mxu0 %v8636
    %9263 = vmatprep.subr.bf16.mxu0 %v8645
    %9264 = vmatpush1.bf16.msra.mxu0 %v8644
    %9265 = vmatprep.subr.bf16.mxu0 %v8653
    %9266 = vmatpush1.bf16.msra.mxu0 %v8652
    %9267 = vmatprep.subr.bf16.mxu0 %v8661
    %9268 = vmatpush1.bf16.msra.mxu0 %v8660
    %9269 = vmatprep.subr.bf16.mxu0 %v8669
    %9270 = vmatpush1.bf16.msra.mxu0 %v8668
    %9271 = vmatprep.subr.bf16.mxu0 %v8677
    %9272 = vmatpush1.bf16.msra.mxu0 %v8676
    %9273 = vmatprep.subr.bf16.mxu0 %v8685
    %9274 = vmatpush1.bf16.msra.mxu0 %v8684
    %9275 = vmatprep.mubr.bf16.mxu0 %v7363
    %9276 = vmatmul.mubr.bf16.gmra.mrb[0].mxu0 %v7362
    %v9277 = vpop.f32.mrb[0].mxu0
    %v9278 = vadd.f32 %v9235, %v9277
    %v9279 = vpop.f32.mrb[0].mxu0
    %v9280 = vadd.f32 %v9237, %v9279
    %v9281 = vpop.f32.mrb[0].mxu0
    %v9282 = vadd.f32 %v9239, %v9281
    %v9283 = vpop.f32.mrb[0].mxu0
    %v9284 = vadd.f32 %v9241, %v9283
    %9285 = vdwg.mxu0
    %v9286 = vmul.f32 %v9020, 0.5
    %v9287 = vmul.f32 %v9022, 0.5
    %v9288 = vmul.f32 %v9106, 0.5
    %v9289 = vmul.f32 %v9108, 0.5
    %v9290 = vmul.f32 %v9192, 0.5
    %v9291 = vmul.f32 %v9194, 0.5
    %v9292 = vmul.f32 %v9278, 0.5
    %v9293 = vmul.f32 %v9280, 0.5
    %v9294 = vmul.f32 %v9024, 0.5
    %v9295 = vmul.f32 %v9026, 0.5
    %v9296 = vmul.f32 %v9110, 0.5
    %v9297 = vmul.f32 %v9112, 0.5
    %v9298 = vmul.f32 %v9196, 0.5
    %v9299 = vmul.f32 %v9198, 0.5
    %v9300 = vmul.f32 %v9282, 0.5
    %v9301 = vmul.f32 %v9284, 0.5
    %v9302 = vmul.f32 %v9020, 0.70710677
    %v9303 = vmul.f32 %v9022, 0.70710677
    %v9304 = vmul.f32 %v9106, 0.70710677
    %v9305 = vmul.f32 %v9108, 0.70710677
    %v9306 = vmul.f32 %v9192, 0.70710677
    %v9307 = vmul.f32 %v9194, 0.70710677
    %v9308 = vmul.f32 %v9278, 0.70710677
    %v9309 = vmul.f32 %v9280, 0.70710677
    %v9310 = vmul.f32 %v9024, 0.70710677
    %v9311 = vmul.f32 %v9026, 0.70710677
    %v9312 = vmul.f32 %v9110, 0.70710677
    %v9313 = vmul.f32 %v9112, 0.70710677
    %v9314 = vmul.f32 %v9196, 0.70710677
    %v9315 = vmul.f32 %v9198, 0.70710677
    %v9316 = vmul.f32 %v9282, 0.70710677
    %v9317 = vmul.f32 %v9284, 0.70710677
    %v9318 = verf.f32.pop %v9302
    %v9319 = verf.f32.pop %v9303
    %v9320 = verf.f32.pop %v9304
    %v9321 = verf.f32.pop %v9305
    %v9322 = verf.f32.pop %v9306
    %v9323 = verf.f32.pop %v9307
    %v9324 = verf.f32.pop %v9308
    %v9325 = verf.f32.pop %v9309
    %v9326 = verf.f32.pop %v9310
    %v9327 = verf.f32.pop %v9311
    %v9328 = verf.f32.pop %v9312
    %v9329 = verf.f32.pop %v9313
    %v9330 = verf.f32.pop %v9314
    %v9331 = verf.f32.pop %v9315
    %v9332 = verf.f32.pop %v9316
    %v9333 = verf.f32.pop %v9317
    %v9334 = vadd.f32 %v9318, 1.0
    %v9335 = vadd.f32 %v9319, 1.0
    %v9336 = vadd.f32 %v9320, 1.0
    %v9337 = vadd.f32 %v9321, 1.0
    %v9338 = vadd.f32 %v9322, 1.0
    %v9339 = vadd.f32 %v9323, 1.0
    %v9340 = vadd.f32 %v9324, 1.0
    %v9341 = vadd.f32 %v9325, 1.0
    %v9342 = vadd.f32 %v9326, 1.0
    %v9343 = vadd.f32 %v9327, 1.0
    %v9344 = vadd.f32 %v9328, 1.0
    %v9345 = vadd.f32 %v9329, 1.0
    %v9346 = vadd.f32 %v9330, 1.0
    %v9347 = vadd.f32 %v9331, 1.0
    %v9348 = vadd.f32 %v9332, 1.0
    %v9349 = vadd.f32 %v9333, 1.0
    %v9350 = vmul.f32 %v9286, %v9334
    %v9351 = vmul.f32 %v9287, %v9335
    %v9352 = vmul.f32 %v9288, %v9336
    %v9353 = vmul.f32 %v9289, %v9337
    %v9354 = vmul.f32 %v9290, %v9338
    %v9355 = vmul.f32 %v9291, %v9339
    %v9356 = vmul.f32 %v9292, %v9340
    %v9357 = vmul.f32 %v9293, %v9341
    %v9358 = vmul.f32 %v9294, %v9342
    %v9359 = vmul.f32 %v9295, %v9343
    %v9360 = vmul.f32 %v9296, %v9344
    %v9361 = vmul.f32 %v9297, %v9345
    %v9362 = vmul.f32 %v9298, %v9346
    %v9363 = vmul.f32 %v9299, %v9347
    %v9364 = vmul.f32 %v9300, %v9348
    %v9365 = vmul.f32 %v9301, %v9349
    %v9366 = vpack.c.bf16 %v9358, %v9350
    %v9367 = vpack.c.bf16 %v9359, %v9351
    %v9368 = vpack.c.bf16 %v9360, %v9352
    %v9369 = vpack.c.bf16 %v9361, %v9353
    %v9370 = vpack.c.bf16 %v9362, %v9354
    %v9371 = vpack.c.bf16 %v9363, %v9355
    %v9372 = vpack.c.bf16 %v9364, %v9356
    %v9373 = vpack.c.bf16 %v9365, %v9357
    %v9374 = vld [vmem:[#allocation27] sm:$0xff]
    %v9375 = vld [vmem:[#allocation27 + $0x8] sm:$0xff]
    %v9376 = vld [vmem:[#allocation27 + $0x10] sm:$0xff]
    %v9377 = vld [vmem:[#allocation27 + $0x18] sm:$0xf]
    %v9378 = vld [vmem:[#allocation27 + $0x1c] sm:$0xff]
    %v9379 = vld [vmem:[#allocation27 + $0x24] sm:$0xff]
    %v9380 = vld [vmem:[#allocation27 + $0x2c] sm:$0xff]
    %v9381 = vld [vmem:[#allocation27 + $0x34] sm:$0xf]
    %v9382 = vld [vmem:[#allocation27 + $0x38] sm:$0xff]
    %v9383 = vld [vmem:[#allocation27 + $0x40] sm:$0xff]
    %v9384 = vld [vmem:[#allocation27 + $0x48] sm:$0xff]
    %v9385 = vld [vmem:[#allocation27 + $0x50] sm:$0xf]
    %v9386 = vld [vmem:[#allocation27 + $0x54] sm:$0xff]
    %v9387 = vld [vmem:[#allocation27 + $0x5c] sm:$0xff]
    %v9388 = vld [vmem:[#allocation27 + $0x64] sm:$0xff]
    %v9389 = vld [vmem:[#allocation27 + $0x6c] sm:$0xf]
    %v9390 = vld [vmem:[#allocation27 + $0x70] sm:$0xff]
    %v9391 = vld [vmem:[#allocation27 + $0x78] sm:$0xff]
    %v9392 = vld [vmem:[#allocation27 + $0x80] sm:$0xff]
    %v9393 = vld [vmem:[#allocation27 + $0x88] sm:$0xf]
    %v9394 = vld [vmem:[#allocation27 + $0x8c] sm:$0xff]
    %v9395 = vld [vmem:[#allocation27 + $0x94] sm:$0xff]
    %v9396 = vld [vmem:[#allocation27 + $0x9c] sm:$0xff]
    %v9397 = vld [vmem:[#allocation27 + $0xa4] sm:$0xf]
    %v9398 = vld [vmem:[#allocation27 + $0xa8] sm:$0xff]
    %v9399 = vld [vmem:[#allocation27 + $0xb0] sm:$0xff]
    %v9400 = vld [vmem:[#allocation27 + $0xb8] sm:$0xff]
    %v9401 = vld [vmem:[#allocation27 + $0xc0] sm:$0xf]
    %v9402 = vld [vmem:[#allocation27 + $0xc4] sm:$0xff]
    %v9403 = vld [vmem:[#allocation27 + $0xcc] sm:$0xff]
    %v9404 = vld [vmem:[#allocation27 + $0xd4] sm:$0xff]
    %v9405 = vld [vmem:[#allocation27 + $0xdc] sm:$0xf]
    %v9406 = vld [vmem:[#allocation27 + $0xe0] sm:$0xff]
    %v9407 = vld [vmem:[#allocation27 + $0xe8] sm:$0xff]
    %v9408 = vld [vmem:[#allocation27 + $0xf0] sm:$0xff]
    %v9409 = vld [vmem:[#allocation27 + $0xf8] sm:$0xf]
    %v9410 = vld [vmem:[#allocation27 + $0xfc] sm:$0xff]
    %v9411 = vld [vmem:[#allocation27 + $0x104] sm:$0xff]
    %v9412 = vld [vmem:[#allocation27 + $0x10c] sm:$0xff]
    %v9413 = vld [vmem:[#allocation27 + $0x114] sm:$0xf]
    %v9414 = vld [vmem:[#allocation27 + $0x118] sm:$0xff]
    %v9415 = vld [vmem:[#allocation27 + $0x120] sm:$0xff]
    %v9416 = vld [vmem:[#allocation27 + $0x128] sm:$0xff]
    %v9417 = vld [vmem:[#allocation27 + $0x130] sm:$0xf]
    %v9418 = vld [vmem:[#allocation27 + $0x134] sm:$0xff]
    %v9419 = vld [vmem:[#allocation27 + $0x13c] sm:$0xff]
    %v9420 = vld [vmem:[#allocation27 + $0x144] sm:$0xff]
    %v9421 = vld [vmem:[#allocation27 + $0x14c] sm:$0xf]
    %v9422 = vld [vmem:[#allocation27 + $0x150] sm:$0xff]
    %v9423 = vld [vmem:[#allocation27 + $0x158] sm:$0xff]
    %v9424 = vld [vmem:[#allocation27 + $0x160] sm:$0xff]
    %v9425 = vld [vmem:[#allocation27 + $0x168] sm:$0xf]
    %v9426 = vld [vmem:[#allocation27 + $0x16c] sm:$0xff]
    %v9427 = vld [vmem:[#allocation27 + $0x174] sm:$0xff]
    %v9428 = vld [vmem:[#allocation27 + $0x17c] sm:$0xff]
    %v9429 = vld [vmem:[#allocation27 + $0x184] sm:$0xf]
    %v9430 = vld [vmem:[#allocation27 + $0x188] sm:$0xff]
    %v9431 = vld [vmem:[#allocation27 + $0x190] sm:$0xff]
    %v9432 = vld [vmem:[#allocation27 + $0x198] sm:$0xff]
    %v9433 = vld [vmem:[#allocation27 + $0x1a0] sm:$0xf]
    %v9434 = vld [vmem:[#allocation27 + $0x1a4] sm:$0xff]
    %v9435 = vld [vmem:[#allocation27 + $0x1ac] sm:$0xff]
    %v9436 = vld [vmem:[#allocation27 + $0x1b4] sm:$0xff]
    %v9437 = vld [vmem:[#allocation27 + $0x1bc] sm:$0xf]
    %v9438 = vld [vmem:[#allocation27 + $0x1c0] sm:$0xff]
    %v9439 = vld [vmem:[#allocation27 + $0x1c8] sm:$0xff]
    %v9440 = vld [vmem:[#allocation27 + $0x1d0] sm:$0xff]
    %v9441 = vld [vmem:[#allocation27 + $0x1d8] sm:$0xf]
    %v9442 = vld [vmem:[#allocation27 + $0x1dc] sm:$0xff]
    %v9443 = vld [vmem:[#allocation27 + $0x1e4] sm:$0xff]
    %v9444 = vld [vmem:[#allocation27 + $0x1ec] sm:$0xff]
    %v9445 = vld [vmem:[#allocation27 + $0x1f4] sm:$0xf]
    %v9446 = vld [vmem:[#allocation27 + $0x1f8] sm:$0xff]
    %v9447 = vld [vmem:[#allocation27 + $0x200] sm:$0xff]
    %v9448 = vld [vmem:[#allocation27 + $0x208] sm:$0xff]
    %v9449 = vld [vmem:[#allocation27 + $0x210] sm:$0xf]
    %v9450 = vld [vmem:[#allocation27 + $0x214] sm:$0xff]
    %v9451 = vld [vmem:[#allocation27 + $0x21c] sm:$0xff]
    %v9452 = vld [vmem:[#allocation27 + $0x224] sm:$0xff]
    %v9453 = vld [vmem:[#allocation27 + $0x22c] sm:$0xf]
    %v9454 = vld [vmem:[#allocation27 + $0x230] sm:$0xff]
    %v9455 = vld [vmem:[#allocation27 + $0x238] sm:$0xff]
    %v9456 = vld [vmem:[#allocation27 + $0x240] sm:$0xff]
    %v9457 = vld [vmem:[#allocation27 + $0x248] sm:$0xf]
    %v9458 = vld [vmem:[#allocation27 + $0x24c] sm:$0xff]
    %v9459 = vld [vmem:[#allocation27 + $0x254] sm:$0xff]
    %v9460 = vld [vmem:[#allocation27 + $0x25c] sm:$0xff]
    %v9461 = vld [vmem:[#allocation27 + $0x264] sm:$0xf]
    %v9462 = vld [vmem:[#allocation27 + $0x268] sm:$0xff]
    %v9463 = vld [vmem:[#allocation27 + $0x270] sm:$0xff]
    %v9464 = vld [vmem:[#allocation27 + $0x278] sm:$0xff]
    %v9465 = vld [vmem:[#allocation27 + $0x280] sm:$0xf]
    %v9466 = vld [vmem:[#allocation27 + $0x284] sm:$0xff]
    %v9467 = vld [vmem:[#allocation27 + $0x28c] sm:$0xff]
    %v9468 = vld [vmem:[#allocation27 + $0x294] sm:$0xff]
    %v9469 = vld [vmem:[#allocation27 + $0x29c] sm:$0xf]
    %v9470 = vld [vmem:[#allocation27 + $0x2a0] sm:$0xff]
    %v9471 = vld [vmem:[#allocation27 + $0x2a8] sm:$0xff]
    %v9472 = vld [vmem:[#allocation27 + $0x2b0] sm:$0xff]
    %v9473 = vld [vmem:[#allocation27 + $0x2b8] sm:$0xf]
    %v9474 = vld [vmem:[#allocation27 + $0x2bc] sm:$0xff]
    %v9475 = vld [vmem:[#allocation27 + $0x2c4] sm:$0xff]
    %v9476 = vld [vmem:[#allocation27 + $0x2cc] sm:$0xff]
    %v9477 = vld [vmem:[#allocation27 + $0x2d4] sm:$0xf]
    %v9478 = vld [vmem:[#allocation27 + $0x2d8] sm:$0xff]
    %v9479 = vld [vmem:[#allocation27 + $0x2e0] sm:$0xff]
    %v9480 = vld [vmem:[#allocation27 + $0x2e8] sm:$0xff]
    %v9481 = vld [vmem:[#allocation27 + $0x2f0] sm:$0xf]
    %v9482 = vld [vmem:[#allocation27 + $0x2f4] sm:$0xff]
    %v9483 = vld [vmem:[#allocation27 + $0x2fc] sm:$0xff]
    %v9484 = vld [vmem:[#allocation27 + $0x304] sm:$0xff]
    %v9485 = vld [vmem:[#allocation27 + $0x30c] sm:$0xf]
    %v9486 = vld [vmem:[#allocation27 + $0x310] sm:$0xff]
    %v9487 = vld [vmem:[#allocation27 + $0x318] sm:$0xff]
    %v9488 = vld [vmem:[#allocation27 + $0x320] sm:$0xff]
    %v9489 = vld [vmem:[#allocation27 + $0x328] sm:$0xf]
    %v9490 = vld [vmem:[#allocation27 + $0x32c] sm:$0xff]
    %v9491 = vld [vmem:[#allocation27 + $0x334] sm:$0xff]
    %v9492 = vld [vmem:[#allocation27 + $0x33c] sm:$0xff]
    %v9493 = vld [vmem:[#allocation27 + $0x344] sm:$0xf]
    %v9494 = vld [vmem:[#allocation27 + $0x348] sm:$0xff]
    %v9495 = vld [vmem:[#allocation27 + $0x350] sm:$0xff]
    %v9496 = vld [vmem:[#allocation27 + $0x358] sm:$0xff]
    %v9497 = vld [vmem:[#allocation27 + $0x360] sm:$0xf]
    %v9498 = vld [vmem:[#allocation27 + $0x364] sm:$0xff]
    %v9499 = vld [vmem:[#allocation27 + $0x36c] sm:$0xff]
    %v9500 = vld [vmem:[#allocation27 + $0x374] sm:$0xff]
    %v9501 = vld [vmem:[#allocation27 + $0x37c] sm:$0xf]
    %v9502 = vld [vmem:[#allocation27 + $0x380] sm:$0xff]
    %v9503 = vld [vmem:[#allocation27 + $0x388] sm:$0xff]
    %v9504 = vld [vmem:[#allocation27 + $0x390] sm:$0xff]
    %v9505 = vld [vmem:[#allocation27 + $0x398] sm:$0xf]
    %v9506 = vld [vmem:[#allocation27 + $0x39c] sm:$0xff]
    %v9507 = vld [vmem:[#allocation27 + $0x3a4] sm:$0xff]
    %v9508 = vld [vmem:[#allocation27 + $0x3ac] sm:$0xff]
    %v9509 = vld [vmem:[#allocation27 + $0x3b4] sm:$0xf]
    %v9510 = vld [vmem:[#allocation27 + $0x3b8] sm:$0xff]
    %v9511 = vld [vmem:[#allocation27 + $0x3c0] sm:$0xff]
    %v9512 = vld [vmem:[#allocation27 + $0x3c8] sm:$0xff]
    %v9513 = vld [vmem:[#allocation27 + $0x3d0] sm:$0xf]
    %v9514 = vld [vmem:[#allocation27 + $0x3d4] sm:$0xff]
    %v9515 = vld [vmem:[#allocation27 + $0x3dc] sm:$0xff]
    %v9516 = vld [vmem:[#allocation27 + $0x3e4] sm:$0xff]
    %v9517 = vld [vmem:[#allocation27 + $0x3ec] sm:$0xf]
    %v9518 = vld [vmem:[#allocation27 + $0x3f0] sm:$0xff]
    %v9519 = vld [vmem:[#allocation27 + $0x3f8] sm:$0xff]
    %v9520 = vld [vmem:[#allocation27 + $0x400] sm:$0xff]
    %v9521 = vld [vmem:[#allocation27 + $0x408] sm:$0xf]
    %v9522 = vld [vmem:[#allocation27 + $0x40c] sm:$0xff]
    %v9523 = vld [vmem:[#allocation27 + $0x414] sm:$0xff]
    %v9524 = vld [vmem:[#allocation27 + $0x41c] sm:$0xff]
    %v9525 = vld [vmem:[#allocation27 + $0x424] sm:$0xf]
    %v9526 = vld [vmem:[#allocation27 + $0x428] sm:$0xff]
    %v9527 = vld [vmem:[#allocation27 + $0x430] sm:$0xff]
    %v9528 = vld [vmem:[#allocation27 + $0x438] sm:$0xff]
    %v9529 = vld [vmem:[#allocation27 + $0x440] sm:$0xf]
    %v9530 = vld [vmem:[#allocation27 + $0x444] sm:$0xff]
    %v9531 = vld [vmem:[#allocation27 + $0x44c] sm:$0xff]
    %v9532 = vld [vmem:[#allocation27 + $0x454] sm:$0xff]
    %v9533 = vld [vmem:[#allocation27 + $0x45c] sm:$0xf]
    %v9534 = vld [vmem:[#allocation27 + $0x460] sm:$0xff]
    %v9535 = vld [vmem:[#allocation27 + $0x468] sm:$0xff]
    %v9536 = vld [vmem:[#allocation27 + $0x470] sm:$0xff]
    %v9537 = vld [vmem:[#allocation27 + $0x478] sm:$0xf]
    %v9538 = vld [vmem:[#allocation27 + $0x47c] sm:$0xff]
    %v9539 = vld [vmem:[#allocation27 + $0x484] sm:$0xff]
    %v9540 = vld [vmem:[#allocation27 + $0x48c] sm:$0xff]
    %v9541 = vld [vmem:[#allocation27 + $0x494] sm:$0xf]
    %v9542 = vld [vmem:[#allocation27 + $0x498] sm:$0xff]
    %v9543 = vld [vmem:[#allocation27 + $0x4a0] sm:$0xff]
    %v9544 = vld [vmem:[#allocation27 + $0x4a8] sm:$0xff]
    %v9545 = vld [vmem:[#allocation27 + $0x4b0] sm:$0xf]
    %v9546 = vld [vmem:[#allocation27 + $0x4b4] sm:$0xff]
    %v9547 = vld [vmem:[#allocation27 + $0x4bc] sm:$0xff]
    %v9548 = vld [vmem:[#allocation27 + $0x4c4] sm:$0xff]
    %v9549 = vld [vmem:[#allocation27 + $0x4cc] sm:$0xf]
    %v9550 = vld [vmem:[#allocation27 + $0x4d0] sm:$0xff]
    %v9551 = vld [vmem:[#allocation27 + $0x4d8] sm:$0xff]
    %v9552 = vld [vmem:[#allocation27 + $0x4e0] sm:$0xff]
    %v9553 = vld [vmem:[#allocation27 + $0x4e8] sm:$0xf]
    %v9554 = vld [vmem:[#allocation27 + $0x4ec] sm:$0xff]
    %v9555 = vld [vmem:[#allocation27 + $0x4f4] sm:$0xff]
    %v9556 = vld [vmem:[#allocation27 + $0x4fc] sm:$0xff]
    %v9557 = vld [vmem:[#allocation27 + $0x504] sm:$0xf]
    %v9558 = vld [vmem:[#allocation27 + $0x508] sm:$0xff]
    %v9559 = vld [vmem:[#allocation27 + $0x510] sm:$0xff]
    %v9560 = vld [vmem:[#allocation27 + $0x518] sm:$0xff]
    %v9561 = vld [vmem:[#allocation27 + $0x520] sm:$0xf]
    %v9562 = vld [vmem:[#allocation27 + $0x524] sm:$0xff]
    %v9563 = vld [vmem:[#allocation27 + $0x52c] sm:$0xff]
    %v9564 = vld [vmem:[#allocation27 + $0x534] sm:$0xff]
    %v9565 = vld [vmem:[#allocation27 + $0x53c] sm:$0xf]
    %v9566 = vld [vmem:[#allocation27 + $0x540] sm:$0xff]
    %v9567 = vld [vmem:[#allocation27 + $0x548] sm:$0xff]
    %v9568 = vld [vmem:[#allocation27 + $0x550] sm:$0xff]
    %v9569 = vld [vmem:[#allocation27 + $0x558] sm:$0xf]
    %v9570 = vld [vmem:[#allocation27 + $0x55c] sm:$0xff]
    %v9571 = vld [vmem:[#allocation27 + $0x564] sm:$0xff]
    %v9572 = vld [vmem:[#allocation27 + $0x56c] sm:$0xff]
    %v9573 = vld [vmem:[#allocation27 + $0x574] sm:$0xf]
    %v9574 = vld [vmem:[#allocation27 + $0x578] sm:$0xff]
    %v9575 = vld [vmem:[#allocation27 + $0x580] sm:$0xff]
    %v9576 = vld [vmem:[#allocation27 + $0x588] sm:$0xff]
    %v9577 = vld [vmem:[#allocation27 + $0x590] sm:$0xf]
    %v9578 = vld [vmem:[#allocation27 + $0x594] sm:$0xff]
    %v9579 = vld [vmem:[#allocation27 + $0x59c] sm:$0xff]
    %v9580 = vld [vmem:[#allocation27 + $0x5a4] sm:$0xff]
    %v9581 = vld [vmem:[#allocation27 + $0x5ac] sm:$0xf]
    %v9582 = vld [vmem:[#allocation27 + $0x5b0] sm:$0xff]
    %v9583 = vld [vmem:[#allocation27 + $0x5b8] sm:$0xff]
    %v9584 = vld [vmem:[#allocation27 + $0x5c0] sm:$0xff]
    %v9585 = vld [vmem:[#allocation27 + $0x5c8] sm:$0xf]
    %v9586 = vld [vmem:[#allocation27 + $0x5cc] sm:$0xff]
    %v9587 = vld [vmem:[#allocation27 + $0x5d4] sm:$0xff]
    %v9588 = vld [vmem:[#allocation27 + $0x5dc] sm:$0xff]
    %v9589 = vld [vmem:[#allocation27 + $0x5e4] sm:$0xf]
    %v9590 = vld [vmem:[#allocation27 + $0x5e8] sm:$0xff]
    %v9591 = vld [vmem:[#allocation27 + $0x5f0] sm:$0xff]
    %v9592 = vld [vmem:[#allocation27 + $0x5f8] sm:$0xff]
    %v9593 = vld [vmem:[#allocation27 + $0x600] sm:$0xf]
    %v9594 = vld [vmem:[#allocation27 + $0x604] sm:$0xff]
    %v9595 = vld [vmem:[#allocation27 + $0x60c] sm:$0xff]
    %v9596 = vld [vmem:[#allocation27 + $0x614] sm:$0xff]
    %v9597 = vld [vmem:[#allocation27 + $0x61c] sm:$0xf]
    %v9598 = vld [vmem:[#allocation27 + $0x620] sm:$0xff]
    %v9599 = vld [vmem:[#allocation27 + $0x628] sm:$0xff]
    %v9600 = vld [vmem:[#allocation27 + $0x630] sm:$0xff]
    %v9601 = vld [vmem:[#allocation27 + $0x638] sm:$0xf]
    %v9602 = vld [vmem:[#allocation27 + $0x63c] sm:$0xff]
    %v9603 = vld [vmem:[#allocation27 + $0x644] sm:$0xff]
    %v9604 = vld [vmem:[#allocation27 + $0x64c] sm:$0xff]
    %v9605 = vld [vmem:[#allocation27 + $0x654] sm:$0xf]
    %v9606 = vld [vmem:[#allocation27 + $0x658] sm:$0xff]
    %v9607 = vld [vmem:[#allocation27 + $0x660] sm:$0xff]
    %v9608 = vld [vmem:[#allocation27 + $0x668] sm:$0xff]
    %v9609 = vld [vmem:[#allocation27 + $0x670] sm:$0xf]
    %v9610 = vld [vmem:[#allocation27 + $0x674] sm:$0xff]
    %v9611 = vld [vmem:[#allocation27 + $0x67c] sm:$0xff]
    %v9612 = vld [vmem:[#allocation27 + $0x684] sm:$0xff]
    %v9613 = vld [vmem:[#allocation27 + $0x68c] sm:$0xf]
    %v9614 = vld [vmem:[#allocation27 + $0x690] sm:$0xff]
    %v9615 = vld [vmem:[#allocation27 + $0x698] sm:$0xff]
    %v9616 = vld [vmem:[#allocation27 + $0x6a0] sm:$0xff]
    %v9617 = vld [vmem:[#allocation27 + $0x6a8] sm:$0xf]
    %v9618 = vld [vmem:[#allocation27 + $0x6ac] sm:$0xff]
    %v9619 = vld [vmem:[#allocation27 + $0x6b4] sm:$0xff]
    %v9620 = vld [vmem:[#allocation27 + $0x6bc] sm:$0xff]
    %v9621 = vld [vmem:[#allocation27 + $0x6c4] sm:$0xf]
    %v9622 = vld [vmem:[#allocation27 + $0x6c8] sm:$0xff]
    %v9623 = vld [vmem:[#allocation27 + $0x6d0] sm:$0xff]
    %v9624 = vld [vmem:[#allocation27 + $0x6d8] sm:$0xff]
    %v9625 = vld [vmem:[#allocation27 + $0x6e0] sm:$0xf]
    %v9626 = vld [vmem:[#allocation27 + $0x6e4] sm:$0xff]
    %v9627 = vld [vmem:[#allocation27 + $0x6ec] sm:$0xff]
    %v9628 = vld [vmem:[#allocation27 + $0x6f4] sm:$0xff]
    %v9629 = vld [vmem:[#allocation27 + $0x6fc] sm:$0xf]
    %v9630 = vld [vmem:[#allocation27 + $0x700] sm:$0xff]
    %v9631 = vld [vmem:[#allocation27 + $0x708] sm:$0xff]
    %v9632 = vld [vmem:[#allocation27 + $0x710] sm:$0xff]
    %v9633 = vld [vmem:[#allocation27 + $0x718] sm:$0xf]
    %v9634 = vld [vmem:[#allocation27 + $0x71c] sm:$0xff]
    %v9635 = vld [vmem:[#allocation27 + $0x724] sm:$0xff]
    %v9636 = vld [vmem:[#allocation27 + $0x72c] sm:$0xff]
    %v9637 = vld [vmem:[#allocation27 + $0x734] sm:$0xf]
    %v9638 = vld [vmem:[#allocation27 + $0x738] sm:$0xff]
    %v9639 = vld [vmem:[#allocation27 + $0x740] sm:$0xff]
    %v9640 = vld [vmem:[#allocation27 + $0x748] sm:$0xff]
    %v9641 = vld [vmem:[#allocation27 + $0x750] sm:$0xf]
    %v9642 = vld [vmem:[#allocation27 + $0x754] sm:$0xff]
    %v9643 = vld [vmem:[#allocation27 + $0x75c] sm:$0xff]
    %v9644 = vld [vmem:[#allocation27 + $0x764] sm:$0xff]
    %v9645 = vld [vmem:[#allocation27 + $0x76c] sm:$0xf]
    %v9646 = vld [vmem:[#allocation27 + $0x770] sm:$0xff]
    %v9647 = vld [vmem:[#allocation27 + $0x778] sm:$0xff]
    %v9648 = vld [vmem:[#allocation27 + $0x780] sm:$0xff]
    %v9649 = vld [vmem:[#allocation27 + $0x788] sm:$0xf]
    %v9650 = vld [vmem:[#allocation27 + $0x78c] sm:$0xff]
    %v9651 = vld [vmem:[#allocation27 + $0x794] sm:$0xff]
    %v9652 = vld [vmem:[#allocation27 + $0x79c] sm:$0xff]
    %v9653 = vld [vmem:[#allocation27 + $0x7a4] sm:$0xf]
    %v9654 = vld [vmem:[#allocation27 + $0x7a8] sm:$0xff]
    %v9655 = vld [vmem:[#allocation27 + $0x7b0] sm:$0xff]
    %v9656 = vld [vmem:[#allocation27 + $0x7b8] sm:$0xff]
    %v9657 = vld [vmem:[#allocation27 + $0x7c0] sm:$0xf]
    %v9658 = vld [vmem:[#allocation27 + $0x7c4] sm:$0xff]
    %v9659 = vld [vmem:[#allocation27 + $0x7cc] sm:$0xff]
    %v9660 = vld [vmem:[#allocation27 + $0x7d4] sm:$0xff]
    %v9661 = vld [vmem:[#allocation27 + $0x7dc] sm:$0xf]
    %v9662 = vld [vmem:[#allocation27 + $0x7e0] sm:$0xff]
    %v9663 = vld [vmem:[#allocation27 + $0x7e8] sm:$0xff]
    %v9664 = vld [vmem:[#allocation27 + $0x7f0] sm:$0xff]
    %v9665 = vld [vmem:[#allocation27 + $0x7f8] sm:$0xf]
    %v9666 = vld [vmem:[#allocation27 + $0x7fc] sm:$0xff]
    %v9667 = vld [vmem:[#allocation27 + $0x804] sm:$0xff]
    %v9668 = vld [vmem:[#allocation27 + $0x80c] sm:$0xff]
    %v9669 = vld [vmem:[#allocation27 + $0x814] sm:$0xf]
    %v9670 = vld [vmem:[#allocation27 + $0x818] sm:$0xff]
    %v9671 = vld [vmem:[#allocation27 + $0x820] sm:$0xff]
    %v9672 = vld [vmem:[#allocation27 + $0x828] sm:$0xff]
    %v9673 = vld [vmem:[#allocation27 + $0x830] sm:$0xf]
    %v9674 = vld [vmem:[#allocation27 + $0x834] sm:$0xff]
    %v9675 = vld [vmem:[#allocation27 + $0x83c] sm:$0xff]
    %v9676 = vld [vmem:[#allocation27 + $0x844] sm:$0xff]
    %v9677 = vld [vmem:[#allocation27 + $0x84c] sm:$0xf]
    %v9678 = vld [vmem:[#allocation27 + $0x850] sm:$0xff]
    %v9679 = vld [vmem:[#allocation27 + $0x858] sm:$0xff]
    %v9680 = vld [vmem:[#allocation27 + $0x860] sm:$0xff]
    %v9681 = vld [vmem:[#allocation27 + $0x868] sm:$0xf]
    %v9682 = vld [vmem:[#allocation27 + $0x86c] sm:$0xff]
    %v9683 = vld [vmem:[#allocation27 + $0x874] sm:$0xff]
    %v9684 = vld [vmem:[#allocation27 + $0x87c] sm:$0xff]
    %v9685 = vld [vmem:[#allocation27 + $0x884] sm:$0xf]
    %v9686 = vld [vmem:[#allocation27 + $0x888] sm:$0xff]
    %v9687 = vld [vmem:[#allocation27 + $0x890] sm:$0xff]
    %v9688 = vld [vmem:[#allocation27 + $0x898] sm:$0xff]
    %v9689 = vld [vmem:[#allocation27 + $0x8a0] sm:$0xf]
    %v9690 = vld [vmem:[#allocation27 + $0x8a4] sm:$0xff]
    %v9691 = vld [vmem:[#allocation27 + $0x8ac] sm:$0xff]
    %v9692 = vld [vmem:[#allocation27 + $0x8b4] sm:$0xff]
    %v9693 = vld [vmem:[#allocation27 + $0x8bc] sm:$0xf]
    %v9694 = vld [vmem:[#allocation27 + $0x8c0] sm:$0xff]
    %v9695 = vld [vmem:[#allocation27 + $0x8c8] sm:$0xff]
    %v9696 = vld [vmem:[#allocation27 + $0x8d0] sm:$0xff]
    %v9697 = vld [vmem:[#allocation27 + $0x8d8] sm:$0xf]
    %v9698 = vld [vmem:[#allocation27 + $0x8dc] sm:$0xff]
    %v9699 = vld [vmem:[#allocation27 + $0x8e4] sm:$0xff]
    %v9700 = vld [vmem:[#allocation27 + $0x8ec] sm:$0xff]
    %v9701 = vld [vmem:[#allocation27 + $0x8f4] sm:$0xf]
    %v9702 = vld [vmem:[#allocation27 + $0x8f8] sm:$0xff]
    %v9703 = vld [vmem:[#allocation27 + $0x900] sm:$0xff]
    %v9704 = vld [vmem:[#allocation27 + $0x908] sm:$0xff]
    %v9705 = vld [vmem:[#allocation27 + $0x910] sm:$0xf]
    %v9706 = vld [vmem:[#allocation27 + $0x914] sm:$0xff]
    %v9707 = vld [vmem:[#allocation27 + $0x91c] sm:$0xff]
    %v9708 = vld [vmem:[#allocation27 + $0x924] sm:$0xff]
    %v9709 = vld [vmem:[#allocation27 + $0x92c] sm:$0xf]
    %v9710 = vld [vmem:[#allocation27 + $0x930] sm:$0xff]
    %v9711 = vld [vmem:[#allocation27 + $0x938] sm:$0xff]
    %v9712 = vld [vmem:[#allocation27 + $0x940] sm:$0xff]
    %v9713 = vld [vmem:[#allocation27 + $0x948] sm:$0xf]
    %v9714 = vld [vmem:[#allocation27 + $0x94c] sm:$0xff]
    %v9715 = vld [vmem:[#allocation27 + $0x954] sm:$0xff]
    %v9716 = vld [vmem:[#allocation27 + $0x95c] sm:$0xff]
    %v9717 = vld [vmem:[#allocation27 + $0x964] sm:$0xf]
    %v9718 = vld [vmem:[#allocation27 + $0x968] sm:$0xff]
    %v9719 = vld [vmem:[#allocation27 + $0x970] sm:$0xff]
    %v9720 = vld [vmem:[#allocation27 + $0x978] sm:$0xff]
    %v9721 = vld [vmem:[#allocation27 + $0x980] sm:$0xf]
    %v9722 = vld [vmem:[#allocation27 + $0x984] sm:$0xff]
    %v9723 = vld [vmem:[#allocation27 + $0x98c] sm:$0xff]
    %v9724 = vld [vmem:[#allocation27 + $0x994] sm:$0xff]
    %v9725 = vld [vmem:[#allocation27 + $0x99c] sm:$0xf]
    %v9726 = vld [vmem:[#allocation27 + $0x9a0] sm:$0xff]
    %v9727 = vld [vmem:[#allocation27 + $0x9a8] sm:$0xff]
    %v9728 = vld [vmem:[#allocation27 + $0x9b0] sm:$0xff]
    %v9729 = vld [vmem:[#allocation27 + $0x9b8] sm:$0xf]
    %v9730 = vld [vmem:[#allocation27 + $0x9bc] sm:$0xff]
    %v9731 = vld [vmem:[#allocation27 + $0x9c4] sm:$0xff]
    %v9732 = vld [vmem:[#allocation27 + $0x9cc] sm:$0xff]
    %v9733 = vld [vmem:[#allocation27 + $0x9d4] sm:$0xf]
    %v9734 = vld [vmem:[#allocation27 + $0x9d8] sm:$0xff]
    %v9735 = vld [vmem:[#allocation27 + $0x9e0] sm:$0xff]
    %v9736 = vld [vmem:[#allocation27 + $0x9e8] sm:$0xff]
    %v9737 = vld [vmem:[#allocation27 + $0x9f0] sm:$0xf]
    %v9738 = vld [vmem:[#allocation27 + $0x9f4] sm:$0xff]
    %v9739 = vld [vmem:[#allocation27 + $0x9fc] sm:$0xff]
    %v9740 = vld [vmem:[#allocation27 + $0xa04] sm:$0xff]
    %v9741 = vld [vmem:[#allocation27 + $0xa0c] sm:$0xf]
    %v9742 = vld [vmem:[#allocation27 + $0xa10] sm:$0xff]
    %v9743 = vld [vmem:[#allocation27 + $0xa18] sm:$0xff]
    %v9744 = vld [vmem:[#allocation27 + $0xa20] sm:$0xff]
    %v9745 = vld [vmem:[#allocation27 + $0xa28] sm:$0xf]
    %v9746 = vld [vmem:[#allocation27 + $0xa2c] sm:$0xff]
    %v9747 = vld [vmem:[#allocation27 + $0xa34] sm:$0xff]
    %v9748 = vld [vmem:[#allocation27 + $0xa3c] sm:$0xff]
    %v9749 = vld [vmem:[#allocation27 + $0xa44] sm:$0xf]
    %v9750 = vld [vmem:[#allocation27 + $0xa48] sm:$0xff]
    %v9751 = vld [vmem:[#allocation27 + $0xa50] sm:$0xff]
    %v9752 = vld [vmem:[#allocation27 + $0xa58] sm:$0xff]
    %v9753 = vld [vmem:[#allocation27 + $0xa60] sm:$0xf]
    %v9754 = vld [vmem:[#allocation27 + $0xa64] sm:$0xff]
    %v9755 = vld [vmem:[#allocation27 + $0xa6c] sm:$0xff]
    %v9756 = vld [vmem:[#allocation27 + $0xa74] sm:$0xff]
    %v9757 = vld [vmem:[#allocation27 + $0xa7c] sm:$0xf]
    %v9758 = vld [vmem:[#allocation27 + $0xa80] sm:$0xff]
    %v9759 = vld [vmem:[#allocation27 + $0xa88] sm:$0xff]
    %v9760 = vld [vmem:[#allocation27 + $0xa90] sm:$0xff]
    %v9761 = vld [vmem:[#allocation27 + $0xa98] sm:$0xf]
    %v9762 = vld [vmem:[#allocation27 + $0xa9c] sm:$0xff]
    %v9763 = vld [vmem:[#allocation27 + $0xaa4] sm:$0xff]
    %v9764 = vld [vmem:[#allocation27 + $0xaac] sm:$0xff]
    %v9765 = vld [vmem:[#allocation27 + $0xab4] sm:$0xf]
    %v9766 = vld [vmem:[#allocation27 + $0xab8] sm:$0xff]
    %v9767 = vld [vmem:[#allocation27 + $0xac0] sm:$0xff]
    %v9768 = vld [vmem:[#allocation27 + $0xac8] sm:$0xff]
    %v9769 = vld [vmem:[#allocation27 + $0xad0] sm:$0xf]
    %v9770 = vld [vmem:[#allocation27 + $0xad4] sm:$0xff]
    %v9771 = vld [vmem:[#allocation27 + $0xadc] sm:$0xff]
    %v9772 = vld [vmem:[#allocation27 + $0xae4] sm:$0xff]
    %v9773 = vld [vmem:[#allocation27 + $0xaec] sm:$0xf]
    %v9774 = vld [vmem:[#allocation27 + $0xaf0] sm:$0xff]
    %v9775 = vld [vmem:[#allocation27 + $0xaf8] sm:$0xff]
    %v9776 = vld [vmem:[#allocation27 + $0xb00] sm:$0xff]
    %v9777 = vld [vmem:[#allocation27 + $0xb08] sm:$0xf]
    %v9778 = vld [vmem:[#allocation27 + $0xb0c] sm:$0xff]
    %v9779 = vld [vmem:[#allocation27 + $0xb14] sm:$0xff]
    %v9780 = vld [vmem:[#allocation27 + $0xb1c] sm:$0xff]
    %v9781 = vld [vmem:[#allocation27 + $0xb24] sm:$0xf]
    %v9782 = vld [vmem:[#allocation27 + $0xb28] sm:$0xff]
    %v9783 = vld [vmem:[#allocation27 + $0xb30] sm:$0xff]
    %v9784 = vld [vmem:[#allocation27 + $0xb38] sm:$0xff]
    %v9785 = vld [vmem:[#allocation27 + $0xb40] sm:$0xf]
    %v9786 = vld [vmem:[#allocation27 + $0xb44] sm:$0xff]
    %v9787 = vld [vmem:[#allocation27 + $0xb4c] sm:$0xff]
    %v9788 = vld [vmem:[#allocation27 + $0xb54] sm:$0xff]
    %v9789 = vld [vmem:[#allocation27 + $0xb5c] sm:$0xf]
    %v9790 = vld [vmem:[#allocation27 + $0xb60] sm:$0xff]
    %v9791 = vld [vmem:[#allocation27 + $0xb68] sm:$0xff]
    %v9792 = vld [vmem:[#allocation27 + $0xb70] sm:$0xff]
    %v9793 = vld [vmem:[#allocation27 + $0xb78] sm:$0xf]
    %v9794 = vld [vmem:[#allocation27 + $0xb7c] sm:$0xff]
    %v9795 = vld [vmem:[#allocation27 + $0xb84] sm:$0xff]
    %v9796 = vld [vmem:[#allocation27 + $0xb8c] sm:$0xff]
    %v9797 = vld [vmem:[#allocation27 + $0xb94] sm:$0xf]
    %v9798 = vld [vmem:[#allocation27 + $0xb98] sm:$0xff]
    %v9799 = vld [vmem:[#allocation27 + $0xba0] sm:$0xff]
    %v9800 = vld [vmem:[#allocation27 + $0xba8] sm:$0xff]
    %v9801 = vld [vmem:[#allocation27 + $0xbb0] sm:$0xf]
    %v9802 = vld [vmem:[#allocation27 + $0xbb4] sm:$0xff]
    %v9803 = vld [vmem:[#allocation27 + $0xbbc] sm:$0xff]
    %v9804 = vld [vmem:[#allocation27 + $0xbc4] sm:$0xff]
    %v9805 = vld [vmem:[#allocation27 + $0xbcc] sm:$0xf]
    %v9806 = vld [vmem:[#allocation27 + $0xbd0] sm:$0xff]
    %v9807 = vld [vmem:[#allocation27 + $0xbd8] sm:$0xff]
    %v9808 = vld [vmem:[#allocation27 + $0xbe0] sm:$0xff]
    %v9809 = vld [vmem:[#allocation27 + $0xbe8] sm:$0xf]
    %v9810 = vld [vmem:[#allocation27 + $0xbec] sm:$0xff]
    %v9811 = vld [vmem:[#allocation27 + $0xbf4] sm:$0xff]
    %v9812 = vld [vmem:[#allocation27 + $0xbfc] sm:$0xff]
    %v9813 = vld [vmem:[#allocation27 + $0xc04] sm:$0xf]
    %v9814 = vld [vmem:[#allocation27 + $0xc08] sm:$0xff]
    %v9815 = vld [vmem:[#allocation27 + $0xc10] sm:$0xff]
    %v9816 = vld [vmem:[#allocation27 + $0xc18] sm:$0xff]
    %v9817 = vld [vmem:[#allocation27 + $0xc20] sm:$0xf]
    %v9818 = vld [vmem:[#allocation27 + $0xc24] sm:$0xff]
    %v9819 = vld [vmem:[#allocation27 + $0xc2c] sm:$0xff]
    %v9820 = vld [vmem:[#allocation27 + $0xc34] sm:$0xff]
    %v9821 = vld [vmem:[#allocation27 + $0xc3c] sm:$0xf]
    %v9822 = vld [vmem:[#allocation27 + $0xc40] sm:$0xff]
    %v9823 = vld [vmem:[#allocation27 + $0xc48] sm:$0xff]
    %v9824 = vld [vmem:[#allocation27 + $0xc50] sm:$0xff]
    %v9825 = vld [vmem:[#allocation27 + $0xc58] sm:$0xf]
    %v9826 = vld [vmem:[#allocation27 + $0xc5c] sm:$0xff]
    %v9827 = vld [vmem:[#allocation27 + $0xc64] sm:$0xff]
    %v9828 = vld [vmem:[#allocation27 + $0xc6c] sm:$0xff]
    %v9829 = vld [vmem:[#allocation27 + $0xc74] sm:$0xf]
    %v9830 = vld [vmem:[#allocation27 + $0xc78] sm:$0xff]
    %v9831 = vld [vmem:[#allocation27 + $0xc80] sm:$0xff]
    %v9832 = vld [vmem:[#allocation27 + $0xc88] sm:$0xff]
    %v9833 = vld [vmem:[#allocation27 + $0xc90] sm:$0xf]
    %v9834 = vld [vmem:[#allocation27 + $0xc94] sm:$0xff]
    %v9835 = vld [vmem:[#allocation27 + $0xc9c] sm:$0xff]
    %v9836 = vld [vmem:[#allocation27 + $0xca4] sm:$0xff]
    %v9837 = vld [vmem:[#allocation27 + $0xcac] sm:$0xf]
    %v9838 = vld [vmem:[#allocation27 + $0xcb0] sm:$0xff]
    %v9839 = vld [vmem:[#allocation27 + $0xcb8] sm:$0xff]
    %v9840 = vld [vmem:[#allocation27 + $0xcc0] sm:$0xff]
    %v9841 = vld [vmem:[#allocation27 + $0xcc8] sm:$0xf]
    %v9842 = vld [vmem:[#allocation27 + $0xccc] sm:$0xff]
    %v9843 = vld [vmem:[#allocation27 + $0xcd4] sm:$0xff]
    %v9844 = vld [vmem:[#allocation27 + $0xcdc] sm:$0xff]
    %v9845 = vld [vmem:[#allocation27 + $0xce4] sm:$0xf]
    %v9846 = vld [vmem:[#allocation27 + $0xce8] sm:$0xff]
    %v9847 = vld [vmem:[#allocation27 + $0xcf0] sm:$0xff]
    %v9848 = vld [vmem:[#allocation27 + $0xcf8] sm:$0xff]
    %v9849 = vld [vmem:[#allocation27 + $0xd00] sm:$0xf]
    %v9850 = vld [vmem:[#allocation27 + $0xd04] sm:$0xff]
    %v9851 = vld [vmem:[#allocation27 + $0xd0c] sm:$0xff]
    %v9852 = vld [vmem:[#allocation27 + $0xd14] sm:$0xff]
    %v9853 = vld [vmem:[#allocation27 + $0xd1c] sm:$0xf]
    %v9854 = vld [vmem:[#allocation27 + $0xd20] sm:$0xff]
    %v9855 = vld [vmem:[#allocation27 + $0xd28] sm:$0xff]
    %v9856 = vld [vmem:[#allocation27 + $0xd30] sm:$0xff]
    %v9857 = vld [vmem:[#allocation27 + $0xd38] sm:$0xf]
    %v9858 = vld [vmem:[#allocation27 + $0xd3c] sm:$0xff]
    %v9859 = vld [vmem:[#allocation27 + $0xd44] sm:$0xff]
    %v9860 = vld [vmem:[#allocation27 + $0xd4c] sm:$0xff]
    %v9861 = vld [vmem:[#allocation27 + $0xd54] sm:$0xf]
    %v9862 = vld [vmem:[#allocation27 + $0xd58] sm:$0xff]
    %v9863 = vld [vmem:[#allocation27 + $0xd60] sm:$0xff]
    %v9864 = vld [vmem:[#allocation27 + $0xd68] sm:$0xff]
    %v9865 = vld [vmem:[#allocation27 + $0xd70] sm:$0xf]
    %v9866 = vld [vmem:[#allocation27 + $0xd74] sm:$0xff]
    %v9867 = vld [vmem:[#allocation27 + $0xd7c] sm:$0xff]
    %v9868 = vld [vmem:[#allocation27 + $0xd84] sm:$0xff]
    %v9869 = vld [vmem:[#allocation27 + $0xd8c] sm:$0xf]
    %v9870 = vld [vmem:[#allocation27 + $0xd90] sm:$0xff]
    %v9871 = vld [vmem:[#allocation27 + $0xd98] sm:$0xff]
    %v9872 = vld [vmem:[#allocation27 + $0xda0] sm:$0xff]
    %v9873 = vld [vmem:[#allocation27 + $0xda8] sm:$0xf]
    %v9874 = vld [vmem:[#allocation27 + $0xdac] sm:$0xff]
    %v9875 = vld [vmem:[#allocation27 + $0xdb4] sm:$0xff]
    %v9876 = vld [vmem:[#allocation27 + $0xdbc] sm:$0xff]
    %v9877 = vld [vmem:[#allocation27 + $0xdc4] sm:$0xf]
    %v9878 = vld [vmem:[#allocation27 + $0xdc8] sm:$0xff]
    %v9879 = vld [vmem:[#allocation27 + $0xdd0] sm:$0xff]
    %v9880 = vld [vmem:[#allocation27 + $0xdd8] sm:$0xff]
    %v9881 = vld [vmem:[#allocation27 + $0xde0] sm:$0xf]
    %v9882 = vld [vmem:[#allocation27 + $0xde4] sm:$0xff]
    %v9883 = vld [vmem:[#allocation27 + $0xdec] sm:$0xff]
    %v9884 = vld [vmem:[#allocation27 + $0xdf4] sm:$0xff]
    %v9885 = vld [vmem:[#allocation27 + $0xdfc] sm:$0xf]
    %v9886 = vld [vmem:[#allocation28] sm:$0xff]
    %v9888 = vlaneseq
    %v9889 = vshrl.u32 %v9888, 7
    %v9890 = vsub.s32 0, %v9889
    %v9891 = vrot.slane %v9886, %v9890
    %v9892 = vlaneseq
    %v9893 = vshrl.u32 %v9892, 7
    %v9894 = vsub.s32 1, %v9893
    %v9895 = vrot.slane %v9886, %v9894
    %v9896 = vlaneseq
    %v9897 = vshrl.u32 %v9896, 7
    %v9898 = vsub.s32 2, %v9897
    %v9899 = vrot.slane %v9886, %v9898
    %v9900 = vlaneseq
    %v9901 = vshrl.u32 %v9900, 7
    %v9902 = vsub.s32 3, %v9901
    %v9903 = vrot.slane %v9886, %v9902
    %v9904 = vlaneseq
    %v9905 = vshrl.u32 %v9904, 7
    %v9906 = vsub.s32 4, %v9905
    %v9907 = vrot.slane %v9886, %v9906
    %v9908 = vlaneseq
    %v9909 = vshrl.u32 %v9908, 7
    %v9910 = vsub.s32 5, %v9909
    %v9911 = vrot.slane %v9886, %v9910
    %v9912 = vlaneseq
    %v9913 = vshrl.u32 %v9912, 7
    %v9914 = vsub.s32 6, %v9913
    %v9915 = vrot.slane %v9886, %v9914
    %v10435 = vunpack.c.l.b16 %v9374
    %v10436 = vunpack.c.h.b16 %v9374
    %v10437 = vunpack.c.l.b16 %v9375
    %v10438 = vunpack.c.h.b16 %v9375
    %v10439 = vunpack.c.l.b16 %v9376
    %v10440 = vunpack.c.h.b16 %v9376
    %v10441 = vunpack.c.l.b16 %v9377
    %v10442 = vunpack.c.l.b16 %v9378
    %v10443 = vunpack.c.h.b16 %v9378
    %v10444 = vunpack.c.l.b16 %v9379
    %v10445 = vunpack.c.h.b16 %v9379
    %v10446 = vunpack.c.l.b16 %v9380
    %v10447 = vunpack.c.h.b16 %v9380
    %v10448 = vunpack.c.l.b16 %v9381
    %v10449 = vunpack.c.l.b16 %v9382
    %v10450 = vunpack.c.h.b16 %v9382
    %v10451 = vunpack.c.l.b16 %v9383
    %v10452 = vunpack.c.h.b16 %v9383
    %v10453 = vunpack.c.l.b16 %v9384
    %v10454 = vunpack.c.h.b16 %v9384
    %v10455 = vunpack.c.l.b16 %v9385
    %v10456 = vunpack.c.l.b16 %v9386
    %v10457 = vunpack.c.h.b16 %v9386
    %v10458 = vunpack.c.l.b16 %v9387
    %v10459 = vunpack.c.h.b16 %v9387
    %v10460 = vunpack.c.l.b16 %v9388
    %v10461 = vunpack.c.h.b16 %v9388
    %v10462 = vunpack.c.l.b16 %v9389
    %v10463 = vunpack.c.l.b16 %v9390
    %v10464 = vunpack.c.h.b16 %v9390
    %v10465 = vunpack.c.l.b16 %v9391
    %v10466 = vunpack.c.h.b16 %v9391
    %v10467 = vunpack.c.l.b16 %v9392
    %v10468 = vunpack.c.h.b16 %v9392
    %v10469 = vunpack.c.l.b16 %v9393
    %v10470 = vunpack.c.l.b16 %v9394
    %v10471 = vunpack.c.h.b16 %v9394
    %v10472 = vunpack.c.l.b16 %v9395
    %v10473 = vunpack.c.h.b16 %v9395
    %v10474 = vunpack.c.l.b16 %v9396
    %v10475 = vunpack.c.h.b16 %v9396
    %v10476 = vunpack.c.l.b16 %v9397
    %v10477 = vunpack.c.l.b16 %v9398
    %v10478 = vunpack.c.h.b16 %v9398
    %v10479 = vunpack.c.l.b16 %v9399
    %v10480 = vunpack.c.h.b16 %v9399
    %v10481 = vunpack.c.l.b16 %v9400
    %v10482 = vunpack.c.h.b16 %v9400
    %v10483 = vunpack.c.l.b16 %v9401
    %v10484 = vunpack.c.l.b16 %v9402
    %v10485 = vunpack.c.h.b16 %v9402
    %v10486 = vunpack.c.l.b16 %v9403
    %v10487 = vunpack.c.h.b16 %v9403
    %v10488 = vunpack.c.l.b16 %v9404
    %v10489 = vunpack.c.h.b16 %v9404
    %v10490 = vunpack.c.l.b16 %v9405
    %v10491 = vunpack.c.l.b16 %v9406
    %v10492 = vunpack.c.h.b16 %v9406
    %v10493 = vunpack.c.l.b16 %v9407
    %v10494 = vunpack.c.h.b16 %v9407
    %v10495 = vunpack.c.l.b16 %v9408
    %v10496 = vunpack.c.h.b16 %v9408
    %v10497 = vunpack.c.l.b16 %v9409
    %v10498 = vunpack.c.l.b16 %v9410
    %v10499 = vunpack.c.h.b16 %v9410
    %v10500 = vunpack.c.l.b16 %v9411
    %v10501 = vunpack.c.h.b16 %v9411
    %v10502 = vunpack.c.l.b16 %v9412
    %v10503 = vunpack.c.h.b16 %v9412
    %v10504 = vunpack.c.l.b16 %v9413
    %v10505 = vunpack.c.l.b16 %v9414
    %v10506 = vunpack.c.h.b16 %v9414
    %v10507 = vunpack.c.l.b16 %v9415
    %v10508 = vunpack.c.h.b16 %v9415
    %v10509 = vunpack.c.l.b16 %v9416
    %v10510 = vunpack.c.h.b16 %v9416
    %v10511 = vunpack.c.l.b16 %v9417
    %v10512 = vunpack.c.l.b16 %v9418
    %v10513 = vunpack.c.h.b16 %v9418
    %v10514 = vunpack.c.l.b16 %v9419
    %v10515 = vunpack.c.h.b16 %v9419
    %v10516 = vunpack.c.l.b16 %v9420
    %v10517 = vunpack.c.h.b16 %v9420
    %v10518 = vunpack.c.l.b16 %v9421
    %v10519 = vunpack.c.l.b16 %v9422
    %v10520 = vunpack.c.h.b16 %v9422
    %v10521 = vunpack.c.l.b16 %v9423
    %v10522 = vunpack.c.h.b16 %v9423
    %v10523 = vunpack.c.l.b16 %v9424
    %v10524 = vunpack.c.h.b16 %v9424
    %v10525 = vunpack.c.l.b16 %v9425
    %v10526 = vunpack.c.l.b16 %v9426
    %v10527 = vunpack.c.h.b16 %v9426
    %v10528 = vunpack.c.l.b16 %v9427
    %v10529 = vunpack.c.h.b16 %v9427
    %v10530 = vunpack.c.l.b16 %v9428
    %v10531 = vunpack.c.h.b16 %v9428
    %v10532 = vunpack.c.l.b16 %v9429
    %v10533 = vunpack.c.l.b16 %v9430
    %v10534 = vunpack.c.h.b16 %v9430
    %v10535 = vunpack.c.l.b16 %v9431
    %v10536 = vunpack.c.h.b16 %v9431
    %v10537 = vunpack.c.l.b16 %v9432
    %v10538 = vunpack.c.h.b16 %v9432
    %v10539 = vunpack.c.l.b16 %v9433
    %v10540 = vunpack.c.l.b16 %v9434
    %v10541 = vunpack.c.h.b16 %v9434
    %v10542 = vunpack.c.l.b16 %v9435
    %v10543 = vunpack.c.h.b16 %v9435
    %v10544 = vunpack.c.l.b16 %v9436
    %v10545 = vunpack.c.h.b16 %v9436
    %v10546 = vunpack.c.l.b16 %v9437
    %v10547 = vunpack.c.l.b16 %v9438
    %v10548 = vunpack.c.h.b16 %v9438
    %v10549 = vunpack.c.l.b16 %v9439
    %v10550 = vunpack.c.h.b16 %v9439
    %v10551 = vunpack.c.l.b16 %v9440
    %v10552 = vunpack.c.h.b16 %v9440
    %v10553 = vunpack.c.l.b16 %v9441
    %v10554 = vunpack.c.l.b16 %v9442
    %v10555 = vunpack.c.h.b16 %v9442
    %v10556 = vunpack.c.l.b16 %v9443
    %v10557 = vunpack.c.h.b16 %v9443
    %v10558 = vunpack.c.l.b16 %v9444
    %v10559 = vunpack.c.h.b16 %v9444
    %v10560 = vunpack.c.l.b16 %v9445
    %v10561 = vunpack.c.l.b16 %v9446
    %v10562 = vunpack.c.h.b16 %v9446
    %v10563 = vunpack.c.l.b16 %v9447
    %v10564 = vunpack.c.h.b16 %v9447
    %v10565 = vunpack.c.l.b16 %v9448
    %v10566 = vunpack.c.h.b16 %v9448
    %v10567 = vunpack.c.l.b16 %v9449
    %v10568 = vunpack.c.l.b16 %v9450
    %v10569 = vunpack.c.h.b16 %v9450
    %v10570 = vunpack.c.l.b16 %v9451
    %v10571 = vunpack.c.h.b16 %v9451
    %v10572 = vunpack.c.l.b16 %v9452
    %v10573 = vunpack.c.h.b16 %v9452
    %v10574 = vunpack.c.l.b16 %v9453
    %v10575 = vunpack.c.l.b16 %v9454
    %v10576 = vunpack.c.h.b16 %v9454
    %v10577 = vunpack.c.l.b16 %v9455
    %v10578 = vunpack.c.h.b16 %v9455
    %v10579 = vunpack.c.l.b16 %v9456
    %v10580 = vunpack.c.h.b16 %v9456
    %v10581 = vunpack.c.l.b16 %v9457
    %v10582 = vunpack.c.l.b16 %v9458
    %v10583 = vunpack.c.h.b16 %v9458
    %v10584 = vunpack.c.l.b16 %v9459
    %v10585 = vunpack.c.h.b16 %v9459
    %v10586 = vunpack.c.l.b16 %v9460
    %v10587 = vunpack.c.h.b16 %v9460
    %v10588 = vunpack.c.l.b16 %v9461
    %v10589 = vunpack.c.l.b16 %v9462
    %v10590 = vunpack.c.h.b16 %v9462
    %v10591 = vunpack.c.l.b16 %v9463
    %v10592 = vunpack.c.h.b16 %v9463
    %v10593 = vunpack.c.l.b16 %v9464
    %v10594 = vunpack.c.h.b16 %v9464
    %v10595 = vunpack.c.l.b16 %v9465
    %v10596 = vunpack.c.l.b16 %v9466
    %v10597 = vunpack.c.h.b16 %v9466
    %v10598 = vunpack.c.l.b16 %v9467
    %v10599 = vunpack.c.h.b16 %v9467
    %v10600 = vunpack.c.l.b16 %v9468
    %v10601 = vunpack.c.h.b16 %v9468
    %v10602 = vunpack.c.l.b16 %v9469
    %v10603 = vunpack.c.l.b16 %v9470
    %v10604 = vunpack.c.h.b16 %v9470
    %v10605 = vunpack.c.l.b16 %v9471
    %v10606 = vunpack.c.h.b16 %v9471
    %v10607 = vunpack.c.l.b16 %v9472
    %v10608 = vunpack.c.h.b16 %v9472
    %v10609 = vunpack.c.l.b16 %v9473
    %v10610 = vunpack.c.l.b16 %v9474
    %v10611 = vunpack.c.h.b16 %v9474
    %v10612 = vunpack.c.l.b16 %v9475
    %v10613 = vunpack.c.h.b16 %v9475
    %v10614 = vunpack.c.l.b16 %v9476
    %v10615 = vunpack.c.h.b16 %v9476
    %v10616 = vunpack.c.l.b16 %v9477
    %v10617 = vunpack.c.l.b16 %v9478
    %v10618 = vunpack.c.h.b16 %v9478
    %v10619 = vunpack.c.l.b16 %v9479
    %v10620 = vunpack.c.h.b16 %v9479
    %v10621 = vunpack.c.l.b16 %v9480
    %v10622 = vunpack.c.h.b16 %v9480
    %v10623 = vunpack.c.l.b16 %v9481
    %v10624 = vunpack.c.l.b16 %v9482
    %v10625 = vunpack.c.h.b16 %v9482
    %v10626 = vunpack.c.l.b16 %v9483
    %v10627 = vunpack.c.h.b16 %v9483
    %v10628 = vunpack.c.l.b16 %v9484
    %v10629 = vunpack.c.h.b16 %v9484
    %v10630 = vunpack.c.l.b16 %v9485
    %v10631 = vunpack.c.l.b16 %v9486
    %v10632 = vunpack.c.h.b16 %v9486
    %v10633 = vunpack.c.l.b16 %v9487
    %v10634 = vunpack.c.h.b16 %v9487
    %v10635 = vunpack.c.l.b16 %v9488
    %v10636 = vunpack.c.h.b16 %v9488
    %v10637 = vunpack.c.l.b16 %v9489
    %v10638 = vunpack.c.l.b16 %v9490
    %v10639 = vunpack.c.h.b16 %v9490
    %v10640 = vunpack.c.l.b16 %v9491
    %v10641 = vunpack.c.h.b16 %v9491
    %v10642 = vunpack.c.l.b16 %v9492
    %v10643 = vunpack.c.h.b16 %v9492
    %v10644 = vunpack.c.l.b16 %v9493
    %v10645 = vunpack.c.l.b16 %v9494
    %v10646 = vunpack.c.h.b16 %v9494
    %v10647 = vunpack.c.l.b16 %v9495
    %v10648 = vunpack.c.h.b16 %v9495
    %v10649 = vunpack.c.l.b16 %v9496
    %v10650 = vunpack.c.h.b16 %v9496
    %v10651 = vunpack.c.l.b16 %v9497
    %v10652 = vunpack.c.l.b16 %v9498
    %v10653 = vunpack.c.h.b16 %v9498
    %v10654 = vunpack.c.l.b16 %v9499
    %v10655 = vunpack.c.h.b16 %v9499
    %v10656 = vunpack.c.l.b16 %v9500
    %v10657 = vunpack.c.h.b16 %v9500
    %v10658 = vunpack.c.l.b16 %v9501
    %v10659 = vunpack.c.l.b16 %v9502
    %v10660 = vunpack.c.h.b16 %v9502
    %v10661 = vunpack.c.l.b16 %v9503
    %v10662 = vunpack.c.h.b16 %v9503
    %v10663 = vunpack.c.l.b16 %v9504
    %v10664 = vunpack.c.h.b16 %v9504
    %v10665 = vunpack.c.l.b16 %v9505
    %v10666 = vunpack.c.l.b16 %v9506
    %v10667 = vunpack.c.h.b16 %v9506
    %v10668 = vunpack.c.l.b16 %v9507
    %v10669 = vunpack.c.h.b16 %v9507
    %v10670 = vunpack.c.l.b16 %v9508
    %v10671 = vunpack.c.h.b16 %v9508
    %v10672 = vunpack.c.l.b16 %v9509
    %v10673 = vunpack.c.l.b16 %v9510
    %v10674 = vunpack.c.h.b16 %v9510
    %v10675 = vunpack.c.l.b16 %v9511
    %v10676 = vunpack.c.h.b16 %v9511
    %v10677 = vunpack.c.l.b16 %v9512
    %v10678 = vunpack.c.h.b16 %v9512
    %v10679 = vunpack.c.l.b16 %v9513
    %v10680 = vunpack.c.l.b16 %v9514
    %v10681 = vunpack.c.h.b16 %v9514
    %v10682 = vunpack.c.l.b16 %v9515
    %v10683 = vunpack.c.h.b16 %v9515
    %v10684 = vunpack.c.l.b16 %v9516
    %v10685 = vunpack.c.h.b16 %v9516
    %v10686 = vunpack.c.l.b16 %v9517
    %v10687 = vunpack.c.l.b16 %v9518
    %v10688 = vunpack.c.h.b16 %v9518
    %v10689 = vunpack.c.l.b16 %v9519
    %v10690 = vunpack.c.h.b16 %v9519
    %v10691 = vunpack.c.l.b16 %v9520
    %v10692 = vunpack.c.h.b16 %v9520
    %v10693 = vunpack.c.l.b16 %v9521
    %v10694 = vunpack.c.l.b16 %v9522
    %v10695 = vunpack.c.h.b16 %v9522
    %v10696 = vunpack.c.l.b16 %v9523
    %v10697 = vunpack.c.h.b16 %v9523
    %v10698 = vunpack.c.l.b16 %v9524
    %v10699 = vunpack.c.h.b16 %v9524
    %v10700 = vunpack.c.l.b16 %v9525
    %v10701 = vunpack.c.l.b16 %v9526
    %v10702 = vunpack.c.h.b16 %v9526
    %v10703 = vunpack.c.l.b16 %v9527
    %v10704 = vunpack.c.h.b16 %v9527
    %v10705 = vunpack.c.l.b16 %v9528
    %v10706 = vunpack.c.h.b16 %v9528
    %v10707 = vunpack.c.l.b16 %v9529
    %v10708 = vunpack.c.l.b16 %v9530
    %v10709 = vunpack.c.h.b16 %v9530
    %v10710 = vunpack.c.l.b16 %v9531
    %v10711 = vunpack.c.h.b16 %v9531
    %v10712 = vunpack.c.l.b16 %v9532
    %v10713 = vunpack.c.h.b16 %v9532
    %v10714 = vunpack.c.l.b16 %v9533
    %v10715 = vunpack.c.l.b16 %v9534
    %v10716 = vunpack.c.h.b16 %v9534
    %v10717 = vunpack.c.l.b16 %v9535
    %v10718 = vunpack.c.h.b16 %v9535
    %v10719 = vunpack.c.l.b16 %v9536
    %v10720 = vunpack.c.h.b16 %v9536
    %v10721 = vunpack.c.l.b16 %v9537
    %v10722 = vunpack.c.l.b16 %v9538
    %v10723 = vunpack.c.h.b16 %v9538
    %v10724 = vunpack.c.l.b16 %v9539
    %v10725 = vunpack.c.h.b16 %v9539
    %v10726 = vunpack.c.l.b16 %v9540
    %v10727 = vunpack.c.h.b16 %v9540
    %v10728 = vunpack.c.l.b16 %v9541
    %v10729 = vunpack.c.l.b16 %v9542
    %v10730 = vunpack.c.h.b16 %v9542
    %v10731 = vunpack.c.l.b16 %v9543
    %v10732 = vunpack.c.h.b16 %v9543
    %v10733 = vunpack.c.l.b16 %v9544
    %v10734 = vunpack.c.h.b16 %v9544
    %v10735 = vunpack.c.l.b16 %v9545
    %v10736 = vunpack.c.l.b16 %v9546
    %v10737 = vunpack.c.h.b16 %v9546
    %v10738 = vunpack.c.l.b16 %v9547
    %v10739 = vunpack.c.h.b16 %v9547
    %v10740 = vunpack.c.l.b16 %v9548
    %v10741 = vunpack.c.h.b16 %v9548
    %v10742 = vunpack.c.l.b16 %v9549
    %v10743 = vunpack.c.l.b16 %v9550
    %v10744 = vunpack.c.h.b16 %v9550
    %v10745 = vunpack.c.l.b16 %v9551
    %v10746 = vunpack.c.h.b16 %v9551
    %v10747 = vunpack.c.l.b16 %v9552
    %v10748 = vunpack.c.h.b16 %v9552
    %v10749 = vunpack.c.l.b16 %v9553
    %v10750 = vunpack.c.l.b16 %v9554
    %v10751 = vunpack.c.h.b16 %v9554
    %v10752 = vunpack.c.l.b16 %v9555
    %v10753 = vunpack.c.h.b16 %v9555
    %v10754 = vunpack.c.l.b16 %v9556
    %v10755 = vunpack.c.h.b16 %v9556
    %v10756 = vunpack.c.l.b16 %v9557
    %v10757 = vunpack.c.l.b16 %v9558
    %v10758 = vunpack.c.h.b16 %v9558
    %v10759 = vunpack.c.l.b16 %v9559
    %v10760 = vunpack.c.h.b16 %v9559
    %v10761 = vunpack.c.l.b16 %v9560
    %v10762 = vunpack.c.h.b16 %v9560
    %v10763 = vunpack.c.l.b16 %v9561
    %v10764 = vunpack.c.l.b16 %v9562
    %v10765 = vunpack.c.h.b16 %v9562
    %v10766 = vunpack.c.l.b16 %v9563
    %v10767 = vunpack.c.h.b16 %v9563
    %v10768 = vunpack.c.l.b16 %v9564
    %v10769 = vunpack.c.h.b16 %v9564
    %v10770 = vunpack.c.l.b16 %v9565
    %v10771 = vunpack.c.l.b16 %v9566
    %v10772 = vunpack.c.h.b16 %v9566
    %v10773 = vunpack.c.l.b16 %v9567
    %v10774 = vunpack.c.h.b16 %v9567
    %v10775 = vunpack.c.l.b16 %v9568
    %v10776 = vunpack.c.h.b16 %v9568
    %v10777 = vunpack.c.l.b16 %v9569
    %v10778 = vunpack.c.l.b16 %v9570
    %v10779 = vunpack.c.h.b16 %v9570
    %v10780 = vunpack.c.l.b16 %v9571
    %v10781 = vunpack.c.h.b16 %v9571
    %v10782 = vunpack.c.l.b16 %v9572
    %v10783 = vunpack.c.h.b16 %v9572
    %v10784 = vunpack.c.l.b16 %v9573
    %v10785 = vunpack.c.l.b16 %v9574
    %v10786 = vunpack.c.h.b16 %v9574
    %v10787 = vunpack.c.l.b16 %v9575
    %v10788 = vunpack.c.h.b16 %v9575
    %v10789 = vunpack.c.l.b16 %v9576
    %v10790 = vunpack.c.h.b16 %v9576
    %v10791 = vunpack.c.l.b16 %v9577
    %v10792 = vunpack.c.l.b16 %v9578
    %v10793 = vunpack.c.h.b16 %v9578
    %v10794 = vunpack.c.l.b16 %v9579
    %v10795 = vunpack.c.h.b16 %v9579
    %v10796 = vunpack.c.l.b16 %v9580
    %v10797 = vunpack.c.h.b16 %v9580
    %v10798 = vunpack.c.l.b16 %v9581
    %v10799 = vunpack.c.l.b16 %v9582
    %v10800 = vunpack.c.h.b16 %v9582
    %v10801 = vunpack.c.l.b16 %v9583
    %v10802 = vunpack.c.h.b16 %v9583
    %v10803 = vunpack.c.l.b16 %v9584
    %v10804 = vunpack.c.h.b16 %v9584
    %v10805 = vunpack.c.l.b16 %v9585
    %v10806 = vunpack.c.l.b16 %v9586
    %v10807 = vunpack.c.h.b16 %v9586
    %v10808 = vunpack.c.l.b16 %v9587
    %v10809 = vunpack.c.h.b16 %v9587
    %v10810 = vunpack.c.l.b16 %v9588
    %v10811 = vunpack.c.h.b16 %v9588
    %v10812 = vunpack.c.l.b16 %v9589
    %v10813 = vunpack.c.l.b16 %v9590
    %v10814 = vunpack.c.h.b16 %v9590
    %v10815 = vunpack.c.l.b16 %v9591
    %v10816 = vunpack.c.h.b16 %v9591
    %v10817 = vunpack.c.l.b16 %v9592
    %v10818 = vunpack.c.h.b16 %v9592
    %v10819 = vunpack.c.l.b16 %v9593
    %v10820 = vunpack.c.l.b16 %v9594
    %v10821 = vunpack.c.h.b16 %v9594
    %v10822 = vunpack.c.l.b16 %v9595
    %v10823 = vunpack.c.h.b16 %v9595
    %v10824 = vunpack.c.l.b16 %v9596
    %v10825 = vunpack.c.h.b16 %v9596
    %v10826 = vunpack.c.l.b16 %v9597
    %v10827 = vunpack.c.l.b16 %v9598
    %v10828 = vunpack.c.h.b16 %v9598
    %v10829 = vunpack.c.l.b16 %v9599
    %v10830 = vunpack.c.h.b16 %v9599
    %v10831 = vunpack.c.l.b16 %v9600
    %v10832 = vunpack.c.h.b16 %v9600
    %v10833 = vunpack.c.l.b16 %v9601
    %v10834 = vunpack.c.l.b16 %v9602
    %v10835 = vunpack.c.h.b16 %v9602
    %v10836 = vunpack.c.l.b16 %v9603
    %v10837 = vunpack.c.h.b16 %v9603
    %v10838 = vunpack.c.l.b16 %v9604
    %v10839 = vunpack.c.h.b16 %v9604
    %v10840 = vunpack.c.l.b16 %v9605
    %v10841 = vunpack.c.l.b16 %v9606
    %v10842 = vunpack.c.h.b16 %v9606
    %v10843 = vunpack.c.l.b16 %v9607
    %v10844 = vunpack.c.h.b16 %v9607
    %v10845 = vunpack.c.l.b16 %v9608
    %v10846 = vunpack.c.h.b16 %v9608
    %v10847 = vunpack.c.l.b16 %v9609
    %v10848 = vunpack.c.l.b16 %v9610
    %v10849 = vunpack.c.h.b16 %v9610
    %v10850 = vunpack.c.l.b16 %v9611
    %v10851 = vunpack.c.h.b16 %v9611
    %v10852 = vunpack.c.l.b16 %v9612
    %v10853 = vunpack.c.h.b16 %v9612
    %v10854 = vunpack.c.l.b16 %v9613
    %v10855 = vunpack.c.l.b16 %v9614
    %v10856 = vunpack.c.h.b16 %v9614
    %v10857 = vunpack.c.l.b16 %v9615
    %v10858 = vunpack.c.h.b16 %v9615
    %v10859 = vunpack.c.l.b16 %v9616
    %v10860 = vunpack.c.h.b16 %v9616
    %v10861 = vunpack.c.l.b16 %v9617
    %v10862 = vunpack.c.l.b16 %v9618
    %v10863 = vunpack.c.h.b16 %v9618
    %v10864 = vunpack.c.l.b16 %v9619
    %v10865 = vunpack.c.h.b16 %v9619
    %v10866 = vunpack.c.l.b16 %v9620
    %v10867 = vunpack.c.h.b16 %v9620
    %v10868 = vunpack.c.l.b16 %v9621
    %v10869 = vunpack.c.l.b16 %v9622
    %v10870 = vunpack.c.h.b16 %v9622
    %v10871 = vunpack.c.l.b16 %v9623
    %v10872 = vunpack.c.h.b16 %v9623
    %v10873 = vunpack.c.l.b16 %v9624
    %v10874 = vunpack.c.h.b16 %v9624
    %v10875 = vunpack.c.l.b16 %v9625
    %v10876 = vunpack.c.l.b16 %v9626
    %v10877 = vunpack.c.h.b16 %v9626
    %v10878 = vunpack.c.l.b16 %v9627
    %v10879 = vunpack.c.h.b16 %v9627
    %v10880 = vunpack.c.l.b16 %v9628
    %v10881 = vunpack.c.h.b16 %v9628
    %v10882 = vunpack.c.l.b16 %v9629
    %v10883 = vunpack.c.l.b16 %v9630
    %v10884 = vunpack.c.h.b16 %v9630
    %v10885 = vunpack.c.l.b16 %v9631
    %v10886 = vunpack.c.h.b16 %v9631
    %v10887 = vunpack.c.l.b16 %v9632
    %v10888 = vunpack.c.h.b16 %v9632
    %v10889 = vunpack.c.l.b16 %v9633
    %v10890 = vunpack.c.l.b16 %v9634
    %v10891 = vunpack.c.h.b16 %v9634
    %v10892 = vunpack.c.l.b16 %v9635
    %v10893 = vunpack.c.h.b16 %v9635
    %v10894 = vunpack.c.l.b16 %v9636
    %v10895 = vunpack.c.h.b16 %v9636
    %v10896 = vunpack.c.l.b16 %v9637
    %v10897 = vunpack.c.l.b16 %v9638
    %v10898 = vunpack.c.h.b16 %v9638
    %v10899 = vunpack.c.l.b16 %v9639
    %v10900 = vunpack.c.h.b16 %v9639
    %v10901 = vunpack.c.l.b16 %v9640
    %v10902 = vunpack.c.h.b16 %v9640
    %v10903 = vunpack.c.l.b16 %v9641
    %v10904 = vunpack.c.l.b16 %v9642
    %v10905 = vunpack.c.h.b16 %v9642
    %v10906 = vunpack.c.l.b16 %v9643
    %v10907 = vunpack.c.h.b16 %v9643
    %v10908 = vunpack.c.l.b16 %v9644
    %v10909 = vunpack.c.h.b16 %v9644
    %v10910 = vunpack.c.l.b16 %v9645
    %v10911 = vunpack.c.l.b16 %v9646
    %v10912 = vunpack.c.h.b16 %v9646
    %v10913 = vunpack.c.l.b16 %v9647
    %v10914 = vunpack.c.h.b16 %v9647
    %v10915 = vunpack.c.l.b16 %v9648
    %v10916 = vunpack.c.h.b16 %v9648
    %v10917 = vunpack.c.l.b16 %v9649
    %v10918 = vunpack.c.l.b16 %v9650
    %v10919 = vunpack.c.h.b16 %v9650
    %v10920 = vunpack.c.l.b16 %v9651
    %v10921 = vunpack.c.h.b16 %v9651
    %v10922 = vunpack.c.l.b16 %v9652
    %v10923 = vunpack.c.h.b16 %v9652
    %v10924 = vunpack.c.l.b16 %v9653
    %v10925 = vunpack.c.l.b16 %v9654
    %v10926 = vunpack.c.h.b16 %v9654
    %v10927 = vunpack.c.l.b16 %v9655
    %v10928 = vunpack.c.h.b16 %v9655
    %v10929 = vunpack.c.l.b16 %v9656
    %v10930 = vunpack.c.h.b16 %v9656
    %v10931 = vunpack.c.l.b16 %v9657
    %v10932 = vunpack.c.l.b16 %v9658
    %v10933 = vunpack.c.h.b16 %v9658
    %v10934 = vunpack.c.l.b16 %v9659
    %v10935 = vunpack.c.h.b16 %v9659
    %v10936 = vunpack.c.l.b16 %v9660
    %v10937 = vunpack.c.h.b16 %v9660
    %v10938 = vunpack.c.l.b16 %v9661
    %v10939 = vunpack.c.l.b16 %v9662
    %v10940 = vunpack.c.h.b16 %v9662
    %v10941 = vunpack.c.l.b16 %v9663
    %v10942 = vunpack.c.h.b16 %v9663
    %v10943 = vunpack.c.l.b16 %v9664
    %v10944 = vunpack.c.h.b16 %v9664
    %v10945 = vunpack.c.l.b16 %v9665
    %v10946 = vunpack.c.l.b16 %v9666
    %v10947 = vunpack.c.h.b16 %v9666
    %v10948 = vunpack.c.l.b16 %v9667
    %v10949 = vunpack.c.h.b16 %v9667
    %v10950 = vunpack.c.l.b16 %v9668
    %v10951 = vunpack.c.h.b16 %v9668
    %v10952 = vunpack.c.l.b16 %v9669
    %v10953 = vunpack.c.l.b16 %v9670
    %v10954 = vunpack.c.h.b16 %v9670
    %v10955 = vunpack.c.l.b16 %v9671
    %v10956 = vunpack.c.h.b16 %v9671
    %v10957 = vunpack.c.l.b16 %v9672
    %v10958 = vunpack.c.h.b16 %v9672
    %v10959 = vunpack.c.l.b16 %v9673
    %v10960 = vunpack.c.l.b16 %v9674
    %v10961 = vunpack.c.h.b16 %v9674
    %v10962 = vunpack.c.l.b16 %v9675
    %v10963 = vunpack.c.h.b16 %v9675
    %v10964 = vunpack.c.l.b16 %v9676
    %v10965 = vunpack.c.h.b16 %v9676
    %v10966 = vunpack.c.l.b16 %v9677
    %v10967 = vunpack.c.l.b16 %v9678
    %v10968 = vunpack.c.h.b16 %v9678
    %v10969 = vunpack.c.l.b16 %v9679
    %v10970 = vunpack.c.h.b16 %v9679
    %v10971 = vunpack.c.l.b16 %v9680
    %v10972 = vunpack.c.h.b16 %v9680
    %v10973 = vunpack.c.l.b16 %v9681
    %v10974 = vunpack.c.l.b16 %v9682
    %v10975 = vunpack.c.h.b16 %v9682
    %v10976 = vunpack.c.l.b16 %v9683
    %v10977 = vunpack.c.h.b16 %v9683
    %v10978 = vunpack.c.l.b16 %v9684
    %v10979 = vunpack.c.h.b16 %v9684
    %v10980 = vunpack.c.l.b16 %v9685
    %v10981 = vunpack.c.l.b16 %v9686
    %v10982 = vunpack.c.h.b16 %v9686
    %v10983 = vunpack.c.l.b16 %v9687
    %v10984 = vunpack.c.h.b16 %v9687
    %v10985 = vunpack.c.l.b16 %v9688
    %v10986 = vunpack.c.h.b16 %v9688
    %v10987 = vunpack.c.l.b16 %v9689
    %v10988 = vunpack.c.l.b16 %v9690
    %v10989 = vunpack.c.h.b16 %v9690
    %v10990 = vunpack.c.l.b16 %v9691
    %v10991 = vunpack.c.h.b16 %v9691
    %v10992 = vunpack.c.l.b16 %v9692
    %v10993 = vunpack.c.h.b16 %v9692
    %v10994 = vunpack.c.l.b16 %v9693
    %v10995 = vunpack.c.l.b16 %v9694
    %v10996 = vunpack.c.h.b16 %v9694
    %v10997 = vunpack.c.l.b16 %v9695
    %v10998 = vunpack.c.h.b16 %v9695
    %v10999 = vunpack.c.l.b16 %v9696
    %v11000 = vunpack.c.h.b16 %v9696
    %v11001 = vunpack.c.l.b16 %v9697
    %v11002 = vunpack.c.l.b16 %v9698
    %v11003 = vunpack.c.h.b16 %v9698
    %v11004 = vunpack.c.l.b16 %v9699
    %v11005 = vunpack.c.h.b16 %v9699
    %v11006 = vunpack.c.l.b16 %v9700
    %v11007 = vunpack.c.h.b16 %v9700
    %v11008 = vunpack.c.l.b16 %v9701
    %v11009 = vunpack.c.l.b16 %v9702
    %v11010 = vunpack.c.h.b16 %v9702
    %v11011 = vunpack.c.l.b16 %v9703
    %v11012 = vunpack.c.h.b16 %v9703
    %v11013 = vunpack.c.l.b16 %v9704
    %v11014 = vunpack.c.h.b16 %v9704
    %v11015 = vunpack.c.l.b16 %v9705
    %v11016 = vunpack.c.l.b16 %v9706
    %v11017 = vunpack.c.h.b16 %v9706
    %v11018 = vunpack.c.l.b16 %v9707
    %v11019 = vunpack.c.h.b16 %v9707
    %v11020 = vunpack.c.l.b16 %v9708
    %v11021 = vunpack.c.h.b16 %v9708
    %v11022 = vunpack.c.l.b16 %v9709
    %v11023 = vunpack.c.l.b16 %v9710
    %v11024 = vunpack.c.h.b16 %v9710
    %v11025 = vunpack.c.l.b16 %v9711
    %v11026 = vunpack.c.h.b16 %v9711
    %v11027 = vunpack.c.l.b16 %v9712
    %v11028 = vunpack.c.h.b16 %v9712
    %v11029 = vunpack.c.l.b16 %v9713
    %v11030 = vunpack.c.l.b16 %v9714
    %v11031 = vunpack.c.h.b16 %v9714
    %v11032 = vunpack.c.l.b16 %v9715
    %v11033 = vunpack.c.h.b16 %v9715
    %v11034 = vunpack.c.l.b16 %v9716
    %v11035 = vunpack.c.h.b16 %v9716
    %v11036 = vunpack.c.l.b16 %v9717
    %v11037 = vunpack.c.l.b16 %v9718
    %v11038 = vunpack.c.h.b16 %v9718
    %v11039 = vunpack.c.l.b16 %v9719
    %v11040 = vunpack.c.h.b16 %v9719
    %v11041 = vunpack.c.l.b16 %v9720
    %v11042 = vunpack.c.h.b16 %v9720
    %v11043 = vunpack.c.l.b16 %v9721
    %v11044 = vunpack.c.l.b16 %v9722
    %v11045 = vunpack.c.h.b16 %v9722
    %v11046 = vunpack.c.l.b16 %v9723
    %v11047 = vunpack.c.h.b16 %v9723
    %v11048 = vunpack.c.l.b16 %v9724
    %v11049 = vunpack.c.h.b16 %v9724
    %v11050 = vunpack.c.l.b16 %v9725
    %v11051 = vunpack.c.l.b16 %v9726
    %v11052 = vunpack.c.h.b16 %v9726
    %v11053 = vunpack.c.l.b16 %v9727
    %v11054 = vunpack.c.h.b16 %v9727
    %v11055 = vunpack.c.l.b16 %v9728
    %v11056 = vunpack.c.h.b16 %v9728
    %v11057 = vunpack.c.l.b16 %v9729
    %v11058 = vunpack.c.l.b16 %v9730
    %v11059 = vunpack.c.h.b16 %v9730
    %v11060 = vunpack.c.l.b16 %v9731
    %v11061 = vunpack.c.h.b16 %v9731
    %v11062 = vunpack.c.l.b16 %v9732
    %v11063 = vunpack.c.h.b16 %v9732
    %v11064 = vunpack.c.l.b16 %v9733
    %v11065 = vunpack.c.l.b16 %v9734
    %v11066 = vunpack.c.h.b16 %v9734
    %v11067 = vunpack.c.l.b16 %v9735
    %v11068 = vunpack.c.h.b16 %v9735
    %v11069 = vunpack.c.l.b16 %v9736
    %v11070 = vunpack.c.h.b16 %v9736
    %v11071 = vunpack.c.l.b16 %v9737
    %v11072 = vunpack.c.l.b16 %v9738
    %v11073 = vunpack.c.h.b16 %v9738
    %v11074 = vunpack.c.l.b16 %v9739
    %v11075 = vunpack.c.h.b16 %v9739
    %v11076 = vunpack.c.l.b16 %v9740
    %v11077 = vunpack.c.h.b16 %v9740
    %v11078 = vunpack.c.l.b16 %v9741
    %v11079 = vunpack.c.l.b16 %v9742
    %v11080 = vunpack.c.h.b16 %v9742
    %v11081 = vunpack.c.l.b16 %v9743
    %v11082 = vunpack.c.h.b16 %v9743
    %v11083 = vunpack.c.l.b16 %v9744
    %v11084 = vunpack.c.h.b16 %v9744
    %v11085 = vunpack.c.l.b16 %v9745
    %v11086 = vunpack.c.l.b16 %v9746
    %v11087 = vunpack.c.h.b16 %v9746
    %v11088 = vunpack.c.l.b16 %v9747
    %v11089 = vunpack.c.h.b16 %v9747
    %v11090 = vunpack.c.l.b16 %v9748
    %v11091 = vunpack.c.h.b16 %v9748
    %v11092 = vunpack.c.l.b16 %v9749
    %v11093 = vunpack.c.l.b16 %v9750
    %v11094 = vunpack.c.h.b16 %v9750
    %v11095 = vunpack.c.l.b16 %v9751
    %v11096 = vunpack.c.h.b16 %v9751
    %v11097 = vunpack.c.l.b16 %v9752
    %v11098 = vunpack.c.h.b16 %v9752
    %v11099 = vunpack.c.l.b16 %v9753
    %v11100 = vunpack.c.l.b16 %v9754
    %v11101 = vunpack.c.h.b16 %v9754
    %v11102 = vunpack.c.l.b16 %v9755
    %v11103 = vunpack.c.h.b16 %v9755
    %v11104 = vunpack.c.l.b16 %v9756
    %v11105 = vunpack.c.h.b16 %v9756
    %v11106 = vunpack.c.l.b16 %v9757
    %v11107 = vunpack.c.l.b16 %v9758
    %v11108 = vunpack.c.h.b16 %v9758
    %v11109 = vunpack.c.l.b16 %v9759
    %v11110 = vunpack.c.h.b16 %v9759
    %v11111 = vunpack.c.l.b16 %v9760
    %v11112 = vunpack.c.h.b16 %v9760
    %v11113 = vunpack.c.l.b16 %v9761
    %v11114 = vunpack.c.l.b16 %v9762
    %v11115 = vunpack.c.h.b16 %v9762
    %v11116 = vunpack.c.l.b16 %v9763
    %v11117 = vunpack.c.h.b16 %v9763
    %v11118 = vunpack.c.l.b16 %v9764
    %v11119 = vunpack.c.h.b16 %v9764
    %v11120 = vunpack.c.l.b16 %v9765
    %v11121 = vunpack.c.l.b16 %v9766
    %v11122 = vunpack.c.h.b16 %v9766
    %v11123 = vunpack.c.l.b16 %v9767
    %v11124 = vunpack.c.h.b16 %v9767
    %v11125 = vunpack.c.l.b16 %v9768
    %v11126 = vunpack.c.h.b16 %v9768
    %v11127 = vunpack.c.l.b16 %v9769
    %v11128 = vunpack.c.l.b16 %v9770
    %v11129 = vunpack.c.h.b16 %v9770
    %v11130 = vunpack.c.l.b16 %v9771
    %v11131 = vunpack.c.h.b16 %v9771
    %v11132 = vunpack.c.l.b16 %v9772
    %v11133 = vunpack.c.h.b16 %v9772
    %v11134 = vunpack.c.l.b16 %v9773
    %v11135 = vunpack.c.l.b16 %v9774
    %v11136 = vunpack.c.h.b16 %v9774
    %v11137 = vunpack.c.l.b16 %v9775
    %v11138 = vunpack.c.h.b16 %v9775
    %v11139 = vunpack.c.l.b16 %v9776
    %v11140 = vunpack.c.h.b16 %v9776
    %v11141 = vunpack.c.l.b16 %v9777
    %v11142 = vunpack.c.l.b16 %v9778
    %v11143 = vunpack.c.h.b16 %v9778
    %v11144 = vunpack.c.l.b16 %v9779
    %v11145 = vunpack.c.h.b16 %v9779
    %v11146 = vunpack.c.l.b16 %v9780
    %v11147 = vunpack.c.h.b16 %v9780
    %v11148 = vunpack.c.l.b16 %v9781
    %v11149 = vunpack.c.l.b16 %v9782
    %v11150 = vunpack.c.h.b16 %v9782
    %v11151 = vunpack.c.l.b16 %v9783
    %v11152 = vunpack.c.h.b16 %v9783
    %v11153 = vunpack.c.l.b16 %v9784
    %v11154 = vunpack.c.h.b16 %v9784
    %v11155 = vunpack.c.l.b16 %v9785
    %v11156 = vunpack.c.l.b16 %v9786
    %v11157 = vunpack.c.h.b16 %v9786
    %v11158 = vunpack.c.l.b16 %v9787
    %v11159 = vunpack.c.h.b16 %v9787
    %v11160 = vunpack.c.l.b16 %v9788
    %v11161 = vunpack.c.h.b16 %v9788
    %v11162 = vunpack.c.l.b16 %v9789
    %v11163 = vunpack.c.l.b16 %v9790
    %v11164 = vunpack.c.h.b16 %v9790
    %v11165 = vunpack.c.l.b16 %v9791
    %v11166 = vunpack.c.h.b16 %v9791
    %v11167 = vunpack.c.l.b16 %v9792
    %v11168 = vunpack.c.h.b16 %v9792
    %v11169 = vunpack.c.l.b16 %v9793
    %v11170 = vunpack.c.l.b16 %v9794
    %v11171 = vunpack.c.h.b16 %v9794
    %v11172 = vunpack.c.l.b16 %v9795
    %v11173 = vunpack.c.h.b16 %v9795
    %v11174 = vunpack.c.l.b16 %v9796
    %v11175 = vunpack.c.h.b16 %v9796
    %v11176 = vunpack.c.l.b16 %v9797
    %v11177 = vunpack.c.l.b16 %v9798
    %v11178 = vunpack.c.h.b16 %v9798
    %v11179 = vunpack.c.l.b16 %v9799
    %v11180 = vunpack.c.h.b16 %v9799
    %v11181 = vunpack.c.l.b16 %v9800
    %v11182 = vunpack.c.h.b16 %v9800
    %v11183 = vunpack.c.l.b16 %v9801
    %v11184 = vunpack.c.l.b16 %v9802
    %v11185 = vunpack.c.h.b16 %v9802
    %v11186 = vunpack.c.l.b16 %v9803
    %v11187 = vunpack.c.h.b16 %v9803
    %v11188 = vunpack.c.l.b16 %v9804
    %v11189 = vunpack.c.h.b16 %v9804
    %v11190 = vunpack.c.l.b16 %v9805
    %v11191 = vunpack.c.l.b16 %v9806
    %v11192 = vunpack.c.h.b16 %v9806
    %v11193 = vunpack.c.l.b16 %v9807
    %v11194 = vunpack.c.h.b16 %v9807
    %v11195 = vunpack.c.l.b16 %v9808
    %v11196 = vunpack.c.h.b16 %v9808
    %v11197 = vunpack.c.l.b16 %v9809
    %v11198 = vunpack.c.l.b16 %v9810
    %v11199 = vunpack.c.h.b16 %v9810
    %v11200 = vunpack.c.l.b16 %v9811
    %v11201 = vunpack.c.h.b16 %v9811
    %v11202 = vunpack.c.l.b16 %v9812
    %v11203 = vunpack.c.h.b16 %v9812
    %v11204 = vunpack.c.l.b16 %v9813
    %v11205 = vunpack.c.l.b16 %v9814
    %v11206 = vunpack.c.h.b16 %v9814
    %v11207 = vunpack.c.l.b16 %v9815
    %v11208 = vunpack.c.h.b16 %v9815
    %v11209 = vunpack.c.l.b16 %v9816
    %v11210 = vunpack.c.h.b16 %v9816
    %v11211 = vunpack.c.l.b16 %v9817
    %v11212 = vunpack.c.l.b16 %v9818
    %v11213 = vunpack.c.h.b16 %v9818
    %v11214 = vunpack.c.l.b16 %v9819
    %v11215 = vunpack.c.h.b16 %v9819
    %v11216 = vunpack.c.l.b16 %v9820
    %v11217 = vunpack.c.h.b16 %v9820
    %v11218 = vunpack.c.l.b16 %v9821
    %v11219 = vunpack.c.l.b16 %v9822
    %v11220 = vunpack.c.h.b16 %v9822
    %v11221 = vunpack.c.l.b16 %v9823
    %v11222 = vunpack.c.h.b16 %v9823
    %v11223 = vunpack.c.l.b16 %v9824
    %v11224 = vunpack.c.h.b16 %v9824
    %v11225 = vunpack.c.l.b16 %v9825
    %v11226 = vunpack.c.l.b16 %v9826
    %v11227 = vunpack.c.h.b16 %v9826
    %v11228 = vunpack.c.l.b16 %v9827
    %v11229 = vunpack.c.h.b16 %v9827
    %v11230 = vunpack.c.l.b16 %v9828
    %v11231 = vunpack.c.h.b16 %v9828
    %v11232 = vunpack.c.l.b16 %v9829
    %v11233 = vunpack.c.l.b16 %v9830
    %v11234 = vunpack.c.h.b16 %v9830
    %v11235 = vunpack.c.l.b16 %v9831
    %v11236 = vunpack.c.h.b16 %v9831
    %v11237 = vunpack.c.l.b16 %v9832
    %v11238 = vunpack.c.h.b16 %v9832
    %v11239 = vunpack.c.l.b16 %v9833
    %v11240 = vunpack.c.l.b16 %v9834
    %v11241 = vunpack.c.h.b16 %v9834
    %v11242 = vunpack.c.l.b16 %v9835
    %v11243 = vunpack.c.h.b16 %v9835
    %v11244 = vunpack.c.l.b16 %v9836
    %v11245 = vunpack.c.h.b16 %v9836
    %v11246 = vunpack.c.l.b16 %v9837
    %v11247 = vunpack.c.l.b16 %v9838
    %v11248 = vunpack.c.h.b16 %v9838
    %v11249 = vunpack.c.l.b16 %v9839
    %v11250 = vunpack.c.h.b16 %v9839
    %v11251 = vunpack.c.l.b16 %v9840
    %v11252 = vunpack.c.h.b16 %v9840
    %v11253 = vunpack.c.l.b16 %v9841
    %v11254 = vunpack.c.l.b16 %v9842
    %v11255 = vunpack.c.h.b16 %v9842
    %v11256 = vunpack.c.l.b16 %v9843
    %v11257 = vunpack.c.h.b16 %v9843
    %v11258 = vunpack.c.l.b16 %v9844
    %v11259 = vunpack.c.h.b16 %v9844
    %v11260 = vunpack.c.l.b16 %v9845
    %v11261 = vunpack.c.l.b16 %v9846
    %v11262 = vunpack.c.h.b16 %v9846
    %v11263 = vunpack.c.l.b16 %v9847
    %v11264 = vunpack.c.h.b16 %v9847
    %v11265 = vunpack.c.l.b16 %v9848
    %v11266 = vunpack.c.h.b16 %v9848
    %v11267 = vunpack.c.l.b16 %v9849
    %v11268 = vunpack.c.l.b16 %v9850
    %v11269 = vunpack.c.h.b16 %v9850
    %v11270 = vunpack.c.l.b16 %v9851
    %v11271 = vunpack.c.h.b16 %v9851
    %v11272 = vunpack.c.l.b16 %v9852
    %v11273 = vunpack.c.h.b16 %v9852
    %v11274 = vunpack.c.l.b16 %v9853
    %v11275 = vunpack.c.l.b16 %v9854
    %v11276 = vunpack.c.h.b16 %v9854
    %v11277 = vunpack.c.l.b16 %v9855
    %v11278 = vunpack.c.h.b16 %v9855
    %v11279 = vunpack.c.l.b16 %v9856
    %v11280 = vunpack.c.h.b16 %v9856
    %v11281 = vunpack.c.l.b16 %v9857
    %v11282 = vunpack.c.l.b16 %v9858
    %v11283 = vunpack.c.h.b16 %v9858
    %v11284 = vunpack.c.l.b16 %v9859
    %v11285 = vunpack.c.h.b16 %v9859
    %v11286 = vunpack.c.l.b16 %v9860
    %v11287 = vunpack.c.h.b16 %v9860
    %v11288 = vunpack.c.l.b16 %v9861
    %v11289 = vunpack.c.l.b16 %v9862
    %v11290 = vunpack.c.h.b16 %v9862
    %v11291 = vunpack.c.l.b16 %v9863
    %v11292 = vunpack.c.h.b16 %v9863
    %v11293 = vunpack.c.l.b16 %v9864
    %v11294 = vunpack.c.h.b16 %v9864
    %v11295 = vunpack.c.l.b16 %v9865
    %v11296 = vunpack.c.l.b16 %v9866
    %v11297 = vunpack.c.h.b16 %v9866
    %v11298 = vunpack.c.l.b16 %v9867
    %v11299 = vunpack.c.h.b16 %v9867
    %v11300 = vunpack.c.l.b16 %v9868
    %v11301 = vunpack.c.h.b16 %v9868
    %v11302 = vunpack.c.l.b16 %v9869
    %v11303 = vunpack.c.l.b16 %v9870
    %v11304 = vunpack.c.h.b16 %v9870
    %v11305 = vunpack.c.l.b16 %v9871
    %v11306 = vunpack.c.h.b16 %v9871
    %v11307 = vunpack.c.l.b16 %v9872
    %v11308 = vunpack.c.h.b16 %v9872
    %v11309 = vunpack.c.l.b16 %v9873
    %v11310 = vunpack.c.l.b16 %v9874
    %v11311 = vunpack.c.h.b16 %v9874
    %v11312 = vunpack.c.l.b16 %v9875
    %v11313 = vunpack.c.h.b16 %v9875
    %v11314 = vunpack.c.l.b16 %v9876
    %v11315 = vunpack.c.h.b16 %v9876
    %v11316 = vunpack.c.l.b16 %v9877
    %v11317 = vunpack.c.l.b16 %v9878
    %v11318 = vunpack.c.h.b16 %v9878
    %v11319 = vunpack.c.l.b16 %v9879
    %v11320 = vunpack.c.h.b16 %v9879
    %v11321 = vunpack.c.l.b16 %v9880
    %v11322 = vunpack.c.h.b16 %v9880
    %v11323 = vunpack.c.l.b16 %v9881
    %v11324 = vunpack.c.l.b16 %v9882
    %v11325 = vunpack.c.h.b16 %v9882
    %v11326 = vunpack.c.l.b16 %v9883
    %v11327 = vunpack.c.h.b16 %v9883
    %v11328 = vunpack.c.l.b16 %v9884
    %v11329 = vunpack.c.h.b16 %v9884
    %v11330 = vunpack.c.l.b16 %v9885
    %v11331 = vpack.c.b16 %v10442, %v10435
    %v11332 = vpack.c.b16 %v10443, %v10436
    %v11333 = vpack.c.b16 %v10444, %v10437
    %v11334 = vpack.c.b16 %v10445, %v10438
    %v11335 = vpack.c.b16 %v10446, %v10439
    %v11336 = vpack.c.b16 %v10447, %v10440
    %v11337 = vpack.c.b16 %v10448, %v10441
    %v11338 = vpack.c.b16 %v10456, %v10449
    %v11339 = vpack.c.b16 %v10457, %v10450
    %v11340 = vpack.c.b16 %v10458, %v10451
    %v11341 = vpack.c.b16 %v10459, %v10452
    %v11342 = vpack.c.b16 %v10460, %v10453
    %v11343 = vpack.c.b16 %v10461, %v10454
    %v11344 = vpack.c.b16 %v10462, %v10455
    %v11345 = vpack.c.b16 %v10470, %v10463
    %v11346 = vpack.c.b16 %v10471, %v10464
    %v11347 = vpack.c.b16 %v10472, %v10465
    %v11348 = vpack.c.b16 %v10473, %v10466
    %v11349 = vpack.c.b16 %v10474, %v10467
    %v11350 = vpack.c.b16 %v10475, %v10468
    %v11351 = vpack.c.b16 %v10476, %v10469
    %v11352 = vpack.c.b16 %v10484, %v10477
    %v11353 = vpack.c.b16 %v10485, %v10478
    %v11354 = vpack.c.b16 %v10486, %v10479
    %v11355 = vpack.c.b16 %v10487, %v10480
    %v11356 = vpack.c.b16 %v10488, %v10481
    %v11357 = vpack.c.b16 %v10489, %v10482
    %v11358 = vpack.c.b16 %v10490, %v10483
    %v11359 = vpack.c.b16 %v10498, %v10491
    %v11360 = vpack.c.b16 %v10499, %v10492
    %v11361 = vpack.c.b16 %v10500, %v10493
    %v11362 = vpack.c.b16 %v10501, %v10494
    %v11363 = vpack.c.b16 %v10502, %v10495
    %v11364 = vpack.c.b16 %v10503, %v10496
    %v11365 = vpack.c.b16 %v10504, %v10497
    %v11366 = vpack.c.b16 %v10512, %v10505
    %v11367 = vpack.c.b16 %v10513, %v10506
    %v11368 = vpack.c.b16 %v10514, %v10507
    %v11369 = vpack.c.b16 %v10515, %v10508
    %v11370 = vpack.c.b16 %v10516, %v10509
    %v11371 = vpack.c.b16 %v10517, %v10510
    %v11372 = vpack.c.b16 %v10518, %v10511
    %v11373 = vpack.c.b16 %v10526, %v10519
    %v11374 = vpack.c.b16 %v10527, %v10520
    %v11375 = vpack.c.b16 %v10528, %v10521
    %v11376 = vpack.c.b16 %v10529, %v10522
    %v11377 = vpack.c.b16 %v10530, %v10523
    %v11378 = vpack.c.b16 %v10531, %v10524
    %v11379 = vpack.c.b16 %v10532, %v10525
    %v11380 = vpack.c.b16 %v10540, %v10533
    %v11381 = vpack.c.b16 %v10541, %v10534
    %v11382 = vpack.c.b16 %v10542, %v10535
    %v11383 = vpack.c.b16 %v10543, %v10536
    %v11384 = vpack.c.b16 %v10544, %v10537
    %v11385 = vpack.c.b16 %v10545, %v10538
    %v11386 = vpack.c.b16 %v10546, %v10539
    %v11387 = vpack.c.b16 %v10554, %v10547
    %v11388 = vpack.c.b16 %v10555, %v10548
    %v11389 = vpack.c.b16 %v10556, %v10549
    %v11390 = vpack.c.b16 %v10557, %v10550
    %v11391 = vpack.c.b16 %v10558, %v10551
    %v11392 = vpack.c.b16 %v10559, %v10552
    %v11393 = vpack.c.b16 %v10560, %v10553
    %v11394 = vpack.c.b16 %v10568, %v10561
    %v11395 = vpack.c.b16 %v10569, %v10562
    %v11396 = vpack.c.b16 %v10570, %v10563
    %v11397 = vpack.c.b16 %v10571, %v10564
    %v11398 = vpack.c.b16 %v10572, %v10565
    %v11399 = vpack.c.b16 %v10573, %v10566
    %v11400 = vpack.c.b16 %v10574, %v10567
    %v11401 = vpack.c.b16 %v10582, %v10575
    %v11402 = vpack.c.b16 %v10583, %v10576
    %v11403 = vpack.c.b16 %v10584, %v10577
    %v11404 = vpack.c.b16 %v10585, %v10578
    %v11405 = vpack.c.b16 %v10586, %v10579
    %v11406 = vpack.c.b16 %v10587, %v10580
    %v11407 = vpack.c.b16 %v10588, %v10581
    %v11408 = vpack.c.b16 %v10596, %v10589
    %v11409 = vpack.c.b16 %v10597, %v10590
    %v11410 = vpack.c.b16 %v10598, %v10591
    %v11411 = vpack.c.b16 %v10599, %v10592
    %v11412 = vpack.c.b16 %v10600, %v10593
    %v11413 = vpack.c.b16 %v10601, %v10594
    %v11414 = vpack.c.b16 %v10602, %v10595
    %v11415 = vpack.c.b16 %v10610, %v10603
    %v11416 = vpack.c.b16 %v10611, %v10604
    %v11417 = vpack.c.b16 %v10612, %v10605
    %v11418 = vpack.c.b16 %v10613, %v10606
    %v11419 = vpack.c.b16 %v10614, %v10607
    %v11420 = vpack.c.b16 %v10615, %v10608
    %v11421 = vpack.c.b16 %v10616, %v10609
    %v11422 = vpack.c.b16 %v10624, %v10617
    %v11423 = vpack.c.b16 %v10625, %v10618
    %v11424 = vpack.c.b16 %v10626, %v10619
    %v11425 = vpack.c.b16 %v10627, %v10620
    %v11426 = vpack.c.b16 %v10628, %v10621
    %v11427 = vpack.c.b16 %v10629, %v10622
    %v11428 = vpack.c.b16 %v10630, %v10623
    %v11429 = vpack.c.b16 %v10638, %v10631
    %v11430 = vpack.c.b16 %v10639, %v10632
    %v11431 = vpack.c.b16 %v10640, %v10633
    %v11432 = vpack.c.b16 %v10641, %v10634
    %v11433 = vpack.c.b16 %v10642, %v10635
    %v11434 = vpack.c.b16 %v10643, %v10636
    %v11435 = vpack.c.b16 %v10644, %v10637
    %v11436 = vpack.c.b16 %v10652, %v10645
    %v11437 = vpack.c.b16 %v10653, %v10646
    %v11438 = vpack.c.b16 %v10654, %v10647
    %v11439 = vpack.c.b16 %v10655, %v10648
    %v11440 = vpack.c.b16 %v10656, %v10649
    %v11441 = vpack.c.b16 %v10657, %v10650
    %v11442 = vpack.c.b16 %v10658, %v10651
    %v11443 = vpack.c.b16 %v10666, %v10659
    %v11444 = vpack.c.b16 %v10667, %v10660
    %v11445 = vpack.c.b16 %v10668, %v10661
    %v11446 = vpack.c.b16 %v10669, %v10662
    %v11447 = vpack.c.b16 %v10670, %v10663
    %v11448 = vpack.c.b16 %v10671, %v10664
    %v11449 = vpack.c.b16 %v10672, %v10665
    %v11450 = vpack.c.b16 %v10680, %v10673
    %v11451 = vpack.c.b16 %v10681, %v10674
    %v11452 = vpack.c.b16 %v10682, %v10675
    %v11453 = vpack.c.b16 %v10683, %v10676
    %v11454 = vpack.c.b16 %v10684, %v10677
    %v11455 = vpack.c.b16 %v10685, %v10678
    %v11456 = vpack.c.b16 %v10686, %v10679
    %v11457 = vpack.c.b16 %v10694, %v10687
    %v11458 = vpack.c.b16 %v10695, %v10688
    %v11459 = vpack.c.b16 %v10696, %v10689
    %v11460 = vpack.c.b16 %v10697, %v10690
    %v11461 = vpack.c.b16 %v10698, %v10691
    %v11462 = vpack.c.b16 %v10699, %v10692
    %v11463 = vpack.c.b16 %v10700, %v10693
    %v11464 = vpack.c.b16 %v10708, %v10701
    %v11465 = vpack.c.b16 %v10709, %v10702
    %v11466 = vpack.c.b16 %v10710, %v10703
    %v11467 = vpack.c.b16 %v10711, %v10704
    %v11468 = vpack.c.b16 %v10712, %v10705
    %v11469 = vpack.c.b16 %v10713, %v10706
    %v11470 = vpack.c.b16 %v10714, %v10707
    %v11471 = vpack.c.b16 %v10722, %v10715
    %v11472 = vpack.c.b16 %v10723, %v10716
    %v11473 = vpack.c.b16 %v10724, %v10717
    %v11474 = vpack.c.b16 %v10725, %v10718
    %v11475 = vpack.c.b16 %v10726, %v10719
    %v11476 = vpack.c.b16 %v10727, %v10720
    %v11477 = vpack.c.b16 %v10728, %v10721
    %v11478 = vpack.c.b16 %v10736, %v10729
    %v11479 = vpack.c.b16 %v10737, %v10730
    %v11480 = vpack.c.b16 %v10738, %v10731
    %v11481 = vpack.c.b16 %v10739, %v10732
    %v11482 = vpack.c.b16 %v10740, %v10733
    %v11483 = vpack.c.b16 %v10741, %v10734
    %v11484 = vpack.c.b16 %v10742, %v10735
    %v11485 = vpack.c.b16 %v10750, %v10743
    %v11486 = vpack.c.b16 %v10751, %v10744
    %v11487 = vpack.c.b16 %v10752, %v10745
    %v11488 = vpack.c.b16 %v10753, %v10746
    %v11489 = vpack.c.b16 %v10754, %v10747
    %v11490 = vpack.c.b16 %v10755, %v10748
    %v11491 = vpack.c.b16 %v10756, %v10749
    %v11492 = vpack.c.b16 %v10764, %v10757
    %v11493 = vpack.c.b16 %v10765, %v10758
    %v11494 = vpack.c.b16 %v10766, %v10759
    %v11495 = vpack.c.b16 %v10767, %v10760
    %v11496 = vpack.c.b16 %v10768, %v10761
    %v11497 = vpack.c.b16 %v10769, %v10762
    %v11498 = vpack.c.b16 %v10770, %v10763
    %v11499 = vpack.c.b16 %v10778, %v10771
    %v11500 = vpack.c.b16 %v10779, %v10772
    %v11501 = vpack.c.b16 %v10780, %v10773
    %v11502 = vpack.c.b16 %v10781, %v10774
    %v11503 = vpack.c.b16 %v10782, %v10775
    %v11504 = vpack.c.b16 %v10783, %v10776
    %v11505 = vpack.c.b16 %v10784, %v10777
    %v11506 = vpack.c.b16 %v10792, %v10785
    %v11507 = vpack.c.b16 %v10793, %v10786
    %v11508 = vpack.c.b16 %v10794, %v10787
    %v11509 = vpack.c.b16 %v10795, %v10788
    %v11510 = vpack.c.b16 %v10796, %v10789
    %v11511 = vpack.c.b16 %v10797, %v10790
    %v11512 = vpack.c.b16 %v10798, %v10791
    %v11513 = vpack.c.b16 %v10806, %v10799
    %v11514 = vpack.c.b16 %v10807, %v10800
    %v11515 = vpack.c.b16 %v10808, %v10801
    %v11516 = vpack.c.b16 %v10809, %v10802
    %v11517 = vpack.c.b16 %v10810, %v10803
    %v11518 = vpack.c.b16 %v10811, %v10804
    %v11519 = vpack.c.b16 %v10812, %v10805
    %v11520 = vpack.c.b16 %v10820, %v10813
    %v11521 = vpack.c.b16 %v10821, %v10814
    %v11522 = vpack.c.b16 %v10822, %v10815
    %v11523 = vpack.c.b16 %v10823, %v10816
    %v11524 = vpack.c.b16 %v10824, %v10817
    %v11525 = vpack.c.b16 %v10825, %v10818
    %v11526 = vpack.c.b16 %v10826, %v10819
    %v11527 = vpack.c.b16 %v10834, %v10827
    %v11528 = vpack.c.b16 %v10835, %v10828
    %v11529 = vpack.c.b16 %v10836, %v10829
    %v11530 = vpack.c.b16 %v10837, %v10830
    %v11531 = vpack.c.b16 %v10838, %v10831
    %v11532 = vpack.c.b16 %v10839, %v10832
    %v11533 = vpack.c.b16 %v10840, %v10833
    %v11534 = vpack.c.b16 %v10848, %v10841
    %v11535 = vpack.c.b16 %v10849, %v10842
    %v11536 = vpack.c.b16 %v10850, %v10843
    %v11537 = vpack.c.b16 %v10851, %v10844
    %v11538 = vpack.c.b16 %v10852, %v10845
    %v11539 = vpack.c.b16 %v10853, %v10846
    %v11540 = vpack.c.b16 %v10854, %v10847
    %v11541 = vpack.c.b16 %v10862, %v10855
    %v11542 = vpack.c.b16 %v10863, %v10856
    %v11543 = vpack.c.b16 %v10864, %v10857
    %v11544 = vpack.c.b16 %v10865, %v10858
    %v11545 = vpack.c.b16 %v10866, %v10859
    %v11546 = vpack.c.b16 %v10867, %v10860
    %v11547 = vpack.c.b16 %v10868, %v10861
    %v11548 = vpack.c.b16 %v10876, %v10869
    %v11549 = vpack.c.b16 %v10877, %v10870
    %v11550 = vpack.c.b16 %v10878, %v10871
    %v11551 = vpack.c.b16 %v10879, %v10872
    %v11552 = vpack.c.b16 %v10880, %v10873
    %v11553 = vpack.c.b16 %v10881, %v10874
    %v11554 = vpack.c.b16 %v10882, %v10875
    %v11555 = vpack.c.b16 %v10890, %v10883
    %v11556 = vpack.c.b16 %v10891, %v10884
    %v11557 = vpack.c.b16 %v10892, %v10885
    %v11558 = vpack.c.b16 %v10893, %v10886
    %v11559 = vpack.c.b16 %v10894, %v10887
    %v11560 = vpack.c.b16 %v10895, %v10888
    %v11561 = vpack.c.b16 %v10896, %v10889
    %v11562 = vpack.c.b16 %v10904, %v10897
    %v11563 = vpack.c.b16 %v10905, %v10898
    %v11564 = vpack.c.b16 %v10906, %v10899
    %v11565 = vpack.c.b16 %v10907, %v10900
    %v11566 = vpack.c.b16 %v10908, %v10901
    %v11567 = vpack.c.b16 %v10909, %v10902
    %v11568 = vpack.c.b16 %v10910, %v10903
    %v11569 = vpack.c.b16 %v10918, %v10911
    %v11570 = vpack.c.b16 %v10919, %v10912
    %v11571 = vpack.c.b16 %v10920, %v10913
    %v11572 = vpack.c.b16 %v10921, %v10914
    %v11573 = vpack.c.b16 %v10922, %v10915
    %v11574 = vpack.c.b16 %v10923, %v10916
    %v11575 = vpack.c.b16 %v10924, %v10917
    %v11576 = vpack.c.b16 %v10932, %v10925
    %v11577 = vpack.c.b16 %v10933, %v10926
    %v11578 = vpack.c.b16 %v10934, %v10927
    %v11579 = vpack.c.b16 %v10935, %v10928
    %v11580 = vpack.c.b16 %v10936, %v10929
    %v11581 = vpack.c.b16 %v10937, %v10930
    %v11582 = vpack.c.b16 %v10938, %v10931
    %v11583 = vpack.c.b16 %v10946, %v10939
    %v11584 = vpack.c.b16 %v10947, %v10940
    %v11585 = vpack.c.b16 %v10948, %v10941
    %v11586 = vpack.c.b16 %v10949, %v10942
    %v11587 = vpack.c.b16 %v10950, %v10943
    %v11588 = vpack.c.b16 %v10951, %v10944
    %v11589 = vpack.c.b16 %v10952, %v10945
    %v11590 = vpack.c.b16 %v10960, %v10953
    %v11591 = vpack.c.b16 %v10961, %v10954
    %v11592 = vpack.c.b16 %v10962, %v10955
    %v11593 = vpack.c.b16 %v10963, %v10956
    %v11594 = vpack.c.b16 %v10964, %v10957
    %v11595 = vpack.c.b16 %v10965, %v10958
    %v11596 = vpack.c.b16 %v10966, %v10959
    %v11597 = vpack.c.b16 %v10974, %v10967
    %v11598 = vpack.c.b16 %v10975, %v10968
    %v11599 = vpack.c.b16 %v10976, %v10969
    %v11600 = vpack.c.b16 %v10977, %v10970
    %v11601 = vpack.c.b16 %v10978, %v10971
    %v11602 = vpack.c.b16 %v10979, %v10972
    %v11603 = vpack.c.b16 %v10980, %v10973
    %v11604 = vpack.c.b16 %v10988, %v10981
    %v11605 = vpack.c.b16 %v10989, %v10982
    %v11606 = vpack.c.b16 %v10990, %v10983
    %v11607 = vpack.c.b16 %v10991, %v10984
    %v11608 = vpack.c.b16 %v10992, %v10985
    %v11609 = vpack.c.b16 %v10993, %v10986
    %v11610 = vpack.c.b16 %v10994, %v10987
    %v11611 = vpack.c.b16 %v11002, %v10995
    %v11612 = vpack.c.b16 %v11003, %v10996
    %v11613 = vpack.c.b16 %v11004, %v10997
    %v11614 = vpack.c.b16 %v11005, %v10998
    %v11615 = vpack.c.b16 %v11006, %v10999
    %v11616 = vpack.c.b16 %v11007, %v11000
    %v11617 = vpack.c.b16 %v11008, %v11001
    %v11618 = vpack.c.b16 %v11016, %v11009
    %v11619 = vpack.c.b16 %v11017, %v11010
    %v11620 = vpack.c.b16 %v11018, %v11011
    %v11621 = vpack.c.b16 %v11019, %v11012
    %v11622 = vpack.c.b16 %v11020, %v11013
    %v11623 = vpack.c.b16 %v11021, %v11014
    %v11624 = vpack.c.b16 %v11022, %v11015
    %v11625 = vpack.c.b16 %v11030, %v11023
    %v11626 = vpack.c.b16 %v11031, %v11024
    %v11627 = vpack.c.b16 %v11032, %v11025
    %v11628 = vpack.c.b16 %v11033, %v11026
    %v11629 = vpack.c.b16 %v11034, %v11027
    %v11630 = vpack.c.b16 %v11035, %v11028
    %v11631 = vpack.c.b16 %v11036, %v11029
    %v11632 = vpack.c.b16 %v11044, %v11037
    %v11633 = vpack.c.b16 %v11045, %v11038
    %v11634 = vpack.c.b16 %v11046, %v11039
    %v11635 = vpack.c.b16 %v11047, %v11040
    %v11636 = vpack.c.b16 %v11048, %v11041
    %v11637 = vpack.c.b16 %v11049, %v11042
    %v11638 = vpack.c.b16 %v11050, %v11043
    %v11639 = vpack.c.b16 %v11058, %v11051
    %v11640 = vpack.c.b16 %v11059, %v11052
    %v11641 = vpack.c.b16 %v11060, %v11053
    %v11642 = vpack.c.b16 %v11061, %v11054
    %v11643 = vpack.c.b16 %v11062, %v11055
    %v11644 = vpack.c.b16 %v11063, %v11056
    %v11645 = vpack.c.b16 %v11064, %v11057
    %v11646 = vpack.c.b16 %v11072, %v11065
    %v11647 = vpack.c.b16 %v11073, %v11066
    %v11648 = vpack.c.b16 %v11074, %v11067
    %v11649 = vpack.c.b16 %v11075, %v11068
    %v11650 = vpack.c.b16 %v11076, %v11069
    %v11651 = vpack.c.b16 %v11077, %v11070
    %v11652 = vpack.c.b16 %v11078, %v11071
    %v11653 = vpack.c.b16 %v11086, %v11079
    %v11654 = vpack.c.b16 %v11087, %v11080
    %v11655 = vpack.c.b16 %v11088, %v11081
    %v11656 = vpack.c.b16 %v11089, %v11082
    %v11657 = vpack.c.b16 %v11090, %v11083
    %v11658 = vpack.c.b16 %v11091, %v11084
    %v11659 = vpack.c.b16 %v11092, %v11085
    %v11660 = vpack.c.b16 %v11100, %v11093
    %v11661 = vpack.c.b16 %v11101, %v11094
    %v11662 = vpack.c.b16 %v11102, %v11095
    %v11663 = vpack.c.b16 %v11103, %v11096
    %v11664 = vpack.c.b16 %v11104, %v11097
    %v11665 = vpack.c.b16 %v11105, %v11098
    %v11666 = vpack.c.b16 %v11106, %v11099
    %v11667 = vpack.c.b16 %v11114, %v11107
    %v11668 = vpack.c.b16 %v11115, %v11108
    %v11669 = vpack.c.b16 %v11116, %v11109
    %v11670 = vpack.c.b16 %v11117, %v11110
    %v11671 = vpack.c.b16 %v11118, %v11111
    %v11672 = vpack.c.b16 %v11119, %v11112
    %v11673 = vpack.c.b16 %v11120, %v11113
    %v11674 = vpack.c.b16 %v11128, %v11121
    %v11675 = vpack.c.b16 %v11129, %v11122
    %v11676 = vpack.c.b16 %v11130, %v11123
    %v11677 = vpack.c.b16 %v11131, %v11124
    %v11678 = vpack.c.b16 %v11132, %v11125
    %v11679 = vpack.c.b16 %v11133, %v11126
    %v11680 = vpack.c.b16 %v11134, %v11127
    %v11681 = vpack.c.b16 %v11142, %v11135
    %v11682 = vpack.c.b16 %v11143, %v11136
    %v11683 = vpack.c.b16 %v11144, %v11137
    %v11684 = vpack.c.b16 %v11145, %v11138
    %v11685 = vpack.c.b16 %v11146, %v11139
    %v11686 = vpack.c.b16 %v11147, %v11140
    %v11687 = vpack.c.b16 %v11148, %v11141
    %v11688 = vpack.c.b16 %v11156, %v11149
    %v11689 = vpack.c.b16 %v11157, %v11150
    %v11690 = vpack.c.b16 %v11158, %v11151
    %v11691 = vpack.c.b16 %v11159, %v11152
    %v11692 = vpack.c.b16 %v11160, %v11153
    %v11693 = vpack.c.b16 %v11161, %v11154
    %v11694 = vpack.c.b16 %v11162, %v11155
    %v11695 = vpack.c.b16 %v11170, %v11163
    %v11696 = vpack.c.b16 %v11171, %v11164
    %v11697 = vpack.c.b16 %v11172, %v11165
    %v11698 = vpack.c.b16 %v11173, %v11166
    %v11699 = vpack.c.b16 %v11174, %v11167
    %v11700 = vpack.c.b16 %v11175, %v11168
    %v11701 = vpack.c.b16 %v11176, %v11169
    %v11702 = vpack.c.b16 %v11184, %v11177
    %v11703 = vpack.c.b16 %v11185, %v11178
    %v11704 = vpack.c.b16 %v11186, %v11179
    %v11705 = vpack.c.b16 %v11187, %v11180
    %v11706 = vpack.c.b16 %v11188, %v11181
    %v11707 = vpack.c.b16 %v11189, %v11182
    %v11708 = vpack.c.b16 %v11190, %v11183
    %v11709 = vpack.c.b16 %v11198, %v11191
    %v11710 = vpack.c.b16 %v11199, %v11192
    %v11711 = vpack.c.b16 %v11200, %v11193
    %v11712 = vpack.c.b16 %v11201, %v11194
    %v11713 = vpack.c.b16 %v11202, %v11195
    %v11714 = vpack.c.b16 %v11203, %v11196
    %v11715 = vpack.c.b16 %v11204, %v11197
    %v11716 = vpack.c.b16 %v11212, %v11205
    %v11717 = vpack.c.b16 %v11213, %v11206
    %v11718 = vpack.c.b16 %v11214, %v11207
    %v11719 = vpack.c.b16 %v11215, %v11208
    %v11720 = vpack.c.b16 %v11216, %v11209
    %v11721 = vpack.c.b16 %v11217, %v11210
    %v11722 = vpack.c.b16 %v11218, %v11211
    %v11723 = vpack.c.b16 %v11226, %v11219
    %v11724 = vpack.c.b16 %v11227, %v11220
    %v11725 = vpack.c.b16 %v11228, %v11221
    %v11726 = vpack.c.b16 %v11229, %v11222
    %v11727 = vpack.c.b16 %v11230, %v11223
    %v11728 = vpack.c.b16 %v11231, %v11224
    %v11729 = vpack.c.b16 %v11232, %v11225
    %v11730 = vpack.c.b16 %v11240, %v11233
    %v11731 = vpack.c.b16 %v11241, %v11234
    %v11732 = vpack.c.b16 %v11242, %v11235
    %v11733 = vpack.c.b16 %v11243, %v11236
    %v11734 = vpack.c.b16 %v11244, %v11237
    %v11735 = vpack.c.b16 %v11245, %v11238
    %v11736 = vpack.c.b16 %v11246, %v11239
    %v11737 = vpack.c.b16 %v11254, %v11247
    %v11738 = vpack.c.b16 %v11255, %v11248
    %v11739 = vpack.c.b16 %v11256, %v11249
    %v11740 = vpack.c.b16 %v11257, %v11250
    %v11741 = vpack.c.b16 %v11258, %v11251
    %v11742 = vpack.c.b16 %v11259, %v11252
    %v11743 = vpack.c.b16 %v11260, %v11253
    %v11744 = vpack.c.b16 %v11268, %v11261
    %v11745 = vpack.c.b16 %v11269, %v11262
    %v11746 = vpack.c.b16 %v11270, %v11263
    %v11747 = vpack.c.b16 %v11271, %v11264
    %v11748 = vpack.c.b16 %v11272, %v11265
    %v11749 = vpack.c.b16 %v11273, %v11266
    %v11750 = vpack.c.b16 %v11274, %v11267
    %v11751 = vpack.c.b16 %v11282, %v11275
    %v11752 = vpack.c.b16 %v11283, %v11276
    %v11753 = vpack.c.b16 %v11284, %v11277
    %v11754 = vpack.c.b16 %v11285, %v11278
    %v11755 = vpack.c.b16 %v11286, %v11279
    %v11756 = vpack.c.b16 %v11287, %v11280
    %v11757 = vpack.c.b16 %v11288, %v11281
    %v11758 = vpack.c.b16 %v11296, %v11289
    %v11759 = vpack.c.b16 %v11297, %v11290
    %v11760 = vpack.c.b16 %v11298, %v11291
    %v11761 = vpack.c.b16 %v11299, %v11292
    %v11762 = vpack.c.b16 %v11300, %v11293
    %v11763 = vpack.c.b16 %v11301, %v11294
    %v11764 = vpack.c.b16 %v11302, %v11295
    %v11765 = vpack.c.b16 %v11310, %v11303
    %v11766 = vpack.c.b16 %v11311, %v11304
    %v11767 = vpack.c.b16 %v11312, %v11305
    %v11768 = vpack.c.b16 %v11313, %v11306
    %v11769 = vpack.c.b16 %v11314, %v11307
    %v11770 = vpack.c.b16 %v11315, %v11308
    %v11771 = vpack.c.b16 %v11316, %v11309
    %v11772 = vpack.c.b16 %v11324, %v11317
    %v11773 = vpack.c.b16 %v11325, %v11318
    %v11774 = vpack.c.b16 %v11326, %v11319
    %v11775 = vpack.c.b16 %v11327, %v11320
    %v11776 = vpack.c.b16 %v11328, %v11321
    %v11777 = vpack.c.b16 %v11329, %v11322
    %v11778 = vpack.c.b16 %v11330, %v11323
    %12227 = vmatprep.subr.bf16.mxu0 %v11332
    %12228 = vmatpush1.bf16.msra.mxu0 %v11331
    %12229 = vmatprep.subr.bf16.mxu0 %v11339
    %12230 = vmatpush1.bf16.msra.mxu0 %v11338
    %12231 = vmatprep.subr.bf16.mxu0 %v11346
    %12232 = vmatpush1.bf16.msra.mxu0 %v11345
    %12233 = vmatprep.subr.bf16.mxu0 %v11353
    %12234 = vmatpush1.bf16.msra.mxu0 %v11352
    %12235 = vmatprep.subr.bf16.mxu0 %v11360
    %12236 = vmatpush1.bf16.msra.mxu0 %v11359
    %12237 = vmatprep.subr.bf16.mxu0 %v11367
    %12238 = vmatpush1.bf16.msra.mxu0 %v11366
    %12239 = vmatprep.subr.bf16.mxu0 %v11374
    %12240 = vmatpush1.bf16.msra.mxu0 %v11373
    %12241 = vmatprep.subr.bf16.mxu0 %v11381
    %12242 = vmatpush1.bf16.msra.mxu0 %v11380
    %12243 = vmatprep.subr.bf16.mxu0 %v11388
    %12244 = vmatpush1.bf16.msra.mxu0 %v11387
    %12245 = vmatprep.subr.bf16.mxu0 %v11395
    %12246 = vmatpush1.bf16.msra.mxu0 %v11394
    %12247 = vmatprep.subr.bf16.mxu0 %v11402
    %12248 = vmatpush1.bf16.msra.mxu0 %v11401
    %12249 = vmatprep.subr.bf16.mxu0 %v11409
    %12250 = vmatpush1.bf16.msra.mxu0 %v11408
    %12251 = vmatprep.subr.bf16.mxu0 %v11416
    %12252 = vmatpush1.bf16.msra.mxu0 %v11415
    %12253 = vmatprep.subr.bf16.mxu0 %v11423
    %12254 = vmatpush1.bf16.msra.mxu0 %v11422
    %12255 = vmatprep.subr.bf16.mxu0 %v11430
    %12256 = vmatpush1.bf16.msra.mxu0 %v11429
    %12257 = vmatprep.subr.bf16.mxu0 %v11437
    %12258 = vmatpush1.bf16.msra.mxu0 %v11436
    %12259 = vmatprep.mubr.bf16.mxu0 %v9367
    %12260 = vmatmul.mubr.bf16.gmra.mrb[0].mxu0 %v9366
    %v12261 = vpop.f32.mrb[0].mxu0
    %v12262 = vadd.f32 %v9891, %v12261
    %v12263 = vpop.f32.mrb[0].mxu0
    %v12264 = vadd.f32 %v9895, %v12263
    %v12265 = vpop.f32.mrb[0].mxu0
    %v12266 = vadd.f32 %v9891, %v12265
    %v12267 = vpop.f32.mrb[0].mxu0
    %v12268 = vadd.f32 %v9895, %v12267
    %12269 = vdwg.mxu0
    %12270 = vmatprep.subr.bf16.mxu0 %v11444
    %12271 = vmatpush1.bf16.msra.mxu0 %v11443
    %12272 = vmatprep.subr.bf16.mxu0 %v11451
    %12273 = vmatpush1.bf16.msra.mxu0 %v11450
    %12274 = vmatprep.subr.bf16.mxu0 %v11458
    %12275 = vmatpush1.bf16.msra.mxu0 %v11457
    %12276 = vmatprep.subr.bf16.mxu0 %v11465
    %12277 = vmatpush1.bf16.msra.mxu0 %v11464
    %12278 = vmatprep.subr.bf16.mxu0 %v11472
    %12279 = vmatpush1.bf16.msra.mxu0 %v11471
    %12280 = vmatprep.subr.bf16.mxu0 %v11479
    %12281 = vmatpush1.bf16.msra.mxu0 %v11478
    %12282 = vmatprep.subr.bf16.mxu0 %v11486
    %12283 = vmatpush1.bf16.msra.mxu0 %v11485
    %12284 = vmatprep.subr.bf16.mxu0 %v11493
    %12285 = vmatpush1.bf16.msra.mxu0 %v11492
    %12286 = vmatprep.subr.bf16.mxu0 %v11500
    %12287 = vmatpush1.bf16.msra.mxu0 %v11499
    %12288 = vmatprep.subr.bf16.mxu0 %v11507
    %12289 = vmatpush1.bf16.msra.mxu0 %v11506
    %12290 = vmatprep.subr.bf16.mxu0 %v11514
    %12291 = vmatpush1.bf16.msra.mxu0 %v11513
    %12292 = vmatprep.subr.bf16.mxu0 %v11521
    %12293 = vmatpush1.bf16.msra.mxu0 %v11520
    %12294 = vmatprep.subr.bf16.mxu0 %v11528
    %12295 = vmatpush1.bf16.msra.mxu0 %v11527
    %12296 = vmatprep.subr.bf16.mxu0 %v11535
    %12297 = vmatpush1.bf16.msra.mxu0 %v11534
    %12298 = vmatprep.subr.bf16.mxu0 %v11542
    %12299 = vmatpush1.bf16.msra.mxu0 %v11541
    %12300 = vmatprep.subr.bf16.mxu0 %v11549
    %12301 = vmatpush1.bf16.msra.mxu0 %v11548
    %12302 = vmatprep.mubr.bf16.mxu0 %v9369
    %12303 = vmatmul.mubr.bf16.gmra.mrb[0].mxu0 %v9368
    %v12304 = vpop.f32.mrb[0].mxu0
    %v12305 = vadd.f32 %v12262, %v12304
    %v12306 = vpop.f32.mrb[0].mxu0
    %v12307 = vadd.f32 %v12264, %v12306
    %v12308 = vpop.f32.mrb[0].mxu0
    %v12309 = vadd.f32 %v12266, %v12308
    %v12310 = vpop.f32.mrb[0].mxu0
    %v12311 = vadd.f32 %v12268, %v12310
    %12312 = vdwg.mxu0
    %12313 = vmatprep.subr.bf16.mxu0 %v11556
    %12314 = vmatpush1.bf16.msra.mxu0 %v11555
    %12315 = vmatprep.subr.bf16.mxu0 %v11563
    %12316 = vmatpush1.bf16.msra.mxu0 %v11562
    %12317 = vmatprep.subr.bf16.mxu0 %v11570
    %12318 = vmatpush1.bf16.msra.mxu0 %v11569
    %12319 = vmatprep.subr.bf16.mxu0 %v11577
    %12320 = vmatpush1.bf16.msra.mxu0 %v11576
    %12321 = vmatprep.subr.bf16.mxu0 %v11584
    %12322 = vmatpush1.bf16.msra.mxu0 %v11583
    %12323 = vmatprep.subr.bf16.mxu0 %v11591
    %12324 = vmatpush1.bf16.msra.mxu0 %v11590
    %12325 = vmatprep.subr.bf16.mxu0 %v11598
    %12326 = vmatpush1.bf16.msra.mxu0 %v11597
    %12327 = vmatprep.subr.bf16.mxu0 %v11605
    %12328 = vmatpush1.bf16.msra.mxu0 %v11604
    %12329 = vmatprep.subr.bf16.mxu0 %v11612
    %12330 = vmatpush1.bf16.msra.mxu0 %v11611
    %12331 = vmatprep.subr.bf16.mxu0 %v11619
    %12332 = vmatpush1.bf16.msra.mxu0 %v11618
    %12333 = vmatprep.subr.bf16.mxu0 %v11626
    %12334 = vmatpush1.bf16.msra.mxu0 %v11625
    %12335 = vmatprep.subr.bf16.mxu0 %v11633
    %12336 = vmatpush1.bf16.msra.mxu0 %v11632
    %12337 = vmatprep.subr.bf16.mxu0 %v11640
    %12338 = vmatpush1.bf16.msra.mxu0 %v11639
    %12339 = vmatprep.subr.bf16.mxu0 %v11647
    %12340 = vmatpush1.bf16.msra.mxu0 %v11646
    %12341 = vmatprep.subr.bf16.mxu0 %v11654
    %12342 = vmatpush1.bf16.msra.mxu0 %v11653
    %12343 = vmatprep.subr.bf16.mxu0 %v11661
    %12344 = vmatpush1.bf16.msra.mxu0 %v11660
    %12345 = vmatprep.mubr.bf16.mxu0 %v9371
    %12346 = vmatmul.mubr.bf16.gmra.mrb[0].mxu0 %v9370
    %v12347 = vpop.f32.mrb[0].mxu0
    %v12348 = vadd.f32 %v12305, %v12347
    %v12349 = vpop.f32.mrb[0].mxu0
    %v12350 = vadd.f32 %v12307, %v12349
    %v12351 = vpop.f32.mrb[0].mxu0
    %v12352 = vadd.f32 %v12309, %v12351
    %v12353 = vpop.f32.mrb[0].mxu0
    %v12354 = vadd.f32 %v12311, %v12353
    %12355 = vdwg.mxu0
    %12356 = vmatprep.subr.bf16.mxu0 %v11668
    %12357 = vmatpush1.bf16.msra.mxu0 %v11667
    %12358 = vmatprep.subr.bf16.mxu0 %v11675
    %12359 = vmatpush1.bf16.msra.mxu0 %v11674
    %12360 = vmatprep.subr.bf16.mxu0 %v11682
    %12361 = vmatpush1.bf16.msra.mxu0 %v11681
    %12362 = vmatprep.subr.bf16.mxu0 %v11689
    %12363 = vmatpush1.bf16.msra.mxu0 %v11688
    %12364 = vmatprep.subr.bf16.mxu0 %v11696
    %12365 = vmatpush1.bf16.msra.mxu0 %v11695
    %12366 = vmatprep.subr.bf16.mxu0 %v11703
    %12367 = vmatpush1.bf16.msra.mxu0 %v11702
    %12368 = vmatprep.subr.bf16.mxu0 %v11710
    %12369 = vmatpush1.bf16.msra.mxu0 %v11709
    %12370 = vmatprep.subr.bf16.mxu0 %v11717
    %12371 = vmatpush1.bf16.msra.mxu0 %v11716
    %12372 = vmatprep.subr.bf16.mxu0 %v11724
    %12373 = vmatpush1.bf16.msra.mxu0 %v11723
    %12374 = vmatprep.subr.bf16.mxu0 %v11731
    %12375 = vmatpush1.bf16.msra.mxu0 %v11730
    %12376 = vmatprep.subr.bf16.mxu0 %v11738
    %12377 = vmatpush1.bf16.msra.mxu0 %v11737
    %12378 = vmatprep.subr.bf16.mxu0 %v11745
    %12379 = vmatpush1.bf16.msra.mxu0 %v11744
    %12380 = vmatprep.subr.bf16.mxu0 %v11752
    %12381 = vmatpush1.bf16.msra.mxu0 %v11751
    %12382 = vmatprep.subr.bf16.mxu0 %v11759
    %12383 = vmatpush1.bf16.msra.mxu0 %v11758
    %12384 = vmatprep.subr.bf16.mxu0 %v11766
    %12385 = vmatpush1.bf16.msra.mxu0 %v11765
    %12386 = vmatprep.subr.bf16.mxu0 %v11773
    %12387 = vmatpush1.bf16.msra.mxu0 %v11772
    %12388 = vmatprep.mubr.bf16.mxu0 %v9373
    %12389 = vmatmul.mubr.bf16.gmra.mrb[0].mxu0 %v9372
    %v12390 = vpop.f32.mrb[0].mxu0
    %v12391 = vadd.f32 %v12348, %v12390
    %v12392 = vpop.f32.mrb[0].mxu0
    %v12393 = vadd.f32 %v12350, %v12392
    %v12394 = vpop.f32.mrb[0].mxu0
    %v12395 = vadd.f32 %v12352, %v12394
    %v12396 = vpop.f32.mrb[0].mxu0
    %v12397 = vadd.f32 %v12354, %v12396
    %12398 = vdwg.mxu0
    %12399 = vmatprep.subr.bf16.mxu0 %v11334
    %12400 = vmatpush1.bf16.msra.mxu0 %v11333
    %12401 = vmatprep.subr.bf16.mxu0 %v11341
    %12402 = vmatpush1.bf16.msra.mxu0 %v11340
    %12403 = vmatprep.subr.bf16.mxu0 %v11348
    %12404 = vmatpush1.bf16.msra.mxu0 %v11347
    %12405 = vmatprep.subr.bf16.mxu0 %v11355
    %12406 = vmatpush1.bf16.msra.mxu0 %v11354
    %12407 = vmatprep.subr.bf16.mxu0 %v11362
    %12408 = vmatpush1.bf16.msra.mxu0 %v11361
    %12409 = vmatprep.subr.bf16.mxu0 %v11369
    %12410 = vmatpush1.bf16.msra.mxu0 %v11368
    %12411 = vmatprep.subr.bf16.mxu0 %v11376
    %12412 = vmatpush1.bf16.msra.mxu0 %v11375
    %12413 = vmatprep.subr.bf16.mxu0 %v11383
    %12414 = vmatpush1.bf16.msra.mxu0 %v11382
    %12415 = vmatprep.subr.bf16.mxu0 %v11390
    %12416 = vmatpush1.bf16.msra.mxu0 %v11389
    %12417 = vmatprep.subr.bf16.mxu0 %v11397
    %12418 = vmatpush1.bf16.msra.mxu0 %v11396
    %12419 = vmatprep.subr.bf16.mxu0 %v11404
    %12420 = vmatpush1.bf16.msra.mxu0 %v11403
    %12421 = vmatprep.subr.bf16.mxu0 %v11411
    %12422 = vmatpush1.bf16.msra.mxu0 %v11410
    %12423 = vmatprep.subr.bf16.mxu0 %v11418
    %12424 = vmatpush1.bf16.msra.mxu0 %v11417
    %12425 = vmatprep.subr.bf16.mxu0 %v11425
    %12426 = vmatpush1.bf16.msra.mxu0 %v11424
    %12427 = vmatprep.subr.bf16.mxu0 %v11432
    %12428 = vmatpush1.bf16.msra.mxu0 %v11431
    %12429 = vmatprep.subr.bf16.mxu0 %v11439
    %12430 = vmatpush1.bf16.msra.mxu0 %v11438
    %12431 = vmatprep.mubr.bf16.mxu0 %v9367
    %12432 = vmatmul.mubr.bf16.gmra.mrb[0].mxu0 %v9366
    %v12433 = vpop.f32.mrb[0].mxu0
    %v12434 = vadd.f32 %v9899, %v12433
    %v12435 = vpop.f32.mrb[0].mxu0
    %v12436 = vadd.f32 %v9903, %v12435
    %v12437 = vpop.f32.mrb[0].mxu0
    %v12438 = vadd.f32 %v9899, %v12437
    %v12439 = vpop.f32.mrb[0].mxu0
    %v12440 = vadd.f32 %v9903, %v12439
    %12441 = vdwg.mxu0
    %12442 = vmatprep.subr.bf16.mxu0 %v11446
    %12443 = vmatpush1.bf16.msra.mxu0 %v11445
    %12444 = vmatprep.subr.bf16.mxu0 %v11453
    %12445 = vmatpush1.bf16.msra.mxu0 %v11452
    %12446 = vmatprep.subr.bf16.mxu0 %v11460
    %12447 = vmatpush1.bf16.msra.mxu0 %v11459
    %12448 = vmatprep.subr.bf16.mxu0 %v11467
    %12449 = vmatpush1.bf16.msra.mxu0 %v11466
    %12450 = vmatprep.subr.bf16.mxu0 %v11474
    %12451 = vmatpush1.bf16.msra.mxu0 %v11473
    %12452 = vmatprep.subr.bf16.mxu0 %v11481
    %12453 = vmatpush1.bf16.msra.mxu0 %v11480
    %12454 = vmatprep.subr.bf16.mxu0 %v11488
    %12455 = vmatpush1.bf16.msra.mxu0 %v11487
    %12456 = vmatprep.subr.bf16.mxu0 %v11495
    %12457 = vmatpush1.bf16.msra.mxu0 %v11494
    %12458 = vmatprep.subr.bf16.mxu0 %v11502
    %12459 = vmatpush1.bf16.msra.mxu0 %v11501
    %12460 = vmatprep.subr.bf16.mxu0 %v11509
    %12461 = vmatpush1.bf16.msra.mxu0 %v11508
    %12462 = vmatprep.subr.bf16.mxu0 %v11516
    %12463 = vmatpush1.bf16.msra.mxu0 %v11515
    %12464 = vmatprep.subr.bf16.mxu0 %v11523
    %12465 = vmatpush1.bf16.msra.mxu0 %v11522
    %12466 = vmatprep.subr.bf16.mxu0 %v11530
    %12467 = vmatpush1.bf16.msra.mxu0 %v11529
    %12468 = vmatprep.subr.bf16.mxu0 %v11537
    %12469 = vmatpush1.bf16.msra.mxu0 %v11536
    %12470 = vmatprep.subr.bf16.mxu0 %v11544
    %12471 = vmatpush1.bf16.msra.mxu0 %v11543
    %12472 = vmatprep.subr.bf16.mxu0 %v11551
    %12473 = vmatpush1.bf16.msra.mxu0 %v11550
    %12474 = vmatprep.mubr.bf16.mxu0 %v9369
    %12475 = vmatmul.mubr.bf16.gmra.mrb[0].mxu0 %v9368
    %v12476 = vpop.f32.mrb[0].mxu0
    %v12477 = vadd.f32 %v12434, %v12476
    %v12478 = vpop.f32.mrb[0].mxu0
    %v12479 = vadd.f32 %v12436, %v12478
    %v12480 = vpop.f32.mrb[0].mxu0
    %v12481 = vadd.f32 %v12438, %v12480
    %v12482 = vpop.f32.mrb[0].mxu0
    %v12483 = vadd.f32 %v12440, %v12482
    %12484 = vdwg.mxu0
    %12485 = vmatprep.subr.bf16.mxu0 %v11558
    %12486 = vmatpush1.bf16.msra.mxu0 %v11557
    %12487 = vmatprep.subr.bf16.mxu0 %v11565
    %12488 = vmatpush1.bf16.msra.mxu0 %v11564
    %12489 = vmatprep.subr.bf16.mxu0 %v11572
    %12490 = vmatpush1.bf16.msra.mxu0 %v11571
    %12491 = vmatprep.subr.bf16.mxu0 %v11579
    %12492 = vmatpush1.bf16.msra.mxu0 %v11578
    %12493 = vmatprep.subr.bf16.mxu0 %v11586
    %12494 = vmatpush1.bf16.msra.mxu0 %v11585
    %12495 = vmatprep.subr.bf16.mxu0 %v11593
    %12496 = vmatpush1.bf16.msra.mxu0 %v11592
    %12497 = vmatprep.subr.bf16.mxu0 %v11600
    %12498 = vmatpush1.bf16.msra.mxu0 %v11599
    %12499 = vmatprep.subr.bf16.mxu0 %v11607
    %12500 = vmatpush1.bf16.msra.mxu0 %v11606
    %12501 = vmatprep.subr.bf16.mxu0 %v11614
    %12502 = vmatpush1.bf16.msra.mxu0 %v11613
    %12503 = vmatprep.subr.bf16.mxu0 %v11621
    %12504 = vmatpush1.bf16.msra.mxu0 %v11620
    %12505 = vmatprep.subr.bf16.mxu0 %v11628
    %12506 = vmatpush1.bf16.msra.mxu0 %v11627
    %12507 = vmatprep.subr.bf16.mxu0 %v11635
    %12508 = vmatpush1.bf16.msra.mxu0 %v11634
    %12509 = vmatprep.subr.bf16.mxu0 %v11642
    %12510 = vmatpush1.bf16.msra.mxu0 %v11641
    %12511 = vmatprep.subr.bf16.mxu0 %v11649
    %12512 = vmatpush1.bf16.msra.mxu0 %v11648
    %12513 = vmatprep.subr.bf16.mxu0 %v11656
    %12514 = vmatpush1.bf16.msra.mxu0 %v11655
    %12515 = vmatprep.subr.bf16.mxu0 %v11663
    %12516 = vmatpush1.bf16.msra.mxu0 %v11662
    %12517 = vmatprep.mubr.bf16.mxu0 %v9371
    %12518 = vmatmul.mubr.bf16.gmra.mrb[0].mxu0 %v9370
    %v12519 = vpop.f32.mrb[0].mxu0
    %v12520 = vadd.f32 %v12477, %v12519
    %v12521 = vpop.f32.mrb[0].mxu0
    %v12522 = vadd.f32 %v12479, %v12521
    %v12523 = vpop.f32.mrb[0].mxu0
    %v12524 = vadd.f32 %v12481, %v12523
    %v12525 = vpop.f32.mrb[0].mxu0
    %v12526 = vadd.f32 %v12483, %v12525
    %12527 = vdwg.mxu0
    %12528 = vmatprep.subr.bf16.mxu0 %v11670
    %12529 = vmatpush1.bf16.msra.mxu0 %v11669
    %12530 = vmatprep.subr.bf16.mxu0 %v11677
    %12531 = vmatpush1.bf16.msra.mxu0 %v11676
    %12532 = vmatprep.subr.bf16.mxu0 %v11684
    %12533 = vmatpush1.bf16.msra.mxu0 %v11683
    %12534 = vmatprep.subr.bf16.mxu0 %v11691
    %12535 = vmatpush1.bf16.msra.mxu0 %v11690
    %12536 = vmatprep.subr.bf16.mxu0 %v11698
    %12537 = vmatpush1.bf16.msra.mxu0 %v11697
    %12538 = vmatprep.subr.bf16.mxu0 %v11705
    %12539 = vmatpush1.bf16.msra.mxu0 %v11704
    %12540 = vmatprep.subr.bf16.mxu0 %v11712
    %12541 = vmatpush1.bf16.msra.mxu0 %v11711
    %12542 = vmatprep.subr.bf16.mxu0 %v11719
    %12543 = vmatpush1.bf16.msra.mxu0 %v11718
    %12544 = vmatprep.subr.bf16.mxu0 %v11726
    %12545 = vmatpush1.bf16.msra.mxu0 %v11725
    %12546 = vmatprep.subr.bf16.mxu0 %v11733
    %12547 = vmatpush1.bf16.msra.mxu0 %v11732
    %12548 = vmatprep.subr.bf16.mxu0 %v11740
    %12549 = vmatpush1.bf16.msra.mxu0 %v11739
    %12550 = vmatprep.subr.bf16.mxu0 %v11747
    %12551 = vmatpush1.bf16.msra.mxu0 %v11746
    %12552 = vmatprep.subr.bf16.mxu0 %v11754
    %12553 = vmatpush1.bf16.msra.mxu0 %v11753
    %12554 = vmatprep.subr.bf16.mxu0 %v11761
    %12555 = vmatpush1.bf16.msra.mxu0 %v11760
    %12556 = vmatprep.subr.bf16.mxu0 %v11768
    %12557 = vmatpush1.bf16.msra.mxu0 %v11767
    %12558 = vmatprep.subr.bf16.mxu0 %v11775
    %12559 = vmatpush1.bf16.msra.mxu0 %v11774
    %12560 = vmatprep.mubr.bf16.mxu0 %v9373
    %12561 = vmatmul.mubr.bf16.gmra.mrb[0].mxu0 %v9372
    %v12562 = vpop.f32.mrb[0].mxu0
    %v12563 = vadd.f32 %v12520, %v12562
    %v12564 = vpop.f32.mrb[0].mxu0
    %v12565 = vadd.f32 %v12522, %v12564
    %v12566 = vpop.f32.mrb[0].mxu0
    %v12567 = vadd.f32 %v12524, %v12566
    %v12568 = vpop.f32.mrb[0].mxu0
    %v12569 = vadd.f32 %v12526, %v12568
    %12570 = vdwg.mxu0
    %12571 = vmatprep.subr.bf16.mxu0 %v11336
    %12572 = vmatpush1.bf16.msra.mxu0 %v11335
    %12573 = vmatprep.subr.bf16.mxu0 %v11343
    %12574 = vmatpush1.bf16.msra.mxu0 %v11342
    %12575 = vmatprep.subr.bf16.mxu0 %v11350
    %12576 = vmatpush1.bf16.msra.mxu0 %v11349
    %12577 = vmatprep.subr.bf16.mxu0 %v11357
    %12578 = vmatpush1.bf16.msra.mxu0 %v11356
    %12579 = vmatprep.subr.bf16.mxu0 %v11364
    %12580 = vmatpush1.bf16.msra.mxu0 %v11363
    %12581 = vmatprep.subr.bf16.mxu0 %v11371
    %12582 = vmatpush1.bf16.msra.mxu0 %v11370
    %12583 = vmatprep.subr.bf16.mxu0 %v11378
    %12584 = vmatpush1.bf16.msra.mxu0 %v11377
    %12585 = vmatprep.subr.bf16.mxu0 %v11385
    %12586 = vmatpush1.bf16.msra.mxu0 %v11384
    %12587 = vmatprep.subr.bf16.mxu0 %v11392
    %12588 = vmatpush1.bf16.msra.mxu0 %v11391
    %12589 = vmatprep.subr.bf16.mxu0 %v11399
    %12590 = vmatpush1.bf16.msra.mxu0 %v11398
    %12591 = vmatprep.subr.bf16.mxu0 %v11406
    %12592 = vmatpush1.bf16.msra.mxu0 %v11405
    %12593 = vmatprep.subr.bf16.mxu0 %v11413
    %12594 = vmatpush1.bf16.msra.mxu0 %v11412
    %12595 = vmatprep.subr.bf16.mxu0 %v11420
    %12596 = vmatpush1.bf16.msra.mxu0 %v11419
    %12597 = vmatprep.subr.bf16.mxu0 %v11427
    %12598 = vmatpush1.bf16.msra.mxu0 %v11426
    %12599 = vmatprep.subr.bf16.mxu0 %v11434
    %12600 = vmatpush1.bf16.msra.mxu0 %v11433
    %12601 = vmatprep.subr.bf16.mxu0 %v11441
    %12602 = vmatpush1.bf16.msra.mxu0 %v11440
    %12603 = vmatprep.mubr.bf16.mxu0 %v9367
    %12604 = vmatmul.mubr.bf16.gmra.mrb[0].mxu0 %v9366
    %v12605 = vpop.f32.mrb[0].mxu0
    %v12606 = vadd.f32 %v9907, %v12605
    %v12607 = vpop.f32.mrb[0].mxu0
    %v12608 = vadd.f32 %v9911, %v12607
    %v12609 = vpop.f32.mrb[0].mxu0
    %v12610 = vadd.f32 %v9907, %v12609
    %v12611 = vpop.f32.mrb[0].mxu0
    %v12612 = vadd.f32 %v9911, %v12611
    %12613 = vdwg.mxu0
    %12614 = vmatprep.subr.bf16.mxu0 %v11448
    %12615 = vmatpush1.bf16.msra.mxu0 %v11447
    %12616 = vmatprep.subr.bf16.mxu0 %v11455
    %12617 = vmatpush1.bf16.msra.mxu0 %v11454
    %12618 = vmatprep.subr.bf16.mxu0 %v11462
    %12619 = vmatpush1.bf16.msra.mxu0 %v11461
    %12620 = vmatprep.subr.bf16.mxu0 %v11469
    %12621 = vmatpush1.bf16.msra.mxu0 %v11468
    %12622 = vmatprep.subr.bf16.mxu0 %v11476
    %12623 = vmatpush1.bf16.msra.mxu0 %v11475
    %12624 = vmatprep.subr.bf16.mxu0 %v11483
    %12625 = vmatpush1.bf16.msra.mxu0 %v11482
    %12626 = vmatprep.subr.bf16.mxu0 %v11490
    %12627 = vmatpush1.bf16.msra.mxu0 %v11489
    %12628 = vmatprep.subr.bf16.mxu0 %v11497
    %12629 = vmatpush1.bf16.msra.mxu0 %v11496
    %12630 = vmatprep.subr.bf16.mxu0 %v11504
    %12631 = vmatpush1.bf16.msra.mxu0 %v11503
    %12632 = vmatprep.subr.bf16.mxu0 %v11511
    %12633 = vmatpush1.bf16.msra.mxu0 %v11510
    %12634 = vmatprep.subr.bf16.mxu0 %v11518
    %12635 = vmatpush1.bf16.msra.mxu0 %v11517
    %12636 = vmatprep.subr.bf16.mxu0 %v11525
    %12637 = vmatpush1.bf16.msra.mxu0 %v11524
    %12638 = vmatprep.subr.bf16.mxu0 %v11532
    %12639 = vmatpush1.bf16.msra.mxu0 %v11531
    %12640 = vmatprep.subr.bf16.mxu0 %v11539
    %12641 = vmatpush1.bf16.msra.mxu0 %v11538
    %12642 = vmatprep.subr.bf16.mxu0 %v11546
    %12643 = vmatpush1.bf16.msra.mxu0 %v11545
    %12644 = vmatprep.subr.bf16.mxu0 %v11553
    %12645 = vmatpush1.bf16.msra.mxu0 %v11552
    %12646 = vmatprep.mubr.bf16.mxu0 %v9369
    %12647 = vmatmul.mubr.bf16.gmra.mrb[0].mxu0 %v9368
    %v12648 = vpop.f32.mrb[0].mxu0
    %v12649 = vadd.f32 %v12606, %v12648
    %v12650 = vpop.f32.mrb[0].mxu0
    %v12651 = vadd.f32 %v12608, %v12650
    %v12652 = vpop.f32.mrb[0].mxu0
    %v12653 = vadd.f32 %v12610, %v12652
    %v12654 = vpop.f32.mrb[0].mxu0
    %v12655 = vadd.f32 %v12612, %v12654
    %12656 = vdwg.mxu0
    %12657 = vmatprep.subr.bf16.mxu0 %v11560
    %12658 = vmatpush1.bf16.msra.mxu0 %v11559
    %12659 = vmatprep.subr.bf16.mxu0 %v11567
    %12660 = vmatpush1.bf16.msra.mxu0 %v11566
    %12661 = vmatprep.subr.bf16.mxu0 %v11574
    %12662 = vmatpush1.bf16.msra.mxu0 %v11573
    %12663 = vmatprep.subr.bf16.mxu0 %v11581
    %12664 = vmatpush1.bf16.msra.mxu0 %v11580
    %12665 = vmatprep.subr.bf16.mxu0 %v11588
    %12666 = vmatpush1.bf16.msra.mxu0 %v11587
    %12667 = vmatprep.subr.bf16.mxu0 %v11595
    %12668 = vmatpush1.bf16.msra.mxu0 %v11594
    %12669 = vmatprep.subr.bf16.mxu0 %v11602
    %12670 = vmatpush1.bf16.msra.mxu0 %v11601
    %12671 = vmatprep.subr.bf16.mxu0 %v11609
    %12672 = vmatpush1.bf16.msra.mxu0 %v11608
    %12673 = vmatprep.subr.bf16.mxu0 %v11616
    %12674 = vmatpush1.bf16.msra.mxu0 %v11615
    %12675 = vmatprep.subr.bf16.mxu0 %v11623
    %12676 = vmatpush1.bf16.msra.mxu0 %v11622
    %12677 = vmatprep.subr.bf16.mxu0 %v11630
    %12678 = vmatpush1.bf16.msra.mxu0 %v11629
    %12679 = vmatprep.subr.bf16.mxu0 %v11637
    %12680 = vmatpush1.bf16.msra.mxu0 %v11636
    %12681 = vmatprep.subr.bf16.mxu0 %v11644
    %12682 = vmatpush1.bf16.msra.mxu0 %v11643
    %12683 = vmatprep.subr.bf16.mxu0 %v11651
    %12684 = vmatpush1.bf16.msra.mxu0 %v11650
    %12685 = vmatprep.subr.bf16.mxu0 %v11658
    %12686 = vmatpush1.bf16.msra.mxu0 %v11657
    %12687 = vmatprep.subr.bf16.mxu0 %v11665
    %12688 = vmatpush1.bf16.msra.mxu0 %v11664
    %12689 = vmatprep.mubr.bf16.mxu0 %v9371
    %12690 = vmatmul.mubr.bf16.gmra.mrb[0].mxu0 %v9370
    %v12691 = vpop.f32.mrb[0].mxu0
    %v12692 = vadd.f32 %v12649, %v12691
    %v12693 = vpop.f32.mrb[0].mxu0
    %v12694 = vadd.f32 %v12651, %v12693
    %v12695 = vpop.f32.mrb[0].mxu0
    %v12696 = vadd.f32 %v12653, %v12695
    %v12697 = vpop.f32.mrb[0].mxu0
    %v12698 = vadd.f32 %v12655, %v12697
    %12699 = vdwg.mxu0
    %12700 = vmatprep.subr.bf16.mxu0 %v11672
    %12701 = vmatpush1.bf16.msra.mxu0 %v11671
    %12702 = vmatprep.subr.bf16.mxu0 %v11679
    %12703 = vmatpush1.bf16.msra.mxu0 %v11678
    %12704 = vmatprep.subr.bf16.mxu0 %v11686
    %12705 = vmatpush1.bf16.msra.mxu0 %v11685
    %12706 = vmatprep.subr.bf16.mxu0 %v11693
    %12707 = vmatpush1.bf16.msra.mxu0 %v11692
    %12708 = vmatprep.subr.bf16.mxu0 %v11700
    %12709 = vmatpush1.bf16.msra.mxu0 %v11699
    %12710 = vmatprep.subr.bf16.mxu0 %v11707
    %12711 = vmatpush1.bf16.msra.mxu0 %v11706
    %12712 = vmatprep.subr.bf16.mxu0 %v11714
    %12713 = vmatpush1.bf16.msra.mxu0 %v11713
    %12714 = vmatprep.subr.bf16.mxu0 %v11721
    %12715 = vmatpush1.bf16.msra.mxu0 %v11720
    %12716 = vmatprep.subr.bf16.mxu0 %v11728
    %12717 = vmatpush1.bf16.msra.mxu0 %v11727
    %12718 = vmatprep.subr.bf16.mxu0 %v11735
    %12719 = vmatpush1.bf16.msra.mxu0 %v11734
    %12720 = vmatprep.subr.bf16.mxu0 %v11742
    %12721 = vmatpush1.bf16.msra.mxu0 %v11741
    %12722 = vmatprep.subr.bf16.mxu0 %v11749
    %12723 = vmatpush1.bf16.msra.mxu0 %v11748
    %12724 = vmatprep.subr.bf16.mxu0 %v11756
    %12725 = vmatpush1.bf16.msra.mxu0 %v11755
    %12726 = vmatprep.subr.bf16.mxu0 %v11763
    %12727 = vmatpush1.bf16.msra.mxu0 %v11762
    %12728 = vmatprep.subr.bf16.mxu0 %v11770
    %12729 = vmatpush1.bf16.msra.mxu0 %v11769
    %12730 = vmatprep.subr.bf16.mxu0 %v11777
    %12731 = vmatpush1.bf16.msra.mxu0 %v11776
    %12732 = vmatprep.mubr.bf16.mxu0 %v9373
    %12733 = vmatmul.mubr.bf16.gmra.mrb[0].mxu0 %v9372
    %v12734 = vpop.f32.mrb[0].mxu0
    %v12735 = vadd.f32 %v12692, %v12734
    %v12736 = vpop.f32.mrb[0].mxu0
    %v12737 = vadd.f32 %v12694, %v12736
    %v12738 = vpop.f32.mrb[0].mxu0
    %v12739 = vadd.f32 %v12696, %v12738
    %v12740 = vpop.f32.mrb[0].mxu0
    %v12741 = vadd.f32 %v12698, %v12740
    %12742 = vdwg.mxu0
    %12743 = vmatprep.subr.bf16.mxu0 0
    %12744 = vmatpush1.bf16.msra.mxu0 %v11337
    %12745 = vmatprep.subr.bf16.mxu0 0
    %12746 = vmatpush1.bf16.msra.mxu0 %v11344
    %12747 = vmatprep.subr.bf16.mxu0 0
    %12748 = vmatpush1.bf16.msra.mxu0 %v11351
    %12749 = vmatprep.subr.bf16.mxu0 0
    %12750 = vmatpush1.bf16.msra.mxu0 %v11358
    %12751 = vmatprep.subr.bf16.mxu0 0
    %12752 = vmatpush1.bf16.msra.mxu0 %v11365
    %12753 = vmatprep.subr.bf16.mxu0 0
    %12754 = vmatpush1.bf16.msra.mxu0 %v11372
    %12755 = vmatprep.subr.bf16.mxu0 0
    %12756 = vmatpush1.bf16.msra.mxu0 %v11379
    %12757 = vmatprep.subr.bf16.mxu0 0
    %12758 = vmatpush1.bf16.msra.mxu0 %v11386
    %12759 = vmatprep.subr.bf16.mxu0 0
    %12760 = vmatpush1.bf16.msra.mxu0 %v11393
    %12761 = vmatprep.subr.bf16.mxu0 0
    %12762 = vmatpush1.bf16.msra.mxu0 %v11400
    %12763 = vmatprep.subr.bf16.mxu0 0
    %12764 = vmatpush1.bf16.msra.mxu0 %v11407
    %12765 = vmatprep.subr.bf16.mxu0 0
    %12766 = vmatpush1.bf16.msra.mxu0 %v11414
    %12767 = vmatprep.subr.bf16.mxu0 0
    %12768 = vmatpush1.bf16.msra.mxu0 %v11421
    %12769 = vmatprep.subr.bf16.mxu0 0
    %12770 = vmatpush1.bf16.msra.mxu0 %v11428
    %12771 = vmatprep.subr.bf16.mxu0 0
    %12772 = vmatpush1.bf16.msra.mxu0 %v11435
    %12773 = vmatprep.subr.bf16.mxu0 0
    %12774 = vmatpush1.bf16.msra.mxu0 %v11442
    %12775 = vmatprep.mubr.bf16.mxu0 %v9367
    %12776 = vmatmul.mubr.bf16.gmra.mrb[0].mxu0 %v9366
    %v12777 = vpop.f32.mrb[0].mxu0
    %v12778 = vadd.f32 %v9915, %v12777
    %v12779 = vpop.f32.mrb[0].mxu0
    %v12780 = vpop.f32.mrb[0].mxu0
    %v12781 = vadd.f32 %v9915, %v12780
    %v12782 = vpop.f32.mrb[0].mxu0
    %12783 = vdwg.mxu0
    %12784 = vmatprep.subr.bf16.mxu0 0
    %12785 = vmatpush1.bf16.msra.mxu0 %v11449
    %12786 = vmatprep.subr.bf16.mxu0 0
    %12787 = vmatpush1.bf16.msra.mxu0 %v11456
    %12788 = vmatprep.subr.bf16.mxu0 0
    %12789 = vmatpush1.bf16.msra.mxu0 %v11463
    %12790 = vmatprep.subr.bf16.mxu0 0
    %12791 = vmatpush1.bf16.msra.mxu0 %v11470
    %12792 = vmatprep.subr.bf16.mxu0 0
    %12793 = vmatpush1.bf16.msra.mxu0 %v11477
    %12794 = vmatprep.subr.bf16.mxu0 0
    %12795 = vmatpush1.bf16.msra.mxu0 %v11484
    %12796 = vmatprep.subr.bf16.mxu0 0
    %12797 = vmatpush1.bf16.msra.mxu0 %v11491
    %12798 = vmatprep.subr.bf16.mxu0 0
    %12799 = vmatpush1.bf16.msra.mxu0 %v11498
    %12800 = vmatprep.subr.bf16.mxu0 0
    %12801 = vmatpush1.bf16.msra.mxu0 %v11505
    %12802 = vmatprep.subr.bf16.mxu0 0
    %12803 = vmatpush1.bf16.msra.mxu0 %v11512
    %12804 = vmatprep.subr.bf16.mxu0 0
    %12805 = vmatpush1.bf16.msra.mxu0 %v11519
    %12806 = vmatprep.subr.bf16.mxu0 0
    %12807 = vmatpush1.bf16.msra.mxu0 %v11526
    %12808 = vmatprep.subr.bf16.mxu0 0
    %12809 = vmatpush1.bf16.msra.mxu0 %v11533
    %12810 = vmatprep.subr.bf16.mxu0 0
    %12811 = vmatpush1.bf16.msra.mxu0 %v11540
    %12812 = vmatprep.subr.bf16.mxu0 0
    %12813 = vmatpush1.bf16.msra.mxu0 %v11547
    %12814 = vmatprep.subr.bf16.mxu0 0
    %12815 = vmatpush1.bf16.msra.mxu0 %v11554
    %12816 = vmatprep.mubr.bf16.mxu0 %v9369
    %12817 = vmatmul.mubr.bf16.gmra.mrb[0].mxu0 %v9368
    %v12818 = vpop.f32.mrb[0].mxu0
    %v12819 = vadd.f32 %v12778, %v12818
    %v12820 = vpop.f32.mrb[0].mxu0
    %v12821 = vpop.f32.mrb[0].mxu0
    %v12822 = vadd.f32 %v12781, %v12821
    %v12823 = vpop.f32.mrb[0].mxu0
    %12824 = vdwg.mxu0
    %12825 = vmatprep.subr.bf16.mxu0 0
    %12826 = vmatpush1.bf16.msra.mxu0 %v11561
    %12827 = vmatprep.subr.bf16.mxu0 0
    %12828 = vmatpush1.bf16.msra.mxu0 %v11568
    %12829 = vmatprep.subr.bf16.mxu0 0
    %12830 = vmatpush1.bf16.msra.mxu0 %v11575
    %12831 = vmatprep.subr.bf16.mxu0 0
    %12832 = vmatpush1.bf16.msra.mxu0 %v11582
    %12833 = vmatprep.subr.bf16.mxu0 0
    %12834 = vmatpush1.bf16.msra.mxu0 %v11589
    %12835 = vmatprep.subr.bf16.mxu0 0
    %12836 = vmatpush1.bf16.msra.mxu0 %v11596
    %12837 = vmatprep.subr.bf16.mxu0 0
    %12838 = vmatpush1.bf16.msra.mxu0 %v11603
    %12839 = vmatprep.subr.bf16.mxu0 0
    %12840 = vmatpush1.bf16.msra.mxu0 %v11610
    %12841 = vmatprep.subr.bf16.mxu0 0
    %12842 = vmatpush1.bf16.msra.mxu0 %v11617
    %12843 = vmatprep.subr.bf16.mxu0 0
    %12844 = vmatpush1.bf16.msra.mxu0 %v11624
    %12845 = vmatprep.subr.bf16.mxu0 0
    %12846 = vmatpush1.bf16.msra.mxu0 %v11631
    %12847 = vmatprep.subr.bf16.mxu0 0
    %12848 = vmatpush1.bf16.msra.mxu0 %v11638
    %12849 = vmatprep.subr.bf16.mxu0 0
    %12850 = vmatpush1.bf16.msra.mxu0 %v11645
    %12851 = vmatprep.subr.bf16.mxu0 0
    %12852 = vmatpush1.bf16.msra.mxu0 %v11652
    %12853 = vmatprep.subr.bf16.mxu0 0
    %12854 = vmatpush1.bf16.msra.mxu0 %v11659
    %12855 = vmatprep.subr.bf16.mxu0 0
    %12856 = vmatpush1.bf16.msra.mxu0 %v11666
    %12857 = vmatprep.mubr.bf16.mxu0 %v9371
    %12858 = vmatmul.mubr.bf16.gmra.mrb[0].mxu0 %v9370
    %v12859 = vpop.f32.mrb[0].mxu0
    %v12860 = vadd.f32 %v12819, %v12859
    %v12861 = vpop.f32.mrb[0].mxu0
    %v12862 = vpop.f32.mrb[0].mxu0
    %v12863 = vadd.f32 %v12822, %v12862
    %v12864 = vpop.f32.mrb[0].mxu0
    %12865 = vdwg.mxu0
    %12866 = vmatprep.subr.bf16.mxu0 0
    %12867 = vmatpush1.bf16.msra.mxu0 %v11673
    %12868 = vmatprep.subr.bf16.mxu0 0
    %12869 = vmatpush1.bf16.msra.mxu0 %v11680
    %12870 = vmatprep.subr.bf16.mxu0 0
    %12871 = vmatpush1.bf16.msra.mxu0 %v11687
    %12872 = vmatprep.subr.bf16.mxu0 0
    %12873 = vmatpush1.bf16.msra.mxu0 %v11694
    %12874 = vmatprep.subr.bf16.mxu0 0
    %12875 = vmatpush1.bf16.msra.mxu0 %v11701
    %12876 = vmatprep.subr.bf16.mxu0 0
    %12877 = vmatpush1.bf16.msra.mxu0 %v11708
    %12878 = vmatprep.subr.bf16.mxu0 0
    %12879 = vmatpush1.bf16.msra.mxu0 %v11715
    %12880 = vmatprep.subr.bf16.mxu0 0
    %12881 = vmatpush1.bf16.msra.mxu0 %v11722
    %12882 = vmatprep.subr.bf16.mxu0 0
    %12883 = vmatpush1.bf16.msra.mxu0 %v11729
    %12884 = vmatprep.subr.bf16.mxu0 0
    %12885 = vmatpush1.bf16.msra.mxu0 %v11736
    %12886 = vmatprep.subr.bf16.mxu0 0
    %12887 = vmatpush1.bf16.msra.mxu0 %v11743
    %12888 = vmatprep.subr.bf16.mxu0 0
    %12889 = vmatpush1.bf16.msra.mxu0 %v11750
    %12890 = vmatprep.subr.bf16.mxu0 0
    %12891 = vmatpush1.bf16.msra.mxu0 %v11757
    %12892 = vmatprep.subr.bf16.mxu0 0
    %12893 = vmatpush1.bf16.msra.mxu0 %v11764
    %12894 = vmatprep.subr.bf16.mxu0 0
    %12895 = vmatpush1.bf16.msra.mxu0 %v11771
    %12896 = vmatprep.subr.bf16.mxu0 0
    %12897 = vmatpush1.bf16.msra.mxu0 %v11778
    %12898 = vmatprep.mubr.bf16.mxu0 %v9373
    %12899 = vmatmul.mubr.bf16.gmra.mrb[0].mxu0 %v9372
    %v12900 = vpop.f32.mrb[0].mxu0
    %v12901 = vadd.f32 %v12860, %v12900
    %v12902 = vpop.f32.mrb[0].mxu0
    %v12903 = vpop.f32.mrb[0].mxu0
    %v12904 = vadd.f32 %v12863, %v12903
    %v12905 = vpop.f32.mrb[0].mxu0
    %12906 = vdwg.mxu0
    %v12907 = vsub.f32 0.0, %v12391
    %v12908 = vsub.f32 0.0, %v12393
    %v12909 = vsub.f32 0.0, %v12563
    %v12910 = vsub.f32 0.0, %v12565
    %v12911 = vsub.f32 0.0, %v12735
    %v12912 = vsub.f32 0.0, %v12737
    %v12913 = vsub.f32 0.0, %v12901
    %v12914 = vsub.f32 0.0, %v12395
    %v12915 = vsub.f32 0.0, %v12397
    %v12916 = vsub.f32 0.0, %v12567
    %v12917 = vsub.f32 0.0, %v12569
    %v12918 = vsub.f32 0.0, %v12739
    %v12919 = vsub.f32 0.0, %v12741
    %v12920 = vsub.f32 0.0, %v12904
    %v12921 = vmul.f32 %v12907, 1.442695
    %v12922 = vpow.pop %v12921
    %v12923 = vmul.f32 %v12908, 1.442695
    %v12924 = vpow.pop %v12923
    %v12925 = vmul.f32 %v12909, 1.442695
    %v12926 = vpow.pop %v12925
    %v12927 = vmul.f32 %v12910, 1.442695
    %v12928 = vpow.pop %v12927
    %v12929 = vmul.f32 %v12911, 1.442695
    %v12930 = vpow.pop %v12929
    %v12931 = vmul.f32 %v12912, 1.442695
    %v12932 = vpow.pop %v12931
    %v12933 = vmul.f32 %v12913, 1.442695
    %v12934 = vpow.pop %v12933
    %v12935 = vmul.f32 %v12914, 1.442695
    %v12936 = vpow.pop %v12935
    %v12937 = vmul.f32 %v12915, 1.442695
    %v12938 = vpow.pop %v12937
    %v12939 = vmul.f32 %v12916, 1.442695
    %v12940 = vpow.pop %v12939
    %v12941 = vmul.f32 %v12917, 1.442695
    %v12942 = vpow.pop %v12941
    %v12943 = vmul.f32 %v12918, 1.442695
    %v12944 = vpow.pop %v12943
    %v12945 = vmul.f32 %v12919, 1.442695
    %v12946 = vpow.pop %v12945
    %v12947 = vmul.f32 %v12920, 1.442695
    %v12948 = vpow.pop %v12947
    %v12949 = vadd.f32 %v12922, 1.0
    %v12950 = vadd.f32 %v12924, 1.0
    %v12951 = vadd.f32 %v12926, 1.0
    %v12952 = vadd.f32 %v12928, 1.0
    %v12953 = vadd.f32 %v12930, 1.0
    %v12954 = vadd.f32 %v12932, 1.0
    %v12955 = vadd.f32 %v12934, 1.0
    %v12956 = vadd.f32 %v12936, 1.0
    %v12957 = vadd.f32 %v12938, 1.0
    %v12958 = vadd.f32 %v12940, 1.0
    %v12959 = vadd.f32 %v12942, 1.0
    %v12960 = vadd.f32 %v12944, 1.0
    %v12961 = vadd.f32 %v12946, 1.0
    %v12962 = vadd.f32 %v12948, 1.0
    %v12963 = vrcp.pop %v12949
    %v12964 = vmul.f32 1.0, %v12963
    %v12965 = vrcp.pop %v12950
    %v12966 = vmul.f32 1.0, %v12965
    %v12967 = vrcp.pop %v12951
    %v12968 = vmul.f32 1.0, %v12967
    %v12969 = vrcp.pop %v12952
    %v12970 = vmul.f32 1.0, %v12969
    %v12971 = vrcp.pop %v12953
    %v12972 = vmul.f32 1.0, %v12971
    %v12973 = vrcp.pop %v12954
    %v12974 = vmul.f32 1.0, %v12973
    %v12975 = vrcp.pop %v12955
    %v12976 = vmul.f32 1.0, %v12975
    %v12977 = vrcp.pop %v12956
    %v12978 = vmul.f32 1.0, %v12977
    %v12979 = vrcp.pop %v12957
    %v12980 = vmul.f32 1.0, %v12979
    %v12981 = vrcp.pop %v12958
    %v12982 = vmul.f32 1.0, %v12981
    %v12983 = vrcp.pop %v12959
    %v12984 = vmul.f32 1.0, %v12983
    %v12985 = vrcp.pop %v12960
    %v12986 = vmul.f32 1.0, %v12985
    %v12987 = vrcp.pop %v12961
    %v12988 = vmul.f32 1.0, %v12987
    %v12989 = vrcp.pop %v12962
    %v12990 = vmul.f32 1.0, %v12989
    %12991 = vst [vmem:[%s20] sm:$0xff] %v12964
    %12992 = vst [vmem:[%s20 + $0x8] sm:$0xff] %v12966
    %12993 = vst [vmem:[%s20 + $0x10] sm:$0xff] %v12968
    %12994 = vst [vmem:[%s20 + $0x18] sm:$0xff] %v12970
    %12995 = vst [vmem:[%s20 + $0x20] sm:$0xff] %v12972
    %12996 = vst [vmem:[%s20 + $0x28] sm:$0xff] %v12974
    %12997 = vst [vmem:[%s20 + $0x30] sm:$0xff] %v12976
    %12998 = vst [vmem:[%s20 + $0x38] sm:$0xff] %v12978
    %12999 = vst [vmem:[%s20 + $0x40] sm:$0xff] %v12980
    %13000 = vst [vmem:[%s20 + $0x48] sm:$0xff] %v12982
    %13001 = vst [vmem:[%s20 + $0x50] sm:$0xff] %v12984
    %13002 = vst [vmem:[%s20 + $0x58] sm:$0xff] %v12986
    %13003 = vst [vmem:[%s20 + $0x60] sm:$0xff] %v12988
    %13004 = vst [vmem:[%s20 + $0x68] sm:$0xff] %v12990
    // Predicated region
    $region154: #{vae_forward.1} parent=1 // pred_check
      _
    $region155: #{vae_forward.1} parent=1 // pred_check_branch
      %13006 = sbr.rel (0) target = $region157
    $region156: #{vae_forward.1} parent=1 // pred_region
      _
    $region157: #{vae_forward.1} parent=1 // pred_fallthru
      _
    // Predicated region
    $region158: #{vae_forward.1} parent=1 // pred_check
      _
    $region159: #{vae_forward.1} parent=1 // pred_check_branch
      %13008 = sbr.rel (0) target = $region161
    $region160: #{vae_forward.1} parent=1 // pred_region
      _
    $region161: #{vae_forward.1} parent=1 // pred_fallthru
      _
    %13009 = vsyncpa [#allocation3], 1
    %13010 = vsyncpa [#allocation5], 1
    %13011 = vsyncpa [#allocation8], 1
    %13012 = vsyncpa [#allocation11], 1
    %13013 = vsyncpa [#allocation14], 1
    %13014 = vsyncpa [#allocation17], 1
    %13015 = vsyncpa [#allocation20], 1
    %13016 = vsyncpa [#allocation23], 1
    %13017 = vsyncpa [#allocation26], 1
    %13018 = vsyncpa [#allocation29], 1

</llo_original>
